<compile_context>
chip_gen: v7x
topology: tpu7x:2x2x1
jax: 0.10.0
libtpu: 0.0.40
codegen_flags: <defaults>
</compile_context>

<pallas_src>
import functools

import jax
import jax.numpy as jnp
from jax import lax
from jax.experimental import pallas as pl
from jax.experimental.pallas import tpu as pltpu


def lstm_seq_kernel(x_ref, wih_ref, whh_ref, b_ref, wlin_ref, blin_ref,
                    out1_ref, out2_ref, hist0_ref, hist1_ref, hist2_ref):
    """Three cascaded LSTM passes + concat + linear + residual, all in VMEM.

    x_ref:    (T, B, H)   enc_output + pos_embeddings, time-major
    wih_ref:  (H, 4H)     input->gates weight (gate order i, f, g, o)
    whh_ref:  (H, 4H)     hidden->gates weight
    b_ref:    (1, 4H)     bias_ih + bias_hh
    wlin_ref: (3H, H)     linear weight (transposed for right-matmul)
    blin_ref: (1, H)      linear bias
    out1_ref: (T, B, H)   output1
    out2_ref: (T, B, 3H)  output2 (concat of the three LSTM outputs)
    hist*_ref:(T, B, H)   per-pass hidden-state history scratch
    """
    T, B, H = x_ref.shape
    f32 = jnp.float32

    x = x_ref[...]                                   # (T, B, H)
    x2d = x.reshape(T * B, H)
    wih = wih_ref[...]
    whh = whh_ref[...]
    b = b_ref[...]

    # Static per-gate weight/bias slices (gate order i, f, g, o). One-time cost.
    wih_g = [wih[:, g * H:(g + 1) * H] for g in range(4)]    # (H, H)
    whh_g = [whh[:, g * H:(g + 1) * H] for g in range(4)]    # (H, H)
    b_g = [b[:, g * H:(g + 1) * H] for g in range(4)]        # (1, H)

    # Hoisted input projection: one (T*B,H)@(H,H) matmul per gate, bias folded.
    # Time positions shifted past the end have zero input, so their gate
    # pre-activation contribution is just the bias -> pad with bias-only rows.
    xb_list = []      # (T,   B, H) per gate
    xbpad = []        # (T+2, B, H) per gate
    for g in range(4):
        xb = (jnp.dot(x2d, wih_g[g], preferred_element_type=f32)
              + b_g[g]).reshape(T, B, H)
        pad = jnp.broadcast_to(b_g[g].reshape(1, 1, H), (2, B, H))
        xb_list.append(xb)
        xbpad.append(jnp.concatenate([xb, pad], axis=0))

    hist_refs = (hist0_ref, hist1_ref, hist2_ref)
    h = jnp.zeros((B, H), f32)
    c = jnp.zeros((B, H), f32)

    # Three cascaded passes; (h, c) carries across passes exactly like feeding
    # (h1, c1) / (h2, c2) back into nn.LSTM, so the passes are serial.
    for p in range(3):
        if p == 0:
            pre = xb_list
        else:
            # Project the previous pass's whole output history through W_ih in
            # one big matmul per gate (off the serial chain).
            hprev = hist_refs[p - 1][...].reshape(T * B, H)
            pre = [xbpad[g][p:p + T]
                   + jnp.dot(hprev, wih_g[g],
                             preferred_element_type=f32).reshape(T, B, H)
                   for g in range(4)]

        # Fully unrolled recurrence: per step, only h @ whh_g on the critical
        # path (4 independent tiny MXU matmuls), no masking, no lane slicing.
        for t in range(T):
            a = [pre[g][t] + jnp.dot(h, whh_g[g], preferred_element_type=f32)
                 for g in range(4)]
            i_gate = jax.nn.sigmoid(a[0])
            f_gate = jax.nn.sigmoid(a[1])
            g_gate = jnp.tanh(a[2])
            o_gate = jax.nn.sigmoid(a[3])
            c = f_gate * c + i_gate * g_gate
            h = o_gate * jnp.tanh(c)
            hist_refs[p][t, :, :] = h                # (B, H) store, own tile

    # Epilogue: assemble out2 and the linear + residual with full-width ops.
    h0 = hist0_ref[...]
    h1 = hist1_ref[...]
    h2 = hist2_ref[...]
    concat = jnp.concatenate([h0, h1, h2], axis=-1)          # (T, B, 3H)
    out2_ref[...] = concat
    y = (jnp.dot(concat.reshape(T * B, 3 * H), wlin_ref[...],
                 preferred_element_type=f32)
         + blin_ref[...])                                    # (T*B, H)
    out1_ref[...] = y.reshape(T, B, H) + x


@functools.partial(jax.jit, static_argnames=())
def lstm_sequence_forward(pos_embeddings, enc_output,
                          w_ih, w_hh, b_gates, w_lin, b_lin):
    """Wrapper: PyTorch (B, T, H) batch_first in/out; kernel is time-major."""
    x = enc_output + pos_embeddings                               # (B, T, H)
    B, T, H = x.shape
    x_tbh = jnp.transpose(x, (1, 0, 2)).astype(jnp.float32)       # (T, B, H)

    vmem = pl.BlockSpec(memory_space=pltpu.MemorySpace.VMEM)
    out1_t, out2_t = pl.pallas_call(
        lstm_seq_kernel,
        out_shape=(jax.ShapeDtypeStruct((T, B, H), jnp.float32),
                   jax.ShapeDtypeStruct((T, B, 3 * H), jnp.float32)),
        in_specs=[vmem] * 6,
        out_specs=(vmem, vmem),
        scratch_shapes=[pltpu.VMEM((T, B, H), jnp.float32)] * 3,
    )(x_tbh, w_ih, w_hh, b_gates, w_lin, b_lin)

    # Transposes back to batch_first (negligible at these sizes; for production
    # shapes, consume time-major downstream instead).
    output1 = jnp.transpose(out1_t, (1, 0, 2))                    # (B, T, H)
    output2 = jnp.transpose(out2_t, (1, 0, 2))                    # (B, T, 3H)
    return output1, output2


# ----------------------------- pure-JAX reference -----------------------------
def _lstm_ref(x_btH, h0, c0, w_ih, w_hh, b):
    def step(carry, xt):
        h, c = carry
        gates = xt @ w_ih + h @ w_hh + b[0]
        H = h.shape[-1]
        i = jax.nn.sigmoid(gates[:, 0:H])
        f = jax.nn.sigmoid(gates[:, H:2 * H])
        g = jnp.tanh(gates[:, 2 * H:3 * H])
        o = jax.nn.sigmoid(gates[:, 3 * H:4 * H])
        c = f * c + i * g
        h = o * jnp.tanh(c)
        return (h, c), h

    (h, c), ys = lax.scan(step, (h0, c0), jnp.transpose(x_btH, (1, 0, 2)))
    return jnp.transpose(ys, (1, 0, 2)), h, c


def _reference_forward(pos, enc, w_ih, w_hh, b_gates, w_lin, b_lin):
    x = enc + pos
    B, T, H = x.shape
    h0 = jnp.zeros((B, H), jnp.float32)
    c0 = jnp.zeros((B, H), jnp.float32)

    out1, h1, c1 = _lstm_ref(x, h0, c0, w_ih, w_hh, b_gates)
    tmp1 = jnp.concatenate([x[:, 1:, :], jnp.zeros((B, 1, H))], axis=1)
    out2, h2, c2 = _lstm_ref(tmp1 + out1, h1, c1, w_ih, w_hh, b_gates)
    tmp2 = jnp.concatenate([x[:, 2:, :], jnp.zeros((B, 2, H))], axis=1)
    out3, _, _ = _lstm_ref(tmp2 + out2, h2, c2, w_ih, w_hh, b_gates)

    concat = jnp.concatenate([out1, out2, out3], axis=2)
    output1 = concat @ w_lin + b_lin[0] + x
    return output1, concat


if __name__ == "__main__":
    B, T, H = 2, 8, 32   # batch, target-seq len (< 30 -> test branch), dim_hidden

    key = jax.random.PRNGKey(0)
    k_pos, k_enc, k_wih, k_whh, k_lin = jax.random.split(key, 5)

    pos_embeddings = jax.random.normal(k_pos, (B, T, H), jnp.float32)
    enc_output = jax.random.normal(k_enc, (B, T, H), jnp.float32)

    # init_weights(): LSTM weights ~ U(-0.08, 0.08), biases = 0,
    # linear weight ~ U(-0.08, 0.08), linear bias = 0.
    w_ih = jax.random.uniform(k_wih, (H, 4 * H), jnp.float32, -0.08, 0.08)
    w_hh = jax.random.uniform(k_whh, (H, 4 * H), jnp.float32, -0.08, 0.08)
    b_gates = jnp.zeros((1, 4 * H), jnp.float32)
    w_lin = jax.random.uniform(k_lin, (3 * H, H), jnp.float32, -0.08, 0.08)
    b_lin = jnp.zeros((1, H), jnp.float32)

    out1, out2 = lstm_sequence_forward(pos_embeddings, enc_output,
                                       w_ih, w_hh, b_gates, w_lin, b_lin)
    jax.block_until_ready((out1, out2))

    ref1, ref2 = _reference_forward(pos_embeddings, enc_output,
                                    w_ih, w_hh, b_gates, w_lin, b_lin)
    assert out1.shape == (B, T, H) and out2.shape == (B, T, 3 * H)
    assert jnp.allclose(out1, ref1, atol=1e-4, rtol=1e-4)
    assert jnp.allclose(out2, ref2, atol=1e-4, rtol=1e-4)

    print("KERNEL_OK")
</pallas_src>

<mosaic_0001>
module attributes {stable_mosaic.version = 11 : i64} {
  func.func @lstm_seq_kernel(%arg0: memref<8x2x32xf32, #tpu.memory_space<vmem>>, %arg1: memref<32x128xf32, #tpu.memory_space<vmem>>, %arg2: memref<32x128xf32, #tpu.memory_space<vmem>>, %arg3: memref<1x128xf32, #tpu.memory_space<vmem>>, %arg4: memref<96x32xf32, #tpu.memory_space<vmem>>, %arg5: memref<1x32xf32, #tpu.memory_space<vmem>>, %arg6: memref<8x2x32xf32, #tpu.memory_space<vmem>>, %arg7: memref<8x2x96xf32, #tpu.memory_space<vmem>>, %arg8: memref<8x2x32xf32, #tpu.memory_space<vmem>>, %arg9: memref<8x2x32xf32, #tpu.memory_space<vmem>>, %arg10: memref<8x2x32xf32, #tpu.memory_space<vmem>>) attributes {dimension_semantics = [], scalar_prefetch = 0 : i64, scratch_operands = 3 : i64, tpu.core_type = #tpu.core_type<tc>} {
    %c0 = arith.constant 0 : index
    %c0_0 = arith.constant 0 : index
    %c0_1 = arith.constant 0 : index
    %0 = vector.load %arg0[%c0, %c0_0, %c0_1] : memref<8x2x32xf32, #tpu.memory_space<vmem>>, vector<8x2x32xf32>
    %1 = vector.shape_cast %0 : vector<8x2x32xf32> to vector<16x32xf32>
    %c0_2 = arith.constant 0 : index
    %c0_3 = arith.constant 0 : index
    %2 = vector.load %arg1[%c0_2, %c0_3] : memref<32x128xf32, #tpu.memory_space<vmem>>, vector<32x128xf32>
    %c0_4 = arith.constant 0 : index
    %c0_5 = arith.constant 0 : index
    %3 = vector.load %arg2[%c0_4, %c0_5] : memref<32x128xf32, #tpu.memory_space<vmem>>, vector<32x128xf32>
    %c0_6 = arith.constant 0 : index
    %c0_7 = arith.constant 0 : index
    %4 = vector.load %arg3[%c0_6, %c0_7] : memref<1x128xf32, #tpu.memory_space<vmem>>, vector<1x128xf32>
    %5 = vector.extract_strided_slice %2 {offsets = [0, 0], sizes = [32, 32], strides = [1, 1]} : vector<32x128xf32> to vector<32x32xf32>
    %6 = vector.extract_strided_slice %2 {offsets = [0, 32], sizes = [32, 32], strides = [1, 1]} : vector<32x128xf32> to vector<32x32xf32>
    %7 = vector.extract_strided_slice %2 {offsets = [0, 64], sizes = [32, 32], strides = [1, 1]} : vector<32x128xf32> to vector<32x32xf32>
    %8 = vector.extract_strided_slice %2 {offsets = [0, 96], sizes = [32, 32], strides = [1, 1]} : vector<32x128xf32> to vector<32x32xf32>
    %9 = vector.extract_strided_slice %3 {offsets = [0, 0], sizes = [32, 32], strides = [1, 1]} : vector<32x128xf32> to vector<32x32xf32>
    %10 = vector.extract_strided_slice %3 {offsets = [0, 32], sizes = [32, 32], strides = [1, 1]} : vector<32x128xf32> to vector<32x32xf32>
    %11 = vector.extract_strided_slice %3 {offsets = [0, 64], sizes = [32, 32], strides = [1, 1]} : vector<32x128xf32> to vector<32x32xf32>
    %12 = vector.extract_strided_slice %3 {offsets = [0, 96], sizes = [32, 32], strides = [1, 1]} : vector<32x128xf32> to vector<32x32xf32>
    %13 = vector.extract_strided_slice %4 {offsets = [0, 0], sizes = [1, 32], strides = [1, 1]} : vector<1x128xf32> to vector<1x32xf32>
    %14 = vector.extract_strided_slice %4 {offsets = [0, 32], sizes = [1, 32], strides = [1, 1]} : vector<1x128xf32> to vector<1x32xf32>
    %15 = vector.extract_strided_slice %4 {offsets = [0, 64], sizes = [1, 32], strides = [1, 1]} : vector<1x128xf32> to vector<1x32xf32>
    %16 = vector.extract_strided_slice %4 {offsets = [0, 96], sizes = [1, 32], strides = [1, 1]} : vector<1x128xf32> to vector<1x32xf32>
    %cst = arith.constant dense<0.000000e+00> : vector<16x32xf32>
    %17 = tpu.matmul %1, %5, %cst {dimension_numbers = #tpu.dot_dimension_numbers<[1], [0], [0], [1], [0, 0, 1, 1], [], []>} : vector<16x32xf32>, vector<32x32xf32>, vector<16x32xf32> -> vector<16x32xf32>
    %18 = vector.broadcast %13 : vector<1x32xf32> to vector<16x32xf32>
    %19 = arith.addf %17, %18 : vector<16x32xf32>
    %20 = vector.shape_cast %19 : vector<16x32xf32> to vector<8x2x32xf32>
    %21 = vector.shape_cast %13 : vector<1x32xf32> to vector<1x1x32xf32>
    %22 = vector.shape_cast %21 : vector<1x1x32xf32> to vector<1x1x32xf32>
    %23 = vector.broadcast %22 : vector<1x1x32xf32> to vector<2x2x32xf32>
    %24 = tpu.concatenate %20, %23 in 0 : vector<8x2x32xf32>, vector<2x2x32xf32> -> vector<10x2x32xf32>
    %cst_8 = arith.constant dense<0.000000e+00> : vector<16x32xf32>
    %25 = tpu.matmul %1, %6, %cst_8 {dimension_numbers = #tpu.dot_dimension_numbers<[1], [0], [0], [1], [0, 0, 1, 1], [], []>} : vector<16x32xf32>, vector<32x32xf32>, vector<16x32xf32> -> vector<16x32xf32>
    %26 = vector.broadcast %14 : vector<1x32xf32> to vector<16x32xf32>
    %27 = arith.addf %25, %26 : vector<16x32xf32>
    %28 = vector.shape_cast %27 : vector<16x32xf32> to vector<8x2x32xf32>
    %29 = vector.shape_cast %14 : vector<1x32xf32> to vector<1x1x32xf32>
    %30 = vector.shape_cast %29 : vector<1x1x32xf32> to vector<1x1x32xf32>
    %31 = vector.broadcast %30 : vector<1x1x32xf32> to vector<2x2x32xf32>
    %32 = tpu.concatenate %28, %31 in 0 : vector<8x2x32xf32>, vector<2x2x32xf32> -> vector<10x2x32xf32>
    %cst_9 = arith.constant dense<0.000000e+00> : vector<16x32xf32>
    %33 = tpu.matmul %1, %7, %cst_9 {dimension_numbers = #tpu.dot_dimension_numbers<[1], [0], [0], [1], [0, 0, 1, 1], [], []>} : vector<16x32xf32>, vector<32x32xf32>, vector<16x32xf32> -> vector<16x32xf32>
    %34 = vector.broadcast %15 : vector<1x32xf32> to vector<16x32xf32>
    %35 = arith.addf %33, %34 : vector<16x32xf32>
    %36 = vector.shape_cast %35 : vector<16x32xf32> to vector<8x2x32xf32>
    %37 = vector.shape_cast %15 : vector<1x32xf32> to vector<1x1x32xf32>
    %38 = vector.shape_cast %37 : vector<1x1x32xf32> to vector<1x1x32xf32>
    %39 = vector.broadcast %38 : vector<1x1x32xf32> to vector<2x2x32xf32>
    %40 = tpu.concatenate %36, %39 in 0 : vector<8x2x32xf32>, vector<2x2x32xf32> -> vector<10x2x32xf32>
    %cst_10 = arith.constant dense<0.000000e+00> : vector<16x32xf32>
    %41 = tpu.matmul %1, %8, %cst_10 {dimension_numbers = #tpu.dot_dimension_numbers<[1], [0], [0], [1], [0, 0, 1, 1], [], []>} : vector<16x32xf32>, vector<32x32xf32>, vector<16x32xf32> -> vector<16x32xf32>
    %42 = vector.broadcast %16 : vector<1x32xf32> to vector<16x32xf32>
    %43 = arith.addf %41, %42 : vector<16x32xf32>
    %44 = vector.shape_cast %43 : vector<16x32xf32> to vector<8x2x32xf32>
    %45 = vector.shape_cast %16 : vector<1x32xf32> to vector<1x1x32xf32>
    %46 = vector.shape_cast %45 : vector<1x1x32xf32> to vector<1x1x32xf32>
    %47 = vector.broadcast %46 : vector<1x1x32xf32> to vector<2x2x32xf32>
    %48 = tpu.concatenate %44, %47 in 0 : vector<8x2x32xf32>, vector<2x2x32xf32> -> vector<10x2x32xf32>
    %cst_11 = arith.constant 0.000000e+00 : f32
    %49 = vector.broadcast %cst_11 : f32 to vector<2x32xf32>
    %cst_12 = arith.constant 0.000000e+00 : f32
    %50 = vector.broadcast %cst_12 : f32 to vector<2x32xf32>
    %51 = vector.extract_strided_slice %20 {offsets = [0, 0, 0], sizes = [1, 2, 32], strides = [1, 1, 1]} : vector<8x2x32xf32> to vector<1x2x32xf32>
    %52 = vector.shape_cast %51 : vector<1x2x32xf32> to vector<2x32xf32>
    %cst_13 = arith.constant dense<0.000000e+00> : vector<2x32xf32>
    %53 = tpu.matmul %49, %9, %cst_13 {dimension_numbers = #tpu.dot_dimension_numbers<[1], [0], [0], [1], [0, 0, 1, 1], [], []>} : vector<2x32xf32>, vector<32x32xf32>, vector<2x32xf32> -> vector<2x32xf32>
    %54 = arith.addf %52, %53 : vector<2x32xf32>
    %55 = vector.extract_strided_slice %28 {offsets = [0, 0, 0], sizes = [1, 2, 32], strides = [1, 1, 1]} : vector<8x2x32xf32> to vector<1x2x32xf32>
    %56 = vector.shape_cast %55 : vector<1x2x32xf32> to vector<2x32xf32>
    %cst_14 = arith.constant dense<0.000000e+00> : vector<2x32xf32>
    %57 = tpu.matmul %49, %10, %cst_14 {dimension_numbers = #tpu.dot_dimension_numbers<[1], [0], [0], [1], [0, 0, 1, 1], [], []>} : vector<2x32xf32>, vector<32x32xf32>, vector<2x32xf32> -> vector<2x32xf32>
    %58 = arith.addf %56, %57 : vector<2x32xf32>
    %59 = vector.extract_strided_slice %36 {offsets = [0, 0, 0], sizes = [1, 2, 32], strides = [1, 1, 1]} : vector<8x2x32xf32> to vector<1x2x32xf32>
    %60 = vector.shape_cast %59 : vector<1x2x32xf32> to vector<2x32xf32>
    %cst_15 = arith.constant dense<0.000000e+00> : vector<2x32xf32>
    %61 = tpu.matmul %49, %11, %cst_15 {dimension_numbers = #tpu.dot_dimension_numbers<[1], [0], [0], [1], [0, 0, 1, 1], [], []>} : vector<2x32xf32>, vector<32x32xf32>, vector<2x32xf32> -> vector<2x32xf32>
    %62 = arith.addf %60, %61 : vector<2x32xf32>
    %63 = vector.extract_strided_slice %44 {offsets = [0, 0, 0], sizes = [1, 2, 32], strides = [1, 1, 1]} : vector<8x2x32xf32> to vector<1x2x32xf32>
    %64 = vector.shape_cast %63 : vector<1x2x32xf32> to vector<2x32xf32>
    %cst_16 = arith.constant dense<0.000000e+00> : vector<2x32xf32>
    %65 = tpu.matmul %49, %12, %cst_16 {dimension_numbers = #tpu.dot_dimension_numbers<[1], [0], [0], [1], [0, 0, 1, 1], [], []>} : vector<2x32xf32>, vector<32x32xf32>, vector<2x32xf32> -> vector<2x32xf32>
    %66 = arith.addf %64, %65 : vector<2x32xf32>
    %67 = arith.negf %54 : vector<2x32xf32>
    %68 = math.exp %67 : vector<2x32xf32>
    %cst_17 = arith.constant 1.000000e+00 : f32
    %69 = vector.broadcast %cst_17 : f32 to vector<2x32xf32>
    %70 = arith.addf %69, %68 : vector<2x32xf32>
    %71 = arith.divf %69, %70 : vector<2x32xf32>
    %72 = arith.negf %58 : vector<2x32xf32>
    %73 = math.exp %72 : vector<2x32xf32>
    %cst_18 = arith.constant 1.000000e+00 : f32
    %74 = vector.broadcast %cst_18 : f32 to vector<2x32xf32>
    %75 = arith.addf %74, %73 : vector<2x32xf32>
    %76 = arith.divf %74, %75 : vector<2x32xf32>
    %77 = math.tanh %62 : vector<2x32xf32>
    %78 = arith.negf %66 : vector<2x32xf32>
    %79 = math.exp %78 : vector<2x32xf32>
    %cst_19 = arith.constant 1.000000e+00 : f32
    %80 = vector.broadcast %cst_19 : f32 to vector<2x32xf32>
    %81 = arith.addf %80, %79 : vector<2x32xf32>
    %82 = arith.divf %80, %81 : vector<2x32xf32>
    %83 = arith.mulf %76, %50 : vector<2x32xf32>
    %84 = arith.mulf %71, %77 : vector<2x32xf32>
    %85 = arith.addf %83, %84 : vector<2x32xf32>
    %86 = math.tanh %85 : vector<2x32xf32>
    %87 = arith.mulf %82, %86 : vector<2x32xf32>
    %c0_20 = arith.constant 0 : index
    %c0_21 = arith.constant 0 : index
    %c0_22 = arith.constant 0 : index
    %88 = vector.load %arg8[%c0_20, %c0_21, %c0_22] : memref<8x2x32xf32, #tpu.memory_space<vmem>>, vector<1x2x32xf32>
    %89 = vector.shape_cast %88 : vector<1x2x32xf32> to vector<2x32xf32>
    %90 = vector.shape_cast %87 : vector<2x32xf32> to vector<1x2x32xf32>
    tpu.vector_store %arg8[%c0_20, %c0_21, %c0_22], %90 {strides = array<i32>} : memref<8x2x32xf32, #tpu.memory_space<vmem>>, vector<1x2x32xf32>,
    %91 = vector.extract_strided_slice %20 {offsets = [1, 0, 0], sizes = [1, 2, 32], strides = [1, 1, 1]} : vector<8x2x32xf32> to vector<1x2x32xf32>
    %92 = vector.shape_cast %91 : vector<1x2x32xf32> to vector<2x32xf32>
    %cst_23 = arith.constant dense<0.000000e+00> : vector<2x32xf32>
    %93 = tpu.matmul %87, %9, %cst_23 {dimension_numbers = #tpu.dot_dimension_numbers<[1], [0], [0], [1], [0, 0, 1, 1], [], []>} : vector<2x32xf32>, vector<32x32xf32>, vector<2x32xf32> -> vector<2x32xf32>
    %94 = arith.addf %92, %93 : vector<2x32xf32>
    %95 = vector.extract_strided_slice %28 {offsets = [1, 0, 0], sizes = [1, 2, 32], strides = [1, 1, 1]} : vector<8x2x32xf32> to vector<1x2x32xf32>
    %96 = vector.shape_cast %95 : vector<1x2x32xf32> to vector<2x32xf32>
    %cst_24 = arith.constant dense<0.000000e+00> : vector<2x32xf32>
    %97 = tpu.matmul %87, %10, %cst_24 {dimension_numbers = #tpu.dot_dimension_numbers<[1], [0], [0], [1], [0, 0, 1, 1], [], []>} : vector<2x32xf32>, vector<32x32xf32>, vector<2x32xf32> -> vector<2x32xf32>
    %98 = arith.addf %96, %97 : vector<2x32xf32>
    %99 = vector.extract_strided_slice %36 {offsets = [1, 0, 0], sizes = [1, 2, 32], strides = [1, 1, 1]} : vector<8x2x32xf32> to vector<1x2x32xf32>
    %100 = vector.shape_cast %99 : vector<1x2x32xf32> to vector<2x32xf32>
    %cst_25 = arith.constant dense<0.000000e+00> : vector<2x32xf32>
    %101 = tpu.matmul %87, %11, %cst_25 {dimension_numbers = #tpu.dot_dimension_numbers<[1], [0], [0], [1], [0, 0, 1, 1], [], []>} : vector<2x32xf32>, vector<32x32xf32>, vector<2x32xf32> -> vector<2x32xf32>
    %102 = arith.addf %100, %101 : vector<2x32xf32>
    %103 = vector.extract_strided_slice %44 {offsets = [1, 0, 0], sizes = [1, 2, 32], strides = [1, 1, 1]} : vector<8x2x32xf32> to vector<1x2x32xf32>
    %104 = vector.shape_cast %103 : vector<1x2x32xf32> to vector<2x32xf32>
    %cst_26 = arith.constant dense<0.000000e+00> : vector<2x32xf32>
    %105 = tpu.matmul %87, %12, %cst_26 {dimension_numbers = #tpu.dot_dimension_numbers<[1], [0], [0], [1], [0, 0, 1, 1], [], []>} : vector<2x32xf32>, vector<32x32xf32>, vector<2x32xf32> -> vector<2x32xf32>
    %106 = arith.addf %104, %105 : vector<2x32xf32>
    %107 = arith.negf %94 : vector<2x32xf32>
    %108 = math.exp %107 : vector<2x32xf32>
    %cst_27 = arith.constant 1.000000e+00 : f32
    %109 = vector.broadcast %cst_27 : f32 to vector<2x32xf32>
    %110 = arith.addf %109, %108 : vector<2x32xf32>
    %111 = arith.divf %109, %110 : vector<2x32xf32>
    %112 = arith.negf %98 : vector<2x32xf32>
    %113 = math.exp %112 : vector<2x32xf32>
    %cst_28 = arith.constant 1.000000e+00 : f32
    %114 = vector.broadcast %cst_28 : f32 to vector<2x32xf32>
    %115 = arith.addf %114, %113 : vector<2x32xf32>
    %116 = arith.divf %114, %115 : vector<2x32xf32>
    %117 = math.tanh %102 : vector<2x32xf32>
    %118 = arith.negf %106 : vector<2x32xf32>
    %119 = math.exp %118 : vector<2x32xf32>
    %cst_29 = arith.constant 1.000000e+00 : f32
    %120 = vector.broadcast %cst_29 : f32 to vector<2x32xf32>
    %121 = arith.addf %120, %119 : vector<2x32xf32>
    %122 = arith.divf %120, %121 : vector<2x32xf32>
    %123 = arith.mulf %116, %85 : vector<2x32xf32>
    %124 = arith.mulf %111, %117 : vector<2x32xf32>
    %125 = arith.addf %123, %124 : vector<2x32xf32>
    %126 = math.tanh %125 : vector<2x32xf32>
    %127 = arith.mulf %122, %126 : vector<2x32xf32>
    %c1 = arith.constant 1 : index
    %c0_30 = arith.constant 0 : index
    %c0_31 = arith.constant 0 : index
    %128 = vector.load %arg8[%c1, %c0_30, %c0_31] : memref<8x2x32xf32, #tpu.memory_space<vmem>>, vector<1x2x32xf32>
    %129 = vector.shape_cast %128 : vector<1x2x32xf32> to vector<2x32xf32>
    %130 = vector.shape_cast %127 : vector<2x32xf32> to vector<1x2x32xf32>
    tpu.vector_store %arg8[%c1, %c0_30, %c0_31], %130 {strides = array<i32>} : memref<8x2x32xf32, #tpu.memory_space<vmem>>, vector<1x2x32xf32>,
    %131 = vector.extract_strided_slice %20 {offsets = [2, 0, 0], sizes = [1, 2, 32], strides = [1, 1, 1]} : vector<8x2x32xf32> to vector<1x2x32xf32>
    %132 = vector.shape_cast %131 : vector<1x2x32xf32> to vector<2x32xf32>
    %cst_32 = arith.constant dense<0.000000e+00> : vector<2x32xf32>
    %133 = tpu.matmul %127, %9, %cst_32 {dimension_numbers = #tpu.dot_dimension_numbers<[1], [0], [0], [1], [0, 0, 1, 1], [], []>} : vector<2x32xf32>, vector<32x32xf32>, vector<2x32xf32> -> vector<2x32xf32>
    %134 = arith.addf %132, %133 : vector<2x32xf32>
    %135 = vector.extract_strided_slice %28 {offsets = [2, 0, 0], sizes = [1, 2, 32], strides = [1, 1, 1]} : vector<8x2x32xf32> to vector<1x2x32xf32>
    %136 = vector.shape_cast %135 : vector<1x2x32xf32> to vector<2x32xf32>
    %cst_33 = arith.constant dense<0.000000e+00> : vector<2x32xf32>
    %137 = tpu.matmul %127, %10, %cst_33 {dimension_numbers = #tpu.dot_dimension_numbers<[1], [0], [0], [1], [0, 0, 1, 1], [], []>} : vector<2x32xf32>, vector<32x32xf32>, vector<2x32xf32> -> vector<2x32xf32>
    %138 = arith.addf %136, %137 : vector<2x32xf32>
    %139 = vector.extract_strided_slice %36 {offsets = [2, 0, 0], sizes = [1, 2, 32], strides = [1, 1, 1]} : vector<8x2x32xf32> to vector<1x2x32xf32>
    %140 = vector.shape_cast %139 : vector<1x2x32xf32> to vector<2x32xf32>
    %cst_34 = arith.constant dense<0.000000e+00> : vector<2x32xf32>
    %141 = tpu.matmul %127, %11, %cst_34 {dimension_numbers = #tpu.dot_dimension_numbers<[1], [0], [0], [1], [0, 0, 1, 1], [], []>} : vector<2x32xf32>, vector<32x32xf32>, vector<2x32xf32> -> vector<2x32xf32>
    %142 = arith.addf %140, %141 : vector<2x32xf32>
    %143 = vector.extract_strided_slice %44 {offsets = [2, 0, 0], sizes = [1, 2, 32], strides = [1, 1, 1]} : vector<8x2x32xf32> to vector<1x2x32xf32>
    %144 = vector.shape_cast %143 : vector<1x2x32xf32> to vector<2x32xf32>
    %cst_35 = arith.constant dense<0.000000e+00> : vector<2x32xf32>
    %145 = tpu.matmul %127, %12, %cst_35 {dimension_numbers = #tpu.dot_dimension_numbers<[1], [0], [0], [1], [0, 0, 1, 1], [], []>} : vector<2x32xf32>, vector<32x32xf32>, vector<2x32xf32> -> vector<2x32xf32>
    %146 = arith.addf %144, %145 : vector<2x32xf32>
    %147 = arith.negf %134 : vector<2x32xf32>
    %148 = math.exp %147 : vector<2x32xf32>
    %cst_36 = arith.constant 1.000000e+00 : f32
    %149 = vector.broadcast %cst_36 : f32 to vector<2x32xf32>
    %150 = arith.addf %149, %148 : vector<2x32xf32>
    %151 = arith.divf %149, %150 : vector<2x32xf32>
    %152 = arith.negf %138 : vector<2x32xf32>
    %153 = math.exp %152 : vector<2x32xf32>
    %cst_37 = arith.constant 1.000000e+00 : f32
    %154 = vector.broadcast %cst_37 : f32 to vector<2x32xf32>
    %155 = arith.addf %154, %153 : vector<2x32xf32>
    %156 = arith.divf %154, %155 : vector<2x32xf32>
    %157 = math.tanh %142 : vector<2x32xf32>
    %158 = arith.negf %146 : vector<2x32xf32>
    %159 = math.exp %158 : vector<2x32xf32>
    %cst_38 = arith.constant 1.000000e+00 : f32
    %160 = vector.broadcast %cst_38 : f32 to vector<2x32xf32>
    %161 = arith.addf %160, %159 : vector<2x32xf32>
    %162 = arith.divf %160, %161 : vector<2x32xf32>
    %163 = arith.mulf %156, %125 : vector<2x32xf32>
    %164 = arith.mulf %151, %157 : vector<2x32xf32>
    %165 = arith.addf %163, %164 : vector<2x32xf32>
    %166 = math.tanh %165 : vector<2x32xf32>
    %167 = arith.mulf %162, %166 : vector<2x32xf32>
    %c2 = arith.constant 2 : index
    %c0_39 = arith.constant 0 : index
    %c0_40 = arith.constant 0 : index
    %168 = vector.load %arg8[%c2, %c0_39, %c0_40] : memref<8x2x32xf32, #tpu.memory_space<vmem>>, vector<1x2x32xf32>
    %169 = vector.shape_cast %168 : vector<1x2x32xf32> to vector<2x32xf32>
    %170 = vector.shape_cast %167 : vector<2x32xf32> to vector<1x2x32xf32>
    tpu.vector_store %arg8[%c2, %c0_39, %c0_40], %170 {strides = array<i32>} : memref<8x2x32xf32, #tpu.memory_space<vmem>>, vector<1x2x32xf32>,
    %171 = vector.extract_strided_slice %20 {offsets = [3, 0, 0], sizes = [1, 2, 32], strides = [1, 1, 1]} : vector<8x2x32xf32> to vector<1x2x32xf32>
    %172 = vector.shape_cast %171 : vector<1x2x32xf32> to vector<2x32xf32>
    %cst_41 = arith.constant dense<0.000000e+00> : vector<2x32xf32>
    %173 = tpu.matmul %167, %9, %cst_41 {dimension_numbers = #tpu.dot_dimension_numbers<[1], [0], [0], [1], [0, 0, 1, 1], [], []>} : vector<2x32xf32>, vector<32x32xf32>, vector<2x32xf32> -> vector<2x32xf32>
    %174 = arith.addf %172, %173 : vector<2x32xf32>
    %175 = vector.extract_strided_slice %28 {offsets = [3, 0, 0], sizes = [1, 2, 32], strides = [1, 1, 1]} : vector<8x2x32xf32> to vector<1x2x32xf32>
    %176 = vector.shape_cast %175 : vector<1x2x32xf32> to vector<2x32xf32>
    %cst_42 = arith.constant dense<0.000000e+00> : vector<2x32xf32>
    %177 = tpu.matmul %167, %10, %cst_42 {dimension_numbers = #tpu.dot_dimension_numbers<[1], [0], [0], [1], [0, 0, 1, 1], [], []>} : vector<2x32xf32>, vector<32x32xf32>, vector<2x32xf32> -> vector<2x32xf32>
    %178 = arith.addf %176, %177 : vector<2x32xf32>
    %179 = vector.extract_strided_slice %36 {offsets = [3, 0, 0], sizes = [1, 2, 32], strides = [1, 1, 1]} : vector<8x2x32xf32> to vector<1x2x32xf32>
    %180 = vector.shape_cast %179 : vector<1x2x32xf32> to vector<2x32xf32>
    %cst_43 = arith.constant dense<0.000000e+00> : vector<2x32xf32>
    %181 = tpu.matmul %167, %11, %cst_43 {dimension_numbers = #tpu.dot_dimension_numbers<[1], [0], [0], [1], [0, 0, 1, 1], [], []>} : vector<2x32xf32>, vector<32x32xf32>, vector<2x32xf32> -> vector<2x32xf32>
    %182 = arith.addf %180, %181 : vector<2x32xf32>
    %183 = vector.extract_strided_slice %44 {offsets = [3, 0, 0], sizes = [1, 2, 32], strides = [1, 1, 1]} : vector<8x2x32xf32> to vector<1x2x32xf32>
    %184 = vector.shape_cast %183 : vector<1x2x32xf32> to vector<2x32xf32>
    %cst_44 = arith.constant dense<0.000000e+00> : vector<2x32xf32>
    %185 = tpu.matmul %167, %12, %cst_44 {dimension_numbers = #tpu.dot_dimension_numbers<[1], [0], [0], [1], [0, 0, 1, 1], [], []>} : vector<2x32xf32>, vector<32x32xf32>, vector<2x32xf32> -> vector<2x32xf32>
    %186 = arith.addf %184, %185 : vector<2x32xf32>
    %187 = arith.negf %174 : vector<2x32xf32>
    %188 = math.exp %187 : vector<2x32xf32>
    %cst_45 = arith.constant 1.000000e+00 : f32
    %189 = vector.broadcast %cst_45 : f32 to vector<2x32xf32>
    %190 = arith.addf %189, %188 : vector<2x32xf32>
    %191 = arith.divf %189, %190 : vector<2x32xf32>
    %192 = arith.negf %178 : vector<2x32xf32>
    %193 = math.exp %192 : vector<2x32xf32>
    %cst_46 = arith.constant 1.000000e+00 : f32
    %194 = vector.broadcast %cst_46 : f32 to vector<2x32xf32>
    %195 = arith.addf %194, %193 : vector<2x32xf32>
    %196 = arith.divf %194, %195 : vector<2x32xf32>
    %197 = math.tanh %182 : vector<2x32xf32>
    %198 = arith.negf %186 : vector<2x32xf32>
    %199 = math.exp %198 : vector<2x32xf32>
    %cst_47 = arith.constant 1.000000e+00 : f32
    %200 = vector.broadcast %cst_47 : f32 to vector<2x32xf32>
    %201 = arith.addf %200, %199 : vector<2x32xf32>
    %202 = arith.divf %200, %201 : vector<2x32xf32>
    %203 = arith.mulf %196, %165 : vector<2x32xf32>
    %204 = arith.mulf %191, %197 : vector<2x32xf32>
    %205 = arith.addf %203, %204 : vector<2x32xf32>
    %206 = math.tanh %205 : vector<2x32xf32>
    %207 = arith.mulf %202, %206 : vector<2x32xf32>
    %c3 = arith.constant 3 : index
    %c0_48 = arith.constant 0 : index
    %c0_49 = arith.constant 0 : index
    %208 = vector.load %arg8[%c3, %c0_48, %c0_49] : memref<8x2x32xf32, #tpu.memory_space<vmem>>, vector<1x2x32xf32>
    %209 = vector.shape_cast %208 : vector<1x2x32xf32> to vector<2x32xf32>
    %210 = vector.shape_cast %207 : vector<2x32xf32> to vector<1x2x32xf32>
    tpu.vector_store %arg8[%c3, %c0_48, %c0_49], %210 {strides = array<i32>} : memref<8x2x32xf32, #tpu.memory_space<vmem>>, vector<1x2x32xf32>,
    %211 = vector.extract_strided_slice %20 {offsets = [4, 0, 0], sizes = [1, 2, 32], strides = [1, 1, 1]} : vector<8x2x32xf32> to vector<1x2x32xf32>
    %212 = vector.shape_cast %211 : vector<1x2x32xf32> to vector<2x32xf32>
    %cst_50 = arith.constant dense<0.000000e+00> : vector<2x32xf32>
    %213 = tpu.matmul %207, %9, %cst_50 {dimension_numbers = #tpu.dot_dimension_numbers<[1], [0], [0], [1], [0, 0, 1, 1], [], []>} : vector<2x32xf32>, vector<32x32xf32>, vector<2x32xf32> -> vector<2x32xf32>
    %214 = arith.addf %212, %213 : vector<2x32xf32>
    %215 = vector.extract_strided_slice %28 {offsets = [4, 0, 0], sizes = [1, 2, 32], strides = [1, 1, 1]} : vector<8x2x32xf32> to vector<1x2x32xf32>
    %216 = vector.shape_cast %215 : vector<1x2x32xf32> to vector<2x32xf32>
    %cst_51 = arith.constant dense<0.000000e+00> : vector<2x32xf32>
    %217 = tpu.matmul %207, %10, %cst_51 {dimension_numbers = #tpu.dot_dimension_numbers<[1], [0], [0], [1], [0, 0, 1, 1], [], []>} : vector<2x32xf32>, vector<32x32xf32>, vector<2x32xf32> -> vector<2x32xf32>
    %218 = arith.addf %216, %217 : vector<2x32xf32>
    %219 = vector.extract_strided_slice %36 {offsets = [4, 0, 0], sizes = [1, 2, 32], strides = [1, 1, 1]} : vector<8x2x32xf32> to vector<1x2x32xf32>
    %220 = vector.shape_cast %219 : vector<1x2x32xf32> to vector<2x32xf32>
    %cst_52 = arith.constant dense<0.000000e+00> : vector<2x32xf32>
    %221 = tpu.matmul %207, %11, %cst_52 {dimension_numbers = #tpu.dot_dimension_numbers<[1], [0], [0], [1], [0, 0, 1, 1], [], []>} : vector<2x32xf32>, vector<32x32xf32>, vector<2x32xf32> -> vector<2x32xf32>
    %222 = arith.addf %220, %221 : vector<2x32xf32>
    %223 = vector.extract_strided_slice %44 {offsets = [4, 0, 0], sizes = [1, 2, 32], strides = [1, 1, 1]} : vector<8x2x32xf32> to vector<1x2x32xf32>
    %224 = vector.shape_cast %223 : vector<1x2x32xf32> to vector<2x32xf32>
    %cst_53 = arith.constant dense<0.000000e+00> : vector<2x32xf32>
    %225 = tpu.matmul %207, %12, %cst_53 {dimension_numbers = #tpu.dot_dimension_numbers<[1], [0], [0], [1], [0, 0, 1, 1], [], []>} : vector<2x32xf32>, vector<32x32xf32>, vector<2x32xf32> -> vector<2x32xf32>
    %226 = arith.addf %224, %225 : vector<2x32xf32>
    %227 = arith.negf %214 : vector<2x32xf32>
    %228 = math.exp %227 : vector<2x32xf32>
    %cst_54 = arith.constant 1.000000e+00 : f32
    %229 = vector.broadcast %cst_54 : f32 to vector<2x32xf32>
    %230 = arith.addf %229, %228 : vector<2x32xf32>
    %231 = arith.divf %229, %230 : vector<2x32xf32>
    %232 = arith.negf %218 : vector<2x32xf32>
    %233 = math.exp %232 : vector<2x32xf32>
    %cst_55 = arith.constant 1.000000e+00 : f32
    %234 = vector.broadcast %cst_55 : f32 to vector<2x32xf32>
    %235 = arith.addf %234, %233 : vector<2x32xf32>
    %236 = arith.divf %234, %235 : vector<2x32xf32>
    %237 = math.tanh %222 : vector<2x32xf32>
    %238 = arith.negf %226 : vector<2x32xf32>
    %239 = math.exp %238 : vector<2x32xf32>
    %cst_56 = arith.constant 1.000000e+00 : f32
    %240 = vector.broadcast %cst_56 : f32 to vector<2x32xf32>
    %241 = arith.addf %240, %239 : vector<2x32xf32>
    %242 = arith.divf %240, %241 : vector<2x32xf32>
    %243 = arith.mulf %236, %205 : vector<2x32xf32>
    %244 = arith.mulf %231, %237 : vector<2x32xf32>
    %245 = arith.addf %243, %244 : vector<2x32xf32>
    %246 = math.tanh %245 : vector<2x32xf32>
    %247 = arith.mulf %242, %246 : vector<2x32xf32>
    %c4 = arith.constant 4 : index
    %c0_57 = arith.constant 0 : index
    %c0_58 = arith.constant 0 : index
    %248 = vector.load %arg8[%c4, %c0_57, %c0_58] : memref<8x2x32xf32, #tpu.memory_space<vmem>>, vector<1x2x32xf32>
    %249 = vector.shape_cast %248 : vector<1x2x32xf32> to vector<2x32xf32>
    %250 = vector.shape_cast %247 : vector<2x32xf32> to vector<1x2x32xf32>
    tpu.vector_store %arg8[%c4, %c0_57, %c0_58], %250 {strides = array<i32>} : memref<8x2x32xf32, #tpu.memory_space<vmem>>, vector<1x2x32xf32>,
    %251 = vector.extract_strided_slice %20 {offsets = [5, 0, 0], sizes = [1, 2, 32], strides = [1, 1, 1]} : vector<8x2x32xf32> to vector<1x2x32xf32>
    %252 = vector.shape_cast %251 : vector<1x2x32xf32> to vector<2x32xf32>
    %cst_59 = arith.constant dense<0.000000e+00> : vector<2x32xf32>
    %253 = tpu.matmul %247, %9, %cst_59 {dimension_numbers = #tpu.dot_dimension_numbers<[1], [0], [0], [1], [0, 0, 1, 1], [], []>} : vector<2x32xf32>, vector<32x32xf32>, vector<2x32xf32> -> vector<2x32xf32>
    %254 = arith.addf %252, %253 : vector<2x32xf32>
    %255 = vector.extract_strided_slice %28 {offsets = [5, 0, 0], sizes = [1, 2, 32], strides = [1, 1, 1]} : vector<8x2x32xf32> to vector<1x2x32xf32>
    %256 = vector.shape_cast %255 : vector<1x2x32xf32> to vector<2x32xf32>
    %cst_60 = arith.constant dense<0.000000e+00> : vector<2x32xf32>
    %257 = tpu.matmul %247, %10, %cst_60 {dimension_numbers = #tpu.dot_dimension_numbers<[1], [0], [0], [1], [0, 0, 1, 1], [], []>} : vector<2x32xf32>, vector<32x32xf32>, vector<2x32xf32> -> vector<2x32xf32>
    %258 = arith.addf %256, %257 : vector<2x32xf32>
    %259 = vector.extract_strided_slice %36 {offsets = [5, 0, 0], sizes = [1, 2, 32], strides = [1, 1, 1]} : vector<8x2x32xf32> to vector<1x2x32xf32>
    %260 = vector.shape_cast %259 : vector<1x2x32xf32> to vector<2x32xf32>
    %cst_61 = arith.constant dense<0.000000e+00> : vector<2x32xf32>
    %261 = tpu.matmul %247, %11, %cst_61 {dimension_numbers = #tpu.dot_dimension_numbers<[1], [0], [0], [1], [0, 0, 1, 1], [], []>} : vector<2x32xf32>, vector<32x32xf32>, vector<2x32xf32> -> vector<2x32xf32>
    %262 = arith.addf %260, %261 : vector<2x32xf32>
    %263 = vector.extract_strided_slice %44 {offsets = [5, 0, 0], sizes = [1, 2, 32], strides = [1, 1, 1]} : vector<8x2x32xf32> to vector<1x2x32xf32>
    %264 = vector.shape_cast %263 : vector<1x2x32xf32> to vector<2x32xf32>
    %cst_62 = arith.constant dense<0.000000e+00> : vector<2x32xf32>
    %265 = tpu.matmul %247, %12, %cst_62 {dimension_numbers = #tpu.dot_dimension_numbers<[1], [0], [0], [1], [0, 0, 1, 1], [], []>} : vector<2x32xf32>, vector<32x32xf32>, vector<2x32xf32> -> vector<2x32xf32>
    %266 = arith.addf %264, %265 : vector<2x32xf32>
    %267 = arith.negf %254 : vector<2x32xf32>
    %268 = math.exp %267 : vector<2x32xf32>
    %cst_63 = arith.constant 1.000000e+00 : f32
    %269 = vector.broadcast %cst_63 : f32 to vector<2x32xf32>
    %270 = arith.addf %269, %268 : vector<2x32xf32>
    %271 = arith.divf %269, %270 : vector<2x32xf32>
    %272 = arith.negf %258 : vector<2x32xf32>
    %273 = math.exp %272 : vector<2x32xf32>
    %cst_64 = arith.constant 1.000000e+00 : f32
    %274 = vector.broadcast %cst_64 : f32 to vector<2x32xf32>
    %275 = arith.addf %274, %273 : vector<2x32xf32>
    %276 = arith.divf %274, %275 : vector<2x32xf32>
    %277 = math.tanh %262 : vector<2x32xf32>
    %278 = arith.negf %266 : vector<2x32xf32>
    %279 = math.exp %278 : vector<2x32xf32>
    %cst_65 = arith.constant 1.000000e+00 : f32
    %280 = vector.broadcast %cst_65 : f32 to vector<2x32xf32>
    %281 = arith.addf %280, %279 : vector<2x32xf32>
    %282 = arith.divf %280, %281 : vector<2x32xf32>
    %283 = arith.mulf %276, %245 : vector<2x32xf32>
    %284 = arith.mulf %271, %277 : vector<2x32xf32>
    %285 = arith.addf %283, %284 : vector<2x32xf32>
    %286 = math.tanh %285 : vector<2x32xf32>
    %287 = arith.mulf %282, %286 : vector<2x32xf32>
    %c5 = arith.constant 5 : index
    %c0_66 = arith.constant 0 : index
    %c0_67 = arith.constant 0 : index
    %288 = vector.load %arg8[%c5, %c0_66, %c0_67] : memref<8x2x32xf32, #tpu.memory_space<vmem>>, vector<1x2x32xf32>
    %289 = vector.shape_cast %288 : vector<1x2x32xf32> to vector<2x32xf32>
    %290 = vector.shape_cast %287 : vector<2x32xf32> to vector<1x2x32xf32>
    tpu.vector_store %arg8[%c5, %c0_66, %c0_67], %290 {strides = array<i32>} : memref<8x2x32xf32, #tpu.memory_space<vmem>>, vector<1x2x32xf32>,
    %291 = vector.extract_strided_slice %20 {offsets = [6, 0, 0], sizes = [1, 2, 32], strides = [1, 1, 1]} : vector<8x2x32xf32> to vector<1x2x32xf32>
    %292 = vector.shape_cast %291 : vector<1x2x32xf32> to vector<2x32xf32>
    %cst_68 = arith.constant dense<0.000000e+00> : vector<2x32xf32>
    %293 = tpu.matmul %287, %9, %cst_68 {dimension_numbers = #tpu.dot_dimension_numbers<[1], [0], [0], [1], [0, 0, 1, 1], [], []>} : vector<2x32xf32>, vector<32x32xf32>, vector<2x32xf32> -> vector<2x32xf32>
    %294 = arith.addf %292, %293 : vector<2x32xf32>
    %295 = vector.extract_strided_slice %28 {offsets = [6, 0, 0], sizes = [1, 2, 32], strides = [1, 1, 1]} : vector<8x2x32xf32> to vector<1x2x32xf32>
    %296 = vector.shape_cast %295 : vector<1x2x32xf32> to vector<2x32xf32>
    %cst_69 = arith.constant dense<0.000000e+00> : vector<2x32xf32>
    %297 = tpu.matmul %287, %10, %cst_69 {dimension_numbers = #tpu.dot_dimension_numbers<[1], [0], [0], [1], [0, 0, 1, 1], [], []>} : vector<2x32xf32>, vector<32x32xf32>, vector<2x32xf32> -> vector<2x32xf32>
    %298 = arith.addf %296, %297 : vector<2x32xf32>
    %299 = vector.extract_strided_slice %36 {offsets = [6, 0, 0], sizes = [1, 2, 32], strides = [1, 1, 1]} : vector<8x2x32xf32> to vector<1x2x32xf32>
    %300 = vector.shape_cast %299 : vector<1x2x32xf32> to vector<2x32xf32>
    %cst_70 = arith.constant dense<0.000000e+00> : vector<2x32xf32>
    %301 = tpu.matmul %287, %11, %cst_70 {dimension_numbers = #tpu.dot_dimension_numbers<[1], [0], [0], [1], [0, 0, 1, 1], [], []>} : vector<2x32xf32>, vector<32x32xf32>, vector<2x32xf32> -> vector<2x32xf32>
    %302 = arith.addf %300, %301 : vector<2x32xf32>
    %303 = vector.extract_strided_slice %44 {offsets = [6, 0, 0], sizes = [1, 2, 32], strides = [1, 1, 1]} : vector<8x2x32xf32> to vector<1x2x32xf32>
    %304 = vector.shape_cast %303 : vector<1x2x32xf32> to vector<2x32xf32>
    %cst_71 = arith.constant dense<0.000000e+00> : vector<2x32xf32>
    %305 = tpu.matmul %287, %12, %cst_71 {dimension_numbers = #tpu.dot_dimension_numbers<[1], [0], [0], [1], [0, 0, 1, 1], [], []>} : vector<2x32xf32>, vector<32x32xf32>, vector<2x32xf32> -> vector<2x32xf32>
    %306 = arith.addf %304, %305 : vector<2x32xf32>
    %307 = arith.negf %294 : vector<2x32xf32>
    %308 = math.exp %307 : vector<2x32xf32>
    %cst_72 = arith.constant 1.000000e+00 : f32
    %309 = vector.broadcast %cst_72 : f32 to vector<2x32xf32>
    %310 = arith.addf %309, %308 : vector<2x32xf32>
    %311 = arith.divf %309, %310 : vector<2x32xf32>
    %312 = arith.negf %298 : vector<2x32xf32>
    %313 = math.exp %312 : vector<2x32xf32>
    %cst_73 = arith.constant 1.000000e+00 : f32
    %314 = vector.broadcast %cst_73 : f32 to vector<2x32xf32>
    %315 = arith.addf %314, %313 : vector<2x32xf32>
    %316 = arith.divf %314, %315 : vector<2x32xf32>
    %317 = math.tanh %302 : vector<2x32xf32>
    %318 = arith.negf %306 : vector<2x32xf32>
    %319 = math.exp %318 : vector<2x32xf32>
    %cst_74 = arith.constant 1.000000e+00 : f32
    %320 = vector.broadcast %cst_74 : f32 to vector<2x32xf32>
    %321 = arith.addf %320, %319 : vector<2x32xf32>
    %322 = arith.divf %320, %321 : vector<2x32xf32>
    %323 = arith.mulf %316, %285 : vector<2x32xf32>
    %324 = arith.mulf %311, %317 : vector<2x32xf32>
    %325 = arith.addf %323, %324 : vector<2x32xf32>
    %326 = math.tanh %325 : vector<2x32xf32>
    %327 = arith.mulf %322, %326 : vector<2x32xf32>
    %c6 = arith.constant 6 : index
    %c0_75 = arith.constant 0 : index
    %c0_76 = arith.constant 0 : index
    %328 = vector.load %arg8[%c6, %c0_75, %c0_76] : memref<8x2x32xf32, #tpu.memory_space<vmem>>, vector<1x2x32xf32>
    %329 = vector.shape_cast %328 : vector<1x2x32xf32> to vector<2x32xf32>
    %330 = vector.shape_cast %327 : vector<2x32xf32> to vector<1x2x32xf32>
    tpu.vector_store %arg8[%c6, %c0_75, %c0_76], %330 {strides = array<i32>} : memref<8x2x32xf32, #tpu.memory_space<vmem>>, vector<1x2x32xf32>,
    %331 = vector.extract_strided_slice %20 {offsets = [7, 0, 0], sizes = [1, 2, 32], strides = [1, 1, 1]} : vector<8x2x32xf32> to vector<1x2x32xf32>
    %332 = vector.shape_cast %331 : vector<1x2x32xf32> to vector<2x32xf32>
    %cst_77 = arith.constant dense<0.000000e+00> : vector<2x32xf32>
    %333 = tpu.matmul %327, %9, %cst_77 {dimension_numbers = #tpu.dot_dimension_numbers<[1], [0], [0], [1], [0, 0, 1, 1], [], []>} : vector<2x32xf32>, vector<32x32xf32>, vector<2x32xf32> -> vector<2x32xf32>
    %334 = arith.addf %332, %333 : vector<2x32xf32>
    %335 = vector.extract_strided_slice %28 {offsets = [7, 0, 0], sizes = [1, 2, 32], strides = [1, 1, 1]} : vector<8x2x32xf32> to vector<1x2x32xf32>
    %336 = vector.shape_cast %335 : vector<1x2x32xf32> to vector<2x32xf32>
    %cst_78 = arith.constant dense<0.000000e+00> : vector<2x32xf32>
    %337 = tpu.matmul %327, %10, %cst_78 {dimension_numbers = #tpu.dot_dimension_numbers<[1], [0], [0], [1], [0, 0, 1, 1], [], []>} : vector<2x32xf32>, vector<32x32xf32>, vector<2x32xf32> -> vector<2x32xf32>
    %338 = arith.addf %336, %337 : vector<2x32xf32>
    %339 = vector.extract_strided_slice %36 {offsets = [7, 0, 0], sizes = [1, 2, 32], strides = [1, 1, 1]} : vector<8x2x32xf32> to vector<1x2x32xf32>
    %340 = vector.shape_cast %339 : vector<1x2x32xf32> to vector<2x32xf32>
    %cst_79 = arith.constant dense<0.000000e+00> : vector<2x32xf32>
    %341 = tpu.matmul %327, %11, %cst_79 {dimension_numbers = #tpu.dot_dimension_numbers<[1], [0], [0], [1], [0, 0, 1, 1], [], []>} : vector<2x32xf32>, vector<32x32xf32>, vector<2x32xf32> -> vector<2x32xf32>
    %342 = arith.addf %340, %341 : vector<2x32xf32>
    %343 = vector.extract_strided_slice %44 {offsets = [7, 0, 0], sizes = [1, 2, 32], strides = [1, 1, 1]} : vector<8x2x32xf32> to vector<1x2x32xf32>
    %344 = vector.shape_cast %343 : vector<1x2x32xf32> to vector<2x32xf32>
    %cst_80 = arith.constant dense<0.000000e+00> : vector<2x32xf32>
    %345 = tpu.matmul %327, %12, %cst_80 {dimension_numbers = #tpu.dot_dimension_numbers<[1], [0], [0], [1], [0, 0, 1, 1], [], []>} : vector<2x32xf32>, vector<32x32xf32>, vector<2x32xf32> -> vector<2x32xf32>
    %346 = arith.addf %344, %345 : vector<2x32xf32>
    %347 = arith.negf %334 : vector<2x32xf32>
    %348 = math.exp %347 : vector<2x32xf32>
    %cst_81 = arith.constant 1.000000e+00 : f32
    %349 = vector.broadcast %cst_81 : f32 to vector<2x32xf32>
    %350 = arith.addf %349, %348 : vector<2x32xf32>
    %351 = arith.divf %349, %350 : vector<2x32xf32>
    %352 = arith.negf %338 : vector<2x32xf32>
    %353 = math.exp %352 : vector<2x32xf32>
    %cst_82 = arith.constant 1.000000e+00 : f32
    %354 = vector.broadcast %cst_82 : f32 to vector<2x32xf32>
    %355 = arith.addf %354, %353 : vector<2x32xf32>
    %356 = arith.divf %354, %355 : vector<2x32xf32>
    %357 = math.tanh %342 : vector<2x32xf32>
    %358 = arith.negf %346 : vector<2x32xf32>
    %359 = math.exp %358 : vector<2x32xf32>
    %cst_83 = arith.constant 1.000000e+00 : f32
    %360 = vector.broadcast %cst_83 : f32 to vector<2x32xf32>
    %361 = arith.addf %360, %359 : vector<2x32xf32>
    %362 = arith.divf %360, %361 : vector<2x32xf32>
    %363 = arith.mulf %356, %325 : vector<2x32xf32>
    %364 = arith.mulf %351, %357 : vector<2x32xf32>
    %365 = arith.addf %363, %364 : vector<2x32xf32>
    %366 = math.tanh %365 : vector<2x32xf32>
    %367 = arith.mulf %362, %366 : vector<2x32xf32>
    %c7 = arith.constant 7 : index
    %c0_84 = arith.constant 0 : index
    %c0_85 = arith.constant 0 : index
    %368 = vector.load %arg8[%c7, %c0_84, %c0_85] : memref<8x2x32xf32, #tpu.memory_space<vmem>>, vector<1x2x32xf32>
    %369 = vector.shape_cast %368 : vector<1x2x32xf32> to vector<2x32xf32>
    %370 = vector.shape_cast %367 : vector<2x32xf32> to vector<1x2x32xf32>
    tpu.vector_store %arg8[%c7, %c0_84, %c0_85], %370 {strides = array<i32>} : memref<8x2x32xf32, #tpu.memory_space<vmem>>, vector<1x2x32xf32>,
    %c0_86 = arith.constant 0 : index
    %c0_87 = arith.constant 0 : index
    %c0_88 = arith.constant 0 : index
    %371 = vector.load %arg8[%c0_86, %c0_87, %c0_88] : memref<8x2x32xf32, #tpu.memory_space<vmem>>, vector<8x2x32xf32>
    %372 = vector.shape_cast %371 : vector<8x2x32xf32> to vector<16x32xf32>
    %373 = vector.extract_strided_slice %24 {offsets = [1, 0, 0], sizes = [8, 2, 32], strides = [1, 1, 1]} : vector<10x2x32xf32> to vector<8x2x32xf32>
    %cst_89 = arith.constant dense<0.000000e+00> : vector<16x32xf32>
    %374 = tpu.matmul %372, %5, %cst_89 {dimension_numbers = #tpu.dot_dimension_numbers<[1], [0], [0], [1], [0, 0, 1, 1], [], []>} : vector<16x32xf32>, vector<32x32xf32>, vector<16x32xf32> -> vector<16x32xf32>
    %375 = vector.shape_cast %374 : vector<16x32xf32> to vector<8x2x32xf32>
    %376 = arith.addf %373, %375 : vector<8x2x32xf32>
    %377 = vector.extract_strided_slice %32 {offsets = [1, 0, 0], sizes = [8, 2, 32], strides = [1, 1, 1]} : vector<10x2x32xf32> to vector<8x2x32xf32>
    %cst_90 = arith.constant dense<0.000000e+00> : vector<16x32xf32>
    %378 = tpu.matmul %372, %6, %cst_90 {dimension_numbers = #tpu.dot_dimension_numbers<[1], [0], [0], [1], [0, 0, 1, 1], [], []>} : vector<16x32xf32>, vector<32x32xf32>, vector<16x32xf32> -> vector<16x32xf32>
    %379 = vector.shape_cast %378 : vector<16x32xf32> to vector<8x2x32xf32>
    %380 = arith.addf %377, %379 : vector<8x2x32xf32>
    %381 = vector.extract_strided_slice %40 {offsets = [1, 0, 0], sizes = [8, 2, 32], strides = [1, 1, 1]} : vector<10x2x32xf32> to vector<8x2x32xf32>
    %cst_91 = arith.constant dense<0.000000e+00> : vector<16x32xf32>
    %382 = tpu.matmul %372, %7, %cst_91 {dimension_numbers = #tpu.dot_dimension_numbers<[1], [0], [0], [1], [0, 0, 1, 1], [], []>} : vector<16x32xf32>, vector<32x32xf32>, vector<16x32xf32> -> vector<16x32xf32>
    %383 = vector.shape_cast %382 : vector<16x32xf32> to vector<8x2x32xf32>
    %384 = arith.addf %381, %383 : vector<8x2x32xf32>
    %385 = vector.extract_strided_slice %48 {offsets = [1, 0, 0], sizes = [8, 2, 32], strides = [1, 1, 1]} : vector<10x2x32xf32> to vector<8x2x32xf32>
    %cst_92 = arith.constant dense<0.000000e+00> : vector<16x32xf32>
    %386 = tpu.matmul %372, %8, %cst_92 {dimension_numbers = #tpu.dot_dimension_numbers<[1], [0], [0], [1], [0, 0, 1, 1], [], []>} : vector<16x32xf32>, vector<32x32xf32>, vector<16x32xf32> -> vector<16x32xf32>
    %387 = vector.shape_cast %386 : vector<16x32xf32> to vector<8x2x32xf32>
    %388 = arith.addf %385, %387 : vector<8x2x32xf32>
    %389 = vector.extract_strided_slice %376 {offsets = [0, 0, 0], sizes = [1, 2, 32], strides = [1, 1, 1]} : vector<8x2x32xf32> to vector<1x2x32xf32>
    %390 = vector.shape_cast %389 : vector<1x2x32xf32> to vector<2x32xf32>
    %cst_93 = arith.constant dense<0.000000e+00> : vector<2x32xf32>
    %391 = tpu.matmul %367, %9, %cst_93 {dimension_numbers = #tpu.dot_dimension_numbers<[1], [0], [0], [1], [0, 0, 1, 1], [], []>} : vector<2x32xf32>, vector<32x32xf32>, vector<2x32xf32> -> vector<2x32xf32>
    %392 = arith.addf %390, %391 : vector<2x32xf32>
    %393 = vector.extract_strided_slice %380 {offsets = [0, 0, 0], sizes = [1, 2, 32], strides = [1, 1, 1]} : vector<8x2x32xf32> to vector<1x2x32xf32>
    %394 = vector.shape_cast %393 : vector<1x2x32xf32> to vector<2x32xf32>
    %cst_94 = arith.constant dense<0.000000e+00> : vector<2x32xf32>
    %395 = tpu.matmul %367, %10, %cst_94 {dimension_numbers = #tpu.dot_dimension_numbers<[1], [0], [0], [1], [0, 0, 1, 1], [], []>} : vector<2x32xf32>, vector<32x32xf32>, vector<2x32xf32> -> vector<2x32xf32>
    %396 = arith.addf %394, %395 : vector<2x32xf32>
    %397 = vector.extract_strided_slice %384 {offsets = [0, 0, 0], sizes = [1, 2, 32], strides = [1, 1, 1]} : vector<8x2x32xf32> to vector<1x2x32xf32>
    %398 = vector.shape_cast %397 : vector<1x2x32xf32> to vector<2x32xf32>
    %cst_95 = arith.constant dense<0.000000e+00> : vector<2x32xf32>
    %399 = tpu.matmul %367, %11, %cst_95 {dimension_numbers = #tpu.dot_dimension_numbers<[1], [0], [0], [1], [0, 0, 1, 1], [], []>} : vector<2x32xf32>, vector<32x32xf32>, vector<2x32xf32> -> vector<2x32xf32>
    %400 = arith.addf %398, %399 : vector<2x32xf32>
    %401 = vector.extract_strided_slice %388 {offsets = [0, 0, 0], sizes = [1, 2, 32], strides = [1, 1, 1]} : vector<8x2x32xf32> to vector<1x2x32xf32>
    %402 = vector.shape_cast %401 : vector<1x2x32xf32> to vector<2x32xf32>
    %cst_96 = arith.constant dense<0.000000e+00> : vector<2x32xf32>
    %403 = tpu.matmul %367, %12, %cst_96 {dimension_numbers = #tpu.dot_dimension_numbers<[1], [0], [0], [1], [0, 0, 1, 1], [], []>} : vector<2x32xf32>, vector<32x32xf32>, vector<2x32xf32> -> vector<2x32xf32>
    %404 = arith.addf %402, %403 : vector<2x32xf32>
    %405 = arith.negf %392 : vector<2x32xf32>
    %406 = math.exp %405 : vector<2x32xf32>
    %cst_97 = arith.constant 1.000000e+00 : f32
    %407 = vector.broadcast %cst_97 : f32 to vector<2x32xf32>
    %408 = arith.addf %407, %406 : vector<2x32xf32>
    %409 = arith.divf %407, %408 : vector<2x32xf32>
    %410 = arith.negf %396 : vector<2x32xf32>
    %411 = math.exp %410 : vector<2x32xf32>
    %cst_98 = arith.constant 1.000000e+00 : f32
    %412 = vector.broadcast %cst_98 : f32 to vector<2x32xf32>
    %413 = arith.addf %412, %411 : vector<2x32xf32>
    %414 = arith.divf %412, %413 : vector<2x32xf32>
    %415 = math.tanh %400 : vector<2x32xf32>
    %416 = arith.negf %404 : vector<2x32xf32>
    %417 = math.exp %416 : vector<2x32xf32>
    %cst_99 = arith.constant 1.000000e+00 : f32
    %418 = vector.broadcast %cst_99 : f32 to vector<2x32xf32>
    %419 = arith.addf %418, %417 : vector<2x32xf32>
    %420 = arith.divf %418, %419 : vector<2x32xf32>
    %421 = arith.mulf %414, %365 : vector<2x32xf32>
    %422 = arith.mulf %409, %415 : vector<2x32xf32>
    %423 = arith.addf %421, %422 : vector<2x32xf32>
    %424 = math.tanh %423 : vector<2x32xf32>
    %425 = arith.mulf %420, %424 : vector<2x32xf32>
    %c0_100 = arith.constant 0 : index
    %c0_101 = arith.constant 0 : index
    %c0_102 = arith.constant 0 : index
    %426 = vector.load %arg9[%c0_100, %c0_101, %c0_102] : memref<8x2x32xf32, #tpu.memory_space<vmem>>, vector<1x2x32xf32>
    %427 = vector.shape_cast %426 : vector<1x2x32xf32> to vector<2x32xf32>
    %428 = vector.shape_cast %425 : vector<2x32xf32> to vector<1x2x32xf32>
    tpu.vector_store %arg9[%c0_100, %c0_101, %c0_102], %428 {strides = array<i32>} : memref<8x2x32xf32, #tpu.memory_space<vmem>>, vector<1x2x32xf32>,
    %429 = vector.extract_strided_slice %376 {offsets = [1, 0, 0], sizes = [1, 2, 32], strides = [1, 1, 1]} : vector<8x2x32xf32> to vector<1x2x32xf32>
    %430 = vector.shape_cast %429 : vector<1x2x32xf32> to vector<2x32xf32>
    %cst_103 = arith.constant dense<0.000000e+00> : vector<2x32xf32>
    %431 = tpu.matmul %425, %9, %cst_103 {dimension_numbers = #tpu.dot_dimension_numbers<[1], [0], [0], [1], [0, 0, 1, 1], [], []>} : vector<2x32xf32>, vector<32x32xf32>, vector<2x32xf32> -> vector<2x32xf32>
    %432 = arith.addf %430, %431 : vector<2x32xf32>
    %433 = vector.extract_strided_slice %380 {offsets = [1, 0, 0], sizes = [1, 2, 32], strides = [1, 1, 1]} : vector<8x2x32xf32> to vector<1x2x32xf32>
    %434 = vector.shape_cast %433 : vector<1x2x32xf32> to vector<2x32xf32>
    %cst_104 = arith.constant dense<0.000000e+00> : vector<2x32xf32>
    %435 = tpu.matmul %425, %10, %cst_104 {dimension_numbers = #tpu.dot_dimension_numbers<[1], [0], [0], [1], [0, 0, 1, 1], [], []>} : vector<2x32xf32>, vector<32x32xf32>, vector<2x32xf32> -> vector<2x32xf32>
    %436 = arith.addf %434, %435 : vector<2x32xf32>
    %437 = vector.extract_strided_slice %384 {offsets = [1, 0, 0], sizes = [1, 2, 32], strides = [1, 1, 1]} : vector<8x2x32xf32> to vector<1x2x32xf32>
    %438 = vector.shape_cast %437 : vector<1x2x32xf32> to vector<2x32xf32>
    %cst_105 = arith.constant dense<0.000000e+00> : vector<2x32xf32>
    %439 = tpu.matmul %425, %11, %cst_105 {dimension_numbers = #tpu.dot_dimension_numbers<[1], [0], [0], [1], [0, 0, 1, 1], [], []>} : vector<2x32xf32>, vector<32x32xf32>, vector<2x32xf32> -> vector<2x32xf32>
    %440 = arith.addf %438, %439 : vector<2x32xf32>
    %441 = vector.extract_strided_slice %388 {offsets = [1, 0, 0], sizes = [1, 2, 32], strides = [1, 1, 1]} : vector<8x2x32xf32> to vector<1x2x32xf32>
    %442 = vector.shape_cast %441 : vector<1x2x32xf32> to vector<2x32xf32>
    %cst_106 = arith.constant dense<0.000000e+00> : vector<2x32xf32>
    %443 = tpu.matmul %425, %12, %cst_106 {dimension_numbers = #tpu.dot_dimension_numbers<[1], [0], [0], [1], [0, 0, 1, 1], [], []>} : vector<2x32xf32>, vector<32x32xf32>, vector<2x32xf32> -> vector<2x32xf32>
    %444 = arith.addf %442, %443 : vector<2x32xf32>
    %445 = arith.negf %432 : vector<2x32xf32>
    %446 = math.exp %445 : vector<2x32xf32>
    %cst_107 = arith.constant 1.000000e+00 : f32
    %447 = vector.broadcast %cst_107 : f32 to vector<2x32xf32>
    %448 = arith.addf %447, %446 : vector<2x32xf32>
    %449 = arith.divf %447, %448 : vector<2x32xf32>
    %450 = arith.negf %436 : vector<2x32xf32>
    %451 = math.exp %450 : vector<2x32xf32>
    %cst_108 = arith.constant 1.000000e+00 : f32
    %452 = vector.broadcast %cst_108 : f32 to vector<2x32xf32>
    %453 = arith.addf %452, %451 : vector<2x32xf32>
    %454 = arith.divf %452, %453 : vector<2x32xf32>
    %455 = math.tanh %440 : vector<2x32xf32>
    %456 = arith.negf %444 : vector<2x32xf32>
    %457 = math.exp %456 : vector<2x32xf32>
    %cst_109 = arith.constant 1.000000e+00 : f32
    %458 = vector.broadcast %cst_109 : f32 to vector<2x32xf32>
    %459 = arith.addf %458, %457 : vector<2x32xf32>
    %460 = arith.divf %458, %459 : vector<2x32xf32>
    %461 = arith.mulf %454, %423 : vector<2x32xf32>
    %462 = arith.mulf %449, %455 : vector<2x32xf32>
    %463 = arith.addf %461, %462 : vector<2x32xf32>
    %464 = math.tanh %463 : vector<2x32xf32>
    %465 = arith.mulf %460, %464 : vector<2x32xf32>
    %c1_110 = arith.constant 1 : index
    %c0_111 = arith.constant 0 : index
    %c0_112 = arith.constant 0 : index
    %466 = vector.load %arg9[%c1_110, %c0_111, %c0_112] : memref<8x2x32xf32, #tpu.memory_space<vmem>>, vector<1x2x32xf32>
    %467 = vector.shape_cast %466 : vector<1x2x32xf32> to vector<2x32xf32>
    %468 = vector.shape_cast %465 : vector<2x32xf32> to vector<1x2x32xf32>
    tpu.vector_store %arg9[%c1_110, %c0_111, %c0_112], %468 {strides = array<i32>} : memref<8x2x32xf32, #tpu.memory_space<vmem>>, vector<1x2x32xf32>,
    %469 = vector.extract_strided_slice %376 {offsets = [2, 0, 0], sizes = [1, 2, 32], strides = [1, 1, 1]} : vector<8x2x32xf32> to vector<1x2x32xf32>
    %470 = vector.shape_cast %469 : vector<1x2x32xf32> to vector<2x32xf32>
    %cst_113 = arith.constant dense<0.000000e+00> : vector<2x32xf32>
    %471 = tpu.matmul %465, %9, %cst_113 {dimension_numbers = #tpu.dot_dimension_numbers<[1], [0], [0], [1], [0, 0, 1, 1], [], []>} : vector<2x32xf32>, vector<32x32xf32>, vector<2x32xf32> -> vector<2x32xf32>
    %472 = arith.addf %470, %471 : vector<2x32xf32>
    %473 = vector.extract_strided_slice %380 {offsets = [2, 0, 0], sizes = [1, 2, 32], strides = [1, 1, 1]} : vector<8x2x32xf32> to vector<1x2x32xf32>
    %474 = vector.shape_cast %473 : vector<1x2x32xf32> to vector<2x32xf32>
    %cst_114 = arith.constant dense<0.000000e+00> : vector<2x32xf32>
    %475 = tpu.matmul %465, %10, %cst_114 {dimension_numbers = #tpu.dot_dimension_numbers<[1], [0], [0], [1], [0, 0, 1, 1], [], []>} : vector<2x32xf32>, vector<32x32xf32>, vector<2x32xf32> -> vector<2x32xf32>
    %476 = arith.addf %474, %475 : vector<2x32xf32>
    %477 = vector.extract_strided_slice %384 {offsets = [2, 0, 0], sizes = [1, 2, 32], strides = [1, 1, 1]} : vector<8x2x32xf32> to vector<1x2x32xf32>
    %478 = vector.shape_cast %477 : vector<1x2x32xf32> to vector<2x32xf32>
    %cst_115 = arith.constant dense<0.000000e+00> : vector<2x32xf32>
    %479 = tpu.matmul %465, %11, %cst_115 {dimension_numbers = #tpu.dot_dimension_numbers<[1], [0], [0], [1], [0, 0, 1, 1], [], []>} : vector<2x32xf32>, vector<32x32xf32>, vector<2x32xf32> -> vector<2x32xf32>
    %480 = arith.addf %478, %479 : vector<2x32xf32>
    %481 = vector.extract_strided_slice %388 {offsets = [2, 0, 0], sizes = [1, 2, 32], strides = [1, 1, 1]} : vector<8x2x32xf32> to vector<1x2x32xf32>
    %482 = vector.shape_cast %481 : vector<1x2x32xf32> to vector<2x32xf32>
    %cst_116 = arith.constant dense<0.000000e+00> : vector<2x32xf32>
    %483 = tpu.matmul %465, %12, %cst_116 {dimension_numbers = #tpu.dot_dimension_numbers<[1], [0], [0], [1], [0, 0, 1, 1], [], []>} : vector<2x32xf32>, vector<32x32xf32>, vector<2x32xf32> -> vector<2x32xf32>
    %484 = arith.addf %482, %483 : vector<2x32xf32>
    %485 = arith.negf %472 : vector<2x32xf32>
    %486 = math.exp %485 : vector<2x32xf32>
    %cst_117 = arith.constant 1.000000e+00 : f32
    %487 = vector.broadcast %cst_117 : f32 to vector<2x32xf32>
    %488 = arith.addf %487, %486 : vector<2x32xf32>
    %489 = arith.divf %487, %488 : vector<2x32xf32>
    %490 = arith.negf %476 : vector<2x32xf32>
    %491 = math.exp %490 : vector<2x32xf32>
    %cst_118 = arith.constant 1.000000e+00 : f32
    %492 = vector.broadcast %cst_118 : f32 to vector<2x32xf32>
    %493 = arith.addf %492, %491 : vector<2x32xf32>
    %494 = arith.divf %492, %493 : vector<2x32xf32>
    %495 = math.tanh %480 : vector<2x32xf32>
    %496 = arith.negf %484 : vector<2x32xf32>
    %497 = math.exp %496 : vector<2x32xf32>
    %cst_119 = arith.constant 1.000000e+00 : f32
    %498 = vector.broadcast %cst_119 : f32 to vector<2x32xf32>
    %499 = arith.addf %498, %497 : vector<2x32xf32>
    %500 = arith.divf %498, %499 : vector<2x32xf32>
    %501 = arith.mulf %494, %463 : vector<2x32xf32>
    %502 = arith.mulf %489, %495 : vector<2x32xf32>
    %503 = arith.addf %501, %502 : vector<2x32xf32>
    %504 = math.tanh %503 : vector<2x32xf32>
    %505 = arith.mulf %500, %504 : vector<2x32xf32>
    %c2_120 = arith.constant 2 : index
    %c0_121 = arith.constant 0 : index
    %c0_122 = arith.constant 0 : index
    %506 = vector.load %arg9[%c2_120, %c0_121, %c0_122] : memref<8x2x32xf32, #tpu.memory_space<vmem>>, vector<1x2x32xf32>
    %507 = vector.shape_cast %506 : vector<1x2x32xf32> to vector<2x32xf32>
    %508 = vector.shape_cast %505 : vector<2x32xf32> to vector<1x2x32xf32>
    tpu.vector_store %arg9[%c2_120, %c0_121, %c0_122], %508 {strides = array<i32>} : memref<8x2x32xf32, #tpu.memory_space<vmem>>, vector<1x2x32xf32>,
    %509 = vector.extract_strided_slice %376 {offsets = [3, 0, 0], sizes = [1, 2, 32], strides = [1, 1, 1]} : vector<8x2x32xf32> to vector<1x2x32xf32>
    %510 = vector.shape_cast %509 : vector<1x2x32xf32> to vector<2x32xf32>
    %cst_123 = arith.constant dense<0.000000e+00> : vector<2x32xf32>
    %511 = tpu.matmul %505, %9, %cst_123 {dimension_numbers = #tpu.dot_dimension_numbers<[1], [0], [0], [1], [0, 0, 1, 1], [], []>} : vector<2x32xf32>, vector<32x32xf32>, vector<2x32xf32> -> vector<2x32xf32>
    %512 = arith.addf %510, %511 : vector<2x32xf32>
    %513 = vector.extract_strided_slice %380 {offsets = [3, 0, 0], sizes = [1, 2, 32], strides = [1, 1, 1]} : vector<8x2x32xf32> to vector<1x2x32xf32>
    %514 = vector.shape_cast %513 : vector<1x2x32xf32> to vector<2x32xf32>
    %cst_124 = arith.constant dense<0.000000e+00> : vector<2x32xf32>
    %515 = tpu.matmul %505, %10, %cst_124 {dimension_numbers = #tpu.dot_dimension_numbers<[1], [0], [0], [1], [0, 0, 1, 1], [], []>} : vector<2x32xf32>, vector<32x32xf32>, vector<2x32xf32> -> vector<2x32xf32>
    %516 = arith.addf %514, %515 : vector<2x32xf32>
    %517 = vector.extract_strided_slice %384 {offsets = [3, 0, 0], sizes = [1, 2, 32], strides = [1, 1, 1]} : vector<8x2x32xf32> to vector<1x2x32xf32>
    %518 = vector.shape_cast %517 : vector<1x2x32xf32> to vector<2x32xf32>
    %cst_125 = arith.constant dense<0.000000e+00> : vector<2x32xf32>
    %519 = tpu.matmul %505, %11, %cst_125 {dimension_numbers = #tpu.dot_dimension_numbers<[1], [0], [0], [1], [0, 0, 1, 1], [], []>} : vector<2x32xf32>, vector<32x32xf32>, vector<2x32xf32> -> vector<2x32xf32>
    %520 = arith.addf %518, %519 : vector<2x32xf32>
    %521 = vector.extract_strided_slice %388 {offsets = [3, 0, 0], sizes = [1, 2, 32], strides = [1, 1, 1]} : vector<8x2x32xf32> to vector<1x2x32xf32>
    %522 = vector.shape_cast %521 : vector<1x2x32xf32> to vector<2x32xf32>
    %cst_126 = arith.constant dense<0.000000e+00> : vector<2x32xf32>
    %523 = tpu.matmul %505, %12, %cst_126 {dimension_numbers = #tpu.dot_dimension_numbers<[1], [0], [0], [1], [0, 0, 1, 1], [], []>} : vector<2x32xf32>, vector<32x32xf32>, vector<2x32xf32> -> vector<2x32xf32>
    %524 = arith.addf %522, %523 : vector<2x32xf32>
    %525 = arith.negf %512 : vector<2x32xf32>
    %526 = math.exp %525 : vector<2x32xf32>
    %cst_127 = arith.constant 1.000000e+00 : f32
    %527 = vector.broadcast %cst_127 : f32 to vector<2x32xf32>
    %528 = arith.addf %527, %526 : vector<2x32xf32>
    %529 = arith.divf %527, %528 : vector<2x32xf32>
    %530 = arith.negf %516 : vector<2x32xf32>
    %531 = math.exp %530 : vector<2x32xf32>
    %cst_128 = arith.constant 1.000000e+00 : f32
    %532 = vector.broadcast %cst_128 : f32 to vector<2x32xf32>
    %533 = arith.addf %532, %531 : vector<2x32xf32>
    %534 = arith.divf %532, %533 : vector<2x32xf32>
    %535 = math.tanh %520 : vector<2x32xf32>
    %536 = arith.negf %524 : vector<2x32xf32>
    %537 = math.exp %536 : vector<2x32xf32>
    %cst_129 = arith.constant 1.000000e+00 : f32
    %538 = vector.broadcast %cst_129 : f32 to vector<2x32xf32>
    %539 = arith.addf %538, %537 : vector<2x32xf32>
    %540 = arith.divf %538, %539 : vector<2x32xf32>
    %541 = arith.mulf %534, %503 : vector<2x32xf32>
    %542 = arith.mulf %529, %535 : vector<2x32xf32>
    %543 = arith.addf %541, %542 : vector<2x32xf32>
    %544 = math.tanh %543 : vector<2x32xf32>
    %545 = arith.mulf %540, %544 : vector<2x32xf32>
    %c3_130 = arith.constant 3 : index
    %c0_131 = arith.constant 0 : index
    %c0_132 = arith.constant 0 : index
    %546 = vector.load %arg9[%c3_130, %c0_131, %c0_132] : memref<8x2x32xf32, #tpu.memory_space<vmem>>, vector<1x2x32xf32>
    %547 = vector.shape_cast %546 : vector<1x2x32xf32> to vector<2x32xf32>
    %548 = vector.shape_cast %545 : vector<2x32xf32> to vector<1x2x32xf32>
    tpu.vector_store %arg9[%c3_130, %c0_131, %c0_132], %548 {strides = array<i32>} : memref<8x2x32xf32, #tpu.memory_space<vmem>>, vector<1x2x32xf32>,
    %549 = vector.extract_strided_slice %376 {offsets = [4, 0, 0], sizes = [1, 2, 32], strides = [1, 1, 1]} : vector<8x2x32xf32> to vector<1x2x32xf32>
    %550 = vector.shape_cast %549 : vector<1x2x32xf32> to vector<2x32xf32>
    %cst_133 = arith.constant dense<0.000000e+00> : vector<2x32xf32>
    %551 = tpu.matmul %545, %9, %cst_133 {dimension_numbers = #tpu.dot_dimension_numbers<[1], [0], [0], [1], [0, 0, 1, 1], [], []>} : vector<2x32xf32>, vector<32x32xf32>, vector<2x32xf32> -> vector<2x32xf32>
    %552 = arith.addf %550, %551 : vector<2x32xf32>
    %553 = vector.extract_strided_slice %380 {offsets = [4, 0, 0], sizes = [1, 2, 32], strides = [1, 1, 1]} : vector<8x2x32xf32> to vector<1x2x32xf32>
    %554 = vector.shape_cast %553 : vector<1x2x32xf32> to vector<2x32xf32>
    %cst_134 = arith.constant dense<0.000000e+00> : vector<2x32xf32>
    %555 = tpu.matmul %545, %10, %cst_134 {dimension_numbers = #tpu.dot_dimension_numbers<[1], [0], [0], [1], [0, 0, 1, 1], [], []>} : vector<2x32xf32>, vector<32x32xf32>, vector<2x32xf32> -> vector<2x32xf32>
    %556 = arith.addf %554, %555 : vector<2x32xf32>
    %557 = vector.extract_strided_slice %384 {offsets = [4, 0, 0], sizes = [1, 2, 32], strides = [1, 1, 1]} : vector<8x2x32xf32> to vector<1x2x32xf32>
    %558 = vector.shape_cast %557 : vector<1x2x32xf32> to vector<2x32xf32>
    %cst_135 = arith.constant dense<0.000000e+00> : vector<2x32xf32>
    %559 = tpu.matmul %545, %11, %cst_135 {dimension_numbers = #tpu.dot_dimension_numbers<[1], [0], [0], [1], [0, 0, 1, 1], [], []>} : vector<2x32xf32>, vector<32x32xf32>, vector<2x32xf32> -> vector<2x32xf32>
    %560 = arith.addf %558, %559 : vector<2x32xf32>
    %561 = vector.extract_strided_slice %388 {offsets = [4, 0, 0], sizes = [1, 2, 32], strides = [1, 1, 1]} : vector<8x2x32xf32> to vector<1x2x32xf32>
    %562 = vector.shape_cast %561 : vector<1x2x32xf32> to vector<2x32xf32>
    %cst_136 = arith.constant dense<0.000000e+00> : vector<2x32xf32>
    %563 = tpu.matmul %545, %12, %cst_136 {dimension_numbers = #tpu.dot_dimension_numbers<[1], [0], [0], [1], [0, 0, 1, 1], [], []>} : vector<2x32xf32>, vector<32x32xf32>, vector<2x32xf32> -> vector<2x32xf32>
    %564 = arith.addf %562, %563 : vector<2x32xf32>
    %565 = arith.negf %552 : vector<2x32xf32>
    %566 = math.exp %565 : vector<2x32xf32>
    %cst_137 = arith.constant 1.000000e+00 : f32
    %567 = vector.broadcast %cst_137 : f32 to vector<2x32xf32>
    %568 = arith.addf %567, %566 : vector<2x32xf32>
    %569 = arith.divf %567, %568 : vector<2x32xf32>
    %570 = arith.negf %556 : vector<2x32xf32>
    %571 = math.exp %570 : vector<2x32xf32>
    %cst_138 = arith.constant 1.000000e+00 : f32
    %572 = vector.broadcast %cst_138 : f32 to vector<2x32xf32>
    %573 = arith.addf %572, %571 : vector<2x32xf32>
    %574 = arith.divf %572, %573 : vector<2x32xf32>
    %575 = math.tanh %560 : vector<2x32xf32>
    %576 = arith.negf %564 : vector<2x32xf32>
    %577 = math.exp %576 : vector<2x32xf32>
    %cst_139 = arith.constant 1.000000e+00 : f32
    %578 = vector.broadcast %cst_139 : f32 to vector<2x32xf32>
    %579 = arith.addf %578, %577 : vector<2x32xf32>
    %580 = arith.divf %578, %579 : vector<2x32xf32>
    %581 = arith.mulf %574, %543 : vector<2x32xf32>
    %582 = arith.mulf %569, %575 : vector<2x32xf32>
    %583 = arith.addf %581, %582 : vector<2x32xf32>
    %584 = math.tanh %583 : vector<2x32xf32>
    %585 = arith.mulf %580, %584 : vector<2x32xf32>
    %c4_140 = arith.constant 4 : index
    %c0_141 = arith.constant 0 : index
    %c0_142 = arith.constant 0 : index
    %586 = vector.load %arg9[%c4_140, %c0_141, %c0_142] : memref<8x2x32xf32, #tpu.memory_space<vmem>>, vector<1x2x32xf32>
    %587 = vector.shape_cast %586 : vector<1x2x32xf32> to vector<2x32xf32>
    %588 = vector.shape_cast %585 : vector<2x32xf32> to vector<1x2x32xf32>
    tpu.vector_store %arg9[%c4_140, %c0_141, %c0_142], %588 {strides = array<i32>} : memref<8x2x32xf32, #tpu.memory_space<vmem>>, vector<1x2x32xf32>,
    %589 = vector.extract_strided_slice %376 {offsets = [5, 0, 0], sizes = [1, 2, 32], strides = [1, 1, 1]} : vector<8x2x32xf32> to vector<1x2x32xf32>
    %590 = vector.shape_cast %589 : vector<1x2x32xf32> to vector<2x32xf32>
    %cst_143 = arith.constant dense<0.000000e+00> : vector<2x32xf32>
    %591 = tpu.matmul %585, %9, %cst_143 {dimension_numbers = #tpu.dot_dimension_numbers<[1], [0], [0], [1], [0, 0, 1, 1], [], []>} : vector<2x32xf32>, vector<32x32xf32>, vector<2x32xf32> -> vector<2x32xf32>
    %592 = arith.addf %590, %591 : vector<2x32xf32>
    %593 = vector.extract_strided_slice %380 {offsets = [5, 0, 0], sizes = [1, 2, 32], strides = [1, 1, 1]} : vector<8x2x32xf32> to vector<1x2x32xf32>
    %594 = vector.shape_cast %593 : vector<1x2x32xf32> to vector<2x32xf32>
    %cst_144 = arith.constant dense<0.000000e+00> : vector<2x32xf32>
    %595 = tpu.matmul %585, %10, %cst_144 {dimension_numbers = #tpu.dot_dimension_numbers<[1], [0], [0], [1], [0, 0, 1, 1], [], []>} : vector<2x32xf32>, vector<32x32xf32>, vector<2x32xf32> -> vector<2x32xf32>
    %596 = arith.addf %594, %595 : vector<2x32xf32>
    %597 = vector.extract_strided_slice %384 {offsets = [5, 0, 0], sizes = [1, 2, 32], strides = [1, 1, 1]} : vector<8x2x32xf32> to vector<1x2x32xf32>
    %598 = vector.shape_cast %597 : vector<1x2x32xf32> to vector<2x32xf32>
    %cst_145 = arith.constant dense<0.000000e+00> : vector<2x32xf32>
    %599 = tpu.matmul %585, %11, %cst_145 {dimension_numbers = #tpu.dot_dimension_numbers<[1], [0], [0], [1], [0, 0, 1, 1], [], []>} : vector<2x32xf32>, vector<32x32xf32>, vector<2x32xf32> -> vector<2x32xf32>
    %600 = arith.addf %598, %599 : vector<2x32xf32>
    %601 = vector.extract_strided_slice %388 {offsets = [5, 0, 0], sizes = [1, 2, 32], strides = [1, 1, 1]} : vector<8x2x32xf32> to vector<1x2x32xf32>
    %602 = vector.shape_cast %601 : vector<1x2x32xf32> to vector<2x32xf32>
    %cst_146 = arith.constant dense<0.000000e+00> : vector<2x32xf32>
    %603 = tpu.matmul %585, %12, %cst_146 {dimension_numbers = #tpu.dot_dimension_numbers<[1], [0], [0], [1], [0, 0, 1, 1], [], []>} : vector<2x32xf32>, vector<32x32xf32>, vector<2x32xf32> -> vector<2x32xf32>
    %604 = arith.addf %602, %603 : vector<2x32xf32>
    %605 = arith.negf %592 : vector<2x32xf32>
    %606 = math.exp %605 : vector<2x32xf32>
    %cst_147 = arith.constant 1.000000e+00 : f32
    %607 = vector.broadcast %cst_147 : f32 to vector<2x32xf32>
    %608 = arith.addf %607, %606 : vector<2x32xf32>
    %609 = arith.divf %607, %608 : vector<2x32xf32>
    %610 = arith.negf %596 : vector<2x32xf32>
    %611 = math.exp %610 : vector<2x32xf32>
    %cst_148 = arith.constant 1.000000e+00 : f32
    %612 = vector.broadcast %cst_148 : f32 to vector<2x32xf32>
    %613 = arith.addf %612, %611 : vector<2x32xf32>
    %614 = arith.divf %612, %613 : vector<2x32xf32>
    %615 = math.tanh %600 : vector<2x32xf32>
    %616 = arith.negf %604 : vector<2x32xf32>
    %617 = math.exp %616 : vector<2x32xf32>
    %cst_149 = arith.constant 1.000000e+00 : f32
    %618 = vector.broadcast %cst_149 : f32 to vector<2x32xf32>
    %619 = arith.addf %618, %617 : vector<2x32xf32>
    %620 = arith.divf %618, %619 : vector<2x32xf32>
    %621 = arith.mulf %614, %583 : vector<2x32xf32>
    %622 = arith.mulf %609, %615 : vector<2x32xf32>
    %623 = arith.addf %621, %622 : vector<2x32xf32>
    %624 = math.tanh %623 : vector<2x32xf32>
    %625 = arith.mulf %620, %624 : vector<2x32xf32>
    %c5_150 = arith.constant 5 : index
    %c0_151 = arith.constant 0 : index
    %c0_152 = arith.constant 0 : index
    %626 = vector.load %arg9[%c5_150, %c0_151, %c0_152] : memref<8x2x32xf32, #tpu.memory_space<vmem>>, vector<1x2x32xf32>
    %627 = vector.shape_cast %626 : vector<1x2x32xf32> to vector<2x32xf32>
    %628 = vector.shape_cast %625 : vector<2x32xf32> to vector<1x2x32xf32>
    tpu.vector_store %arg9[%c5_150, %c0_151, %c0_152], %628 {strides = array<i32>} : memref<8x2x32xf32, #tpu.memory_space<vmem>>, vector<1x2x32xf32>,
    %629 = vector.extract_strided_slice %376 {offsets = [6, 0, 0], sizes = [1, 2, 32], strides = [1, 1, 1]} : vector<8x2x32xf32> to vector<1x2x32xf32>
    %630 = vector.shape_cast %629 : vector<1x2x32xf32> to vector<2x32xf32>
    %cst_153 = arith.constant dense<0.000000e+00> : vector<2x32xf32>
    %631 = tpu.matmul %625, %9, %cst_153 {dimension_numbers = #tpu.dot_dimension_numbers<[1], [0], [0], [1], [0, 0, 1, 1], [], []>} : vector<2x32xf32>, vector<32x32xf32>, vector<2x32xf32> -> vector<2x32xf32>
    %632 = arith.addf %630, %631 : vector<2x32xf32>
    %633 = vector.extract_strided_slice %380 {offsets = [6, 0, 0], sizes = [1, 2, 32], strides = [1, 1, 1]} : vector<8x2x32xf32> to vector<1x2x32xf32>
    %634 = vector.shape_cast %633 : vector<1x2x32xf32> to vector<2x32xf32>
    %cst_154 = arith.constant dense<0.000000e+00> : vector<2x32xf32>
    %635 = tpu.matmul %625, %10, %cst_154 {dimension_numbers = #tpu.dot_dimension_numbers<[1], [0], [0], [1], [0, 0, 1, 1], [], []>} : vector<2x32xf32>, vector<32x32xf32>, vector<2x32xf32> -> vector<2x32xf32>
    %636 = arith.addf %634, %635 : vector<2x32xf32>
    %637 = vector.extract_strided_slice %384 {offsets = [6, 0, 0], sizes = [1, 2, 32], strides = [1, 1, 1]} : vector<8x2x32xf32> to vector<1x2x32xf32>
    %638 = vector.shape_cast %637 : vector<1x2x32xf32> to vector<2x32xf32>
    %cst_155 = arith.constant dense<0.000000e+00> : vector<2x32xf32>
    %639 = tpu.matmul %625, %11, %cst_155 {dimension_numbers = #tpu.dot_dimension_numbers<[1], [0], [0], [1], [0, 0, 1, 1], [], []>} : vector<2x32xf32>, vector<32x32xf32>, vector<2x32xf32> -> vector<2x32xf32>
    %640 = arith.addf %638, %639 : vector<2x32xf32>
    %641 = vector.extract_strided_slice %388 {offsets = [6, 0, 0], sizes = [1, 2, 32], strides = [1, 1, 1]} : vector<8x2x32xf32> to vector<1x2x32xf32>
    %642 = vector.shape_cast %641 : vector<1x2x32xf32> to vector<2x32xf32>
    %cst_156 = arith.constant dense<0.000000e+00> : vector<2x32xf32>
    %643 = tpu.matmul %625, %12, %cst_156 {dimension_numbers = #tpu.dot_dimension_numbers<[1], [0], [0], [1], [0, 0, 1, 1], [], []>} : vector<2x32xf32>, vector<32x32xf32>, vector<2x32xf32> -> vector<2x32xf32>
    %644 = arith.addf %642, %643 : vector<2x32xf32>
    %645 = arith.negf %632 : vector<2x32xf32>
    %646 = math.exp %645 : vector<2x32xf32>
    %cst_157 = arith.constant 1.000000e+00 : f32
    %647 = vector.broadcast %cst_157 : f32 to vector<2x32xf32>
    %648 = arith.addf %647, %646 : vector<2x32xf32>
    %649 = arith.divf %647, %648 : vector<2x32xf32>
    %650 = arith.negf %636 : vector<2x32xf32>
    %651 = math.exp %650 : vector<2x32xf32>
    %cst_158 = arith.constant 1.000000e+00 : f32
    %652 = vector.broadcast %cst_158 : f32 to vector<2x32xf32>
    %653 = arith.addf %652, %651 : vector<2x32xf32>
    %654 = arith.divf %652, %653 : vector<2x32xf32>
    %655 = math.tanh %640 : vector<2x32xf32>
    %656 = arith.negf %644 : vector<2x32xf32>
    %657 = math.exp %656 : vector<2x32xf32>
    %cst_159 = arith.constant 1.000000e+00 : f32
    %658 = vector.broadcast %cst_159 : f32 to vector<2x32xf32>
    %659 = arith.addf %658, %657 : vector<2x32xf32>
    %660 = arith.divf %658, %659 : vector<2x32xf32>
    %661 = arith.mulf %654, %623 : vector<2x32xf32>
    %662 = arith.mulf %649, %655 : vector<2x32xf32>
    %663 = arith.addf %661, %662 : vector<2x32xf32>
    %664 = math.tanh %663 : vector<2x32xf32>
    %665 = arith.mulf %660, %664 : vector<2x32xf32>
    %c6_160 = arith.constant 6 : index
    %c0_161 = arith.constant 0 : index
    %c0_162 = arith.constant 0 : index
    %666 = vector.load %arg9[%c6_160, %c0_161, %c0_162] : memref<8x2x32xf32, #tpu.memory_space<vmem>>, vector<1x2x32xf32>
    %667 = vector.shape_cast %666 : vector<1x2x32xf32> to vector<2x32xf32>
    %668 = vector.shape_cast %665 : vector<2x32xf32> to vector<1x2x32xf32>
    tpu.vector_store %arg9[%c6_160, %c0_161, %c0_162], %668 {strides = array<i32>} : memref<8x2x32xf32, #tpu.memory_space<vmem>>, vector<1x2x32xf32>,
    %669 = vector.extract_strided_slice %376 {offsets = [7, 0, 0], sizes = [1, 2, 32], strides = [1, 1, 1]} : vector<8x2x32xf32> to vector<1x2x32xf32>
    %670 = vector.shape_cast %669 : vector<1x2x32xf32> to vector<2x32xf32>
    %cst_163 = arith.constant dense<0.000000e+00> : vector<2x32xf32>
    %671 = tpu.matmul %665, %9, %cst_163 {dimension_numbers = #tpu.dot_dimension_numbers<[1], [0], [0], [1], [0, 0, 1, 1], [], []>} : vector<2x32xf32>, vector<32x32xf32>, vector<2x32xf32> -> vector<2x32xf32>
    %672 = arith.addf %670, %671 : vector<2x32xf32>
    %673 = vector.extract_strided_slice %380 {offsets = [7, 0, 0], sizes = [1, 2, 32], strides = [1, 1, 1]} : vector<8x2x32xf32> to vector<1x2x32xf32>
    %674 = vector.shape_cast %673 : vector<1x2x32xf32> to vector<2x32xf32>
    %cst_164 = arith.constant dense<0.000000e+00> : vector<2x32xf32>
    %675 = tpu.matmul %665, %10, %cst_164 {dimension_numbers = #tpu.dot_dimension_numbers<[1], [0], [0], [1], [0, 0, 1, 1], [], []>} : vector<2x32xf32>, vector<32x32xf32>, vector<2x32xf32> -> vector<2x32xf32>
    %676 = arith.addf %674, %675 : vector<2x32xf32>
    %677 = vector.extract_strided_slice %384 {offsets = [7, 0, 0], sizes = [1, 2, 32], strides = [1, 1, 1]} : vector<8x2x32xf32> to vector<1x2x32xf32>
    %678 = vector.shape_cast %677 : vector<1x2x32xf32> to vector<2x32xf32>
    %cst_165 = arith.constant dense<0.000000e+00> : vector<2x32xf32>
    %679 = tpu.matmul %665, %11, %cst_165 {dimension_numbers = #tpu.dot_dimension_numbers<[1], [0], [0], [1], [0, 0, 1, 1], [], []>} : vector<2x32xf32>, vector<32x32xf32>, vector<2x32xf32> -> vector<2x32xf32>
    %680 = arith.addf %678, %679 : vector<2x32xf32>
    %681 = vector.extract_strided_slice %388 {offsets = [7, 0, 0], sizes = [1, 2, 32], strides = [1, 1, 1]} : vector<8x2x32xf32> to vector<1x2x32xf32>
    %682 = vector.shape_cast %681 : vector<1x2x32xf32> to vector<2x32xf32>
    %cst_166 = arith.constant dense<0.000000e+00> : vector<2x32xf32>
    %683 = tpu.matmul %665, %12, %cst_166 {dimension_numbers = #tpu.dot_dimension_numbers<[1], [0], [0], [1], [0, 0, 1, 1], [], []>} : vector<2x32xf32>, vector<32x32xf32>, vector<2x32xf32> -> vector<2x32xf32>
    %684 = arith.addf %682, %683 : vector<2x32xf32>
    %685 = arith.negf %672 : vector<2x32xf32>
    %686 = math.exp %685 : vector<2x32xf32>
    %cst_167 = arith.constant 1.000000e+00 : f32
    %687 = vector.broadcast %cst_167 : f32 to vector<2x32xf32>
    %688 = arith.addf %687, %686 : vector<2x32xf32>
    %689 = arith.divf %687, %688 : vector<2x32xf32>
    %690 = arith.negf %676 : vector<2x32xf32>
    %691 = math.exp %690 : vector<2x32xf32>
    %cst_168 = arith.constant 1.000000e+00 : f32
    %692 = vector.broadcast %cst_168 : f32 to vector<2x32xf32>
    %693 = arith.addf %692, %691 : vector<2x32xf32>
    %694 = arith.divf %692, %693 : vector<2x32xf32>
    %695 = math.tanh %680 : vector<2x32xf32>
    %696 = arith.negf %684 : vector<2x32xf32>
    %697 = math.exp %696 : vector<2x32xf32>
    %cst_169 = arith.constant 1.000000e+00 : f32
    %698 = vector.broadcast %cst_169 : f32 to vector<2x32xf32>
    %699 = arith.addf %698, %697 : vector<2x32xf32>
    %700 = arith.divf %698, %699 : vector<2x32xf32>
    %701 = arith.mulf %694, %663 : vector<2x32xf32>
    %702 = arith.mulf %689, %695 : vector<2x32xf32>
    %703 = arith.addf %701, %702 : vector<2x32xf32>
    %704 = math.tanh %703 : vector<2x32xf32>
    %705 = arith.mulf %700, %704 : vector<2x32xf32>
    %c7_170 = arith.constant 7 : index
    %c0_171 = arith.constant 0 : index
    %c0_172 = arith.constant 0 : index
    %706 = vector.load %arg9[%c7_170, %c0_171, %c0_172] : memref<8x2x32xf32, #tpu.memory_space<vmem>>, vector<1x2x32xf32>
    %707 = vector.shape_cast %706 : vector<1x2x32xf32> to vector<2x32xf32>
    %708 = vector.shape_cast %705 : vector<2x32xf32> to vector<1x2x32xf32>
    tpu.vector_store %arg9[%c7_170, %c0_171, %c0_172], %708 {strides = array<i32>} : memref<8x2x32xf32, #tpu.memory_space<vmem>>, vector<1x2x32xf32>,
    %c0_173 = arith.constant 0 : index
    %c0_174 = arith.constant 0 : index
    %c0_175 = arith.constant 0 : index
    %709 = vector.load %arg9[%c0_173, %c0_174, %c0_175] : memref<8x2x32xf32, #tpu.memory_space<vmem>>, vector<8x2x32xf32>
    %710 = vector.shape_cast %709 : vector<8x2x32xf32> to vector<16x32xf32>
    %711 = vector.extract_strided_slice %24 {offsets = [2, 0, 0], sizes = [8, 2, 32], strides = [1, 1, 1]} : vector<10x2x32xf32> to vector<8x2x32xf32>
    %cst_176 = arith.constant dense<0.000000e+00> : vector<16x32xf32>
    %712 = tpu.matmul %710, %5, %cst_176 {dimension_numbers = #tpu.dot_dimension_numbers<[1], [0], [0], [1], [0, 0, 1, 1], [], []>} : vector<16x32xf32>, vector<32x32xf32>, vector<16x32xf32> -> vector<16x32xf32>
    %713 = vector.shape_cast %712 : vector<16x32xf32> to vector<8x2x32xf32>
    %714 = arith.addf %711, %713 : vector<8x2x32xf32>
    %715 = vector.extract_strided_slice %32 {offsets = [2, 0, 0], sizes = [8, 2, 32], strides = [1, 1, 1]} : vector<10x2x32xf32> to vector<8x2x32xf32>
    %cst_177 = arith.constant dense<0.000000e+00> : vector<16x32xf32>
    %716 = tpu.matmul %710, %6, %cst_177 {dimension_numbers = #tpu.dot_dimension_numbers<[1], [0], [0], [1], [0, 0, 1, 1], [], []>} : vector<16x32xf32>, vector<32x32xf32>, vector<16x32xf32> -> vector<16x32xf32>
    %717 = vector.shape_cast %716 : vector<16x32xf32> to vector<8x2x32xf32>
    %718 = arith.addf %715, %717 : vector<8x2x32xf32>
    %719 = vector.extract_strided_slice %40 {offsets = [2, 0, 0], sizes = [8, 2, 32], strides = [1, 1, 1]} : vector<10x2x32xf32> to vector<8x2x32xf32>
    %cst_178 = arith.constant dense<0.000000e+00> : vector<16x32xf32>
    %720 = tpu.matmul %710, %7, %cst_178 {dimension_numbers = #tpu.dot_dimension_numbers<[1], [0], [0], [1], [0, 0, 1, 1], [], []>} : vector<16x32xf32>, vector<32x32xf32>, vector<16x32xf32> -> vector<16x32xf32>
    %721 = vector.shape_cast %720 : vector<16x32xf32> to vector<8x2x32xf32>
    %722 = arith.addf %719, %721 : vector<8x2x32xf32>
    %723 = vector.extract_strided_slice %48 {offsets = [2, 0, 0], sizes = [8, 2, 32], strides = [1, 1, 1]} : vector<10x2x32xf32> to vector<8x2x32xf32>
    %cst_179 = arith.constant dense<0.000000e+00> : vector<16x32xf32>
    %724 = tpu.matmul %710, %8, %cst_179 {dimension_numbers = #tpu.dot_dimension_numbers<[1], [0], [0], [1], [0, 0, 1, 1], [], []>} : vector<16x32xf32>, vector<32x32xf32>, vector<16x32xf32> -> vector<16x32xf32>
    %725 = vector.shape_cast %724 : vector<16x32xf32> to vector<8x2x32xf32>
    %726 = arith.addf %723, %725 : vector<8x2x32xf32>
    %727 = vector.extract_strided_slice %714 {offsets = [0, 0, 0], sizes = [1, 2, 32], strides = [1, 1, 1]} : vector<8x2x32xf32> to vector<1x2x32xf32>
    %728 = vector.shape_cast %727 : vector<1x2x32xf32> to vector<2x32xf32>
    %cst_180 = arith.constant dense<0.000000e+00> : vector<2x32xf32>
    %729 = tpu.matmul %705, %9, %cst_180 {dimension_numbers = #tpu.dot_dimension_numbers<[1], [0], [0], [1], [0, 0, 1, 1], [], []>} : vector<2x32xf32>, vector<32x32xf32>, vector<2x32xf32> -> vector<2x32xf32>
    %730 = arith.addf %728, %729 : vector<2x32xf32>
    %731 = vector.extract_strided_slice %718 {offsets = [0, 0, 0], sizes = [1, 2, 32], strides = [1, 1, 1]} : vector<8x2x32xf32> to vector<1x2x32xf32>
    %732 = vector.shape_cast %731 : vector<1x2x32xf32> to vector<2x32xf32>
    %cst_181 = arith.constant dense<0.000000e+00> : vector<2x32xf32>
    %733 = tpu.matmul %705, %10, %cst_181 {dimension_numbers = #tpu.dot_dimension_numbers<[1], [0], [0], [1], [0, 0, 1, 1], [], []>} : vector<2x32xf32>, vector<32x32xf32>, vector<2x32xf32> -> vector<2x32xf32>
    %734 = arith.addf %732, %733 : vector<2x32xf32>
    %735 = vector.extract_strided_slice %722 {offsets = [0, 0, 0], sizes = [1, 2, 32], strides = [1, 1, 1]} : vector<8x2x32xf32> to vector<1x2x32xf32>
    %736 = vector.shape_cast %735 : vector<1x2x32xf32> to vector<2x32xf32>
    %cst_182 = arith.constant dense<0.000000e+00> : vector<2x32xf32>
    %737 = tpu.matmul %705, %11, %cst_182 {dimension_numbers = #tpu.dot_dimension_numbers<[1], [0], [0], [1], [0, 0, 1, 1], [], []>} : vector<2x32xf32>, vector<32x32xf32>, vector<2x32xf32> -> vector<2x32xf32>
    %738 = arith.addf %736, %737 : vector<2x32xf32>
    %739 = vector.extract_strided_slice %726 {offsets = [0, 0, 0], sizes = [1, 2, 32], strides = [1, 1, 1]} : vector<8x2x32xf32> to vector<1x2x32xf32>
    %740 = vector.shape_cast %739 : vector<1x2x32xf32> to vector<2x32xf32>
    %cst_183 = arith.constant dense<0.000000e+00> : vector<2x32xf32>
    %741 = tpu.matmul %705, %12, %cst_183 {dimension_numbers = #tpu.dot_dimension_numbers<[1], [0], [0], [1], [0, 0, 1, 1], [], []>} : vector<2x32xf32>, vector<32x32xf32>, vector<2x32xf32> -> vector<2x32xf32>
    %742 = arith.addf %740, %741 : vector<2x32xf32>
    %743 = arith.negf %730 : vector<2x32xf32>
    %744 = math.exp %743 : vector<2x32xf32>
    %cst_184 = arith.constant 1.000000e+00 : f32
    %745 = vector.broadcast %cst_184 : f32 to vector<2x32xf32>
    %746 = arith.addf %745, %744 : vector<2x32xf32>
    %747 = arith.divf %745, %746 : vector<2x32xf32>
    %748 = arith.negf %734 : vector<2x32xf32>
    %749 = math.exp %748 : vector<2x32xf32>
    %cst_185 = arith.constant 1.000000e+00 : f32
    %750 = vector.broadcast %cst_185 : f32 to vector<2x32xf32>
    %751 = arith.addf %750, %749 : vector<2x32xf32>
    %752 = arith.divf %750, %751 : vector<2x32xf32>
    %753 = math.tanh %738 : vector<2x32xf32>
    %754 = arith.negf %742 : vector<2x32xf32>
    %755 = math.exp %754 : vector<2x32xf32>
    %cst_186 = arith.constant 1.000000e+00 : f32
    %756 = vector.broadcast %cst_186 : f32 to vector<2x32xf32>
    %757 = arith.addf %756, %755 : vector<2x32xf32>
    %758 = arith.divf %756, %757 : vector<2x32xf32>
    %759 = arith.mulf %752, %703 : vector<2x32xf32>
    %760 = arith.mulf %747, %753 : vector<2x32xf32>
    %761 = arith.addf %759, %760 : vector<2x32xf32>
    %762 = math.tanh %761 : vector<2x32xf32>
    %763 = arith.mulf %758, %762 : vector<2x32xf32>
    %c0_187 = arith.constant 0 : index
    %c0_188 = arith.constant 0 : index
    %c0_189 = arith.constant 0 : index
    %764 = vector.load %arg10[%c0_187, %c0_188, %c0_189] : memref<8x2x32xf32, #tpu.memory_space<vmem>>, vector<1x2x32xf32>
    %765 = vector.shape_cast %764 : vector<1x2x32xf32> to vector<2x32xf32>
    %766 = vector.shape_cast %763 : vector<2x32xf32> to vector<1x2x32xf32>
    tpu.vector_store %arg10[%c0_187, %c0_188, %c0_189], %766 {strides = array<i32>} : memref<8x2x32xf32, #tpu.memory_space<vmem>>, vector<1x2x32xf32>,
    %767 = vector.extract_strided_slice %714 {offsets = [1, 0, 0], sizes = [1, 2, 32], strides = [1, 1, 1]} : vector<8x2x32xf32> to vector<1x2x32xf32>
    %768 = vector.shape_cast %767 : vector<1x2x32xf32> to vector<2x32xf32>
    %cst_190 = arith.constant dense<0.000000e+00> : vector<2x32xf32>
    %769 = tpu.matmul %763, %9, %cst_190 {dimension_numbers = #tpu.dot_dimension_numbers<[1], [0], [0], [1], [0, 0, 1, 1], [], []>} : vector<2x32xf32>, vector<32x32xf32>, vector<2x32xf32> -> vector<2x32xf32>
    %770 = arith.addf %768, %769 : vector<2x32xf32>
    %771 = vector.extract_strided_slice %718 {offsets = [1, 0, 0], sizes = [1, 2, 32], strides = [1, 1, 1]} : vector<8x2x32xf32> to vector<1x2x32xf32>
    %772 = vector.shape_cast %771 : vector<1x2x32xf32> to vector<2x32xf32>
    %cst_191 = arith.constant dense<0.000000e+00> : vector<2x32xf32>
    %773 = tpu.matmul %763, %10, %cst_191 {dimension_numbers = #tpu.dot_dimension_numbers<[1], [0], [0], [1], [0, 0, 1, 1], [], []>} : vector<2x32xf32>, vector<32x32xf32>, vector<2x32xf32> -> vector<2x32xf32>
    %774 = arith.addf %772, %773 : vector<2x32xf32>
    %775 = vector.extract_strided_slice %722 {offsets = [1, 0, 0], sizes = [1, 2, 32], strides = [1, 1, 1]} : vector<8x2x32xf32> to vector<1x2x32xf32>
    %776 = vector.shape_cast %775 : vector<1x2x32xf32> to vector<2x32xf32>
    %cst_192 = arith.constant dense<0.000000e+00> : vector<2x32xf32>
    %777 = tpu.matmul %763, %11, %cst_192 {dimension_numbers = #tpu.dot_dimension_numbers<[1], [0], [0], [1], [0, 0, 1, 1], [], []>} : vector<2x32xf32>, vector<32x32xf32>, vector<2x32xf32> -> vector<2x32xf32>
    %778 = arith.addf %776, %777 : vector<2x32xf32>
    %779 = vector.extract_strided_slice %726 {offsets = [1, 0, 0], sizes = [1, 2, 32], strides = [1, 1, 1]} : vector<8x2x32xf32> to vector<1x2x32xf32>
    %780 = vector.shape_cast %779 : vector<1x2x32xf32> to vector<2x32xf32>
    %cst_193 = arith.constant dense<0.000000e+00> : vector<2x32xf32>
    %781 = tpu.matmul %763, %12, %cst_193 {dimension_numbers = #tpu.dot_dimension_numbers<[1], [0], [0], [1], [0, 0, 1, 1], [], []>} : vector<2x32xf32>, vector<32x32xf32>, vector<2x32xf32> -> vector<2x32xf32>
    %782 = arith.addf %780, %781 : vector<2x32xf32>
    %783 = arith.negf %770 : vector<2x32xf32>
    %784 = math.exp %783 : vector<2x32xf32>
    %cst_194 = arith.constant 1.000000e+00 : f32
    %785 = vector.broadcast %cst_194 : f32 to vector<2x32xf32>
    %786 = arith.addf %785, %784 : vector<2x32xf32>
    %787 = arith.divf %785, %786 : vector<2x32xf32>
    %788 = arith.negf %774 : vector<2x32xf32>
    %789 = math.exp %788 : vector<2x32xf32>
    %cst_195 = arith.constant 1.000000e+00 : f32
    %790 = vector.broadcast %cst_195 : f32 to vector<2x32xf32>
    %791 = arith.addf %790, %789 : vector<2x32xf32>
    %792 = arith.divf %790, %791 : vector<2x32xf32>
    %793 = math.tanh %778 : vector<2x32xf32>
    %794 = arith.negf %782 : vector<2x32xf32>
    %795 = math.exp %794 : vector<2x32xf32>
    %cst_196 = arith.constant 1.000000e+00 : f32
    %796 = vector.broadcast %cst_196 : f32 to vector<2x32xf32>
    %797 = arith.addf %796, %795 : vector<2x32xf32>
    %798 = arith.divf %796, %797 : vector<2x32xf32>
    %799 = arith.mulf %792, %761 : vector<2x32xf32>
    %800 = arith.mulf %787, %793 : vector<2x32xf32>
    %801 = arith.addf %799, %800 : vector<2x32xf32>
    %802 = math.tanh %801 : vector<2x32xf32>
    %803 = arith.mulf %798, %802 : vector<2x32xf32>
    %c1_197 = arith.constant 1 : index
    %c0_198 = arith.constant 0 : index
    %c0_199 = arith.constant 0 : index
    %804 = vector.load %arg10[%c1_197, %c0_198, %c0_199] : memref<8x2x32xf32, #tpu.memory_space<vmem>>, vector<1x2x32xf32>
    %805 = vector.shape_cast %804 : vector<1x2x32xf32> to vector<2x32xf32>
    %806 = vector.shape_cast %803 : vector<2x32xf32> to vector<1x2x32xf32>
    tpu.vector_store %arg10[%c1_197, %c0_198, %c0_199], %806 {strides = array<i32>} : memref<8x2x32xf32, #tpu.memory_space<vmem>>, vector<1x2x32xf32>,
    %807 = vector.extract_strided_slice %714 {offsets = [2, 0, 0], sizes = [1, 2, 32], strides = [1, 1, 1]} : vector<8x2x32xf32> to vector<1x2x32xf32>
    %808 = vector.shape_cast %807 : vector<1x2x32xf32> to vector<2x32xf32>
    %cst_200 = arith.constant dense<0.000000e+00> : vector<2x32xf32>
    %809 = tpu.matmul %803, %9, %cst_200 {dimension_numbers = #tpu.dot_dimension_numbers<[1], [0], [0], [1], [0, 0, 1, 1], [], []>} : vector<2x32xf32>, vector<32x32xf32>, vector<2x32xf32> -> vector<2x32xf32>
    %810 = arith.addf %808, %809 : vector<2x32xf32>
    %811 = vector.extract_strided_slice %718 {offsets = [2, 0, 0], sizes = [1, 2, 32], strides = [1, 1, 1]} : vector<8x2x32xf32> to vector<1x2x32xf32>
    %812 = vector.shape_cast %811 : vector<1x2x32xf32> to vector<2x32xf32>
    %cst_201 = arith.constant dense<0.000000e+00> : vector<2x32xf32>
    %813 = tpu.matmul %803, %10, %cst_201 {dimension_numbers = #tpu.dot_dimension_numbers<[1], [0], [0], [1], [0, 0, 1, 1], [], []>} : vector<2x32xf32>, vector<32x32xf32>, vector<2x32xf32> -> vector<2x32xf32>
    %814 = arith.addf %812, %813 : vector<2x32xf32>
    %815 = vector.extract_strided_slice %722 {offsets = [2, 0, 0], sizes = [1, 2, 32], strides = [1, 1, 1]} : vector<8x2x32xf32> to vector<1x2x32xf32>
    %816 = vector.shape_cast %815 : vector<1x2x32xf32> to vector<2x32xf32>
    %cst_202 = arith.constant dense<0.000000e+00> : vector<2x32xf32>
    %817 = tpu.matmul %803, %11, %cst_202 {dimension_numbers = #tpu.dot_dimension_numbers<[1], [0], [0], [1], [0, 0, 1, 1], [], []>} : vector<2x32xf32>, vector<32x32xf32>, vector<2x32xf32> -> vector<2x32xf32>
    %818 = arith.addf %816, %817 : vector<2x32xf32>
    %819 = vector.extract_strided_slice %726 {offsets = [2, 0, 0], sizes = [1, 2, 32], strides = [1, 1, 1]} : vector<8x2x32xf32> to vector<1x2x32xf32>
    %820 = vector.shape_cast %819 : vector<1x2x32xf32> to vector<2x32xf32>
    %cst_203 = arith.constant dense<0.000000e+00> : vector<2x32xf32>
    %821 = tpu.matmul %803, %12, %cst_203 {dimension_numbers = #tpu.dot_dimension_numbers<[1], [0], [0], [1], [0, 0, 1, 1], [], []>} : vector<2x32xf32>, vector<32x32xf32>, vector<2x32xf32> -> vector<2x32xf32>
    %822 = arith.addf %820, %821 : vector<2x32xf32>
    %823 = arith.negf %810 : vector<2x32xf32>
    %824 = math.exp %823 : vector<2x32xf32>
    %cst_204 = arith.constant 1.000000e+00 : f32
    %825 = vector.broadcast %cst_204 : f32 to vector<2x32xf32>
    %826 = arith.addf %825, %824 : vector<2x32xf32>
    %827 = arith.divf %825, %826 : vector<2x32xf32>
    %828 = arith.negf %814 : vector<2x32xf32>
    %829 = math.exp %828 : vector<2x32xf32>
    %cst_205 = arith.constant 1.000000e+00 : f32
    %830 = vector.broadcast %cst_205 : f32 to vector<2x32xf32>
    %831 = arith.addf %830, %829 : vector<2x32xf32>
    %832 = arith.divf %830, %831 : vector<2x32xf32>
    %833 = math.tanh %818 : vector<2x32xf32>
    %834 = arith.negf %822 : vector<2x32xf32>
    %835 = math.exp %834 : vector<2x32xf32>
    %cst_206 = arith.constant 1.000000e+00 : f32
    %836 = vector.broadcast %cst_206 : f32 to vector<2x32xf32>
    %837 = arith.addf %836, %835 : vector<2x32xf32>
    %838 = arith.divf %836, %837 : vector<2x32xf32>
    %839 = arith.mulf %832, %801 : vector<2x32xf32>
    %840 = arith.mulf %827, %833 : vector<2x32xf32>
    %841 = arith.addf %839, %840 : vector<2x32xf32>
    %842 = math.tanh %841 : vector<2x32xf32>
    %843 = arith.mulf %838, %842 : vector<2x32xf32>
    %c2_207 = arith.constant 2 : index
    %c0_208 = arith.constant 0 : index
    %c0_209 = arith.constant 0 : index
    %844 = vector.load %arg10[%c2_207, %c0_208, %c0_209] : memref<8x2x32xf32, #tpu.memory_space<vmem>>, vector<1x2x32xf32>
    %845 = vector.shape_cast %844 : vector<1x2x32xf32> to vector<2x32xf32>
    %846 = vector.shape_cast %843 : vector<2x32xf32> to vector<1x2x32xf32>
    tpu.vector_store %arg10[%c2_207, %c0_208, %c0_209], %846 {strides = array<i32>} : memref<8x2x32xf32, #tpu.memory_space<vmem>>, vector<1x2x32xf32>,
    %847 = vector.extract_strided_slice %714 {offsets = [3, 0, 0], sizes = [1, 2, 32], strides = [1, 1, 1]} : vector<8x2x32xf32> to vector<1x2x32xf32>
    %848 = vector.shape_cast %847 : vector<1x2x32xf32> to vector<2x32xf32>
    %cst_210 = arith.constant dense<0.000000e+00> : vector<2x32xf32>
    %849 = tpu.matmul %843, %9, %cst_210 {dimension_numbers = #tpu.dot_dimension_numbers<[1], [0], [0], [1], [0, 0, 1, 1], [], []>} : vector<2x32xf32>, vector<32x32xf32>, vector<2x32xf32> -> vector<2x32xf32>
    %850 = arith.addf %848, %849 : vector<2x32xf32>
    %851 = vector.extract_strided_slice %718 {offsets = [3, 0, 0], sizes = [1, 2, 32], strides = [1, 1, 1]} : vector<8x2x32xf32> to vector<1x2x32xf32>
    %852 = vector.shape_cast %851 : vector<1x2x32xf32> to vector<2x32xf32>
    %cst_211 = arith.constant dense<0.000000e+00> : vector<2x32xf32>
    %853 = tpu.matmul %843, %10, %cst_211 {dimension_numbers = #tpu.dot_dimension_numbers<[1], [0], [0], [1], [0, 0, 1, 1], [], []>} : vector<2x32xf32>, vector<32x32xf32>, vector<2x32xf32> -> vector<2x32xf32>
    %854 = arith.addf %852, %853 : vector<2x32xf32>
    %855 = vector.extract_strided_slice %722 {offsets = [3, 0, 0], sizes = [1, 2, 32], strides = [1, 1, 1]} : vector<8x2x32xf32> to vector<1x2x32xf32>
    %856 = vector.shape_cast %855 : vector<1x2x32xf32> to vector<2x32xf32>
    %cst_212 = arith.constant dense<0.000000e+00> : vector<2x32xf32>
    %857 = tpu.matmul %843, %11, %cst_212 {dimension_numbers = #tpu.dot_dimension_numbers<[1], [0], [0], [1], [0, 0, 1, 1], [], []>} : vector<2x32xf32>, vector<32x32xf32>, vector<2x32xf32> -> vector<2x32xf32>
    %858 = arith.addf %856, %857 : vector<2x32xf32>
    %859 = vector.extract_strided_slice %726 {offsets = [3, 0, 0], sizes = [1, 2, 32], strides = [1, 1, 1]} : vector<8x2x32xf32> to vector<1x2x32xf32>
    %860 = vector.shape_cast %859 : vector<1x2x32xf32> to vector<2x32xf32>
    %cst_213 = arith.constant dense<0.000000e+00> : vector<2x32xf32>
    %861 = tpu.matmul %843, %12, %cst_213 {dimension_numbers = #tpu.dot_dimension_numbers<[1], [0], [0], [1], [0, 0, 1, 1], [], []>} : vector<2x32xf32>, vector<32x32xf32>, vector<2x32xf32> -> vector<2x32xf32>
    %862 = arith.addf %860, %861 : vector<2x32xf32>
    %863 = arith.negf %850 : vector<2x32xf32>
    %864 = math.exp %863 : vector<2x32xf32>
    %cst_214 = arith.constant 1.000000e+00 : f32
    %865 = vector.broadcast %cst_214 : f32 to vector<2x32xf32>
    %866 = arith.addf %865, %864 : vector<2x32xf32>
    %867 = arith.divf %865, %866 : vector<2x32xf32>
    %868 = arith.negf %854 : vector<2x32xf32>
    %869 = math.exp %868 : vector<2x32xf32>
    %cst_215 = arith.constant 1.000000e+00 : f32
    %870 = vector.broadcast %cst_215 : f32 to vector<2x32xf32>
    %871 = arith.addf %870, %869 : vector<2x32xf32>
    %872 = arith.divf %870, %871 : vector<2x32xf32>
    %873 = math.tanh %858 : vector<2x32xf32>
    %874 = arith.negf %862 : vector<2x32xf32>
    %875 = math.exp %874 : vector<2x32xf32>
    %cst_216 = arith.constant 1.000000e+00 : f32
    %876 = vector.broadcast %cst_216 : f32 to vector<2x32xf32>
    %877 = arith.addf %876, %875 : vector<2x32xf32>
    %878 = arith.divf %876, %877 : vector<2x32xf32>
    %879 = arith.mulf %872, %841 : vector<2x32xf32>
    %880 = arith.mulf %867, %873 : vector<2x32xf32>
    %881 = arith.addf %879, %880 : vector<2x32xf32>
    %882 = math.tanh %881 : vector<2x32xf32>
    %883 = arith.mulf %878, %882 : vector<2x32xf32>
    %c3_217 = arith.constant 3 : index
    %c0_218 = arith.constant 0 : index
    %c0_219 = arith.constant 0 : index
    %884 = vector.load %arg10[%c3_217, %c0_218, %c0_219] : memref<8x2x32xf32, #tpu.memory_space<vmem>>, vector<1x2x32xf32>
    %885 = vector.shape_cast %884 : vector<1x2x32xf32> to vector<2x32xf32>
    %886 = vector.shape_cast %883 : vector<2x32xf32> to vector<1x2x32xf32>
    tpu.vector_store %arg10[%c3_217, %c0_218, %c0_219], %886 {strides = array<i32>} : memref<8x2x32xf32, #tpu.memory_space<vmem>>, vector<1x2x32xf32>,
    %887 = vector.extract_strided_slice %714 {offsets = [4, 0, 0], sizes = [1, 2, 32], strides = [1, 1, 1]} : vector<8x2x32xf32> to vector<1x2x32xf32>
    %888 = vector.shape_cast %887 : vector<1x2x32xf32> to vector<2x32xf32>
    %cst_220 = arith.constant dense<0.000000e+00> : vector<2x32xf32>
    %889 = tpu.matmul %883, %9, %cst_220 {dimension_numbers = #tpu.dot_dimension_numbers<[1], [0], [0], [1], [0, 0, 1, 1], [], []>} : vector<2x32xf32>, vector<32x32xf32>, vector<2x32xf32> -> vector<2x32xf32>
    %890 = arith.addf %888, %889 : vector<2x32xf32>
    %891 = vector.extract_strided_slice %718 {offsets = [4, 0, 0], sizes = [1, 2, 32], strides = [1, 1, 1]} : vector<8x2x32xf32> to vector<1x2x32xf32>
    %892 = vector.shape_cast %891 : vector<1x2x32xf32> to vector<2x32xf32>
    %cst_221 = arith.constant dense<0.000000e+00> : vector<2x32xf32>
    %893 = tpu.matmul %883, %10, %cst_221 {dimension_numbers = #tpu.dot_dimension_numbers<[1], [0], [0], [1], [0, 0, 1, 1], [], []>} : vector<2x32xf32>, vector<32x32xf32>, vector<2x32xf32> -> vector<2x32xf32>
    %894 = arith.addf %892, %893 : vector<2x32xf32>
    %895 = vector.extract_strided_slice %722 {offsets = [4, 0, 0], sizes = [1, 2, 32], strides = [1, 1, 1]} : vector<8x2x32xf32> to vector<1x2x32xf32>
    %896 = vector.shape_cast %895 : vector<1x2x32xf32> to vector<2x32xf32>
    %cst_222 = arith.constant dense<0.000000e+00> : vector<2x32xf32>
    %897 = tpu.matmul %883, %11, %cst_222 {dimension_numbers = #tpu.dot_dimension_numbers<[1], [0], [0], [1], [0, 0, 1, 1], [], []>} : vector<2x32xf32>, vector<32x32xf32>, vector<2x32xf32> -> vector<2x32xf32>
    %898 = arith.addf %896, %897 : vector<2x32xf32>
    %899 = vector.extract_strided_slice %726 {offsets = [4, 0, 0], sizes = [1, 2, 32], strides = [1, 1, 1]} : vector<8x2x32xf32> to vector<1x2x32xf32>
    %900 = vector.shape_cast %899 : vector<1x2x32xf32> to vector<2x32xf32>
    %cst_223 = arith.constant dense<0.000000e+00> : vector<2x32xf32>
    %901 = tpu.matmul %883, %12, %cst_223 {dimension_numbers = #tpu.dot_dimension_numbers<[1], [0], [0], [1], [0, 0, 1, 1], [], []>} : vector<2x32xf32>, vector<32x32xf32>, vector<2x32xf32> -> vector<2x32xf32>
    %902 = arith.addf %900, %901 : vector<2x32xf32>
    %903 = arith.negf %890 : vector<2x32xf32>
    %904 = math.exp %903 : vector<2x32xf32>
    %cst_224 = arith.constant 1.000000e+00 : f32
    %905 = vector.broadcast %cst_224 : f32 to vector<2x32xf32>
    %906 = arith.addf %905, %904 : vector<2x32xf32>
    %907 = arith.divf %905, %906 : vector<2x32xf32>
    %908 = arith.negf %894 : vector<2x32xf32>
    %909 = math.exp %908 : vector<2x32xf32>
    %cst_225 = arith.constant 1.000000e+00 : f32
    %910 = vector.broadcast %cst_225 : f32 to vector<2x32xf32>
    %911 = arith.addf %910, %909 : vector<2x32xf32>
    %912 = arith.divf %910, %911 : vector<2x32xf32>
    %913 = math.tanh %898 : vector<2x32xf32>
    %914 = arith.negf %902 : vector<2x32xf32>
    %915 = math.exp %914 : vector<2x32xf32>
    %cst_226 = arith.constant 1.000000e+00 : f32
    %916 = vector.broadcast %cst_226 : f32 to vector<2x32xf32>
    %917 = arith.addf %916, %915 : vector<2x32xf32>
    %918 = arith.divf %916, %917 : vector<2x32xf32>
    %919 = arith.mulf %912, %881 : vector<2x32xf32>
    %920 = arith.mulf %907, %913 : vector<2x32xf32>
    %921 = arith.addf %919, %920 : vector<2x32xf32>
    %922 = math.tanh %921 : vector<2x32xf32>
    %923 = arith.mulf %918, %922 : vector<2x32xf32>
    %c4_227 = arith.constant 4 : index
    %c0_228 = arith.constant 0 : index
    %c0_229 = arith.constant 0 : index
    %924 = vector.load %arg10[%c4_227, %c0_228, %c0_229] : memref<8x2x32xf32, #tpu.memory_space<vmem>>, vector<1x2x32xf32>
    %925 = vector.shape_cast %924 : vector<1x2x32xf32> to vector<2x32xf32>
    %926 = vector.shape_cast %923 : vector<2x32xf32> to vector<1x2x32xf32>
    tpu.vector_store %arg10[%c4_227, %c0_228, %c0_229], %926 {strides = array<i32>} : memref<8x2x32xf32, #tpu.memory_space<vmem>>, vector<1x2x32xf32>,
    %927 = vector.extract_strided_slice %714 {offsets = [5, 0, 0], sizes = [1, 2, 32], strides = [1, 1, 1]} : vector<8x2x32xf32> to vector<1x2x32xf32>
    %928 = vector.shape_cast %927 : vector<1x2x32xf32> to vector<2x32xf32>
    %cst_230 = arith.constant dense<0.000000e+00> : vector<2x32xf32>
    %929 = tpu.matmul %923, %9, %cst_230 {dimension_numbers = #tpu.dot_dimension_numbers<[1], [0], [0], [1], [0, 0, 1, 1], [], []>} : vector<2x32xf32>, vector<32x32xf32>, vector<2x32xf32> -> vector<2x32xf32>
    %930 = arith.addf %928, %929 : vector<2x32xf32>
    %931 = vector.extract_strided_slice %718 {offsets = [5, 0, 0], sizes = [1, 2, 32], strides = [1, 1, 1]} : vector<8x2x32xf32> to vector<1x2x32xf32>
    %932 = vector.shape_cast %931 : vector<1x2x32xf32> to vector<2x32xf32>
    %cst_231 = arith.constant dense<0.000000e+00> : vector<2x32xf32>
    %933 = tpu.matmul %923, %10, %cst_231 {dimension_numbers = #tpu.dot_dimension_numbers<[1], [0], [0], [1], [0, 0, 1, 1], [], []>} : vector<2x32xf32>, vector<32x32xf32>, vector<2x32xf32> -> vector<2x32xf32>
    %934 = arith.addf %932, %933 : vector<2x32xf32>
    %935 = vector.extract_strided_slice %722 {offsets = [5, 0, 0], sizes = [1, 2, 32], strides = [1, 1, 1]} : vector<8x2x32xf32> to vector<1x2x32xf32>
    %936 = vector.shape_cast %935 : vector<1x2x32xf32> to vector<2x32xf32>
    %cst_232 = arith.constant dense<0.000000e+00> : vector<2x32xf32>
    %937 = tpu.matmul %923, %11, %cst_232 {dimension_numbers = #tpu.dot_dimension_numbers<[1], [0], [0], [1], [0, 0, 1, 1], [], []>} : vector<2x32xf32>, vector<32x32xf32>, vector<2x32xf32> -> vector<2x32xf32>
    %938 = arith.addf %936, %937 : vector<2x32xf32>
    %939 = vector.extract_strided_slice %726 {offsets = [5, 0, 0], sizes = [1, 2, 32], strides = [1, 1, 1]} : vector<8x2x32xf32> to vector<1x2x32xf32>
    %940 = vector.shape_cast %939 : vector<1x2x32xf32> to vector<2x32xf32>
    %cst_233 = arith.constant dense<0.000000e+00> : vector<2x32xf32>
    %941 = tpu.matmul %923, %12, %cst_233 {dimension_numbers = #tpu.dot_dimension_numbers<[1], [0], [0], [1], [0, 0, 1, 1], [], []>} : vector<2x32xf32>, vector<32x32xf32>, vector<2x32xf32> -> vector<2x32xf32>
    %942 = arith.addf %940, %941 : vector<2x32xf32>
    %943 = arith.negf %930 : vector<2x32xf32>
    %944 = math.exp %943 : vector<2x32xf32>
    %cst_234 = arith.constant 1.000000e+00 : f32
    %945 = vector.broadcast %cst_234 : f32 to vector<2x32xf32>
    %946 = arith.addf %945, %944 : vector<2x32xf32>
    %947 = arith.divf %945, %946 : vector<2x32xf32>
    %948 = arith.negf %934 : vector<2x32xf32>
    %949 = math.exp %948 : vector<2x32xf32>
    %cst_235 = arith.constant 1.000000e+00 : f32
    %950 = vector.broadcast %cst_235 : f32 to vector<2x32xf32>
    %951 = arith.addf %950, %949 : vector<2x32xf32>
    %952 = arith.divf %950, %951 : vector<2x32xf32>
    %953 = math.tanh %938 : vector<2x32xf32>
    %954 = arith.negf %942 : vector<2x32xf32>
    %955 = math.exp %954 : vector<2x32xf32>
    %cst_236 = arith.constant 1.000000e+00 : f32
    %956 = vector.broadcast %cst_236 : f32 to vector<2x32xf32>
    %957 = arith.addf %956, %955 : vector<2x32xf32>
    %958 = arith.divf %956, %957 : vector<2x32xf32>
    %959 = arith.mulf %952, %921 : vector<2x32xf32>
    %960 = arith.mulf %947, %953 : vector<2x32xf32>
    %961 = arith.addf %959, %960 : vector<2x32xf32>
    %962 = math.tanh %961 : vector<2x32xf32>
    %963 = arith.mulf %958, %962 : vector<2x32xf32>
    %c5_237 = arith.constant 5 : index
    %c0_238 = arith.constant 0 : index
    %c0_239 = arith.constant 0 : index
    %964 = vector.load %arg10[%c5_237, %c0_238, %c0_239] : memref<8x2x32xf32, #tpu.memory_space<vmem>>, vector<1x2x32xf32>
    %965 = vector.shape_cast %964 : vector<1x2x32xf32> to vector<2x32xf32>
    %966 = vector.shape_cast %963 : vector<2x32xf32> to vector<1x2x32xf32>
    tpu.vector_store %arg10[%c5_237, %c0_238, %c0_239], %966 {strides = array<i32>} : memref<8x2x32xf32, #tpu.memory_space<vmem>>, vector<1x2x32xf32>,
    %967 = vector.extract_strided_slice %714 {offsets = [6, 0, 0], sizes = [1, 2, 32], strides = [1, 1, 1]} : vector<8x2x32xf32> to vector<1x2x32xf32>
    %968 = vector.shape_cast %967 : vector<1x2x32xf32> to vector<2x32xf32>
    %cst_240 = arith.constant dense<0.000000e+00> : vector<2x32xf32>
    %969 = tpu.matmul %963, %9, %cst_240 {dimension_numbers = #tpu.dot_dimension_numbers<[1], [0], [0], [1], [0, 0, 1, 1], [], []>} : vector<2x32xf32>, vector<32x32xf32>, vector<2x32xf32> -> vector<2x32xf32>
    %970 = arith.addf %968, %969 : vector<2x32xf32>
    %971 = vector.extract_strided_slice %718 {offsets = [6, 0, 0], sizes = [1, 2, 32], strides = [1, 1, 1]} : vector<8x2x32xf32> to vector<1x2x32xf32>
    %972 = vector.shape_cast %971 : vector<1x2x32xf32> to vector<2x32xf32>
    %cst_241 = arith.constant dense<0.000000e+00> : vector<2x32xf32>
    %973 = tpu.matmul %963, %10, %cst_241 {dimension_numbers = #tpu.dot_dimension_numbers<[1], [0], [0], [1], [0, 0, 1, 1], [], []>} : vector<2x32xf32>, vector<32x32xf32>, vector<2x32xf32> -> vector<2x32xf32>
    %974 = arith.addf %972, %973 : vector<2x32xf32>
    %975 = vector.extract_strided_slice %722 {offsets = [6, 0, 0], sizes = [1, 2, 32], strides = [1, 1, 1]} : vector<8x2x32xf32> to vector<1x2x32xf32>
    %976 = vector.shape_cast %975 : vector<1x2x32xf32> to vector<2x32xf32>
    %cst_242 = arith.constant dense<0.000000e+00> : vector<2x32xf32>
    %977 = tpu.matmul %963, %11, %cst_242 {dimension_numbers = #tpu.dot_dimension_numbers<[1], [0], [0], [1], [0, 0, 1, 1], [], []>} : vector<2x32xf32>, vector<32x32xf32>, vector<2x32xf32> -> vector<2x32xf32>
    %978 = arith.addf %976, %977 : vector<2x32xf32>
    %979 = vector.extract_strided_slice %726 {offsets = [6, 0, 0], sizes = [1, 2, 32], strides = [1, 1, 1]} : vector<8x2x32xf32> to vector<1x2x32xf32>
    %980 = vector.shape_cast %979 : vector<1x2x32xf32> to vector<2x32xf32>
    %cst_243 = arith.constant dense<0.000000e+00> : vector<2x32xf32>
    %981 = tpu.matmul %963, %12, %cst_243 {dimension_numbers = #tpu.dot_dimension_numbers<[1], [0], [0], [1], [0, 0, 1, 1], [], []>} : vector<2x32xf32>, vector<32x32xf32>, vector<2x32xf32> -> vector<2x32xf32>
    %982 = arith.addf %980, %981 : vector<2x32xf32>
    %983 = arith.negf %970 : vector<2x32xf32>
    %984 = math.exp %983 : vector<2x32xf32>
    %cst_244 = arith.constant 1.000000e+00 : f32
    %985 = vector.broadcast %cst_244 : f32 to vector<2x32xf32>
    %986 = arith.addf %985, %984 : vector<2x32xf32>
    %987 = arith.divf %985, %986 : vector<2x32xf32>
    %988 = arith.negf %974 : vector<2x32xf32>
    %989 = math.exp %988 : vector<2x32xf32>
    %cst_245 = arith.constant 1.000000e+00 : f32
    %990 = vector.broadcast %cst_245 : f32 to vector<2x32xf32>
    %991 = arith.addf %990, %989 : vector<2x32xf32>
    %992 = arith.divf %990, %991 : vector<2x32xf32>
    %993 = math.tanh %978 : vector<2x32xf32>
    %994 = arith.negf %982 : vector<2x32xf32>
    %995 = math.exp %994 : vector<2x32xf32>
    %cst_246 = arith.constant 1.000000e+00 : f32
    %996 = vector.broadcast %cst_246 : f32 to vector<2x32xf32>
    %997 = arith.addf %996, %995 : vector<2x32xf32>
    %998 = arith.divf %996, %997 : vector<2x32xf32>
    %999 = arith.mulf %992, %961 : vector<2x32xf32>
    %1000 = arith.mulf %987, %993 : vector<2x32xf32>
    %1001 = arith.addf %999, %1000 : vector<2x32xf32>
    %1002 = math.tanh %1001 : vector<2x32xf32>
    %1003 = arith.mulf %998, %1002 : vector<2x32xf32>
    %c6_247 = arith.constant 6 : index
    %c0_248 = arith.constant 0 : index
    %c0_249 = arith.constant 0 : index
    %1004 = vector.load %arg10[%c6_247, %c0_248, %c0_249] : memref<8x2x32xf32, #tpu.memory_space<vmem>>, vector<1x2x32xf32>
    %1005 = vector.shape_cast %1004 : vector<1x2x32xf32> to vector<2x32xf32>
    %1006 = vector.shape_cast %1003 : vector<2x32xf32> to vector<1x2x32xf32>
    tpu.vector_store %arg10[%c6_247, %c0_248, %c0_249], %1006 {strides = array<i32>} : memref<8x2x32xf32, #tpu.memory_space<vmem>>, vector<1x2x32xf32>,
    %1007 = vector.extract_strided_slice %714 {offsets = [7, 0, 0], sizes = [1, 2, 32], strides = [1, 1, 1]} : vector<8x2x32xf32> to vector<1x2x32xf32>
    %1008 = vector.shape_cast %1007 : vector<1x2x32xf32> to vector<2x32xf32>
    %cst_250 = arith.constant dense<0.000000e+00> : vector<2x32xf32>
    %1009 = tpu.matmul %1003, %9, %cst_250 {dimension_numbers = #tpu.dot_dimension_numbers<[1], [0], [0], [1], [0, 0, 1, 1], [], []>} : vector<2x32xf32>, vector<32x32xf32>, vector<2x32xf32> -> vector<2x32xf32>
    %1010 = arith.addf %1008, %1009 : vector<2x32xf32>
    %1011 = vector.extract_strided_slice %718 {offsets = [7, 0, 0], sizes = [1, 2, 32], strides = [1, 1, 1]} : vector<8x2x32xf32> to vector<1x2x32xf32>
    %1012 = vector.shape_cast %1011 : vector<1x2x32xf32> to vector<2x32xf32>
    %cst_251 = arith.constant dense<0.000000e+00> : vector<2x32xf32>
    %1013 = tpu.matmul %1003, %10, %cst_251 {dimension_numbers = #tpu.dot_dimension_numbers<[1], [0], [0], [1], [0, 0, 1, 1], [], []>} : vector<2x32xf32>, vector<32x32xf32>, vector<2x32xf32> -> vector<2x32xf32>
    %1014 = arith.addf %1012, %1013 : vector<2x32xf32>
    %1015 = vector.extract_strided_slice %722 {offsets = [7, 0, 0], sizes = [1, 2, 32], strides = [1, 1, 1]} : vector<8x2x32xf32> to vector<1x2x32xf32>
    %1016 = vector.shape_cast %1015 : vector<1x2x32xf32> to vector<2x32xf32>
    %cst_252 = arith.constant dense<0.000000e+00> : vector<2x32xf32>
    %1017 = tpu.matmul %1003, %11, %cst_252 {dimension_numbers = #tpu.dot_dimension_numbers<[1], [0], [0], [1], [0, 0, 1, 1], [], []>} : vector<2x32xf32>, vector<32x32xf32>, vector<2x32xf32> -> vector<2x32xf32>
    %1018 = arith.addf %1016, %1017 : vector<2x32xf32>
    %1019 = vector.extract_strided_slice %726 {offsets = [7, 0, 0], sizes = [1, 2, 32], strides = [1, 1, 1]} : vector<8x2x32xf32> to vector<1x2x32xf32>
    %1020 = vector.shape_cast %1019 : vector<1x2x32xf32> to vector<2x32xf32>
    %cst_253 = arith.constant dense<0.000000e+00> : vector<2x32xf32>
    %1021 = tpu.matmul %1003, %12, %cst_253 {dimension_numbers = #tpu.dot_dimension_numbers<[1], [0], [0], [1], [0, 0, 1, 1], [], []>} : vector<2x32xf32>, vector<32x32xf32>, vector<2x32xf32> -> vector<2x32xf32>
    %1022 = arith.addf %1020, %1021 : vector<2x32xf32>
    %1023 = arith.negf %1010 : vector<2x32xf32>
    %1024 = math.exp %1023 : vector<2x32xf32>
    %cst_254 = arith.constant 1.000000e+00 : f32
    %1025 = vector.broadcast %cst_254 : f32 to vector<2x32xf32>
    %1026 = arith.addf %1025, %1024 : vector<2x32xf32>
    %1027 = arith.divf %1025, %1026 : vector<2x32xf32>
    %1028 = arith.negf %1014 : vector<2x32xf32>
    %1029 = math.exp %1028 : vector<2x32xf32>
    %cst_255 = arith.constant 1.000000e+00 : f32
    %1030 = vector.broadcast %cst_255 : f32 to vector<2x32xf32>
    %1031 = arith.addf %1030, %1029 : vector<2x32xf32>
    %1032 = arith.divf %1030, %1031 : vector<2x32xf32>
    %1033 = math.tanh %1018 : vector<2x32xf32>
    %1034 = arith.negf %1022 : vector<2x32xf32>
    %1035 = math.exp %1034 : vector<2x32xf32>
    %cst_256 = arith.constant 1.000000e+00 : f32
    %1036 = vector.broadcast %cst_256 : f32 to vector<2x32xf32>
    %1037 = arith.addf %1036, %1035 : vector<2x32xf32>
    %1038 = arith.divf %1036, %1037 : vector<2x32xf32>
    %1039 = arith.mulf %1032, %1001 : vector<2x32xf32>
    %1040 = arith.mulf %1027, %1033 : vector<2x32xf32>
    %1041 = arith.addf %1039, %1040 : vector<2x32xf32>
    %1042 = math.tanh %1041 : vector<2x32xf32>
    %1043 = arith.mulf %1038, %1042 : vector<2x32xf32>
    %c7_257 = arith.constant 7 : index
    %c0_258 = arith.constant 0 : index
    %c0_259 = arith.constant 0 : index
    %1044 = vector.load %arg10[%c7_257, %c0_258, %c0_259] : memref<8x2x32xf32, #tpu.memory_space<vmem>>, vector<1x2x32xf32>
    %1045 = vector.shape_cast %1044 : vector<1x2x32xf32> to vector<2x32xf32>
    %1046 = vector.shape_cast %1043 : vector<2x32xf32> to vector<1x2x32xf32>
    tpu.vector_store %arg10[%c7_257, %c0_258, %c0_259], %1046 {strides = array<i32>} : memref<8x2x32xf32, #tpu.memory_space<vmem>>, vector<1x2x32xf32>,
    %c0_260 = arith.constant 0 : index
    %c0_261 = arith.constant 0 : index
    %c0_262 = arith.constant 0 : index
    %1047 = vector.load %arg8[%c0_260, %c0_261, %c0_262] : memref<8x2x32xf32, #tpu.memory_space<vmem>>, vector<8x2x32xf32>
    %c0_263 = arith.constant 0 : index
    %c0_264 = arith.constant 0 : index
    %c0_265 = arith.constant 0 : index
    %1048 = vector.load %arg9[%c0_263, %c0_264, %c0_265] : memref<8x2x32xf32, #tpu.memory_space<vmem>>, vector<8x2x32xf32>
    %c0_266 = arith.constant 0 : index
    %c0_267 = arith.constant 0 : index
    %c0_268 = arith.constant 0 : index
    %1049 = vector.load %arg10[%c0_266, %c0_267, %c0_268] : memref<8x2x32xf32, #tpu.memory_space<vmem>>, vector<8x2x32xf32>
    %1050 = tpu.concatenate %1047, %1048, %1049 in 2 : vector<8x2x32xf32>, vector<8x2x32xf32>, vector<8x2x32xf32> -> vector<8x2x96xf32>
    %c0_269 = arith.constant 0 : index
    %c0_270 = arith.constant 0 : index
    %c0_271 = arith.constant 0 : index
    %1051 = vector.load %arg7[%c0_269, %c0_270, %c0_271] : memref<8x2x96xf32, #tpu.memory_space<vmem>>, vector<8x2x96xf32>
    tpu.vector_store %arg7[%c0_269, %c0_270, %c0_271], %1050 {strides = array<i32>} : memref<8x2x96xf32, #tpu.memory_space<vmem>>, vector<8x2x96xf32>,
    %1052 = vector.shape_cast %1050 : vector<8x2x96xf32> to vector<16x96xf32>
    %c0_272 = arith.constant 0 : index
    %c0_273 = arith.constant 0 : index
    %1053 = vector.load %arg4[%c0_272, %c0_273] : memref<96x32xf32, #tpu.memory_space<vmem>>, vector<96x32xf32>
    %cst_274 = arith.constant dense<0.000000e+00> : vector<16x32xf32>
    %1054 = tpu.matmul %1052, %1053, %cst_274 {dimension_numbers = #tpu.dot_dimension_numbers<[1], [0], [0], [1], [0, 0, 1, 1], [], []>} : vector<16x96xf32>, vector<96x32xf32>, vector<16x32xf32> -> vector<16x32xf32>
    %c0_275 = arith.constant 0 : index
    %c0_276 = arith.constant 0 : index
    %1055 = vector.load %arg5[%c0_275, %c0_276] : memref<1x32xf32, #tpu.memory_space<vmem>>, vector<1x32xf32>
    %1056 = vector.broadcast %1055 : vector<1x32xf32> to vector<16x32xf32>
    %1057 = arith.addf %1054, %1056 : vector<16x32xf32>
    %1058 = vector.shape_cast %1057 : vector<16x32xf32> to vector<8x2x32xf32>
    %1059 = arith.addf %1058, %0 : vector<8x2x32xf32>
    %c0_277 = arith.constant 0 : index
    %c0_278 = arith.constant 0 : index
    %c0_279 = arith.constant 0 : index
    %1060 = vector.load %arg6[%c0_277, %c0_278, %c0_279] : memref<8x2x32xf32, #tpu.memory_space<vmem>>, vector<8x2x32xf32>
    tpu.vector_store %arg6[%c0_277, %c0_278, %c0_279], %1059 {strides = array<i32>} : memref<8x2x32xf32, #tpu.memory_space<vmem>>, vector<8x2x32xf32>,
    return
  }
}

</mosaic_0001>

<llo_original>
// kernel: lstm_sequence_forward.1
$region0: #{lstm_sequence_forward.1}
  #allocation0 [shape = 'u32[]', space=smem, size = 0x4, offset = 0x4, fixed_abs, tag = 'smem constant byte address 0x4 - core index']
  #allocation1 [shape = 'u32[144,128]{1,0:T(1,128)}', space=vmem, size = 0x12000, scoped, tag = 'internal scratch']
  #allocation2 [shape = 'f32[8,2,32]{2,1,0:T(2,128)}', space=vmem, size = 0x2000, scoped, tag = 'scratch operand']
  #allocation3 [shape = 'f32[8,2,32]{2,1,0:T(2,128)}', space=vmem, size = 0x2000, scoped, tag = 'scratch operand']
  #allocation4 [shape = 'f32[8,2,32]{2,1,0:T(2,128)}', space=vmem, size = 0x2000, scoped, tag = 'scratch operand']
  %s0 = inlined_call_operand.vmem [shape: f32[8,2,32], index: 0, kind: input, shape index: {}]
  %s1 = inlined_call_operand.vmem [shape: f32[32,128], index: 1, kind: input, shape index: {}]
  %s2 = inlined_call_operand.vmem [shape: f32[32,128], index: 2, kind: input, shape index: {}]
  %s3 = inlined_call_operand.vmem [shape: f32[1,128], index: 3, kind: input, shape index: {}]
  %s4 = inlined_call_operand.vmem [shape: f32[96,32], index: 4, kind: input, shape index: {}]
  %s5 = inlined_call_operand.vmem [shape: f32[1,32], index: 5, kind: input, shape index: {}]
  %s6 = inlined_call_operand.vmem [shape: f32[8,2,32], index: 6, kind: output, shape index: {0}]
  %s7 = inlined_call_operand.vmem [shape: f32[8,2,96], index: 7, kind: output, shape index: {1}]
  %8 = xla_tuple %s6, %s7
  %s9 = sld [smem:[#allocation0]]
  $region42: #{lstm_sequence_forward.1} parent=0
    _
  %s11 = ssub.s32 1, %s9
  %s12 = scalar_select 0, %s11, %s9
  // Predicated region
  $region2: #{lstm_sequence_forward.1} parent=0 // pred_check
    _
  $region3: #{lstm_sequence_forward.1} parent=0 // pred_check_branch
    %14 = sbr.rel (0) target = $region5
  $region4: #{lstm_sequence_forward.1} parent=0 // pred_region
    _
  $region5: #{lstm_sequence_forward.1} parent=0 // pred_fallthru
    _
  // Predicated region
  $region6: #{lstm_sequence_forward.1} parent=0 // pred_check
    _
  $region7: #{lstm_sequence_forward.1} parent=0 // pred_check_branch
    %16 = sbr.rel (0) target = $region9
  $region8: #{lstm_sequence_forward.1} parent=0 // pred_region
    _
  $region9: #{lstm_sequence_forward.1} parent=0 // pred_fallthru
    _
  // Predicated region
  $region10: #{lstm_sequence_forward.1} parent=0 // pred_check
    _
  $region11: #{lstm_sequence_forward.1} parent=0 // pred_check_branch
    %18 = sbr.rel (0) target = $region13
  $region12: #{lstm_sequence_forward.1} parent=0 // pred_region
    _
  $region13: #{lstm_sequence_forward.1} parent=0 // pred_fallthru
    _
  // Predicated region
  $region14: #{lstm_sequence_forward.1} parent=0 // pred_check
    _
  $region15: #{lstm_sequence_forward.1} parent=0 // pred_check_branch
    %20 = sbr.rel (0) target = $region17
  $region16: #{lstm_sequence_forward.1} parent=0 // pred_region
    _
  $region17: #{lstm_sequence_forward.1} parent=0 // pred_fallthru
    _
  // Predicated region
  $region18: #{lstm_sequence_forward.1} parent=0 // pred_check
    _
  $region19: #{lstm_sequence_forward.1} parent=0 // pred_check_branch
    %22 = sbr.rel (0) target = $region21
  $region20: #{lstm_sequence_forward.1} parent=0 // pred_region
    _
  $region21: #{lstm_sequence_forward.1} parent=0 // pred_fallthru
    _
  // Predicated region
  $region22: #{lstm_sequence_forward.1} parent=0 // pred_check
    _
  $region23: #{lstm_sequence_forward.1} parent=0 // pred_check_branch
    %24 = sbr.rel (0) target = $region25
  $region24: #{lstm_sequence_forward.1} parent=0 // pred_region
    _
  $region25: #{lstm_sequence_forward.1} parent=0 // pred_fallthru
    _
  %v25 = vld [vmem:[%s0] sm:$0x3]
  %v26 = vld [vmem:[%s0 + $0x2] sm:$0x3]
  %v27 = vld [vmem:[%s0 + $0x4] sm:$0x3]
  %v28 = vld [vmem:[%s0 + $0x6] sm:$0x3]
  %v29 = vld [vmem:[%s0 + $0x8] sm:$0x3]
  %v30 = vld [vmem:[%s0 + $0xa] sm:$0x3]
  %v31 = vld [vmem:[%s0 + $0xc] sm:$0x3]
  %v32 = vld [vmem:[%s0 + $0xe] sm:$0x3]
  %v33 = vld [vmem:[%s1] sm:$0xff]
  %v34 = vld [vmem:[%s1 + $0x8] sm:$0xff]
  %v35 = vld [vmem:[%s1 + $0x10] sm:$0xff]
  %v36 = vld [vmem:[%s1 + $0x18] sm:$0xff]
  %v37 = vld [vmem:[%s2] sm:$0xff]
  %v38 = vld [vmem:[%s2 + $0x8] sm:$0xff]
  %v39 = vld [vmem:[%s2 + $0x10] sm:$0xff]
  %v40 = vld [vmem:[%s2 + $0x18] sm:$0xff]
  %v41 = vld [vmem:[%s3] sm:$0x1]
  %v43 = vlaneseq
  %v44 = vshrl.u32 %v43, 7
  %v45 = vsub.s32 0, %v44
  %v46 = vrot.slane %v41, %v45
  %v56 = vcombine.low %v25, %v26
  %v57 = vcombine.low %v27, %v28
  %v59 = vunpack.c.l.s4 1983009808
  %v60 = vunpack.c.0.s8 %v59
  %v61 = vlaneseq
  %v62 = vshrl.u32 %v61, 7
  %v63 = vsub.s32 %v60, %v62
  %v64 = vrot.slane %v56, %v63
  %v66 = vunpack.c.l.s4 1983009808
  %v67 = vunpack.c.0.s8 %v66
  %v68 = vlaneseq
  %v69 = vshrl.u32 %v68, 7
  %v70 = vsub.s32 %v67, %v69
  %v71 = vrot.slane %v57, %v70
  %v72 = vcombine.low %v64, %v71
  %v73 = vcombine.low %v29, %v30
  %v74 = vcombine.low %v31, %v32
  %v76 = vunpack.c.l.s4 1983009808
  %v77 = vunpack.c.0.s8 %v76
  %v78 = vlaneseq
  %v79 = vshrl.u32 %v78, 7
  %v80 = vsub.s32 %v77, %v79
  %v81 = vrot.slane %v73, %v80
  %v83 = vunpack.c.l.s4 1983009808
  %v84 = vunpack.c.0.s8 %v83
  %v85 = vlaneseq
  %v86 = vshrl.u32 %v85, 7
  %v87 = vsub.s32 %v84, %v86
  %v88 = vrot.slane %v74, %v87
  %v89 = vcombine.low %v81, %v88
  %vm90 = vcmask 261120
  %v91 = vsel %vm90, %v72, 0
  %v93 = vsel %vm90, %v89, 0
  %95 = vmatprep.subr.mxu0 0.0
  %96 = vmatpush1.msra.mxu0 %v33
  %97 = vmatprep.subr.mxu0 0.0
  %98 = vmatpush1.msra.mxu0 %v34
  %99 = vmatprep.subr.mxu0 0.0
  %100 = vmatpush1.msra.mxu0 %v35
  %101 = vmatprep.subr.mxu0 0.0
  %102 = vmatpush1.msra.mxu0 %v36
  %103 = vmatprep.subr.mxu0 0.0
  %104 = vmatpush1.msra.mxu0 0.0
  %105 = vmatprep.subr.mxu0 0.0
  %106 = vmatpush1.msra.mxu0 0.0
  %107 = vmatprep.subr.mxu0 0.0
  %108 = vmatpush1.msra.mxu0 0.0
  %109 = vmatprep.subr.mxu0 0.0
  %110 = vmatpush1.msra.mxu0 0.0
  %111 = vmatprep.subr.mxu0 0.0
  %112 = vmatpush1.msra.mxu0 0.0
  %113 = vmatprep.subr.mxu0 0.0
  %114 = vmatpush1.msra.mxu0 0.0
  %115 = vmatprep.subr.mxu0 0.0
  %116 = vmatpush1.msra.mxu0 0.0
  %117 = vmatprep.subr.mxu0 0.0
  %118 = vmatpush1.msra.mxu0 0.0
  %119 = vmatprep.subr.mxu0 0.0
  %120 = vmatpush1.msra.mxu0 0.0
  %121 = vmatprep.subr.mxu0 0.0
  %122 = vmatpush1.msra.mxu0 0.0
  %123 = vmatprep.subr.mxu0 0.0
  %124 = vmatpush1.msra.mxu0 0.0
  %125 = vmatprep.subr.mxu0 0.0
  %126 = vmatpush1.msra.mxu0 0.0
  %127 = vmatprep.subr.mxu0 0.0
  %128 = vmatpush1.msra.mxu0 0.0
  %129 = vmatprep.subr.mxu0 0.0
  %130 = vmatpush1.msra.mxu0 0.0
  %131 = vmatprep.subr.mxu0 0.0
  %132 = vmatpush1.msra.mxu0 0.0
  %133 = vmatprep.subr.mxu0 0.0
  %134 = vmatpush1.msra.mxu0 0.0
  %135 = vmatprep.subr.mxu0 0.0
  %136 = vmatpush1.msra.mxu0 0.0
  %137 = vmatprep.subr.mxu0 0.0
  %138 = vmatpush1.msra.mxu0 0.0
  %139 = vmatprep.subr.mxu0 0.0
  %140 = vmatpush1.msra.mxu0 0.0
  %141 = vmatprep.subr.mxu0 0.0
  %142 = vmatpush1.msra.mxu0 0.0
  %143 = vmatprep.subr.mxu0 0.0
  %144 = vmatpush1.msra.mxu0 0.0
  %145 = vmatprep.subr.mxu0 0.0
  %146 = vmatpush1.msra.mxu0 0.0
  %147 = vmatprep.subr.mxu0 0.0
  %148 = vmatpush1.msra.mxu0 0.0
  %149 = vmatprep.subr.mxu0 0.0
  %150 = vmatpush1.msra.mxu0 0.0
  %151 = vmatprep.subr.mxu0 0.0
  %152 = vmatpush1.msra.mxu0 0.0
  %153 = vmatprep.subr.mxu0 0.0
  %154 = vmatpush1.msra.mxu0 0.0
  %155 = vmatprep.subr.mxu0 0.0
  %156 = vmatpush1.msra.mxu0 0.0
  %157 = vmatprep.subr.mxu0 0.0
  %158 = vmatpush1.msra.mxu0 0.0
  %159 = vmatprep.mubr.f32.mxu0 0.0
  %160 = vmatmul.mubr.f32.gmra.mrb[0].mxu0 %v91
  %v161 = vpop.f32.mrb[0].mxu0
  %v162 = vadd.f32 %v46, %v161
  %v163 = vpop.f32.mrb[0].mxu0
  %164 = vmatprep.mubr.f32.mxu0 0.0
  %165 = vmatmul.mubr.f32.gmra.mrb[0].mxu0 %v93
  %v166 = vpop.f32.mrb[0].mxu0
  %v167 = vadd.f32 %v46, %v166
  %v168 = vpop.f32.mrb[0].mxu0
  %169 = vdwg.mxu0
  %v172 = vcombine.high %v162, %v162
  %v174 = vunpack.c.l.s4 1983009808
  %v175 = vunpack.c.0.s8 %v174
  %v176 = vlaneseq
  %v177 = vshrl.u32 %v176, 7
  %v178 = vsub.s32 %v175, %v177
  %v179 = vrot.slane %v162, %v178
  %v181 = vunpack.c.l.s4 1983009808
  %v182 = vunpack.c.0.s8 %v181
  %v183 = vlaneseq
  %v184 = vshrl.u32 %v183, 7
  %v185 = vsub.s32 %v182, %v184
  %v186 = vrot.slane %v172, %v185
  %v187 = vcombine.high %v179, %v179
  %v188 = vcombine.high %v186, %v186
  %v189 = vcombine.high %v167, %v167
  %v191 = vunpack.c.l.s4 1983009808
  %v192 = vunpack.c.0.s8 %v191
  %v193 = vlaneseq
  %v194 = vshrl.u32 %v193, 7
  %v195 = vsub.s32 %v192, %v194
  %v196 = vrot.slane %v167, %v195
  %v198 = vunpack.c.l.s4 1983009808
  %v199 = vunpack.c.0.s8 %v198
  %v200 = vlaneseq
  %v201 = vshrl.u32 %v200, 7
  %v202 = vsub.s32 %v199, %v201
  %v203 = vrot.slane %v189, %v202
  %v204 = vcombine.high %v196, %v196
  %v205 = vcombine.high %v203, %v203
  %218 = vrot.lane.b32.xlu0 %v33, 96
  %v219 = vpop.permute.xlu0 %218
  %220 = vrot.lane.b32.xlu0 %v34, 96
  %v221 = vpop.permute.xlu0 %220
  %222 = vrot.lane.b32.xlu0 %v35, 96
  %v223 = vpop.permute.xlu0 %222
  %224 = vrot.lane.b32.xlu0 %v36, 96
  %v225 = vpop.permute.xlu0 %224
  %230 = vrot.lane.b32.xlu0 %v46, 96
  %v231 = vpop.permute.xlu0 %230
  %233 = vmatprep.subr.mxu0 0.0
  %234 = vmatpush1.msra.mxu0 %v219
  %235 = vmatprep.subr.mxu0 0.0
  %236 = vmatpush1.msra.mxu0 %v221
  %237 = vmatprep.subr.mxu0 0.0
  %238 = vmatpush1.msra.mxu0 %v223
  %239 = vmatprep.subr.mxu0 0.0
  %240 = vmatpush1.msra.mxu0 %v225
  %241 = vmatprep.subr.mxu0 0.0
  %242 = vmatpush1.msra.mxu0 0.0
  %243 = vmatprep.subr.mxu0 0.0
  %244 = vmatpush1.msra.mxu0 0.0
  %245 = vmatprep.subr.mxu0 0.0
  %246 = vmatpush1.msra.mxu0 0.0
  %247 = vmatprep.subr.mxu0 0.0
  %248 = vmatpush1.msra.mxu0 0.0
  %249 = vmatprep.subr.mxu0 0.0
  %250 = vmatpush1.msra.mxu0 0.0
  %251 = vmatprep.subr.mxu0 0.0
  %252 = vmatpush1.msra.mxu0 0.0
  %253 = vmatprep.subr.mxu0 0.0
  %254 = vmatpush1.msra.mxu0 0.0
  %255 = vmatprep.subr.mxu0 0.0
  %256 = vmatpush1.msra.mxu0 0.0
  %257 = vmatprep.subr.mxu0 0.0
  %258 = vmatpush1.msra.mxu0 0.0
  %259 = vmatprep.subr.mxu0 0.0
  %260 = vmatpush1.msra.mxu0 0.0
  %261 = vmatprep.subr.mxu0 0.0
  %262 = vmatpush1.msra.mxu0 0.0
  %263 = vmatprep.subr.mxu0 0.0
  %264 = vmatpush1.msra.mxu0 0.0
  %265 = vmatprep.subr.mxu0 0.0
  %266 = vmatpush1.msra.mxu0 0.0
  %267 = vmatprep.subr.mxu0 0.0
  %268 = vmatpush1.msra.mxu0 0.0
  %269 = vmatprep.subr.mxu0 0.0
  %270 = vmatpush1.msra.mxu0 0.0
  %271 = vmatprep.subr.mxu0 0.0
  %272 = vmatpush1.msra.mxu0 0.0
  %273 = vmatprep.subr.mxu0 0.0
  %274 = vmatpush1.msra.mxu0 0.0
  %275 = vmatprep.subr.mxu0 0.0
  %276 = vmatpush1.msra.mxu0 0.0
  %277 = vmatprep.subr.mxu0 0.0
  %278 = vmatpush1.msra.mxu0 0.0
  %279 = vmatprep.subr.mxu0 0.0
  %280 = vmatpush1.msra.mxu0 0.0
  %281 = vmatprep.subr.mxu0 0.0
  %282 = vmatpush1.msra.mxu0 0.0
  %283 = vmatprep.subr.mxu0 0.0
  %284 = vmatpush1.msra.mxu0 0.0
  %285 = vmatprep.subr.mxu0 0.0
  %286 = vmatpush1.msra.mxu0 0.0
  %287 = vmatprep.subr.mxu0 0.0
  %288 = vmatpush1.msra.mxu0 0.0
  %289 = vmatprep.subr.mxu0 0.0
  %290 = vmatpush1.msra.mxu0 0.0
  %291 = vmatprep.subr.mxu0 0.0
  %292 = vmatpush1.msra.mxu0 0.0
  %293 = vmatprep.subr.mxu0 0.0
  %294 = vmatpush1.msra.mxu0 0.0
  %295 = vmatprep.subr.mxu0 0.0
  %296 = vmatpush1.msra.mxu0 0.0
  %297 = vmatprep.mubr.f32.mxu0 0.0
  %298 = vmatmul.mubr.f32.gmra.mrb[0].mxu0 %v91
  %v299 = vpop.f32.mrb[0].mxu0
  %v300 = vadd.f32 %v231, %v299
  %v301 = vpop.f32.mrb[0].mxu0
  %302 = vmatprep.mubr.f32.mxu0 0.0
  %303 = vmatmul.mubr.f32.gmra.mrb[0].mxu0 %v93
  %v304 = vpop.f32.mrb[0].mxu0
  %v305 = vadd.f32 %v231, %v304
  %v306 = vpop.f32.mrb[0].mxu0
  %307 = vdwg.mxu0
  %v310 = vcombine.high %v300, %v300
  %v312 = vunpack.c.l.s4 1983009808
  %v313 = vunpack.c.0.s8 %v312
  %v314 = vlaneseq
  %v315 = vshrl.u32 %v314, 7
  %v316 = vsub.s32 %v313, %v315
  %v317 = vrot.slane %v300, %v316
  %v319 = vunpack.c.l.s4 1983009808
  %v320 = vunpack.c.0.s8 %v319
  %v321 = vlaneseq
  %v322 = vshrl.u32 %v321, 7
  %v323 = vsub.s32 %v320, %v322
  %v324 = vrot.slane %v310, %v323
  %v325 = vcombine.high %v317, %v317
  %v326 = vcombine.high %v324, %v324
  %v327 = vcombine.high %v305, %v305
  %v329 = vunpack.c.l.s4 1983009808
  %v330 = vunpack.c.0.s8 %v329
  %v331 = vlaneseq
  %v332 = vshrl.u32 %v331, 7
  %v333 = vsub.s32 %v330, %v332
  %v334 = vrot.slane %v305, %v333
  %v336 = vunpack.c.l.s4 1983009808
  %v337 = vunpack.c.0.s8 %v336
  %v338 = vlaneseq
  %v339 = vshrl.u32 %v338, 7
  %v340 = vsub.s32 %v337, %v339
  %v341 = vrot.slane %v327, %v340
  %v342 = vcombine.high %v334, %v334
  %v343 = vcombine.high %v341, %v341
  %v353 = vunpack.c.l.s4 1983009808
  %v354 = vunpack.c.0.s8 %v353
  %v355 = vlaneseq
  %v356 = vshrl.u32 %v355, 7
  %v357 = vsub.s32 %v354, %v356
  %v358 = vrot.slane %v46, %v357
  %359 = vrot.lane.b32.xlu0 %v358, 96
  %v360 = vpop.permute.xlu0 %359
  %362 = vrot.lane.b32.xlu0 %v33, 64
  %v363 = vpop.permute.xlu0 %362
  %364 = vrot.lane.b32.xlu0 %v34, 64
  %v365 = vpop.permute.xlu0 %364
  %366 = vrot.lane.b32.xlu0 %v35, 64
  %v367 = vpop.permute.xlu0 %366
  %368 = vrot.lane.b32.xlu0 %v36, 64
  %v369 = vpop.permute.xlu0 %368
  %374 = vrot.lane.b32.xlu0 %v46, 64
  %v375 = vpop.permute.xlu0 %374
  %377 = vmatprep.subr.mxu0 0.0
  %378 = vmatpush1.msra.mxu0 %v363
  %379 = vmatprep.subr.mxu0 0.0
  %380 = vmatpush1.msra.mxu0 %v365
  %381 = vmatprep.subr.mxu0 0.0
  %382 = vmatpush1.msra.mxu0 %v367
  %383 = vmatprep.subr.mxu0 0.0
  %384 = vmatpush1.msra.mxu0 %v369
  %385 = vmatprep.subr.mxu0 0.0
  %386 = vmatpush1.msra.mxu0 0.0
  %387 = vmatprep.subr.mxu0 0.0
  %388 = vmatpush1.msra.mxu0 0.0
  %389 = vmatprep.subr.mxu0 0.0
  %390 = vmatpush1.msra.mxu0 0.0
  %391 = vmatprep.subr.mxu0 0.0
  %392 = vmatpush1.msra.mxu0 0.0
  %393 = vmatprep.subr.mxu0 0.0
  %394 = vmatpush1.msra.mxu0 0.0
  %395 = vmatprep.subr.mxu0 0.0
  %396 = vmatpush1.msra.mxu0 0.0
  %397 = vmatprep.subr.mxu0 0.0
  %398 = vmatpush1.msra.mxu0 0.0
  %399 = vmatprep.subr.mxu0 0.0
  %400 = vmatpush1.msra.mxu0 0.0
  %401 = vmatprep.subr.mxu0 0.0
  %402 = vmatpush1.msra.mxu0 0.0
  %403 = vmatprep.subr.mxu0 0.0
  %404 = vmatpush1.msra.mxu0 0.0
  %405 = vmatprep.subr.mxu0 0.0
  %406 = vmatpush1.msra.mxu0 0.0
  %407 = vmatprep.subr.mxu0 0.0
  %408 = vmatpush1.msra.mxu0 0.0
  %409 = vmatprep.subr.mxu0 0.0
  %410 = vmatpush1.msra.mxu0 0.0
  %411 = vmatprep.subr.mxu0 0.0
  %412 = vmatpush1.msra.mxu0 0.0
  %413 = vmatprep.subr.mxu0 0.0
  %414 = vmatpush1.msra.mxu0 0.0
  %415 = vmatprep.subr.mxu0 0.0
  %416 = vmatpush1.msra.mxu0 0.0
  %417 = vmatprep.subr.mxu0 0.0
  %418 = vmatpush1.msra.mxu0 0.0
  %419 = vmatprep.subr.mxu0 0.0
  %420 = vmatpush1.msra.mxu0 0.0
  %421 = vmatprep.subr.mxu0 0.0
  %422 = vmatpush1.msra.mxu0 0.0
  %423 = vmatprep.subr.mxu0 0.0
  %424 = vmatpush1.msra.mxu0 0.0
  %425 = vmatprep.subr.mxu0 0.0
  %426 = vmatpush1.msra.mxu0 0.0
  %427 = vmatprep.subr.mxu0 0.0
  %428 = vmatpush1.msra.mxu0 0.0
  %429 = vmatprep.subr.mxu0 0.0
  %430 = vmatpush1.msra.mxu0 0.0
  %431 = vmatprep.subr.mxu0 0.0
  %432 = vmatpush1.msra.mxu0 0.0
  %433 = vmatprep.subr.mxu0 0.0
  %434 = vmatpush1.msra.mxu0 0.0
  %435 = vmatprep.subr.mxu0 0.0
  %436 = vmatpush1.msra.mxu0 0.0
  %437 = vmatprep.subr.mxu0 0.0
  %438 = vmatpush1.msra.mxu0 0.0
  %439 = vmatprep.subr.mxu0 0.0
  %440 = vmatpush1.msra.mxu0 0.0
  %441 = vmatprep.mubr.f32.mxu0 0.0
  %442 = vmatmul.mubr.f32.gmra.mrb[0].mxu0 %v91
  %v443 = vpop.f32.mrb[0].mxu0
  %v444 = vadd.f32 %v375, %v443
  %v445 = vpop.f32.mrb[0].mxu0
  %446 = vmatprep.mubr.f32.mxu0 0.0
  %447 = vmatmul.mubr.f32.gmra.mrb[0].mxu0 %v93
  %v448 = vpop.f32.mrb[0].mxu0
  %v449 = vadd.f32 %v375, %v448
  %v450 = vpop.f32.mrb[0].mxu0
  %451 = vdwg.mxu0
  %v454 = vcombine.high %v444, %v444
  %v456 = vunpack.c.l.s4 1983009808
  %v457 = vunpack.c.0.s8 %v456
  %v458 = vlaneseq
  %v459 = vshrl.u32 %v458, 7
  %v460 = vsub.s32 %v457, %v459
  %v461 = vrot.slane %v444, %v460
  %v463 = vunpack.c.l.s4 1983009808
  %v464 = vunpack.c.0.s8 %v463
  %v465 = vlaneseq
  %v466 = vshrl.u32 %v465, 7
  %v467 = vsub.s32 %v464, %v466
  %v468 = vrot.slane %v454, %v467
  %v469 = vcombine.high %v461, %v461
  %v470 = vcombine.high %v468, %v468
  %v471 = vcombine.high %v449, %v449
  %v473 = vunpack.c.l.s4 1983009808
  %v474 = vunpack.c.0.s8 %v473
  %v475 = vlaneseq
  %v476 = vshrl.u32 %v475, 7
  %v477 = vsub.s32 %v474, %v476
  %v478 = vrot.slane %v449, %v477
  %v480 = vunpack.c.l.s4 1983009808
  %v481 = vunpack.c.0.s8 %v480
  %v482 = vlaneseq
  %v483 = vshrl.u32 %v482, 7
  %v484 = vsub.s32 %v481, %v483
  %v485 = vrot.slane %v471, %v484
  %v486 = vcombine.high %v478, %v478
  %v487 = vcombine.high %v485, %v485
  %496 = vrot.lane.b32.xlu0 %v358, 64
  %v497 = vpop.permute.xlu0 %496
  %499 = vrot.lane.b32.xlu0 %v33, 32
  %v500 = vpop.permute.xlu0 %499
  %501 = vrot.lane.b32.xlu0 %v34, 32
  %v502 = vpop.permute.xlu0 %501
  %503 = vrot.lane.b32.xlu0 %v35, 32
  %v504 = vpop.permute.xlu0 %503
  %505 = vrot.lane.b32.xlu0 %v36, 32
  %v506 = vpop.permute.xlu0 %505
  %511 = vrot.lane.b32.xlu0 %v46, 32
  %v512 = vpop.permute.xlu0 %511
  %514 = vmatprep.subr.mxu0 0.0
  %515 = vmatpush1.msra.mxu0 %v500
  %516 = vmatprep.subr.mxu0 0.0
  %517 = vmatpush1.msra.mxu0 %v502
  %518 = vmatprep.subr.mxu0 0.0
  %519 = vmatpush1.msra.mxu0 %v504
  %520 = vmatprep.subr.mxu0 0.0
  %521 = vmatpush1.msra.mxu0 %v506
  %522 = vmatprep.subr.mxu0 0.0
  %523 = vmatpush1.msra.mxu0 0.0
  %524 = vmatprep.subr.mxu0 0.0
  %525 = vmatpush1.msra.mxu0 0.0
  %526 = vmatprep.subr.mxu0 0.0
  %527 = vmatpush1.msra.mxu0 0.0
  %528 = vmatprep.subr.mxu0 0.0
  %529 = vmatpush1.msra.mxu0 0.0
  %530 = vmatprep.subr.mxu0 0.0
  %531 = vmatpush1.msra.mxu0 0.0
  %532 = vmatprep.subr.mxu0 0.0
  %533 = vmatpush1.msra.mxu0 0.0
  %534 = vmatprep.subr.mxu0 0.0
  %535 = vmatpush1.msra.mxu0 0.0
  %536 = vmatprep.subr.mxu0 0.0
  %537 = vmatpush1.msra.mxu0 0.0
  %538 = vmatprep.subr.mxu0 0.0
  %539 = vmatpush1.msra.mxu0 0.0
  %540 = vmatprep.subr.mxu0 0.0
  %541 = vmatpush1.msra.mxu0 0.0
  %542 = vmatprep.subr.mxu0 0.0
  %543 = vmatpush1.msra.mxu0 0.0
  %544 = vmatprep.subr.mxu0 0.0
  %545 = vmatpush1.msra.mxu0 0.0
  %546 = vmatprep.subr.mxu0 0.0
  %547 = vmatpush1.msra.mxu0 0.0
  %548 = vmatprep.subr.mxu0 0.0
  %549 = vmatpush1.msra.mxu0 0.0
  %550 = vmatprep.subr.mxu0 0.0
  %551 = vmatpush1.msra.mxu0 0.0
  %552 = vmatprep.subr.mxu0 0.0
  %553 = vmatpush1.msra.mxu0 0.0
  %554 = vmatprep.subr.mxu0 0.0
  %555 = vmatpush1.msra.mxu0 0.0
  %556 = vmatprep.subr.mxu0 0.0
  %557 = vmatpush1.msra.mxu0 0.0
  %558 = vmatprep.subr.mxu0 0.0
  %559 = vmatpush1.msra.mxu0 0.0
  %560 = vmatprep.subr.mxu0 0.0
  %561 = vmatpush1.msra.mxu0 0.0
  %562 = vmatprep.subr.mxu0 0.0
  %563 = vmatpush1.msra.mxu0 0.0
  %564 = vmatprep.subr.mxu0 0.0
  %565 = vmatpush1.msra.mxu0 0.0
  %566 = vmatprep.subr.mxu0 0.0
  %567 = vmatpush1.msra.mxu0 0.0
  %568 = vmatprep.subr.mxu0 0.0
  %569 = vmatpush1.msra.mxu0 0.0
  %570 = vmatprep.subr.mxu0 0.0
  %571 = vmatpush1.msra.mxu0 0.0
  %572 = vmatprep.subr.mxu0 0.0
  %573 = vmatpush1.msra.mxu0 0.0
  %574 = vmatprep.subr.mxu0 0.0
  %575 = vmatpush1.msra.mxu0 0.0
  %576 = vmatprep.subr.mxu0 0.0
  %577 = vmatpush1.msra.mxu0 0.0
  %578 = vmatprep.mubr.f32.mxu0 0.0
  %579 = vmatmul.mubr.f32.gmra.mrb[0].mxu0 %v91
  %v580 = vpop.f32.mrb[0].mxu0
  %v581 = vadd.f32 %v512, %v580
  %v582 = vpop.f32.mrb[0].mxu0
  %583 = vmatprep.mubr.f32.mxu0 0.0
  %584 = vmatmul.mubr.f32.gmra.mrb[0].mxu0 %v93
  %v585 = vpop.f32.mrb[0].mxu0
  %v586 = vadd.f32 %v512, %v585
  %v587 = vpop.f32.mrb[0].mxu0
  %588 = vdwg.mxu0
  %v591 = vcombine.high %v581, %v581
  %v593 = vunpack.c.l.s4 1983009808
  %v594 = vunpack.c.0.s8 %v593
  %v595 = vlaneseq
  %v596 = vshrl.u32 %v595, 7
  %v597 = vsub.s32 %v594, %v596
  %v598 = vrot.slane %v581, %v597
  %v600 = vunpack.c.l.s4 1983009808
  %v601 = vunpack.c.0.s8 %v600
  %v602 = vlaneseq
  %v603 = vshrl.u32 %v602, 7
  %v604 = vsub.s32 %v601, %v603
  %v605 = vrot.slane %v591, %v604
  %v606 = vcombine.high %v598, %v598
  %v607 = vcombine.high %v605, %v605
  %v608 = vcombine.high %v586, %v586
  %v610 = vunpack.c.l.s4 1983009808
  %v611 = vunpack.c.0.s8 %v610
  %v612 = vlaneseq
  %v613 = vshrl.u32 %v612, 7
  %v614 = vsub.s32 %v611, %v613
  %v615 = vrot.slane %v586, %v614
  %v617 = vunpack.c.l.s4 1983009808
  %v618 = vunpack.c.0.s8 %v617
  %v619 = vlaneseq
  %v620 = vshrl.u32 %v619, 7
  %v621 = vsub.s32 %v618, %v620
  %v622 = vrot.slane %v608, %v621
  %v623 = vcombine.high %v615, %v615
  %v624 = vcombine.high %v622, %v622
  %633 = vrot.lane.b32.xlu0 %v358, 32
  %v634 = vpop.permute.xlu0 %633
  %v637 = vsel %vm90, 0.0, 0
  %639 = vmatprep.subr.mxu0 0.0
  %640 = vmatpush1.msra.mxu0 %v37
  %641 = vmatprep.subr.mxu0 0.0
  %642 = vmatpush1.msra.mxu0 %v38
  %643 = vmatprep.subr.mxu0 0.0
  %644 = vmatpush1.msra.mxu0 %v39
  %645 = vmatprep.subr.mxu0 0.0
  %646 = vmatpush1.msra.mxu0 %v40
  %647 = vmatprep.subr.mxu0 0.0
  %648 = vmatpush1.msra.mxu0 0.0
  %649 = vmatprep.subr.mxu0 0.0
  %650 = vmatpush1.msra.mxu0 0.0
  %651 = vmatprep.subr.mxu0 0.0
  %652 = vmatpush1.msra.mxu0 0.0
  %653 = vmatprep.subr.mxu0 0.0
  %654 = vmatpush1.msra.mxu0 0.0
  %655 = vmatprep.subr.mxu0 0.0
  %656 = vmatpush1.msra.mxu0 0.0
  %657 = vmatprep.subr.mxu0 0.0
  %658 = vmatpush1.msra.mxu0 0.0
  %659 = vmatprep.subr.mxu0 0.0
  %660 = vmatpush1.msra.mxu0 0.0
  %661 = vmatprep.subr.mxu0 0.0
  %662 = vmatpush1.msra.mxu0 0.0
  %663 = vmatprep.subr.mxu0 0.0
  %664 = vmatpush1.msra.mxu0 0.0
  %665 = vmatprep.subr.mxu0 0.0
  %666 = vmatpush1.msra.mxu0 0.0
  %667 = vmatprep.subr.mxu0 0.0
  %668 = vmatpush1.msra.mxu0 0.0
  %669 = vmatprep.subr.mxu0 0.0
  %670 = vmatpush1.msra.mxu0 0.0
  %671 = vmatprep.subr.mxu0 0.0
  %672 = vmatpush1.msra.mxu0 0.0
  %673 = vmatprep.subr.mxu0 0.0
  %674 = vmatpush1.msra.mxu0 0.0
  %675 = vmatprep.subr.mxu0 0.0
  %676 = vmatpush1.msra.mxu0 0.0
  %677 = vmatprep.subr.mxu0 0.0
  %678 = vmatpush1.msra.mxu0 0.0
  %679 = vmatprep.subr.mxu0 0.0
  %680 = vmatpush1.msra.mxu0 0.0
  %681 = vmatprep.subr.mxu0 0.0
  %682 = vmatpush1.msra.mxu0 0.0
  %683 = vmatprep.subr.mxu0 0.0
  %684 = vmatpush1.msra.mxu0 0.0
  %685 = vmatprep.subr.mxu0 0.0
  %686 = vmatpush1.msra.mxu0 0.0
  %687 = vmatprep.subr.mxu0 0.0
  %688 = vmatpush1.msra.mxu0 0.0
  %689 = vmatprep.subr.mxu0 0.0
  %690 = vmatpush1.msra.mxu0 0.0
  %691 = vmatprep.subr.mxu0 0.0
  %692 = vmatpush1.msra.mxu0 0.0
  %693 = vmatprep.subr.mxu0 0.0
  %694 = vmatpush1.msra.mxu0 0.0
  %695 = vmatprep.subr.mxu0 0.0
  %696 = vmatpush1.msra.mxu0 0.0
  %697 = vmatprep.subr.mxu0 0.0
  %698 = vmatpush1.msra.mxu0 0.0
  %699 = vmatprep.subr.mxu0 0.0
  %700 = vmatpush1.msra.mxu0 0.0
  %701 = vmatprep.subr.mxu0 0.0
  %702 = vmatpush1.msra.mxu0 0.0
  %703 = vmatprep.mubr.f32.mxu0 0.0
  %704 = vmatmul.mubr.f32.gmra.mrb[0].mxu0 %v637
  %v705 = vpop.f32.mrb[0].mxu0
  %v706 = vadd.f32 0.0, %v705
  %v707 = vpop.f32.mrb[0].mxu0
  %708 = vdwg.mxu0
  %v709 = vadd.f32 %v179, %v706
  %714 = vrot.lane.b32.xlu0 %v37, 96
  %v715 = vpop.permute.xlu0 %714
  %716 = vrot.lane.b32.xlu0 %v38, 96
  %v717 = vpop.permute.xlu0 %716
  %718 = vrot.lane.b32.xlu0 %v39, 96
  %v719 = vpop.permute.xlu0 %718
  %720 = vrot.lane.b32.xlu0 %v40, 96
  %v721 = vpop.permute.xlu0 %720
  %726 = vmatprep.subr.mxu0 0.0
  %727 = vmatpush1.msra.mxu0 %v715
  %728 = vmatprep.subr.mxu0 0.0
  %729 = vmatpush1.msra.mxu0 %v717
  %730 = vmatprep.subr.mxu0 0.0
  %731 = vmatpush1.msra.mxu0 %v719
  %732 = vmatprep.subr.mxu0 0.0
  %733 = vmatpush1.msra.mxu0 %v721
  %734 = vmatprep.subr.mxu0 0.0
  %735 = vmatpush1.msra.mxu0 0.0
  %736 = vmatprep.subr.mxu0 0.0
  %737 = vmatpush1.msra.mxu0 0.0
  %738 = vmatprep.subr.mxu0 0.0
  %739 = vmatpush1.msra.mxu0 0.0
  %740 = vmatprep.subr.mxu0 0.0
  %741 = vmatpush1.msra.mxu0 0.0
  %742 = vmatprep.subr.mxu0 0.0
  %743 = vmatpush1.msra.mxu0 0.0
  %744 = vmatprep.subr.mxu0 0.0
  %745 = vmatpush1.msra.mxu0 0.0
  %746 = vmatprep.subr.mxu0 0.0
  %747 = vmatpush1.msra.mxu0 0.0
  %748 = vmatprep.subr.mxu0 0.0
  %749 = vmatpush1.msra.mxu0 0.0
  %750 = vmatprep.subr.mxu0 0.0
  %751 = vmatpush1.msra.mxu0 0.0
  %752 = vmatprep.subr.mxu0 0.0
  %753 = vmatpush1.msra.mxu0 0.0
  %754 = vmatprep.subr.mxu0 0.0
  %755 = vmatpush1.msra.mxu0 0.0
  %756 = vmatprep.subr.mxu0 0.0
  %757 = vmatpush1.msra.mxu0 0.0
  %758 = vmatprep.subr.mxu0 0.0
  %759 = vmatpush1.msra.mxu0 0.0
  %760 = vmatprep.subr.mxu0 0.0
  %761 = vmatpush1.msra.mxu0 0.0
  %762 = vmatprep.subr.mxu0 0.0
  %763 = vmatpush1.msra.mxu0 0.0
  %764 = vmatprep.subr.mxu0 0.0
  %765 = vmatpush1.msra.mxu0 0.0
  %766 = vmatprep.subr.mxu0 0.0
  %767 = vmatpush1.msra.mxu0 0.0
  %768 = vmatprep.subr.mxu0 0.0
  %769 = vmatpush1.msra.mxu0 0.0
  %770 = vmatprep.subr.mxu0 0.0
  %771 = vmatpush1.msra.mxu0 0.0
  %772 = vmatprep.subr.mxu0 0.0
  %773 = vmatpush1.msra.mxu0 0.0
  %774 = vmatprep.subr.mxu0 0.0
  %775 = vmatpush1.msra.mxu0 0.0
  %776 = vmatprep.subr.mxu0 0.0
  %777 = vmatpush1.msra.mxu0 0.0
  %778 = vmatprep.subr.mxu0 0.0
  %779 = vmatpush1.msra.mxu0 0.0
  %780 = vmatprep.subr.mxu0 0.0
  %781 = vmatpush1.msra.mxu0 0.0
  %782 = vmatprep.subr.mxu0 0.0
  %783 = vmatpush1.msra.mxu0 0.0
  %784 = vmatprep.subr.mxu0 0.0
  %785 = vmatpush1.msra.mxu0 0.0
  %786 = vmatprep.subr.mxu0 0.0
  %787 = vmatpush1.msra.mxu0 0.0
  %788 = vmatprep.subr.mxu0 0.0
  %789 = vmatpush1.msra.mxu0 0.0
  %790 = vmatprep.mubr.f32.mxu0 0.0
  %791 = vmatmul.mubr.f32.gmra.mrb[0].mxu0 %v637
  %v792 = vpop.f32.mrb[0].mxu0
  %v793 = vadd.f32 0.0, %v792
  %v794 = vpop.f32.mrb[0].mxu0
  %795 = vdwg.mxu0
  %v796 = vadd.f32 %v317, %v793
  %797 = vrot.lane.b32.xlu0 %v37, 64
  %v798 = vpop.permute.xlu0 %797
  %799 = vrot.lane.b32.xlu0 %v38, 64
  %v800 = vpop.permute.xlu0 %799
  %801 = vrot.lane.b32.xlu0 %v39, 64
  %v802 = vpop.permute.xlu0 %801
  %803 = vrot.lane.b32.xlu0 %v40, 64
  %v804 = vpop.permute.xlu0 %803
  %809 = vmatprep.subr.mxu0 0.0
  %810 = vmatpush1.msra.mxu0 %v798
  %811 = vmatprep.subr.mxu0 0.0
  %812 = vmatpush1.msra.mxu0 %v800
  %813 = vmatprep.subr.mxu0 0.0
  %814 = vmatpush1.msra.mxu0 %v802
  %815 = vmatprep.subr.mxu0 0.0
  %816 = vmatpush1.msra.mxu0 %v804
  %817 = vmatprep.subr.mxu0 0.0
  %818 = vmatpush1.msra.mxu0 0.0
  %819 = vmatprep.subr.mxu0 0.0
  %820 = vmatpush1.msra.mxu0 0.0
  %821 = vmatprep.subr.mxu0 0.0
  %822 = vmatpush1.msra.mxu0 0.0
  %823 = vmatprep.subr.mxu0 0.0
  %824 = vmatpush1.msra.mxu0 0.0
  %825 = vmatprep.subr.mxu0 0.0
  %826 = vmatpush1.msra.mxu0 0.0
  %827 = vmatprep.subr.mxu0 0.0
  %828 = vmatpush1.msra.mxu0 0.0
  %829 = vmatprep.subr.mxu0 0.0
  %830 = vmatpush1.msra.mxu0 0.0
  %831 = vmatprep.subr.mxu0 0.0
  %832 = vmatpush1.msra.mxu0 0.0
  %833 = vmatprep.subr.mxu0 0.0
  %834 = vmatpush1.msra.mxu0 0.0
  %835 = vmatprep.subr.mxu0 0.0
  %836 = vmatpush1.msra.mxu0 0.0
  %837 = vmatprep.subr.mxu0 0.0
  %838 = vmatpush1.msra.mxu0 0.0
  %839 = vmatprep.subr.mxu0 0.0
  %840 = vmatpush1.msra.mxu0 0.0
  %841 = vmatprep.subr.mxu0 0.0
  %842 = vmatpush1.msra.mxu0 0.0
  %843 = vmatprep.subr.mxu0 0.0
  %844 = vmatpush1.msra.mxu0 0.0
  %845 = vmatprep.subr.mxu0 0.0
  %846 = vmatpush1.msra.mxu0 0.0
  %847 = vmatprep.subr.mxu0 0.0
  %848 = vmatpush1.msra.mxu0 0.0
  %849 = vmatprep.subr.mxu0 0.0
  %850 = vmatpush1.msra.mxu0 0.0
  %851 = vmatprep.subr.mxu0 0.0
  %852 = vmatpush1.msra.mxu0 0.0
  %853 = vmatprep.subr.mxu0 0.0
  %854 = vmatpush1.msra.mxu0 0.0
  %855 = vmatprep.subr.mxu0 0.0
  %856 = vmatpush1.msra.mxu0 0.0
  %857 = vmatprep.subr.mxu0 0.0
  %858 = vmatpush1.msra.mxu0 0.0
  %859 = vmatprep.subr.mxu0 0.0
  %860 = vmatpush1.msra.mxu0 0.0
  %861 = vmatprep.subr.mxu0 0.0
  %862 = vmatpush1.msra.mxu0 0.0
  %863 = vmatprep.subr.mxu0 0.0
  %864 = vmatpush1.msra.mxu0 0.0
  %865 = vmatprep.subr.mxu0 0.0
  %866 = vmatpush1.msra.mxu0 0.0
  %867 = vmatprep.subr.mxu0 0.0
  %868 = vmatpush1.msra.mxu0 0.0
  %869 = vmatprep.subr.mxu0 0.0
  %870 = vmatpush1.msra.mxu0 0.0
  %871 = vmatprep.subr.mxu0 0.0
  %872 = vmatpush1.msra.mxu0 0.0
  %873 = vmatprep.mubr.f32.mxu0 0.0
  %874 = vmatmul.mubr.f32.gmra.mrb[0].mxu0 %v637
  %v875 = vpop.f32.mrb[0].mxu0
  %v876 = vadd.f32 0.0, %v875
  %v877 = vpop.f32.mrb[0].mxu0
  %878 = vdwg.mxu0
  %v879 = vadd.f32 %v461, %v876
  %880 = vrot.lane.b32.xlu0 %v37, 32
  %v881 = vpop.permute.xlu0 %880
  %882 = vrot.lane.b32.xlu0 %v38, 32
  %v883 = vpop.permute.xlu0 %882
  %884 = vrot.lane.b32.xlu0 %v39, 32
  %v885 = vpop.permute.xlu0 %884
  %886 = vrot.lane.b32.xlu0 %v40, 32
  %v887 = vpop.permute.xlu0 %886
  %892 = vmatprep.subr.mxu0 0.0
  %893 = vmatpush1.msra.mxu0 %v881
  %894 = vmatprep.subr.mxu0 0.0
  %895 = vmatpush1.msra.mxu0 %v883
  %896 = vmatprep.subr.mxu0 0.0
  %897 = vmatpush1.msra.mxu0 %v885
  %898 = vmatprep.subr.mxu0 0.0
  %899 = vmatpush1.msra.mxu0 %v887
  %900 = vmatprep.subr.mxu0 0.0
  %901 = vmatpush1.msra.mxu0 0.0
  %902 = vmatprep.subr.mxu0 0.0
  %903 = vmatpush1.msra.mxu0 0.0
  %904 = vmatprep.subr.mxu0 0.0
  %905 = vmatpush1.msra.mxu0 0.0
  %906 = vmatprep.subr.mxu0 0.0
  %907 = vmatpush1.msra.mxu0 0.0
  %908 = vmatprep.subr.mxu0 0.0
  %909 = vmatpush1.msra.mxu0 0.0
  %910 = vmatprep.subr.mxu0 0.0
  %911 = vmatpush1.msra.mxu0 0.0
  %912 = vmatprep.subr.mxu0 0.0
  %913 = vmatpush1.msra.mxu0 0.0
  %914 = vmatprep.subr.mxu0 0.0
  %915 = vmatpush1.msra.mxu0 0.0
  %916 = vmatprep.subr.mxu0 0.0
  %917 = vmatpush1.msra.mxu0 0.0
  %918 = vmatprep.subr.mxu0 0.0
  %919 = vmatpush1.msra.mxu0 0.0
  %920 = vmatprep.subr.mxu0 0.0
  %921 = vmatpush1.msra.mxu0 0.0
  %922 = vmatprep.subr.mxu0 0.0
  %923 = vmatpush1.msra.mxu0 0.0
  %924 = vmatprep.subr.mxu0 0.0
  %925 = vmatpush1.msra.mxu0 0.0
  %926 = vmatprep.subr.mxu0 0.0
  %927 = vmatpush1.msra.mxu0 0.0
  %928 = vmatprep.subr.mxu0 0.0
  %929 = vmatpush1.msra.mxu0 0.0
  %930 = vmatprep.subr.mxu0 0.0
  %931 = vmatpush1.msra.mxu0 0.0
  %932 = vmatprep.subr.mxu0 0.0
  %933 = vmatpush1.msra.mxu0 0.0
  %934 = vmatprep.subr.mxu0 0.0
  %935 = vmatpush1.msra.mxu0 0.0
  %936 = vmatprep.subr.mxu0 0.0
  %937 = vmatpush1.msra.mxu0 0.0
  %938 = vmatprep.subr.mxu0 0.0
  %939 = vmatpush1.msra.mxu0 0.0
  %940 = vmatprep.subr.mxu0 0.0
  %941 = vmatpush1.msra.mxu0 0.0
  %942 = vmatprep.subr.mxu0 0.0
  %943 = vmatpush1.msra.mxu0 0.0
  %944 = vmatprep.subr.mxu0 0.0
  %945 = vmatpush1.msra.mxu0 0.0
  %946 = vmatprep.subr.mxu0 0.0
  %947 = vmatpush1.msra.mxu0 0.0
  %948 = vmatprep.subr.mxu0 0.0
  %949 = vmatpush1.msra.mxu0 0.0
  %950 = vmatprep.subr.mxu0 0.0
  %951 = vmatpush1.msra.mxu0 0.0
  %952 = vmatprep.subr.mxu0 0.0
  %953 = vmatpush1.msra.mxu0 0.0
  %954 = vmatprep.subr.mxu0 0.0
  %955 = vmatpush1.msra.mxu0 0.0
  %956 = vmatprep.mubr.f32.mxu0 0.0
  %957 = vmatmul.mubr.f32.gmra.mrb[0].mxu0 %v637
  %v958 = vpop.f32.mrb[0].mxu0
  %v959 = vadd.f32 0.0, %v958
  %v960 = vpop.f32.mrb[0].mxu0
  %961 = vdwg.mxu0
  %v962 = vadd.f32 %v598, %v959
  %v963 = vxor.u32 %v709, 2147483648
  %v964 = vmul.f32 %v963, 1.442695
  %v965 = vpow.pop %v964
  %v966 = vadd.f32 %v965, 1.0
  %v967 = vrcp.pop %v966
  %v968 = vmul.f32 1.0, %v967
  %v969 = vxor.u32 %v796, 2147483648
  %v970 = vmul.f32 %v969, 1.442695
  %v971 = vpow.pop %v970
  %v972 = vadd.f32 %v971, 1.0
  %v973 = vrcp.pop %v972
  %v974 = vmul.f32 1.0, %v973
  %v975 = vtanh.pop %v879
  %v976 = vxor.u32 %v962, 2147483648
  %v977 = vmul.f32 %v976, 1.442695
  %v978 = vpow.pop %v977
  %v979 = vadd.f32 %v978, 1.0
  %v980 = vrcp.pop %v979
  %v981 = vmul.f32 1.0, %v980
  %v982 = vmul.f32 %v974, 0.0
  %v983 = vmul.f32 %v968, %v975
  %v984 = vadd.f32 %v982, %v983
  %v985 = vtanh.pop %v984
  %v986 = vmul.f32 %v981, %v985
  %vm987 = vcmask 254976
  %988 = vst.msk [vmem:[#allocation2] sm:$0x3] %vm987, %v986
  %v990 = vsel %vm90, %v986, 0
  %992 = vmatprep.subr.mxu0 0.0
  %993 = vmatpush1.msra.mxu0 %v37
  %994 = vmatprep.subr.mxu0 0.0
  %995 = vmatpush1.msra.mxu0 %v38
  %996 = vmatprep.subr.mxu0 0.0
  %997 = vmatpush1.msra.mxu0 %v39
  %998 = vmatprep.subr.mxu0 0.0
  %999 = vmatpush1.msra.mxu0 %v40
  %1000 = vmatprep.subr.mxu0 0.0
  %1001 = vmatpush1.msra.mxu0 0.0
  %1002 = vmatprep.subr.mxu0 0.0
  %1003 = vmatpush1.msra.mxu0 0.0
  %1004 = vmatprep.subr.mxu0 0.0
  %1005 = vmatpush1.msra.mxu0 0.0
  %1006 = vmatprep.subr.mxu0 0.0
  %1007 = vmatpush1.msra.mxu0 0.0
  %1008 = vmatprep.subr.mxu0 0.0
  %1009 = vmatpush1.msra.mxu0 0.0
  %1010 = vmatprep.subr.mxu0 0.0
  %1011 = vmatpush1.msra.mxu0 0.0
  %1012 = vmatprep.subr.mxu0 0.0
  %1013 = vmatpush1.msra.mxu0 0.0
  %1014 = vmatprep.subr.mxu0 0.0
  %1015 = vmatpush1.msra.mxu0 0.0
  %1016 = vmatprep.subr.mxu0 0.0
  %1017 = vmatpush1.msra.mxu0 0.0
  %1018 = vmatprep.subr.mxu0 0.0
  %1019 = vmatpush1.msra.mxu0 0.0
  %1020 = vmatprep.subr.mxu0 0.0
  %1021 = vmatpush1.msra.mxu0 0.0
  %1022 = vmatprep.subr.mxu0 0.0
  %1023 = vmatpush1.msra.mxu0 0.0
  %1024 = vmatprep.subr.mxu0 0.0
  %1025 = vmatpush1.msra.mxu0 0.0
  %1026 = vmatprep.subr.mxu0 0.0
  %1027 = vmatpush1.msra.mxu0 0.0
  %1028 = vmatprep.subr.mxu0 0.0
  %1029 = vmatpush1.msra.mxu0 0.0
  %1030 = vmatprep.subr.mxu0 0.0
  %1031 = vmatpush1.msra.mxu0 0.0
  %1032 = vmatprep.subr.mxu0 0.0
  %1033 = vmatpush1.msra.mxu0 0.0
  %1034 = vmatprep.subr.mxu0 0.0
  %1035 = vmatpush1.msra.mxu0 0.0
  %1036 = vmatprep.subr.mxu0 0.0
  %1037 = vmatpush1.msra.mxu0 0.0
  %1038 = vmatprep.subr.mxu0 0.0
  %1039 = vmatpush1.msra.mxu0 0.0
  %1040 = vmatprep.subr.mxu0 0.0
  %1041 = vmatpush1.msra.mxu0 0.0
  %1042 = vmatprep.subr.mxu0 0.0
  %1043 = vmatpush1.msra.mxu0 0.0
  %1044 = vmatprep.subr.mxu0 0.0
  %1045 = vmatpush1.msra.mxu0 0.0
  %1046 = vmatprep.subr.mxu0 0.0
  %1047 = vmatpush1.msra.mxu0 0.0
  %1048 = vmatprep.subr.mxu0 0.0
  %1049 = vmatpush1.msra.mxu0 0.0
  %1050 = vmatprep.subr.mxu0 0.0
  %1051 = vmatpush1.msra.mxu0 0.0
  %1052 = vmatprep.subr.mxu0 0.0
  %1053 = vmatpush1.msra.mxu0 0.0
  %1054 = vmatprep.subr.mxu0 0.0
  %1055 = vmatpush1.msra.mxu0 0.0
  %1056 = vmatprep.mubr.f32.mxu0 0.0
  %1057 = vmatmul.mubr.f32.gmra.mrb[0].mxu0 %v990
  %v1058 = vpop.f32.mrb[0].mxu0
  %v1059 = vadd.f32 0.0, %v1058
  %v1060 = vpop.f32.mrb[0].mxu0
  %1061 = vdwg.mxu0
  %v1062 = vadd.f32 %v187, %v1059
  %1063 = vmatprep.subr.mxu0 0.0
  %1064 = vmatpush1.msra.mxu0 %v715
  %1065 = vmatprep.subr.mxu0 0.0
  %1066 = vmatpush1.msra.mxu0 %v717
  %1067 = vmatprep.subr.mxu0 0.0
  %1068 = vmatpush1.msra.mxu0 %v719
  %1069 = vmatprep.subr.mxu0 0.0
  %1070 = vmatpush1.msra.mxu0 %v721
  %1071 = vmatprep.subr.mxu0 0.0
  %1072 = vmatpush1.msra.mxu0 0.0
  %1073 = vmatprep.subr.mxu0 0.0
  %1074 = vmatpush1.msra.mxu0 0.0
  %1075 = vmatprep.subr.mxu0 0.0
  %1076 = vmatpush1.msra.mxu0 0.0
  %1077 = vmatprep.subr.mxu0 0.0
  %1078 = vmatpush1.msra.mxu0 0.0
  %1079 = vmatprep.subr.mxu0 0.0
  %1080 = vmatpush1.msra.mxu0 0.0
  %1081 = vmatprep.subr.mxu0 0.0
  %1082 = vmatpush1.msra.mxu0 0.0
  %1083 = vmatprep.subr.mxu0 0.0
  %1084 = vmatpush1.msra.mxu0 0.0
  %1085 = vmatprep.subr.mxu0 0.0
  %1086 = vmatpush1.msra.mxu0 0.0
  %1087 = vmatprep.subr.mxu0 0.0
  %1088 = vmatpush1.msra.mxu0 0.0
  %1089 = vmatprep.subr.mxu0 0.0
  %1090 = vmatpush1.msra.mxu0 0.0
  %1091 = vmatprep.subr.mxu0 0.0
  %1092 = vmatpush1.msra.mxu0 0.0
  %1093 = vmatprep.subr.mxu0 0.0
  %1094 = vmatpush1.msra.mxu0 0.0
  %1095 = vmatprep.subr.mxu0 0.0
  %1096 = vmatpush1.msra.mxu0 0.0
  %1097 = vmatprep.subr.mxu0 0.0
  %1098 = vmatpush1.msra.mxu0 0.0
  %1099 = vmatprep.subr.mxu0 0.0
  %1100 = vmatpush1.msra.mxu0 0.0
  %1101 = vmatprep.subr.mxu0 0.0
  %1102 = vmatpush1.msra.mxu0 0.0
  %1103 = vmatprep.subr.mxu0 0.0
  %1104 = vmatpush1.msra.mxu0 0.0
  %1105 = vmatprep.subr.mxu0 0.0
  %1106 = vmatpush1.msra.mxu0 0.0
  %1107 = vmatprep.subr.mxu0 0.0
  %1108 = vmatpush1.msra.mxu0 0.0
  %1109 = vmatprep.subr.mxu0 0.0
  %1110 = vmatpush1.msra.mxu0 0.0
  %1111 = vmatprep.subr.mxu0 0.0
  %1112 = vmatpush1.msra.mxu0 0.0
  %1113 = vmatprep.subr.mxu0 0.0
  %1114 = vmatpush1.msra.mxu0 0.0
  %1115 = vmatprep.subr.mxu0 0.0
  %1116 = vmatpush1.msra.mxu0 0.0
  %1117 = vmatprep.subr.mxu0 0.0
  %1118 = vmatpush1.msra.mxu0 0.0
  %1119 = vmatprep.subr.mxu0 0.0
  %1120 = vmatpush1.msra.mxu0 0.0
  %1121 = vmatprep.subr.mxu0 0.0
  %1122 = vmatpush1.msra.mxu0 0.0
  %1123 = vmatprep.subr.mxu0 0.0
  %1124 = vmatpush1.msra.mxu0 0.0
  %1125 = vmatprep.subr.mxu0 0.0
  %1126 = vmatpush1.msra.mxu0 0.0
  %1127 = vmatprep.mubr.f32.mxu0 0.0
  %1128 = vmatmul.mubr.f32.gmra.mrb[0].mxu0 %v990
  %v1129 = vpop.f32.mrb[0].mxu0
  %v1130 = vadd.f32 0.0, %v1129
  %v1131 = vpop.f32.mrb[0].mxu0
  %1132 = vdwg.mxu0
  %v1133 = vadd.f32 %v325, %v1130
  %1134 = vmatprep.subr.mxu0 0.0
  %1135 = vmatpush1.msra.mxu0 %v798
  %1136 = vmatprep.subr.mxu0 0.0
  %1137 = vmatpush1.msra.mxu0 %v800
  %1138 = vmatprep.subr.mxu0 0.0
  %1139 = vmatpush1.msra.mxu0 %v802
  %1140 = vmatprep.subr.mxu0 0.0
  %1141 = vmatpush1.msra.mxu0 %v804
  %1142 = vmatprep.subr.mxu0 0.0
  %1143 = vmatpush1.msra.mxu0 0.0
  %1144 = vmatprep.subr.mxu0 0.0
  %1145 = vmatpush1.msra.mxu0 0.0
  %1146 = vmatprep.subr.mxu0 0.0
  %1147 = vmatpush1.msra.mxu0 0.0
  %1148 = vmatprep.subr.mxu0 0.0
  %1149 = vmatpush1.msra.mxu0 0.0
  %1150 = vmatprep.subr.mxu0 0.0
  %1151 = vmatpush1.msra.mxu0 0.0
  %1152 = vmatprep.subr.mxu0 0.0
  %1153 = vmatpush1.msra.mxu0 0.0
  %1154 = vmatprep.subr.mxu0 0.0
  %1155 = vmatpush1.msra.mxu0 0.0
  %1156 = vmatprep.subr.mxu0 0.0
  %1157 = vmatpush1.msra.mxu0 0.0
  %1158 = vmatprep.subr.mxu0 0.0
  %1159 = vmatpush1.msra.mxu0 0.0
  %1160 = vmatprep.subr.mxu0 0.0
  %1161 = vmatpush1.msra.mxu0 0.0
  %1162 = vmatprep.subr.mxu0 0.0
  %1163 = vmatpush1.msra.mxu0 0.0
  %1164 = vmatprep.subr.mxu0 0.0
  %1165 = vmatpush1.msra.mxu0 0.0
  %1166 = vmatprep.subr.mxu0 0.0
  %1167 = vmatpush1.msra.mxu0 0.0
  %1168 = vmatprep.subr.mxu0 0.0
  %1169 = vmatpush1.msra.mxu0 0.0
  %1170 = vmatprep.subr.mxu0 0.0
  %1171 = vmatpush1.msra.mxu0 0.0
  %1172 = vmatprep.subr.mxu0 0.0
  %1173 = vmatpush1.msra.mxu0 0.0
  %1174 = vmatprep.subr.mxu0 0.0
  %1175 = vmatpush1.msra.mxu0 0.0
  %1176 = vmatprep.subr.mxu0 0.0
  %1177 = vmatpush1.msra.mxu0 0.0
  %1178 = vmatprep.subr.mxu0 0.0
  %1179 = vmatpush1.msra.mxu0 0.0
  %1180 = vmatprep.subr.mxu0 0.0
  %1181 = vmatpush1.msra.mxu0 0.0
  %1182 = vmatprep.subr.mxu0 0.0
  %1183 = vmatpush1.msra.mxu0 0.0
  %1184 = vmatprep.subr.mxu0 0.0
  %1185 = vmatpush1.msra.mxu0 0.0
  %1186 = vmatprep.subr.mxu0 0.0
  %1187 = vmatpush1.msra.mxu0 0.0
  %1188 = vmatprep.subr.mxu0 0.0
  %1189 = vmatpush1.msra.mxu0 0.0
  %1190 = vmatprep.subr.mxu0 0.0
  %1191 = vmatpush1.msra.mxu0 0.0
  %1192 = vmatprep.subr.mxu0 0.0
  %1193 = vmatpush1.msra.mxu0 0.0
  %1194 = vmatprep.subr.mxu0 0.0
  %1195 = vmatpush1.msra.mxu0 0.0
  %1196 = vmatprep.subr.mxu0 0.0
  %1197 = vmatpush1.msra.mxu0 0.0
  %1198 = vmatprep.mubr.f32.mxu0 0.0
  %1199 = vmatmul.mubr.f32.gmra.mrb[0].mxu0 %v990
  %v1200 = vpop.f32.mrb[0].mxu0
  %v1201 = vadd.f32 0.0, %v1200
  %v1202 = vpop.f32.mrb[0].mxu0
  %1203 = vdwg.mxu0
  %v1204 = vadd.f32 %v469, %v1201
  %1205 = vmatprep.subr.mxu0 0.0
  %1206 = vmatpush1.msra.mxu0 %v881
  %1207 = vmatprep.subr.mxu0 0.0
  %1208 = vmatpush1.msra.mxu0 %v883
  %1209 = vmatprep.subr.mxu0 0.0
  %1210 = vmatpush1.msra.mxu0 %v885
  %1211 = vmatprep.subr.mxu0 0.0
  %1212 = vmatpush1.msra.mxu0 %v887
  %1213 = vmatprep.subr.mxu0 0.0
  %1214 = vmatpush1.msra.mxu0 0.0
  %1215 = vmatprep.subr.mxu0 0.0
  %1216 = vmatpush1.msra.mxu0 0.0
  %1217 = vmatprep.subr.mxu0 0.0
  %1218 = vmatpush1.msra.mxu0 0.0
  %1219 = vmatprep.subr.mxu0 0.0
  %1220 = vmatpush1.msra.mxu0 0.0
  %1221 = vmatprep.subr.mxu0 0.0
  %1222 = vmatpush1.msra.mxu0 0.0
  %1223 = vmatprep.subr.mxu0 0.0
  %1224 = vmatpush1.msra.mxu0 0.0
  %1225 = vmatprep.subr.mxu0 0.0
  %1226 = vmatpush1.msra.mxu0 0.0
  %1227 = vmatprep.subr.mxu0 0.0
  %1228 = vmatpush1.msra.mxu0 0.0
  %1229 = vmatprep.subr.mxu0 0.0
  %1230 = vmatpush1.msra.mxu0 0.0
  %1231 = vmatprep.subr.mxu0 0.0
  %1232 = vmatpush1.msra.mxu0 0.0
  %1233 = vmatprep.subr.mxu0 0.0
  %1234 = vmatpush1.msra.mxu0 0.0
  %1235 = vmatprep.subr.mxu0 0.0
  %1236 = vmatpush1.msra.mxu0 0.0
  %1237 = vmatprep.subr.mxu0 0.0
  %1238 = vmatpush1.msra.mxu0 0.0
  %1239 = vmatprep.subr.mxu0 0.0
  %1240 = vmatpush1.msra.mxu0 0.0
  %1241 = vmatprep.subr.mxu0 0.0
  %1242 = vmatpush1.msra.mxu0 0.0
  %1243 = vmatprep.subr.mxu0 0.0
  %1244 = vmatpush1.msra.mxu0 0.0
  %1245 = vmatprep.subr.mxu0 0.0
  %1246 = vmatpush1.msra.mxu0 0.0
  %1247 = vmatprep.subr.mxu0 0.0
  %1248 = vmatpush1.msra.mxu0 0.0
  %1249 = vmatprep.subr.mxu0 0.0
  %1250 = vmatpush1.msra.mxu0 0.0
  %1251 = vmatprep.subr.mxu0 0.0
  %1252 = vmatpush1.msra.mxu0 0.0
  %1253 = vmatprep.subr.mxu0 0.0
  %1254 = vmatpush1.msra.mxu0 0.0
  %1255 = vmatprep.subr.mxu0 0.0
  %1256 = vmatpush1.msra.mxu0 0.0
  %1257 = vmatprep.subr.mxu0 0.0
  %1258 = vmatpush1.msra.mxu0 0.0
  %1259 = vmatprep.subr.mxu0 0.0
  %1260 = vmatpush1.msra.mxu0 0.0
  %1261 = vmatprep.subr.mxu0 0.0
  %1262 = vmatpush1.msra.mxu0 0.0
  %1263 = vmatprep.subr.mxu0 0.0
  %1264 = vmatpush1.msra.mxu0 0.0
  %1265 = vmatprep.subr.mxu0 0.0
  %1266 = vmatpush1.msra.mxu0 0.0
  %1267 = vmatprep.subr.mxu0 0.0
  %1268 = vmatpush1.msra.mxu0 0.0
  %1269 = vmatprep.mubr.f32.mxu0 0.0
  %1270 = vmatmul.mubr.f32.gmra.mrb[0].mxu0 %v990
  %v1271 = vpop.f32.mrb[0].mxu0
  %v1272 = vadd.f32 0.0, %v1271
  %v1273 = vpop.f32.mrb[0].mxu0
  %1274 = vdwg.mxu0
  %v1275 = vadd.f32 %v606, %v1272
  %v1276 = vxor.u32 %v1062, 2147483648
  %v1277 = vmul.f32 %v1276, 1.442695
  %v1278 = vpow.pop %v1277
  %v1279 = vadd.f32 %v1278, 1.0
  %v1280 = vrcp.pop %v1279
  %v1281 = vmul.f32 1.0, %v1280
  %v1282 = vxor.u32 %v1133, 2147483648
  %v1283 = vmul.f32 %v1282, 1.442695
  %v1284 = vpow.pop %v1283
  %v1285 = vadd.f32 %v1284, 1.0
  %v1286 = vrcp.pop %v1285
  %v1287 = vmul.f32 1.0, %v1286
  %v1288 = vtanh.pop %v1204
  %v1289 = vxor.u32 %v1275, 2147483648
  %v1290 = vmul.f32 %v1289, 1.442695
  %v1291 = vpow.pop %v1290
  %v1292 = vadd.f32 %v1291, 1.0
  %v1293 = vrcp.pop %v1292
  %v1294 = vmul.f32 1.0, %v1293
  %v1295 = vmul.f32 %v1287, %v984
  %v1296 = vmul.f32 %v1281, %v1288
  %v1297 = vadd.f32 %v1295, %v1296
  %v1298 = vtanh.pop %v1297
  %v1299 = vmul.f32 %v1294, %v1298
  %s1300 = scalar_lea.vmem [#allocation2], 2
  %1301 = vst.msk [vmem:[%s1300] sm:$0x3] %vm987, %v1299
  %v1303 = vsel %vm90, %v1299, 0
  %1305 = vmatprep.subr.mxu0 0.0
  %1306 = vmatpush1.msra.mxu0 %v37
  %1307 = vmatprep.subr.mxu0 0.0
  %1308 = vmatpush1.msra.mxu0 %v38
  %1309 = vmatprep.subr.mxu0 0.0
  %1310 = vmatpush1.msra.mxu0 %v39
  %1311 = vmatprep.subr.mxu0 0.0
  %1312 = vmatpush1.msra.mxu0 %v40
  %1313 = vmatprep.subr.mxu0 0.0
  %1314 = vmatpush1.msra.mxu0 0.0
  %1315 = vmatprep.subr.mxu0 0.0
  %1316 = vmatpush1.msra.mxu0 0.0
  %1317 = vmatprep.subr.mxu0 0.0
  %1318 = vmatpush1.msra.mxu0 0.0
  %1319 = vmatprep.subr.mxu0 0.0
  %1320 = vmatpush1.msra.mxu0 0.0
  %1321 = vmatprep.subr.mxu0 0.0
  %1322 = vmatpush1.msra.mxu0 0.0
  %1323 = vmatprep.subr.mxu0 0.0
  %1324 = vmatpush1.msra.mxu0 0.0
  %1325 = vmatprep.subr.mxu0 0.0
  %1326 = vmatpush1.msra.mxu0 0.0
  %1327 = vmatprep.subr.mxu0 0.0
  %1328 = vmatpush1.msra.mxu0 0.0
  %1329 = vmatprep.subr.mxu0 0.0
  %1330 = vmatpush1.msra.mxu0 0.0
  %1331 = vmatprep.subr.mxu0 0.0
  %1332 = vmatpush1.msra.mxu0 0.0
  %1333 = vmatprep.subr.mxu0 0.0
  %1334 = vmatpush1.msra.mxu0 0.0
  %1335 = vmatprep.subr.mxu0 0.0
  %1336 = vmatpush1.msra.mxu0 0.0
  %1337 = vmatprep.subr.mxu0 0.0
  %1338 = vmatpush1.msra.mxu0 0.0
  %1339 = vmatprep.subr.mxu0 0.0
  %1340 = vmatpush1.msra.mxu0 0.0
  %1341 = vmatprep.subr.mxu0 0.0
  %1342 = vmatpush1.msra.mxu0 0.0
  %1343 = vmatprep.subr.mxu0 0.0
  %1344 = vmatpush1.msra.mxu0 0.0
  %1345 = vmatprep.subr.mxu0 0.0
  %1346 = vmatpush1.msra.mxu0 0.0
  %1347 = vmatprep.subr.mxu0 0.0
  %1348 = vmatpush1.msra.mxu0 0.0
  %1349 = vmatprep.subr.mxu0 0.0
  %1350 = vmatpush1.msra.mxu0 0.0
  %1351 = vmatprep.subr.mxu0 0.0
  %1352 = vmatpush1.msra.mxu0 0.0
  %1353 = vmatprep.subr.mxu0 0.0
  %1354 = vmatpush1.msra.mxu0 0.0
  %1355 = vmatprep.subr.mxu0 0.0
  %1356 = vmatpush1.msra.mxu0 0.0
  %1357 = vmatprep.subr.mxu0 0.0
  %1358 = vmatpush1.msra.mxu0 0.0
  %1359 = vmatprep.subr.mxu0 0.0
  %1360 = vmatpush1.msra.mxu0 0.0
  %1361 = vmatprep.subr.mxu0 0.0
  %1362 = vmatpush1.msra.mxu0 0.0
  %1363 = vmatprep.subr.mxu0 0.0
  %1364 = vmatpush1.msra.mxu0 0.0
  %1365 = vmatprep.subr.mxu0 0.0
  %1366 = vmatpush1.msra.mxu0 0.0
  %1367 = vmatprep.subr.mxu0 0.0
  %1368 = vmatpush1.msra.mxu0 0.0
  %1369 = vmatprep.mubr.f32.mxu0 0.0
  %1370 = vmatmul.mubr.f32.gmra.mrb[0].mxu0 %v1303
  %v1371 = vpop.f32.mrb[0].mxu0
  %v1372 = vadd.f32 0.0, %v1371
  %v1373 = vpop.f32.mrb[0].mxu0
  %1374 = vdwg.mxu0
  %v1375 = vadd.f32 %v186, %v1372
  %1376 = vmatprep.subr.mxu0 0.0
  %1377 = vmatpush1.msra.mxu0 %v715
  %1378 = vmatprep.subr.mxu0 0.0
  %1379 = vmatpush1.msra.mxu0 %v717
  %1380 = vmatprep.subr.mxu0 0.0
  %1381 = vmatpush1.msra.mxu0 %v719
  %1382 = vmatprep.subr.mxu0 0.0
  %1383 = vmatpush1.msra.mxu0 %v721
  %1384 = vmatprep.subr.mxu0 0.0
  %1385 = vmatpush1.msra.mxu0 0.0
  %1386 = vmatprep.subr.mxu0 0.0
  %1387 = vmatpush1.msra.mxu0 0.0
  %1388 = vmatprep.subr.mxu0 0.0
  %1389 = vmatpush1.msra.mxu0 0.0
  %1390 = vmatprep.subr.mxu0 0.0
  %1391 = vmatpush1.msra.mxu0 0.0
  %1392 = vmatprep.subr.mxu0 0.0
  %1393 = vmatpush1.msra.mxu0 0.0
  %1394 = vmatprep.subr.mxu0 0.0
  %1395 = vmatpush1.msra.mxu0 0.0
  %1396 = vmatprep.subr.mxu0 0.0
  %1397 = vmatpush1.msra.mxu0 0.0
  %1398 = vmatprep.subr.mxu0 0.0
  %1399 = vmatpush1.msra.mxu0 0.0
  %1400 = vmatprep.subr.mxu0 0.0
  %1401 = vmatpush1.msra.mxu0 0.0
  %1402 = vmatprep.subr.mxu0 0.0
  %1403 = vmatpush1.msra.mxu0 0.0
  %1404 = vmatprep.subr.mxu0 0.0
  %1405 = vmatpush1.msra.mxu0 0.0
  %1406 = vmatprep.subr.mxu0 0.0
  %1407 = vmatpush1.msra.mxu0 0.0
  %1408 = vmatprep.subr.mxu0 0.0
  %1409 = vmatpush1.msra.mxu0 0.0
  %1410 = vmatprep.subr.mxu0 0.0
  %1411 = vmatpush1.msra.mxu0 0.0
  %1412 = vmatprep.subr.mxu0 0.0
  %1413 = vmatpush1.msra.mxu0 0.0
  %1414 = vmatprep.subr.mxu0 0.0
  %1415 = vmatpush1.msra.mxu0 0.0
  %1416 = vmatprep.subr.mxu0 0.0
  %1417 = vmatpush1.msra.mxu0 0.0
  %1418 = vmatprep.subr.mxu0 0.0
  %1419 = vmatpush1.msra.mxu0 0.0
  %1420 = vmatprep.subr.mxu0 0.0
  %1421 = vmatpush1.msra.mxu0 0.0
  %1422 = vmatprep.subr.mxu0 0.0
  %1423 = vmatpush1.msra.mxu0 0.0
  %1424 = vmatprep.subr.mxu0 0.0
  %1425 = vmatpush1.msra.mxu0 0.0
  %1426 = vmatprep.subr.mxu0 0.0
  %1427 = vmatpush1.msra.mxu0 0.0
  %1428 = vmatprep.subr.mxu0 0.0
  %1429 = vmatpush1.msra.mxu0 0.0
  %1430 = vmatprep.subr.mxu0 0.0
  %1431 = vmatpush1.msra.mxu0 0.0
  %1432 = vmatprep.subr.mxu0 0.0
  %1433 = vmatpush1.msra.mxu0 0.0
  %1434 = vmatprep.subr.mxu0 0.0
  %1435 = vmatpush1.msra.mxu0 0.0
  %1436 = vmatprep.subr.mxu0 0.0
  %1437 = vmatpush1.msra.mxu0 0.0
  %1438 = vmatprep.subr.mxu0 0.0
  %1439 = vmatpush1.msra.mxu0 0.0
  %1440 = vmatprep.mubr.f32.mxu0 0.0
  %1441 = vmatmul.mubr.f32.gmra.mrb[0].mxu0 %v1303
  %v1442 = vpop.f32.mrb[0].mxu0
  %v1443 = vadd.f32 0.0, %v1442
  %v1444 = vpop.f32.mrb[0].mxu0
  %1445 = vdwg.mxu0
  %v1446 = vadd.f32 %v324, %v1443
  %1447 = vmatprep.subr.mxu0 0.0
  %1448 = vmatpush1.msra.mxu0 %v798
  %1449 = vmatprep.subr.mxu0 0.0
  %1450 = vmatpush1.msra.mxu0 %v800
  %1451 = vmatprep.subr.mxu0 0.0
  %1452 = vmatpush1.msra.mxu0 %v802
  %1453 = vmatprep.subr.mxu0 0.0
  %1454 = vmatpush1.msra.mxu0 %v804
  %1455 = vmatprep.subr.mxu0 0.0
  %1456 = vmatpush1.msra.mxu0 0.0
  %1457 = vmatprep.subr.mxu0 0.0
  %1458 = vmatpush1.msra.mxu0 0.0
  %1459 = vmatprep.subr.mxu0 0.0
  %1460 = vmatpush1.msra.mxu0 0.0
  %1461 = vmatprep.subr.mxu0 0.0
  %1462 = vmatpush1.msra.mxu0 0.0
  %1463 = vmatprep.subr.mxu0 0.0
  %1464 = vmatpush1.msra.mxu0 0.0
  %1465 = vmatprep.subr.mxu0 0.0
  %1466 = vmatpush1.msra.mxu0 0.0
  %1467 = vmatprep.subr.mxu0 0.0
  %1468 = vmatpush1.msra.mxu0 0.0
  %1469 = vmatprep.subr.mxu0 0.0
  %1470 = vmatpush1.msra.mxu0 0.0
  %1471 = vmatprep.subr.mxu0 0.0
  %1472 = vmatpush1.msra.mxu0 0.0
  %1473 = vmatprep.subr.mxu0 0.0
  %1474 = vmatpush1.msra.mxu0 0.0
  %1475 = vmatprep.subr.mxu0 0.0
  %1476 = vmatpush1.msra.mxu0 0.0
  %1477 = vmatprep.subr.mxu0 0.0
  %1478 = vmatpush1.msra.mxu0 0.0
  %1479 = vmatprep.subr.mxu0 0.0
  %1480 = vmatpush1.msra.mxu0 0.0
  %1481 = vmatprep.subr.mxu0 0.0
  %1482 = vmatpush1.msra.mxu0 0.0
  %1483 = vmatprep.subr.mxu0 0.0
  %1484 = vmatpush1.msra.mxu0 0.0
  %1485 = vmatprep.subr.mxu0 0.0
  %1486 = vmatpush1.msra.mxu0 0.0
  %1487 = vmatprep.subr.mxu0 0.0
  %1488 = vmatpush1.msra.mxu0 0.0
  %1489 = vmatprep.subr.mxu0 0.0
  %1490 = vmatpush1.msra.mxu0 0.0
  %1491 = vmatprep.subr.mxu0 0.0
  %1492 = vmatpush1.msra.mxu0 0.0
  %1493 = vmatprep.subr.mxu0 0.0
  %1494 = vmatpush1.msra.mxu0 0.0
  %1495 = vmatprep.subr.mxu0 0.0
  %1496 = vmatpush1.msra.mxu0 0.0
  %1497 = vmatprep.subr.mxu0 0.0
  %1498 = vmatpush1.msra.mxu0 0.0
  %1499 = vmatprep.subr.mxu0 0.0
  %1500 = vmatpush1.msra.mxu0 0.0
  %1501 = vmatprep.subr.mxu0 0.0
  %1502 = vmatpush1.msra.mxu0 0.0
  %1503 = vmatprep.subr.mxu0 0.0
  %1504 = vmatpush1.msra.mxu0 0.0
  %1505 = vmatprep.subr.mxu0 0.0
  %1506 = vmatpush1.msra.mxu0 0.0
  %1507 = vmatprep.subr.mxu0 0.0
  %1508 = vmatpush1.msra.mxu0 0.0
  %1509 = vmatprep.subr.mxu0 0.0
  %1510 = vmatpush1.msra.mxu0 0.0
  %1511 = vmatprep.mubr.f32.mxu0 0.0
  %1512 = vmatmul.mubr.f32.gmra.mrb[0].mxu0 %v1303
  %v1513 = vpop.f32.mrb[0].mxu0
  %v1514 = vadd.f32 0.0, %v1513
  %v1515 = vpop.f32.mrb[0].mxu0
  %1516 = vdwg.mxu0
  %v1517 = vadd.f32 %v468, %v1514
  %1518 = vmatprep.subr.mxu0 0.0
  %1519 = vmatpush1.msra.mxu0 %v881
  %1520 = vmatprep.subr.mxu0 0.0
  %1521 = vmatpush1.msra.mxu0 %v883
  %1522 = vmatprep.subr.mxu0 0.0
  %1523 = vmatpush1.msra.mxu0 %v885
  %1524 = vmatprep.subr.mxu0 0.0
  %1525 = vmatpush1.msra.mxu0 %v887
  %1526 = vmatprep.subr.mxu0 0.0
  %1527 = vmatpush1.msra.mxu0 0.0
  %1528 = vmatprep.subr.mxu0 0.0
  %1529 = vmatpush1.msra.mxu0 0.0
  %1530 = vmatprep.subr.mxu0 0.0
  %1531 = vmatpush1.msra.mxu0 0.0
  %1532 = vmatprep.subr.mxu0 0.0
  %1533 = vmatpush1.msra.mxu0 0.0
  %1534 = vmatprep.subr.mxu0 0.0
  %1535 = vmatpush1.msra.mxu0 0.0
  %1536 = vmatprep.subr.mxu0 0.0
  %1537 = vmatpush1.msra.mxu0 0.0
  %1538 = vmatprep.subr.mxu0 0.0
  %1539 = vmatpush1.msra.mxu0 0.0
  %1540 = vmatprep.subr.mxu0 0.0
  %1541 = vmatpush1.msra.mxu0 0.0
  %1542 = vmatprep.subr.mxu0 0.0
  %1543 = vmatpush1.msra.mxu0 0.0
  %1544 = vmatprep.subr.mxu0 0.0
  %1545 = vmatpush1.msra.mxu0 0.0
  %1546 = vmatprep.subr.mxu0 0.0
  %1547 = vmatpush1.msra.mxu0 0.0
  %1548 = vmatprep.subr.mxu0 0.0
  %1549 = vmatpush1.msra.mxu0 0.0
  %1550 = vmatprep.subr.mxu0 0.0
  %1551 = vmatpush1.msra.mxu0 0.0
  %1552 = vmatprep.subr.mxu0 0.0
  %1553 = vmatpush1.msra.mxu0 0.0
  %1554 = vmatprep.subr.mxu0 0.0
  %1555 = vmatpush1.msra.mxu0 0.0
  %1556 = vmatprep.subr.mxu0 0.0
  %1557 = vmatpush1.msra.mxu0 0.0
  %1558 = vmatprep.subr.mxu0 0.0
  %1559 = vmatpush1.msra.mxu0 0.0
  %1560 = vmatprep.subr.mxu0 0.0
  %1561 = vmatpush1.msra.mxu0 0.0
  %1562 = vmatprep.subr.mxu0 0.0
  %1563 = vmatpush1.msra.mxu0 0.0
  %1564 = vmatprep.subr.mxu0 0.0
  %1565 = vmatpush1.msra.mxu0 0.0
  %1566 = vmatprep.subr.mxu0 0.0
  %1567 = vmatpush1.msra.mxu0 0.0
  %1568 = vmatprep.subr.mxu0 0.0
  %1569 = vmatpush1.msra.mxu0 0.0
  %1570 = vmatprep.subr.mxu0 0.0
  %1571 = vmatpush1.msra.mxu0 0.0
  %1572 = vmatprep.subr.mxu0 0.0
  %1573 = vmatpush1.msra.mxu0 0.0
  %1574 = vmatprep.subr.mxu0 0.0
  %1575 = vmatpush1.msra.mxu0 0.0
  %1576 = vmatprep.subr.mxu0 0.0
  %1577 = vmatpush1.msra.mxu0 0.0
  %1578 = vmatprep.subr.mxu0 0.0
  %1579 = vmatpush1.msra.mxu0 0.0
  %1580 = vmatprep.subr.mxu0 0.0
  %1581 = vmatpush1.msra.mxu0 0.0
  %1582 = vmatprep.mubr.f32.mxu0 0.0
  %1583 = vmatmul.mubr.f32.gmra.mrb[0].mxu0 %v1303
  %v1584 = vpop.f32.mrb[0].mxu0
  %v1585 = vadd.f32 0.0, %v1584
  %v1586 = vpop.f32.mrb[0].mxu0
  %1587 = vdwg.mxu0
  %v1588 = vadd.f32 %v605, %v1585
  %v1589 = vxor.u32 %v1375, 2147483648
  %v1590 = vmul.f32 %v1589, 1.442695
  %v1591 = vpow.pop %v1590
  %v1592 = vadd.f32 %v1591, 1.0
  %v1593 = vrcp.pop %v1592
  %v1594 = vmul.f32 1.0, %v1593
  %v1595 = vxor.u32 %v1446, 2147483648
  %v1596 = vmul.f32 %v1595, 1.442695
  %v1597 = vpow.pop %v1596
  %v1598 = vadd.f32 %v1597, 1.0
  %v1599 = vrcp.pop %v1598
  %v1600 = vmul.f32 1.0, %v1599
  %v1601 = vtanh.pop %v1517
  %v1602 = vxor.u32 %v1588, 2147483648
  %v1603 = vmul.f32 %v1602, 1.442695
  %v1604 = vpow.pop %v1603
  %v1605 = vadd.f32 %v1604, 1.0
  %v1606 = vrcp.pop %v1605
  %v1607 = vmul.f32 1.0, %v1606
  %v1608 = vmul.f32 %v1600, %v1297
  %v1609 = vmul.f32 %v1594, %v1601
  %v1610 = vadd.f32 %v1608, %v1609
  %v1611 = vtanh.pop %v1610
  %v1612 = vmul.f32 %v1607, %v1611
  %s1613 = scalar_lea.vmem [#allocation2], 4
  %1614 = vst.msk [vmem:[%s1613] sm:$0x3] %vm987, %v1612
  %v1616 = vsel %vm90, %v1612, 0
  %1618 = vmatprep.subr.mxu0 0.0
  %1619 = vmatpush1.msra.mxu0 %v37
  %1620 = vmatprep.subr.mxu0 0.0
  %1621 = vmatpush1.msra.mxu0 %v38
  %1622 = vmatprep.subr.mxu0 0.0
  %1623 = vmatpush1.msra.mxu0 %v39
  %1624 = vmatprep.subr.mxu0 0.0
  %1625 = vmatpush1.msra.mxu0 %v40
  %1626 = vmatprep.subr.mxu0 0.0
  %1627 = vmatpush1.msra.mxu0 0.0
  %1628 = vmatprep.subr.mxu0 0.0
  %1629 = vmatpush1.msra.mxu0 0.0
  %1630 = vmatprep.subr.mxu0 0.0
  %1631 = vmatpush1.msra.mxu0 0.0
  %1632 = vmatprep.subr.mxu0 0.0
  %1633 = vmatpush1.msra.mxu0 0.0
  %1634 = vmatprep.subr.mxu0 0.0
  %1635 = vmatpush1.msra.mxu0 0.0
  %1636 = vmatprep.subr.mxu0 0.0
  %1637 = vmatpush1.msra.mxu0 0.0
  %1638 = vmatprep.subr.mxu0 0.0
  %1639 = vmatpush1.msra.mxu0 0.0
  %1640 = vmatprep.subr.mxu0 0.0
  %1641 = vmatpush1.msra.mxu0 0.0
  %1642 = vmatprep.subr.mxu0 0.0
  %1643 = vmatpush1.msra.mxu0 0.0
  %1644 = vmatprep.subr.mxu0 0.0
  %1645 = vmatpush1.msra.mxu0 0.0
  %1646 = vmatprep.subr.mxu0 0.0
  %1647 = vmatpush1.msra.mxu0 0.0
  %1648 = vmatprep.subr.mxu0 0.0
  %1649 = vmatpush1.msra.mxu0 0.0
  %1650 = vmatprep.subr.mxu0 0.0
  %1651 = vmatpush1.msra.mxu0 0.0
  %1652 = vmatprep.subr.mxu0 0.0
  %1653 = vmatpush1.msra.mxu0 0.0
  %1654 = vmatprep.subr.mxu0 0.0
  %1655 = vmatpush1.msra.mxu0 0.0
  %1656 = vmatprep.subr.mxu0 0.0
  %1657 = vmatpush1.msra.mxu0 0.0
  %1658 = vmatprep.subr.mxu0 0.0
  %1659 = vmatpush1.msra.mxu0 0.0
  %1660 = vmatprep.subr.mxu0 0.0
  %1661 = vmatpush1.msra.mxu0 0.0
  %1662 = vmatprep.subr.mxu0 0.0
  %1663 = vmatpush1.msra.mxu0 0.0
  %1664 = vmatprep.subr.mxu0 0.0
  %1665 = vmatpush1.msra.mxu0 0.0
  %1666 = vmatprep.subr.mxu0 0.0
  %1667 = vmatpush1.msra.mxu0 0.0
  %1668 = vmatprep.subr.mxu0 0.0
  %1669 = vmatpush1.msra.mxu0 0.0
  %1670 = vmatprep.subr.mxu0 0.0
  %1671 = vmatpush1.msra.mxu0 0.0
  %1672 = vmatprep.subr.mxu0 0.0
  %1673 = vmatpush1.msra.mxu0 0.0
  %1674 = vmatprep.subr.mxu0 0.0
  %1675 = vmatpush1.msra.mxu0 0.0
  %1676 = vmatprep.subr.mxu0 0.0
  %1677 = vmatpush1.msra.mxu0 0.0
  %1678 = vmatprep.subr.mxu0 0.0
  %1679 = vmatpush1.msra.mxu0 0.0
  %1680 = vmatprep.subr.mxu0 0.0
  %1681 = vmatpush1.msra.mxu0 0.0
  %1682 = vmatprep.mubr.f32.mxu0 0.0
  %1683 = vmatmul.mubr.f32.gmra.mrb[0].mxu0 %v1616
  %v1684 = vpop.f32.mrb[0].mxu0
  %v1685 = vadd.f32 0.0, %v1684
  %v1686 = vpop.f32.mrb[0].mxu0
  %1687 = vdwg.mxu0
  %v1688 = vadd.f32 %v188, %v1685
  %1689 = vmatprep.subr.mxu0 0.0
  %1690 = vmatpush1.msra.mxu0 %v715
  %1691 = vmatprep.subr.mxu0 0.0
  %1692 = vmatpush1.msra.mxu0 %v717
  %1693 = vmatprep.subr.mxu0 0.0
  %1694 = vmatpush1.msra.mxu0 %v719
  %1695 = vmatprep.subr.mxu0 0.0
  %1696 = vmatpush1.msra.mxu0 %v721
  %1697 = vmatprep.subr.mxu0 0.0
  %1698 = vmatpush1.msra.mxu0 0.0
  %1699 = vmatprep.subr.mxu0 0.0
  %1700 = vmatpush1.msra.mxu0 0.0
  %1701 = vmatprep.subr.mxu0 0.0
  %1702 = vmatpush1.msra.mxu0 0.0
  %1703 = vmatprep.subr.mxu0 0.0
  %1704 = vmatpush1.msra.mxu0 0.0
  %1705 = vmatprep.subr.mxu0 0.0
  %1706 = vmatpush1.msra.mxu0 0.0
  %1707 = vmatprep.subr.mxu0 0.0
  %1708 = vmatpush1.msra.mxu0 0.0
  %1709 = vmatprep.subr.mxu0 0.0
  %1710 = vmatpush1.msra.mxu0 0.0
  %1711 = vmatprep.subr.mxu0 0.0
  %1712 = vmatpush1.msra.mxu0 0.0
  %1713 = vmatprep.subr.mxu0 0.0
  %1714 = vmatpush1.msra.mxu0 0.0
  %1715 = vmatprep.subr.mxu0 0.0
  %1716 = vmatpush1.msra.mxu0 0.0
  %1717 = vmatprep.subr.mxu0 0.0
  %1718 = vmatpush1.msra.mxu0 0.0
  %1719 = vmatprep.subr.mxu0 0.0
  %1720 = vmatpush1.msra.mxu0 0.0
  %1721 = vmatprep.subr.mxu0 0.0
  %1722 = vmatpush1.msra.mxu0 0.0
  %1723 = vmatprep.subr.mxu0 0.0
  %1724 = vmatpush1.msra.mxu0 0.0
  %1725 = vmatprep.subr.mxu0 0.0
  %1726 = vmatpush1.msra.mxu0 0.0
  %1727 = vmatprep.subr.mxu0 0.0
  %1728 = vmatpush1.msra.mxu0 0.0
  %1729 = vmatprep.subr.mxu0 0.0
  %1730 = vmatpush1.msra.mxu0 0.0
  %1731 = vmatprep.subr.mxu0 0.0
  %1732 = vmatpush1.msra.mxu0 0.0
  %1733 = vmatprep.subr.mxu0 0.0
  %1734 = vmatpush1.msra.mxu0 0.0
  %1735 = vmatprep.subr.mxu0 0.0
  %1736 = vmatpush1.msra.mxu0 0.0
  %1737 = vmatprep.subr.mxu0 0.0
  %1738 = vmatpush1.msra.mxu0 0.0
  %1739 = vmatprep.subr.mxu0 0.0
  %1740 = vmatpush1.msra.mxu0 0.0
  %1741 = vmatprep.subr.mxu0 0.0
  %1742 = vmatpush1.msra.mxu0 0.0
  %1743 = vmatprep.subr.mxu0 0.0
  %1744 = vmatpush1.msra.mxu0 0.0
  %1745 = vmatprep.subr.mxu0 0.0
  %1746 = vmatpush1.msra.mxu0 0.0
  %1747 = vmatprep.subr.mxu0 0.0
  %1748 = vmatpush1.msra.mxu0 0.0
  %1749 = vmatprep.subr.mxu0 0.0
  %1750 = vmatpush1.msra.mxu0 0.0
  %1751 = vmatprep.subr.mxu0 0.0
  %1752 = vmatpush1.msra.mxu0 0.0
  %1753 = vmatprep.mubr.f32.mxu0 0.0
  %1754 = vmatmul.mubr.f32.gmra.mrb[0].mxu0 %v1616
  %v1755 = vpop.f32.mrb[0].mxu0
  %v1756 = vadd.f32 0.0, %v1755
  %v1757 = vpop.f32.mrb[0].mxu0
  %1758 = vdwg.mxu0
  %v1759 = vadd.f32 %v326, %v1756
  %1760 = vmatprep.subr.mxu0 0.0
  %1761 = vmatpush1.msra.mxu0 %v798
  %1762 = vmatprep.subr.mxu0 0.0
  %1763 = vmatpush1.msra.mxu0 %v800
  %1764 = vmatprep.subr.mxu0 0.0
  %1765 = vmatpush1.msra.mxu0 %v802
  %1766 = vmatprep.subr.mxu0 0.0
  %1767 = vmatpush1.msra.mxu0 %v804
  %1768 = vmatprep.subr.mxu0 0.0
  %1769 = vmatpush1.msra.mxu0 0.0
  %1770 = vmatprep.subr.mxu0 0.0
  %1771 = vmatpush1.msra.mxu0 0.0
  %1772 = vmatprep.subr.mxu0 0.0
  %1773 = vmatpush1.msra.mxu0 0.0
  %1774 = vmatprep.subr.mxu0 0.0
  %1775 = vmatpush1.msra.mxu0 0.0
  %1776 = vmatprep.subr.mxu0 0.0
  %1777 = vmatpush1.msra.mxu0 0.0
  %1778 = vmatprep.subr.mxu0 0.0
  %1779 = vmatpush1.msra.mxu0 0.0
  %1780 = vmatprep.subr.mxu0 0.0
  %1781 = vmatpush1.msra.mxu0 0.0
  %1782 = vmatprep.subr.mxu0 0.0
  %1783 = vmatpush1.msra.mxu0 0.0
  %1784 = vmatprep.subr.mxu0 0.0
  %1785 = vmatpush1.msra.mxu0 0.0
  %1786 = vmatprep.subr.mxu0 0.0
  %1787 = vmatpush1.msra.mxu0 0.0
  %1788 = vmatprep.subr.mxu0 0.0
  %1789 = vmatpush1.msra.mxu0 0.0
  %1790 = vmatprep.subr.mxu0 0.0
  %1791 = vmatpush1.msra.mxu0 0.0
  %1792 = vmatprep.subr.mxu0 0.0
  %1793 = vmatpush1.msra.mxu0 0.0
  %1794 = vmatprep.subr.mxu0 0.0
  %1795 = vmatpush1.msra.mxu0 0.0
  %1796 = vmatprep.subr.mxu0 0.0
  %1797 = vmatpush1.msra.mxu0 0.0
  %1798 = vmatprep.subr.mxu0 0.0
  %1799 = vmatpush1.msra.mxu0 0.0
  %1800 = vmatprep.subr.mxu0 0.0
  %1801 = vmatpush1.msra.mxu0 0.0
  %1802 = vmatprep.subr.mxu0 0.0
  %1803 = vmatpush1.msra.mxu0 0.0
  %1804 = vmatprep.subr.mxu0 0.0
  %1805 = vmatpush1.msra.mxu0 0.0
  %1806 = vmatprep.subr.mxu0 0.0
  %1807 = vmatpush1.msra.mxu0 0.0
  %1808 = vmatprep.subr.mxu0 0.0
  %1809 = vmatpush1.msra.mxu0 0.0
  %1810 = vmatprep.subr.mxu0 0.0
  %1811 = vmatpush1.msra.mxu0 0.0
  %1812 = vmatprep.subr.mxu0 0.0
  %1813 = vmatpush1.msra.mxu0 0.0
  %1814 = vmatprep.subr.mxu0 0.0
  %1815 = vmatpush1.msra.mxu0 0.0
  %1816 = vmatprep.subr.mxu0 0.0
  %1817 = vmatpush1.msra.mxu0 0.0
  %1818 = vmatprep.subr.mxu0 0.0
  %1819 = vmatpush1.msra.mxu0 0.0
  %1820 = vmatprep.subr.mxu0 0.0
  %1821 = vmatpush1.msra.mxu0 0.0
  %1822 = vmatprep.subr.mxu0 0.0
  %1823 = vmatpush1.msra.mxu0 0.0
  %1824 = vmatprep.mubr.f32.mxu0 0.0
  %1825 = vmatmul.mubr.f32.gmra.mrb[0].mxu0 %v1616
  %v1826 = vpop.f32.mrb[0].mxu0
  %v1827 = vadd.f32 0.0, %v1826
  %v1828 = vpop.f32.mrb[0].mxu0
  %1829 = vdwg.mxu0
  %v1830 = vadd.f32 %v470, %v1827
  %1831 = vmatprep.subr.mxu0 0.0
  %1832 = vmatpush1.msra.mxu0 %v881
  %1833 = vmatprep.subr.mxu0 0.0
  %1834 = vmatpush1.msra.mxu0 %v883
  %1835 = vmatprep.subr.mxu0 0.0
  %1836 = vmatpush1.msra.mxu0 %v885
  %1837 = vmatprep.subr.mxu0 0.0
  %1838 = vmatpush1.msra.mxu0 %v887
  %1839 = vmatprep.subr.mxu0 0.0
  %1840 = vmatpush1.msra.mxu0 0.0
  %1841 = vmatprep.subr.mxu0 0.0
  %1842 = vmatpush1.msra.mxu0 0.0
  %1843 = vmatprep.subr.mxu0 0.0
  %1844 = vmatpush1.msra.mxu0 0.0
  %1845 = vmatprep.subr.mxu0 0.0
  %1846 = vmatpush1.msra.mxu0 0.0
  %1847 = vmatprep.subr.mxu0 0.0
  %1848 = vmatpush1.msra.mxu0 0.0
  %1849 = vmatprep.subr.mxu0 0.0
  %1850 = vmatpush1.msra.mxu0 0.0
  %1851 = vmatprep.subr.mxu0 0.0
  %1852 = vmatpush1.msra.mxu0 0.0
  %1853 = vmatprep.subr.mxu0 0.0
  %1854 = vmatpush1.msra.mxu0 0.0
  %1855 = vmatprep.subr.mxu0 0.0
  %1856 = vmatpush1.msra.mxu0 0.0
  %1857 = vmatprep.subr.mxu0 0.0
  %1858 = vmatpush1.msra.mxu0 0.0
  %1859 = vmatprep.subr.mxu0 0.0
  %1860 = vmatpush1.msra.mxu0 0.0
  %1861 = vmatprep.subr.mxu0 0.0
  %1862 = vmatpush1.msra.mxu0 0.0
  %1863 = vmatprep.subr.mxu0 0.0
  %1864 = vmatpush1.msra.mxu0 0.0
  %1865 = vmatprep.subr.mxu0 0.0
  %1866 = vmatpush1.msra.mxu0 0.0
  %1867 = vmatprep.subr.mxu0 0.0
  %1868 = vmatpush1.msra.mxu0 0.0
  %1869 = vmatprep.subr.mxu0 0.0
  %1870 = vmatpush1.msra.mxu0 0.0
  %1871 = vmatprep.subr.mxu0 0.0
  %1872 = vmatpush1.msra.mxu0 0.0
  %1873 = vmatprep.subr.mxu0 0.0
  %1874 = vmatpush1.msra.mxu0 0.0
  %1875 = vmatprep.subr.mxu0 0.0
  %1876 = vmatpush1.msra.mxu0 0.0
  %1877 = vmatprep.subr.mxu0 0.0
  %1878 = vmatpush1.msra.mxu0 0.0
  %1879 = vmatprep.subr.mxu0 0.0
  %1880 = vmatpush1.msra.mxu0 0.0
  %1881 = vmatprep.subr.mxu0 0.0
  %1882 = vmatpush1.msra.mxu0 0.0
  %1883 = vmatprep.subr.mxu0 0.0
  %1884 = vmatpush1.msra.mxu0 0.0
  %1885 = vmatprep.subr.mxu0 0.0
  %1886 = vmatpush1.msra.mxu0 0.0
  %1887 = vmatprep.subr.mxu0 0.0
  %1888 = vmatpush1.msra.mxu0 0.0
  %1889 = vmatprep.subr.mxu0 0.0
  %1890 = vmatpush1.msra.mxu0 0.0
  %1891 = vmatprep.subr.mxu0 0.0
  %1892 = vmatpush1.msra.mxu0 0.0
  %1893 = vmatprep.subr.mxu0 0.0
  %1894 = vmatpush1.msra.mxu0 0.0
  %1895 = vmatprep.mubr.f32.mxu0 0.0
  %1896 = vmatmul.mubr.f32.gmra.mrb[0].mxu0 %v1616
  %v1897 = vpop.f32.mrb[0].mxu0
  %v1898 = vadd.f32 0.0, %v1897
  %v1899 = vpop.f32.mrb[0].mxu0
  %1900 = vdwg.mxu0
  %v1901 = vadd.f32 %v607, %v1898
  %v1902 = vxor.u32 %v1688, 2147483648
  %v1903 = vmul.f32 %v1902, 1.442695
  %v1904 = vpow.pop %v1903
  %v1905 = vadd.f32 %v1904, 1.0
  %v1906 = vrcp.pop %v1905
  %v1907 = vmul.f32 1.0, %v1906
  %v1908 = vxor.u32 %v1759, 2147483648
  %v1909 = vmul.f32 %v1908, 1.442695
  %v1910 = vpow.pop %v1909
  %v1911 = vadd.f32 %v1910, 1.0
  %v1912 = vrcp.pop %v1911
  %v1913 = vmul.f32 1.0, %v1912
  %v1914 = vtanh.pop %v1830
  %v1915 = vxor.u32 %v1901, 2147483648
  %v1916 = vmul.f32 %v1915, 1.442695
  %v1917 = vpow.pop %v1916
  %v1918 = vadd.f32 %v1917, 1.0
  %v1919 = vrcp.pop %v1918
  %v1920 = vmul.f32 1.0, %v1919
  %v1921 = vmul.f32 %v1913, %v1610
  %v1922 = vmul.f32 %v1907, %v1914
  %v1923 = vadd.f32 %v1921, %v1922
  %v1924 = vtanh.pop %v1923
  %v1925 = vmul.f32 %v1920, %v1924
  %s1926 = scalar_lea.vmem [#allocation2], 6
  %1927 = vst.msk [vmem:[%s1926] sm:$0x3] %vm987, %v1925
  %v1929 = vsel %vm90, %v1925, 0
  %1931 = vmatprep.subr.mxu0 0.0
  %1932 = vmatpush1.msra.mxu0 %v37
  %1933 = vmatprep.subr.mxu0 0.0
  %1934 = vmatpush1.msra.mxu0 %v38
  %1935 = vmatprep.subr.mxu0 0.0
  %1936 = vmatpush1.msra.mxu0 %v39
  %1937 = vmatprep.subr.mxu0 0.0
  %1938 = vmatpush1.msra.mxu0 %v40
  %1939 = vmatprep.subr.mxu0 0.0
  %1940 = vmatpush1.msra.mxu0 0.0
  %1941 = vmatprep.subr.mxu0 0.0
  %1942 = vmatpush1.msra.mxu0 0.0
  %1943 = vmatprep.subr.mxu0 0.0
  %1944 = vmatpush1.msra.mxu0 0.0
  %1945 = vmatprep.subr.mxu0 0.0
  %1946 = vmatpush1.msra.mxu0 0.0
  %1947 = vmatprep.subr.mxu0 0.0
  %1948 = vmatpush1.msra.mxu0 0.0
  %1949 = vmatprep.subr.mxu0 0.0
  %1950 = vmatpush1.msra.mxu0 0.0
  %1951 = vmatprep.subr.mxu0 0.0
  %1952 = vmatpush1.msra.mxu0 0.0
  %1953 = vmatprep.subr.mxu0 0.0
  %1954 = vmatpush1.msra.mxu0 0.0
  %1955 = vmatprep.subr.mxu0 0.0
  %1956 = vmatpush1.msra.mxu0 0.0
  %1957 = vmatprep.subr.mxu0 0.0
  %1958 = vmatpush1.msra.mxu0 0.0
  %1959 = vmatprep.subr.mxu0 0.0
  %1960 = vmatpush1.msra.mxu0 0.0
  %1961 = vmatprep.subr.mxu0 0.0
  %1962 = vmatpush1.msra.mxu0 0.0
  %1963 = vmatprep.subr.mxu0 0.0
  %1964 = vmatpush1.msra.mxu0 0.0
  %1965 = vmatprep.subr.mxu0 0.0
  %1966 = vmatpush1.msra.mxu0 0.0
  %1967 = vmatprep.subr.mxu0 0.0
  %1968 = vmatpush1.msra.mxu0 0.0
  %1969 = vmatprep.subr.mxu0 0.0
  %1970 = vmatpush1.msra.mxu0 0.0
  %1971 = vmatprep.subr.mxu0 0.0
  %1972 = vmatpush1.msra.mxu0 0.0
  %1973 = vmatprep.subr.mxu0 0.0
  %1974 = vmatpush1.msra.mxu0 0.0
  %1975 = vmatprep.subr.mxu0 0.0
  %1976 = vmatpush1.msra.mxu0 0.0
  %1977 = vmatprep.subr.mxu0 0.0
  %1978 = vmatpush1.msra.mxu0 0.0
  %1979 = vmatprep.subr.mxu0 0.0
  %1980 = vmatpush1.msra.mxu0 0.0
  %1981 = vmatprep.subr.mxu0 0.0
  %1982 = vmatpush1.msra.mxu0 0.0
  %1983 = vmatprep.subr.mxu0 0.0
  %1984 = vmatpush1.msra.mxu0 0.0
  %1985 = vmatprep.subr.mxu0 0.0
  %1986 = vmatpush1.msra.mxu0 0.0
  %1987 = vmatprep.subr.mxu0 0.0
  %1988 = vmatpush1.msra.mxu0 0.0
  %1989 = vmatprep.subr.mxu0 0.0
  %1990 = vmatpush1.msra.mxu0 0.0
  %1991 = vmatprep.subr.mxu0 0.0
  %1992 = vmatpush1.msra.mxu0 0.0
  %1993 = vmatprep.subr.mxu0 0.0
  %1994 = vmatpush1.msra.mxu0 0.0
  %1995 = vmatprep.mubr.f32.mxu0 0.0
  %1996 = vmatmul.mubr.f32.gmra.mrb[0].mxu0 %v1929
  %v1997 = vpop.f32.mrb[0].mxu0
  %v1998 = vadd.f32 0.0, %v1997
  %v1999 = vpop.f32.mrb[0].mxu0
  %2000 = vdwg.mxu0
  %v2001 = vadd.f32 %v196, %v1998
  %2002 = vmatprep.subr.mxu0 0.0
  %2003 = vmatpush1.msra.mxu0 %v715
  %2004 = vmatprep.subr.mxu0 0.0
  %2005 = vmatpush1.msra.mxu0 %v717
  %2006 = vmatprep.subr.mxu0 0.0
  %2007 = vmatpush1.msra.mxu0 %v719
  %2008 = vmatprep.subr.mxu0 0.0
  %2009 = vmatpush1.msra.mxu0 %v721
  %2010 = vmatprep.subr.mxu0 0.0
  %2011 = vmatpush1.msra.mxu0 0.0
  %2012 = vmatprep.subr.mxu0 0.0
  %2013 = vmatpush1.msra.mxu0 0.0
  %2014 = vmatprep.subr.mxu0 0.0
  %2015 = vmatpush1.msra.mxu0 0.0
  %2016 = vmatprep.subr.mxu0 0.0
  %2017 = vmatpush1.msra.mxu0 0.0
  %2018 = vmatprep.subr.mxu0 0.0
  %2019 = vmatpush1.msra.mxu0 0.0
  %2020 = vmatprep.subr.mxu0 0.0
  %2021 = vmatpush1.msra.mxu0 0.0
  %2022 = vmatprep.subr.mxu0 0.0
  %2023 = vmatpush1.msra.mxu0 0.0
  %2024 = vmatprep.subr.mxu0 0.0
  %2025 = vmatpush1.msra.mxu0 0.0
  %2026 = vmatprep.subr.mxu0 0.0
  %2027 = vmatpush1.msra.mxu0 0.0
  %2028 = vmatprep.subr.mxu0 0.0
  %2029 = vmatpush1.msra.mxu0 0.0
  %2030 = vmatprep.subr.mxu0 0.0
  %2031 = vmatpush1.msra.mxu0 0.0
  %2032 = vmatprep.subr.mxu0 0.0
  %2033 = vmatpush1.msra.mxu0 0.0
  %2034 = vmatprep.subr.mxu0 0.0
  %2035 = vmatpush1.msra.mxu0 0.0
  %2036 = vmatprep.subr.mxu0 0.0
  %2037 = vmatpush1.msra.mxu0 0.0
  %2038 = vmatprep.subr.mxu0 0.0
  %2039 = vmatpush1.msra.mxu0 0.0
  %2040 = vmatprep.subr.mxu0 0.0
  %2041 = vmatpush1.msra.mxu0 0.0
  %2042 = vmatprep.subr.mxu0 0.0
  %2043 = vmatpush1.msra.mxu0 0.0
  %2044 = vmatprep.subr.mxu0 0.0
  %2045 = vmatpush1.msra.mxu0 0.0
  %2046 = vmatprep.subr.mxu0 0.0
  %2047 = vmatpush1.msra.mxu0 0.0
  %2048 = vmatprep.subr.mxu0 0.0
  %2049 = vmatpush1.msra.mxu0 0.0
  %2050 = vmatprep.subr.mxu0 0.0
  %2051 = vmatpush1.msra.mxu0 0.0
  %2052 = vmatprep.subr.mxu0 0.0
  %2053 = vmatpush1.msra.mxu0 0.0
  %2054 = vmatprep.subr.mxu0 0.0
  %2055 = vmatpush1.msra.mxu0 0.0
  %2056 = vmatprep.subr.mxu0 0.0
  %2057 = vmatpush1.msra.mxu0 0.0
  %2058 = vmatprep.subr.mxu0 0.0
  %2059 = vmatpush1.msra.mxu0 0.0
  %2060 = vmatprep.subr.mxu0 0.0
  %2061 = vmatpush1.msra.mxu0 0.0
  %2062 = vmatprep.subr.mxu0 0.0
  %2063 = vmatpush1.msra.mxu0 0.0
  %2064 = vmatprep.subr.mxu0 0.0
  %2065 = vmatpush1.msra.mxu0 0.0
  %2066 = vmatprep.mubr.f32.mxu0 0.0
  %2067 = vmatmul.mubr.f32.gmra.mrb[0].mxu0 %v1929
  %v2068 = vpop.f32.mrb[0].mxu0
  %v2069 = vadd.f32 0.0, %v2068
  %v2070 = vpop.f32.mrb[0].mxu0
  %2071 = vdwg.mxu0
  %v2072 = vadd.f32 %v334, %v2069
  %2073 = vmatprep.subr.mxu0 0.0
  %2074 = vmatpush1.msra.mxu0 %v798
  %2075 = vmatprep.subr.mxu0 0.0
  %2076 = vmatpush1.msra.mxu0 %v800
  %2077 = vmatprep.subr.mxu0 0.0
  %2078 = vmatpush1.msra.mxu0 %v802
  %2079 = vmatprep.subr.mxu0 0.0
  %2080 = vmatpush1.msra.mxu0 %v804
  %2081 = vmatprep.subr.mxu0 0.0
  %2082 = vmatpush1.msra.mxu0 0.0
  %2083 = vmatprep.subr.mxu0 0.0
  %2084 = vmatpush1.msra.mxu0 0.0
  %2085 = vmatprep.subr.mxu0 0.0
  %2086 = vmatpush1.msra.mxu0 0.0
  %2087 = vmatprep.subr.mxu0 0.0
  %2088 = vmatpush1.msra.mxu0 0.0
  %2089 = vmatprep.subr.mxu0 0.0
  %2090 = vmatpush1.msra.mxu0 0.0
  %2091 = vmatprep.subr.mxu0 0.0
  %2092 = vmatpush1.msra.mxu0 0.0
  %2093 = vmatprep.subr.mxu0 0.0
  %2094 = vmatpush1.msra.mxu0 0.0
  %2095 = vmatprep.subr.mxu0 0.0
  %2096 = vmatpush1.msra.mxu0 0.0
  %2097 = vmatprep.subr.mxu0 0.0
  %2098 = vmatpush1.msra.mxu0 0.0
  %2099 = vmatprep.subr.mxu0 0.0
  %2100 = vmatpush1.msra.mxu0 0.0
  %2101 = vmatprep.subr.mxu0 0.0
  %2102 = vmatpush1.msra.mxu0 0.0
  %2103 = vmatprep.subr.mxu0 0.0
  %2104 = vmatpush1.msra.mxu0 0.0
  %2105 = vmatprep.subr.mxu0 0.0
  %2106 = vmatpush1.msra.mxu0 0.0
  %2107 = vmatprep.subr.mxu0 0.0
  %2108 = vmatpush1.msra.mxu0 0.0
  %2109 = vmatprep.subr.mxu0 0.0
  %2110 = vmatpush1.msra.mxu0 0.0
  %2111 = vmatprep.subr.mxu0 0.0
  %2112 = vmatpush1.msra.mxu0 0.0
  %2113 = vmatprep.subr.mxu0 0.0
  %2114 = vmatpush1.msra.mxu0 0.0
  %2115 = vmatprep.subr.mxu0 0.0
  %2116 = vmatpush1.msra.mxu0 0.0
  %2117 = vmatprep.subr.mxu0 0.0
  %2118 = vmatpush1.msra.mxu0 0.0
  %2119 = vmatprep.subr.mxu0 0.0
  %2120 = vmatpush1.msra.mxu0 0.0
  %2121 = vmatprep.subr.mxu0 0.0
  %2122 = vmatpush1.msra.mxu0 0.0
  %2123 = vmatprep.subr.mxu0 0.0
  %2124 = vmatpush1.msra.mxu0 0.0
  %2125 = vmatprep.subr.mxu0 0.0
  %2126 = vmatpush1.msra.mxu0 0.0
  %2127 = vmatprep.subr.mxu0 0.0
  %2128 = vmatpush1.msra.mxu0 0.0
  %2129 = vmatprep.subr.mxu0 0.0
  %2130 = vmatpush1.msra.mxu0 0.0
  %2131 = vmatprep.subr.mxu0 0.0
  %2132 = vmatpush1.msra.mxu0 0.0
  %2133 = vmatprep.subr.mxu0 0.0
  %2134 = vmatpush1.msra.mxu0 0.0
  %2135 = vmatprep.subr.mxu0 0.0
  %2136 = vmatpush1.msra.mxu0 0.0
  %2137 = vmatprep.mubr.f32.mxu0 0.0
  %2138 = vmatmul.mubr.f32.gmra.mrb[0].mxu0 %v1929
  %v2139 = vpop.f32.mrb[0].mxu0
  %v2140 = vadd.f32 0.0, %v2139
  %v2141 = vpop.f32.mrb[0].mxu0
  %2142 = vdwg.mxu0
  %v2143 = vadd.f32 %v478, %v2140
  %2144 = vmatprep.subr.mxu0 0.0
  %2145 = vmatpush1.msra.mxu0 %v881
  %2146 = vmatprep.subr.mxu0 0.0
  %2147 = vmatpush1.msra.mxu0 %v883
  %2148 = vmatprep.subr.mxu0 0.0
  %2149 = vmatpush1.msra.mxu0 %v885
  %2150 = vmatprep.subr.mxu0 0.0
  %2151 = vmatpush1.msra.mxu0 %v887
  %2152 = vmatprep.subr.mxu0 0.0
  %2153 = vmatpush1.msra.mxu0 0.0
  %2154 = vmatprep.subr.mxu0 0.0
  %2155 = vmatpush1.msra.mxu0 0.0
  %2156 = vmatprep.subr.mxu0 0.0
  %2157 = vmatpush1.msra.mxu0 0.0
  %2158 = vmatprep.subr.mxu0 0.0
  %2159 = vmatpush1.msra.mxu0 0.0
  %2160 = vmatprep.subr.mxu0 0.0
  %2161 = vmatpush1.msra.mxu0 0.0
  %2162 = vmatprep.subr.mxu0 0.0
  %2163 = vmatpush1.msra.mxu0 0.0
  %2164 = vmatprep.subr.mxu0 0.0
  %2165 = vmatpush1.msra.mxu0 0.0
  %2166 = vmatprep.subr.mxu0 0.0
  %2167 = vmatpush1.msra.mxu0 0.0
  %2168 = vmatprep.subr.mxu0 0.0
  %2169 = vmatpush1.msra.mxu0 0.0
  %2170 = vmatprep.subr.mxu0 0.0
  %2171 = vmatpush1.msra.mxu0 0.0
  %2172 = vmatprep.subr.mxu0 0.0
  %2173 = vmatpush1.msra.mxu0 0.0
  %2174 = vmatprep.subr.mxu0 0.0
  %2175 = vmatpush1.msra.mxu0 0.0
  %2176 = vmatprep.subr.mxu0 0.0
  %2177 = vmatpush1.msra.mxu0 0.0
  %2178 = vmatprep.subr.mxu0 0.0
  %2179 = vmatpush1.msra.mxu0 0.0
  %2180 = vmatprep.subr.mxu0 0.0
  %2181 = vmatpush1.msra.mxu0 0.0
  %2182 = vmatprep.subr.mxu0 0.0
  %2183 = vmatpush1.msra.mxu0 0.0
  %2184 = vmatprep.subr.mxu0 0.0
  %2185 = vmatpush1.msra.mxu0 0.0
  %2186 = vmatprep.subr.mxu0 0.0
  %2187 = vmatpush1.msra.mxu0 0.0
  %2188 = vmatprep.subr.mxu0 0.0
  %2189 = vmatpush1.msra.mxu0 0.0
  %2190 = vmatprep.subr.mxu0 0.0
  %2191 = vmatpush1.msra.mxu0 0.0
  %2192 = vmatprep.subr.mxu0 0.0
  %2193 = vmatpush1.msra.mxu0 0.0
  %2194 = vmatprep.subr.mxu0 0.0
  %2195 = vmatpush1.msra.mxu0 0.0
  %2196 = vmatprep.subr.mxu0 0.0
  %2197 = vmatpush1.msra.mxu0 0.0
  %2198 = vmatprep.subr.mxu0 0.0
  %2199 = vmatpush1.msra.mxu0 0.0
  %2200 = vmatprep.subr.mxu0 0.0
  %2201 = vmatpush1.msra.mxu0 0.0
  %2202 = vmatprep.subr.mxu0 0.0
  %2203 = vmatpush1.msra.mxu0 0.0
  %2204 = vmatprep.subr.mxu0 0.0
  %2205 = vmatpush1.msra.mxu0 0.0
  %2206 = vmatprep.subr.mxu0 0.0
  %2207 = vmatpush1.msra.mxu0 0.0
  %2208 = vmatprep.mubr.f32.mxu0 0.0
  %2209 = vmatmul.mubr.f32.gmra.mrb[0].mxu0 %v1929
  %v2210 = vpop.f32.mrb[0].mxu0
  %v2211 = vadd.f32 0.0, %v2210
  %v2212 = vpop.f32.mrb[0].mxu0
  %2213 = vdwg.mxu0
  %v2214 = vadd.f32 %v615, %v2211
  %v2215 = vxor.u32 %v2001, 2147483648
  %v2216 = vmul.f32 %v2215, 1.442695
  %v2217 = vpow.pop %v2216
  %v2218 = vadd.f32 %v2217, 1.0
  %v2219 = vrcp.pop %v2218
  %v2220 = vmul.f32 1.0, %v2219
  %v2221 = vxor.u32 %v2072, 2147483648
  %v2222 = vmul.f32 %v2221, 1.442695
  %v2223 = vpow.pop %v2222
  %v2224 = vadd.f32 %v2223, 1.0
  %v2225 = vrcp.pop %v2224
  %v2226 = vmul.f32 1.0, %v2225
  %v2227 = vtanh.pop %v2143
  %v2228 = vxor.u32 %v2214, 2147483648
  %v2229 = vmul.f32 %v2228, 1.442695
  %v2230 = vpow.pop %v2229
  %v2231 = vadd.f32 %v2230, 1.0
  %v2232 = vrcp.pop %v2231
  %v2233 = vmul.f32 1.0, %v2232
  %v2234 = vmul.f32 %v2226, %v1923
  %v2235 = vmul.f32 %v2220, %v2227
  %v2236 = vadd.f32 %v2234, %v2235
  %v2237 = vtanh.pop %v2236
  %v2238 = vmul.f32 %v2233, %v2237
  %s2239 = scalar_lea.vmem [#allocation2], 8
  %2240 = vst.msk [vmem:[%s2239] sm:$0x3] %vm987, %v2238
  %v2242 = vsel %vm90, %v2238, 0
  %2244 = vmatprep.subr.mxu0 0.0
  %2245 = vmatpush1.msra.mxu0 %v37
  %2246 = vmatprep.subr.mxu0 0.0
  %2247 = vmatpush1.msra.mxu0 %v38
  %2248 = vmatprep.subr.mxu0 0.0
  %2249 = vmatpush1.msra.mxu0 %v39
  %2250 = vmatprep.subr.mxu0 0.0
  %2251 = vmatpush1.msra.mxu0 %v40
  %2252 = vmatprep.subr.mxu0 0.0
  %2253 = vmatpush1.msra.mxu0 0.0
  %2254 = vmatprep.subr.mxu0 0.0
  %2255 = vmatpush1.msra.mxu0 0.0
  %2256 = vmatprep.subr.mxu0 0.0
  %2257 = vmatpush1.msra.mxu0 0.0
  %2258 = vmatprep.subr.mxu0 0.0
  %2259 = vmatpush1.msra.mxu0 0.0
  %2260 = vmatprep.subr.mxu0 0.0
  %2261 = vmatpush1.msra.mxu0 0.0
  %2262 = vmatprep.subr.mxu0 0.0
  %2263 = vmatpush1.msra.mxu0 0.0
  %2264 = vmatprep.subr.mxu0 0.0
  %2265 = vmatpush1.msra.mxu0 0.0
  %2266 = vmatprep.subr.mxu0 0.0
  %2267 = vmatpush1.msra.mxu0 0.0
  %2268 = vmatprep.subr.mxu0 0.0
  %2269 = vmatpush1.msra.mxu0 0.0
  %2270 = vmatprep.subr.mxu0 0.0
  %2271 = vmatpush1.msra.mxu0 0.0
  %2272 = vmatprep.subr.mxu0 0.0
  %2273 = vmatpush1.msra.mxu0 0.0
  %2274 = vmatprep.subr.mxu0 0.0
  %2275 = vmatpush1.msra.mxu0 0.0
  %2276 = vmatprep.subr.mxu0 0.0
  %2277 = vmatpush1.msra.mxu0 0.0
  %2278 = vmatprep.subr.mxu0 0.0
  %2279 = vmatpush1.msra.mxu0 0.0
  %2280 = vmatprep.subr.mxu0 0.0
  %2281 = vmatpush1.msra.mxu0 0.0
  %2282 = vmatprep.subr.mxu0 0.0
  %2283 = vmatpush1.msra.mxu0 0.0
  %2284 = vmatprep.subr.mxu0 0.0
  %2285 = vmatpush1.msra.mxu0 0.0
  %2286 = vmatprep.subr.mxu0 0.0
  %2287 = vmatpush1.msra.mxu0 0.0
  %2288 = vmatprep.subr.mxu0 0.0
  %2289 = vmatpush1.msra.mxu0 0.0
  %2290 = vmatprep.subr.mxu0 0.0
  %2291 = vmatpush1.msra.mxu0 0.0
  %2292 = vmatprep.subr.mxu0 0.0
  %2293 = vmatpush1.msra.mxu0 0.0
  %2294 = vmatprep.subr.mxu0 0.0
  %2295 = vmatpush1.msra.mxu0 0.0
  %2296 = vmatprep.subr.mxu0 0.0
  %2297 = vmatpush1.msra.mxu0 0.0
  %2298 = vmatprep.subr.mxu0 0.0
  %2299 = vmatpush1.msra.mxu0 0.0
  %2300 = vmatprep.subr.mxu0 0.0
  %2301 = vmatpush1.msra.mxu0 0.0
  %2302 = vmatprep.subr.mxu0 0.0
  %2303 = vmatpush1.msra.mxu0 0.0
  %2304 = vmatprep.subr.mxu0 0.0
  %2305 = vmatpush1.msra.mxu0 0.0
  %2306 = vmatprep.subr.mxu0 0.0
  %2307 = vmatpush1.msra.mxu0 0.0
  %2308 = vmatprep.mubr.f32.mxu0 0.0
  %2309 = vmatmul.mubr.f32.gmra.mrb[0].mxu0 %v2242
  %v2310 = vpop.f32.mrb[0].mxu0
  %v2311 = vadd.f32 0.0, %v2310
  %v2312 = vpop.f32.mrb[0].mxu0
  %2313 = vdwg.mxu0
  %v2314 = vadd.f32 %v204, %v2311
  %2315 = vmatprep.subr.mxu0 0.0
  %2316 = vmatpush1.msra.mxu0 %v715
  %2317 = vmatprep.subr.mxu0 0.0
  %2318 = vmatpush1.msra.mxu0 %v717
  %2319 = vmatprep.subr.mxu0 0.0
  %2320 = vmatpush1.msra.mxu0 %v719
  %2321 = vmatprep.subr.mxu0 0.0
  %2322 = vmatpush1.msra.mxu0 %v721
  %2323 = vmatprep.subr.mxu0 0.0
  %2324 = vmatpush1.msra.mxu0 0.0
  %2325 = vmatprep.subr.mxu0 0.0
  %2326 = vmatpush1.msra.mxu0 0.0
  %2327 = vmatprep.subr.mxu0 0.0
  %2328 = vmatpush1.msra.mxu0 0.0
  %2329 = vmatprep.subr.mxu0 0.0
  %2330 = vmatpush1.msra.mxu0 0.0
  %2331 = vmatprep.subr.mxu0 0.0
  %2332 = vmatpush1.msra.mxu0 0.0
  %2333 = vmatprep.subr.mxu0 0.0
  %2334 = vmatpush1.msra.mxu0 0.0
  %2335 = vmatprep.subr.mxu0 0.0
  %2336 = vmatpush1.msra.mxu0 0.0
  %2337 = vmatprep.subr.mxu0 0.0
  %2338 = vmatpush1.msra.mxu0 0.0
  %2339 = vmatprep.subr.mxu0 0.0
  %2340 = vmatpush1.msra.mxu0 0.0
  %2341 = vmatprep.subr.mxu0 0.0
  %2342 = vmatpush1.msra.mxu0 0.0
  %2343 = vmatprep.subr.mxu0 0.0
  %2344 = vmatpush1.msra.mxu0 0.0
  %2345 = vmatprep.subr.mxu0 0.0
  %2346 = vmatpush1.msra.mxu0 0.0
  %2347 = vmatprep.subr.mxu0 0.0
  %2348 = vmatpush1.msra.mxu0 0.0
  %2349 = vmatprep.subr.mxu0 0.0
  %2350 = vmatpush1.msra.mxu0 0.0
  %2351 = vmatprep.subr.mxu0 0.0
  %2352 = vmatpush1.msra.mxu0 0.0
  %2353 = vmatprep.subr.mxu0 0.0
  %2354 = vmatpush1.msra.mxu0 0.0
  %2355 = vmatprep.subr.mxu0 0.0
  %2356 = vmatpush1.msra.mxu0 0.0
  %2357 = vmatprep.subr.mxu0 0.0
  %2358 = vmatpush1.msra.mxu0 0.0
  %2359 = vmatprep.subr.mxu0 0.0
  %2360 = vmatpush1.msra.mxu0 0.0
  %2361 = vmatprep.subr.mxu0 0.0
  %2362 = vmatpush1.msra.mxu0 0.0
  %2363 = vmatprep.subr.mxu0 0.0
  %2364 = vmatpush1.msra.mxu0 0.0
  %2365 = vmatprep.subr.mxu0 0.0
  %2366 = vmatpush1.msra.mxu0 0.0
  %2367 = vmatprep.subr.mxu0 0.0
  %2368 = vmatpush1.msra.mxu0 0.0
  %2369 = vmatprep.subr.mxu0 0.0
  %2370 = vmatpush1.msra.mxu0 0.0
  %2371 = vmatprep.subr.mxu0 0.0
  %2372 = vmatpush1.msra.mxu0 0.0
  %2373 = vmatprep.subr.mxu0 0.0
  %2374 = vmatpush1.msra.mxu0 0.0
  %2375 = vmatprep.subr.mxu0 0.0
  %2376 = vmatpush1.msra.mxu0 0.0
  %2377 = vmatprep.subr.mxu0 0.0
  %2378 = vmatpush1.msra.mxu0 0.0
  %2379 = vmatprep.mubr.f32.mxu0 0.0
  %2380 = vmatmul.mubr.f32.gmra.mrb[0].mxu0 %v2242
  %v2381 = vpop.f32.mrb[0].mxu0
  %v2382 = vadd.f32 0.0, %v2381
  %v2383 = vpop.f32.mrb[0].mxu0
  %2384 = vdwg.mxu0
  %v2385 = vadd.f32 %v342, %v2382
  %2386 = vmatprep.subr.mxu0 0.0
  %2387 = vmatpush1.msra.mxu0 %v798
  %2388 = vmatprep.subr.mxu0 0.0
  %2389 = vmatpush1.msra.mxu0 %v800
  %2390 = vmatprep.subr.mxu0 0.0
  %2391 = vmatpush1.msra.mxu0 %v802
  %2392 = vmatprep.subr.mxu0 0.0
  %2393 = vmatpush1.msra.mxu0 %v804
  %2394 = vmatprep.subr.mxu0 0.0
  %2395 = vmatpush1.msra.mxu0 0.0
  %2396 = vmatprep.subr.mxu0 0.0
  %2397 = vmatpush1.msra.mxu0 0.0
  %2398 = vmatprep.subr.mxu0 0.0
  %2399 = vmatpush1.msra.mxu0 0.0
  %2400 = vmatprep.subr.mxu0 0.0
  %2401 = vmatpush1.msra.mxu0 0.0
  %2402 = vmatprep.subr.mxu0 0.0
  %2403 = vmatpush1.msra.mxu0 0.0
  %2404 = vmatprep.subr.mxu0 0.0
  %2405 = vmatpush1.msra.mxu0 0.0
  %2406 = vmatprep.subr.mxu0 0.0
  %2407 = vmatpush1.msra.mxu0 0.0
  %2408 = vmatprep.subr.mxu0 0.0
  %2409 = vmatpush1.msra.mxu0 0.0
  %2410 = vmatprep.subr.mxu0 0.0
  %2411 = vmatpush1.msra.mxu0 0.0
  %2412 = vmatprep.subr.mxu0 0.0
  %2413 = vmatpush1.msra.mxu0 0.0
  %2414 = vmatprep.subr.mxu0 0.0
  %2415 = vmatpush1.msra.mxu0 0.0
  %2416 = vmatprep.subr.mxu0 0.0
  %2417 = vmatpush1.msra.mxu0 0.0
  %2418 = vmatprep.subr.mxu0 0.0
  %2419 = vmatpush1.msra.mxu0 0.0
  %2420 = vmatprep.subr.mxu0 0.0
  %2421 = vmatpush1.msra.mxu0 0.0
  %2422 = vmatprep.subr.mxu0 0.0
  %2423 = vmatpush1.msra.mxu0 0.0
  %2424 = vmatprep.subr.mxu0 0.0
  %2425 = vmatpush1.msra.mxu0 0.0
  %2426 = vmatprep.subr.mxu0 0.0
  %2427 = vmatpush1.msra.mxu0 0.0
  %2428 = vmatprep.subr.mxu0 0.0
  %2429 = vmatpush1.msra.mxu0 0.0
  %2430 = vmatprep.subr.mxu0 0.0
  %2431 = vmatpush1.msra.mxu0 0.0
  %2432 = vmatprep.subr.mxu0 0.0
  %2433 = vmatpush1.msra.mxu0 0.0
  %2434 = vmatprep.subr.mxu0 0.0
  %2435 = vmatpush1.msra.mxu0 0.0
  %2436 = vmatprep.subr.mxu0 0.0
  %2437 = vmatpush1.msra.mxu0 0.0
  %2438 = vmatprep.subr.mxu0 0.0
  %2439 = vmatpush1.msra.mxu0 0.0
  %2440 = vmatprep.subr.mxu0 0.0
  %2441 = vmatpush1.msra.mxu0 0.0
  %2442 = vmatprep.subr.mxu0 0.0
  %2443 = vmatpush1.msra.mxu0 0.0
  %2444 = vmatprep.subr.mxu0 0.0
  %2445 = vmatpush1.msra.mxu0 0.0
  %2446 = vmatprep.subr.mxu0 0.0
  %2447 = vmatpush1.msra.mxu0 0.0
  %2448 = vmatprep.subr.mxu0 0.0
  %2449 = vmatpush1.msra.mxu0 0.0
  %2450 = vmatprep.mubr.f32.mxu0 0.0
  %2451 = vmatmul.mubr.f32.gmra.mrb[0].mxu0 %v2242
  %v2452 = vpop.f32.mrb[0].mxu0
  %v2453 = vadd.f32 0.0, %v2452
  %v2454 = vpop.f32.mrb[0].mxu0
  %2455 = vdwg.mxu0
  %v2456 = vadd.f32 %v486, %v2453
  %2457 = vmatprep.subr.mxu0 0.0
  %2458 = vmatpush1.msra.mxu0 %v881
  %2459 = vmatprep.subr.mxu0 0.0
  %2460 = vmatpush1.msra.mxu0 %v883
  %2461 = vmatprep.subr.mxu0 0.0
  %2462 = vmatpush1.msra.mxu0 %v885
  %2463 = vmatprep.subr.mxu0 0.0
  %2464 = vmatpush1.msra.mxu0 %v887
  %2465 = vmatprep.subr.mxu0 0.0
  %2466 = vmatpush1.msra.mxu0 0.0
  %2467 = vmatprep.subr.mxu0 0.0
  %2468 = vmatpush1.msra.mxu0 0.0
  %2469 = vmatprep.subr.mxu0 0.0
  %2470 = vmatpush1.msra.mxu0 0.0
  %2471 = vmatprep.subr.mxu0 0.0
  %2472 = vmatpush1.msra.mxu0 0.0
  %2473 = vmatprep.subr.mxu0 0.0
  %2474 = vmatpush1.msra.mxu0 0.0
  %2475 = vmatprep.subr.mxu0 0.0
  %2476 = vmatpush1.msra.mxu0 0.0
  %2477 = vmatprep.subr.mxu0 0.0
  %2478 = vmatpush1.msra.mxu0 0.0
  %2479 = vmatprep.subr.mxu0 0.0
  %2480 = vmatpush1.msra.mxu0 0.0
  %2481 = vmatprep.subr.mxu0 0.0
  %2482 = vmatpush1.msra.mxu0 0.0
  %2483 = vmatprep.subr.mxu0 0.0
  %2484 = vmatpush1.msra.mxu0 0.0
  %2485 = vmatprep.subr.mxu0 0.0
  %2486 = vmatpush1.msra.mxu0 0.0
  %2487 = vmatprep.subr.mxu0 0.0
  %2488 = vmatpush1.msra.mxu0 0.0
  %2489 = vmatprep.subr.mxu0 0.0
  %2490 = vmatpush1.msra.mxu0 0.0
  %2491 = vmatprep.subr.mxu0 0.0
  %2492 = vmatpush1.msra.mxu0 0.0
  %2493 = vmatprep.subr.mxu0 0.0
  %2494 = vmatpush1.msra.mxu0 0.0
  %2495 = vmatprep.subr.mxu0 0.0
  %2496 = vmatpush1.msra.mxu0 0.0
  %2497 = vmatprep.subr.mxu0 0.0
  %2498 = vmatpush1.msra.mxu0 0.0
  %2499 = vmatprep.subr.mxu0 0.0
  %2500 = vmatpush1.msra.mxu0 0.0
  %2501 = vmatprep.subr.mxu0 0.0
  %2502 = vmatpush1.msra.mxu0 0.0
  %2503 = vmatprep.subr.mxu0 0.0
  %2504 = vmatpush1.msra.mxu0 0.0
  %2505 = vmatprep.subr.mxu0 0.0
  %2506 = vmatpush1.msra.mxu0 0.0
  %2507 = vmatprep.subr.mxu0 0.0
  %2508 = vmatpush1.msra.mxu0 0.0
  %2509 = vmatprep.subr.mxu0 0.0
  %2510 = vmatpush1.msra.mxu0 0.0
  %2511 = vmatprep.subr.mxu0 0.0
  %2512 = vmatpush1.msra.mxu0 0.0
  %2513 = vmatprep.subr.mxu0 0.0
  %2514 = vmatpush1.msra.mxu0 0.0
  %2515 = vmatprep.subr.mxu0 0.0
  %2516 = vmatpush1.msra.mxu0 0.0
  %2517 = vmatprep.subr.mxu0 0.0
  %2518 = vmatpush1.msra.mxu0 0.0
  %2519 = vmatprep.subr.mxu0 0.0
  %2520 = vmatpush1.msra.mxu0 0.0
  %2521 = vmatprep.mubr.f32.mxu0 0.0
  %2522 = vmatmul.mubr.f32.gmra.mrb[0].mxu0 %v2242
  %v2523 = vpop.f32.mrb[0].mxu0
  %v2524 = vadd.f32 0.0, %v2523
  %v2525 = vpop.f32.mrb[0].mxu0
  %2526 = vdwg.mxu0
  %v2527 = vadd.f32 %v623, %v2524
  %v2528 = vxor.u32 %v2314, 2147483648
  %v2529 = vmul.f32 %v2528, 1.442695
  %v2530 = vpow.pop %v2529
  %v2531 = vadd.f32 %v2530, 1.0
  %v2532 = vrcp.pop %v2531
  %v2533 = vmul.f32 1.0, %v2532
  %v2534 = vxor.u32 %v2385, 2147483648
  %v2535 = vmul.f32 %v2534, 1.442695
  %v2536 = vpow.pop %v2535
  %v2537 = vadd.f32 %v2536, 1.0
  %v2538 = vrcp.pop %v2537
  %v2539 = vmul.f32 1.0, %v2538
  %v2540 = vtanh.pop %v2456
  %v2541 = vxor.u32 %v2527, 2147483648
  %v2542 = vmul.f32 %v2541, 1.442695
  %v2543 = vpow.pop %v2542
  %v2544 = vadd.f32 %v2543, 1.0
  %v2545 = vrcp.pop %v2544
  %v2546 = vmul.f32 1.0, %v2545
  %v2547 = vmul.f32 %v2539, %v2236
  %v2548 = vmul.f32 %v2533, %v2540
  %v2549 = vadd.f32 %v2547, %v2548
  %v2550 = vtanh.pop %v2549
  %v2551 = vmul.f32 %v2546, %v2550
  %s2552 = scalar_lea.vmem [#allocation2], 10
  %2553 = vst.msk [vmem:[%s2552] sm:$0x3] %vm987, %v2551
  %v2555 = vsel %vm90, %v2551, 0
  %2557 = vmatprep.subr.mxu0 0.0
  %2558 = vmatpush1.msra.mxu0 %v37
  %2559 = vmatprep.subr.mxu0 0.0
  %2560 = vmatpush1.msra.mxu0 %v38
  %2561 = vmatprep.subr.mxu0 0.0
  %2562 = vmatpush1.msra.mxu0 %v39
  %2563 = vmatprep.subr.mxu0 0.0
  %2564 = vmatpush1.msra.mxu0 %v40
  %2565 = vmatprep.subr.mxu0 0.0
  %2566 = vmatpush1.msra.mxu0 0.0
  %2567 = vmatprep.subr.mxu0 0.0
  %2568 = vmatpush1.msra.mxu0 0.0
  %2569 = vmatprep.subr.mxu0 0.0
  %2570 = vmatpush1.msra.mxu0 0.0
  %2571 = vmatprep.subr.mxu0 0.0
  %2572 = vmatpush1.msra.mxu0 0.0
  %2573 = vmatprep.subr.mxu0 0.0
  %2574 = vmatpush1.msra.mxu0 0.0
  %2575 = vmatprep.subr.mxu0 0.0
  %2576 = vmatpush1.msra.mxu0 0.0
  %2577 = vmatprep.subr.mxu0 0.0
  %2578 = vmatpush1.msra.mxu0 0.0
  %2579 = vmatprep.subr.mxu0 0.0
  %2580 = vmatpush1.msra.mxu0 0.0
  %2581 = vmatprep.subr.mxu0 0.0
  %2582 = vmatpush1.msra.mxu0 0.0
  %2583 = vmatprep.subr.mxu0 0.0
  %2584 = vmatpush1.msra.mxu0 0.0
  %2585 = vmatprep.subr.mxu0 0.0
  %2586 = vmatpush1.msra.mxu0 0.0
  %2587 = vmatprep.subr.mxu0 0.0
  %2588 = vmatpush1.msra.mxu0 0.0
  %2589 = vmatprep.subr.mxu0 0.0
  %2590 = vmatpush1.msra.mxu0 0.0
  %2591 = vmatprep.subr.mxu0 0.0
  %2592 = vmatpush1.msra.mxu0 0.0
  %2593 = vmatprep.subr.mxu0 0.0
  %2594 = vmatpush1.msra.mxu0 0.0
  %2595 = vmatprep.subr.mxu0 0.0
  %2596 = vmatpush1.msra.mxu0 0.0
  %2597 = vmatprep.subr.mxu0 0.0
  %2598 = vmatpush1.msra.mxu0 0.0
  %2599 = vmatprep.subr.mxu0 0.0
  %2600 = vmatpush1.msra.mxu0 0.0
  %2601 = vmatprep.subr.mxu0 0.0
  %2602 = vmatpush1.msra.mxu0 0.0
  %2603 = vmatprep.subr.mxu0 0.0
  %2604 = vmatpush1.msra.mxu0 0.0
  %2605 = vmatprep.subr.mxu0 0.0
  %2606 = vmatpush1.msra.mxu0 0.0
  %2607 = vmatprep.subr.mxu0 0.0
  %2608 = vmatpush1.msra.mxu0 0.0
  %2609 = vmatprep.subr.mxu0 0.0
  %2610 = vmatpush1.msra.mxu0 0.0
  %2611 = vmatprep.subr.mxu0 0.0
  %2612 = vmatpush1.msra.mxu0 0.0
  %2613 = vmatprep.subr.mxu0 0.0
  %2614 = vmatpush1.msra.mxu0 0.0
  %2615 = vmatprep.subr.mxu0 0.0
  %2616 = vmatpush1.msra.mxu0 0.0
  %2617 = vmatprep.subr.mxu0 0.0
  %2618 = vmatpush1.msra.mxu0 0.0
  %2619 = vmatprep.subr.mxu0 0.0
  %2620 = vmatpush1.msra.mxu0 0.0
  %2621 = vmatprep.mubr.f32.mxu0 0.0
  %2622 = vmatmul.mubr.f32.gmra.mrb[0].mxu0 %v2555
  %v2623 = vpop.f32.mrb[0].mxu0
  %v2624 = vadd.f32 0.0, %v2623
  %v2625 = vpop.f32.mrb[0].mxu0
  %2626 = vdwg.mxu0
  %v2627 = vadd.f32 %v203, %v2624
  %2628 = vmatprep.subr.mxu0 0.0
  %2629 = vmatpush1.msra.mxu0 %v715
  %2630 = vmatprep.subr.mxu0 0.0
  %2631 = vmatpush1.msra.mxu0 %v717
  %2632 = vmatprep.subr.mxu0 0.0
  %2633 = vmatpush1.msra.mxu0 %v719
  %2634 = vmatprep.subr.mxu0 0.0
  %2635 = vmatpush1.msra.mxu0 %v721
  %2636 = vmatprep.subr.mxu0 0.0
  %2637 = vmatpush1.msra.mxu0 0.0
  %2638 = vmatprep.subr.mxu0 0.0
  %2639 = vmatpush1.msra.mxu0 0.0
  %2640 = vmatprep.subr.mxu0 0.0
  %2641 = vmatpush1.msra.mxu0 0.0
  %2642 = vmatprep.subr.mxu0 0.0
  %2643 = vmatpush1.msra.mxu0 0.0
  %2644 = vmatprep.subr.mxu0 0.0
  %2645 = vmatpush1.msra.mxu0 0.0
  %2646 = vmatprep.subr.mxu0 0.0
  %2647 = vmatpush1.msra.mxu0 0.0
  %2648 = vmatprep.subr.mxu0 0.0
  %2649 = vmatpush1.msra.mxu0 0.0
  %2650 = vmatprep.subr.mxu0 0.0
  %2651 = vmatpush1.msra.mxu0 0.0
  %2652 = vmatprep.subr.mxu0 0.0
  %2653 = vmatpush1.msra.mxu0 0.0
  %2654 = vmatprep.subr.mxu0 0.0
  %2655 = vmatpush1.msra.mxu0 0.0
  %2656 = vmatprep.subr.mxu0 0.0
  %2657 = vmatpush1.msra.mxu0 0.0
  %2658 = vmatprep.subr.mxu0 0.0
  %2659 = vmatpush1.msra.mxu0 0.0
  %2660 = vmatprep.subr.mxu0 0.0
  %2661 = vmatpush1.msra.mxu0 0.0
  %2662 = vmatprep.subr.mxu0 0.0
  %2663 = vmatpush1.msra.mxu0 0.0
  %2664 = vmatprep.subr.mxu0 0.0
  %2665 = vmatpush1.msra.mxu0 0.0
  %2666 = vmatprep.subr.mxu0 0.0
  %2667 = vmatpush1.msra.mxu0 0.0
  %2668 = vmatprep.subr.mxu0 0.0
  %2669 = vmatpush1.msra.mxu0 0.0
  %2670 = vmatprep.subr.mxu0 0.0
  %2671 = vmatpush1.msra.mxu0 0.0
  %2672 = vmatprep.subr.mxu0 0.0
  %2673 = vmatpush1.msra.mxu0 0.0
  %2674 = vmatprep.subr.mxu0 0.0
  %2675 = vmatpush1.msra.mxu0 0.0
  %2676 = vmatprep.subr.mxu0 0.0
  %2677 = vmatpush1.msra.mxu0 0.0
  %2678 = vmatprep.subr.mxu0 0.0
  %2679 = vmatpush1.msra.mxu0 0.0
  %2680 = vmatprep.subr.mxu0 0.0
  %2681 = vmatpush1.msra.mxu0 0.0
  %2682 = vmatprep.subr.mxu0 0.0
  %2683 = vmatpush1.msra.mxu0 0.0
  %2684 = vmatprep.subr.mxu0 0.0
  %2685 = vmatpush1.msra.mxu0 0.0
  %2686 = vmatprep.subr.mxu0 0.0
  %2687 = vmatpush1.msra.mxu0 0.0
  %2688 = vmatprep.subr.mxu0 0.0
  %2689 = vmatpush1.msra.mxu0 0.0
  %2690 = vmatprep.subr.mxu0 0.0
  %2691 = vmatpush1.msra.mxu0 0.0
  %2692 = vmatprep.mubr.f32.mxu0 0.0
  %2693 = vmatmul.mubr.f32.gmra.mrb[0].mxu0 %v2555
  %v2694 = vpop.f32.mrb[0].mxu0
  %v2695 = vadd.f32 0.0, %v2694
  %v2696 = vpop.f32.mrb[0].mxu0
  %2697 = vdwg.mxu0
  %v2698 = vadd.f32 %v341, %v2695
  %2699 = vmatprep.subr.mxu0 0.0
  %2700 = vmatpush1.msra.mxu0 %v798
  %2701 = vmatprep.subr.mxu0 0.0
  %2702 = vmatpush1.msra.mxu0 %v800
  %2703 = vmatprep.subr.mxu0 0.0
  %2704 = vmatpush1.msra.mxu0 %v802
  %2705 = vmatprep.subr.mxu0 0.0
  %2706 = vmatpush1.msra.mxu0 %v804
  %2707 = vmatprep.subr.mxu0 0.0
  %2708 = vmatpush1.msra.mxu0 0.0
  %2709 = vmatprep.subr.mxu0 0.0
  %2710 = vmatpush1.msra.mxu0 0.0
  %2711 = vmatprep.subr.mxu0 0.0
  %2712 = vmatpush1.msra.mxu0 0.0
  %2713 = vmatprep.subr.mxu0 0.0
  %2714 = vmatpush1.msra.mxu0 0.0
  %2715 = vmatprep.subr.mxu0 0.0
  %2716 = vmatpush1.msra.mxu0 0.0
  %2717 = vmatprep.subr.mxu0 0.0
  %2718 = vmatpush1.msra.mxu0 0.0
  %2719 = vmatprep.subr.mxu0 0.0
  %2720 = vmatpush1.msra.mxu0 0.0
  %2721 = vmatprep.subr.mxu0 0.0
  %2722 = vmatpush1.msra.mxu0 0.0
  %2723 = vmatprep.subr.mxu0 0.0
  %2724 = vmatpush1.msra.mxu0 0.0
  %2725 = vmatprep.subr.mxu0 0.0
  %2726 = vmatpush1.msra.mxu0 0.0
  %2727 = vmatprep.subr.mxu0 0.0
  %2728 = vmatpush1.msra.mxu0 0.0
  %2729 = vmatprep.subr.mxu0 0.0
  %2730 = vmatpush1.msra.mxu0 0.0
  %2731 = vmatprep.subr.mxu0 0.0
  %2732 = vmatpush1.msra.mxu0 0.0
  %2733 = vmatprep.subr.mxu0 0.0
  %2734 = vmatpush1.msra.mxu0 0.0
  %2735 = vmatprep.subr.mxu0 0.0
  %2736 = vmatpush1.msra.mxu0 0.0
  %2737 = vmatprep.subr.mxu0 0.0
  %2738 = vmatpush1.msra.mxu0 0.0
  %2739 = vmatprep.subr.mxu0 0.0
  %2740 = vmatpush1.msra.mxu0 0.0
  %2741 = vmatprep.subr.mxu0 0.0
  %2742 = vmatpush1.msra.mxu0 0.0
  %2743 = vmatprep.subr.mxu0 0.0
  %2744 = vmatpush1.msra.mxu0 0.0
  %2745 = vmatprep.subr.mxu0 0.0
  %2746 = vmatpush1.msra.mxu0 0.0
  %2747 = vmatprep.subr.mxu0 0.0
  %2748 = vmatpush1.msra.mxu0 0.0
  %2749 = vmatprep.subr.mxu0 0.0
  %2750 = vmatpush1.msra.mxu0 0.0
  %2751 = vmatprep.subr.mxu0 0.0
  %2752 = vmatpush1.msra.mxu0 0.0
  %2753 = vmatprep.subr.mxu0 0.0
  %2754 = vmatpush1.msra.mxu0 0.0
  %2755 = vmatprep.subr.mxu0 0.0
  %2756 = vmatpush1.msra.mxu0 0.0
  %2757 = vmatprep.subr.mxu0 0.0
  %2758 = vmatpush1.msra.mxu0 0.0
  %2759 = vmatprep.subr.mxu0 0.0
  %2760 = vmatpush1.msra.mxu0 0.0
  %2761 = vmatprep.subr.mxu0 0.0
  %2762 = vmatpush1.msra.mxu0 0.0
  %2763 = vmatprep.mubr.f32.mxu0 0.0
  %2764 = vmatmul.mubr.f32.gmra.mrb[0].mxu0 %v2555
  %v2765 = vpop.f32.mrb[0].mxu0
  %v2766 = vadd.f32 0.0, %v2765
  %v2767 = vpop.f32.mrb[0].mxu0
  %2768 = vdwg.mxu0
  %v2769 = vadd.f32 %v485, %v2766
  %2770 = vmatprep.subr.mxu0 0.0
  %2771 = vmatpush1.msra.mxu0 %v881
  %2772 = vmatprep.subr.mxu0 0.0
  %2773 = vmatpush1.msra.mxu0 %v883
  %2774 = vmatprep.subr.mxu0 0.0
  %2775 = vmatpush1.msra.mxu0 %v885
  %2776 = vmatprep.subr.mxu0 0.0
  %2777 = vmatpush1.msra.mxu0 %v887
  %2778 = vmatprep.subr.mxu0 0.0
  %2779 = vmatpush1.msra.mxu0 0.0
  %2780 = vmatprep.subr.mxu0 0.0
  %2781 = vmatpush1.msra.mxu0 0.0
  %2782 = vmatprep.subr.mxu0 0.0
  %2783 = vmatpush1.msra.mxu0 0.0
  %2784 = vmatprep.subr.mxu0 0.0
  %2785 = vmatpush1.msra.mxu0 0.0
  %2786 = vmatprep.subr.mxu0 0.0
  %2787 = vmatpush1.msra.mxu0 0.0
  %2788 = vmatprep.subr.mxu0 0.0
  %2789 = vmatpush1.msra.mxu0 0.0
  %2790 = vmatprep.subr.mxu0 0.0
  %2791 = vmatpush1.msra.mxu0 0.0
  %2792 = vmatprep.subr.mxu0 0.0
  %2793 = vmatpush1.msra.mxu0 0.0
  %2794 = vmatprep.subr.mxu0 0.0
  %2795 = vmatpush1.msra.mxu0 0.0
  %2796 = vmatprep.subr.mxu0 0.0
  %2797 = vmatpush1.msra.mxu0 0.0
  %2798 = vmatprep.subr.mxu0 0.0
  %2799 = vmatpush1.msra.mxu0 0.0
  %2800 = vmatprep.subr.mxu0 0.0
  %2801 = vmatpush1.msra.mxu0 0.0
  %2802 = vmatprep.subr.mxu0 0.0
  %2803 = vmatpush1.msra.mxu0 0.0
  %2804 = vmatprep.subr.mxu0 0.0
  %2805 = vmatpush1.msra.mxu0 0.0
  %2806 = vmatprep.subr.mxu0 0.0
  %2807 = vmatpush1.msra.mxu0 0.0
  %2808 = vmatprep.subr.mxu0 0.0
  %2809 = vmatpush1.msra.mxu0 0.0
  %2810 = vmatprep.subr.mxu0 0.0
  %2811 = vmatpush1.msra.mxu0 0.0
  %2812 = vmatprep.subr.mxu0 0.0
  %2813 = vmatpush1.msra.mxu0 0.0
  %2814 = vmatprep.subr.mxu0 0.0
  %2815 = vmatpush1.msra.mxu0 0.0
  %2816 = vmatprep.subr.mxu0 0.0
  %2817 = vmatpush1.msra.mxu0 0.0
  %2818 = vmatprep.subr.mxu0 0.0
  %2819 = vmatpush1.msra.mxu0 0.0
  %2820 = vmatprep.subr.mxu0 0.0
  %2821 = vmatpush1.msra.mxu0 0.0
  %2822 = vmatprep.subr.mxu0 0.0
  %2823 = vmatpush1.msra.mxu0 0.0
  %2824 = vmatprep.subr.mxu0 0.0
  %2825 = vmatpush1.msra.mxu0 0.0
  %2826 = vmatprep.subr.mxu0 0.0
  %2827 = vmatpush1.msra.mxu0 0.0
  %2828 = vmatprep.subr.mxu0 0.0
  %2829 = vmatpush1.msra.mxu0 0.0
  %2830 = vmatprep.subr.mxu0 0.0
  %2831 = vmatpush1.msra.mxu0 0.0
  %2832 = vmatprep.subr.mxu0 0.0
  %2833 = vmatpush1.msra.mxu0 0.0
  %2834 = vmatprep.mubr.f32.mxu0 0.0
  %2835 = vmatmul.mubr.f32.gmra.mrb[0].mxu0 %v2555
  %v2836 = vpop.f32.mrb[0].mxu0
  %v2837 = vadd.f32 0.0, %v2836
  %v2838 = vpop.f32.mrb[0].mxu0
  %2839 = vdwg.mxu0
  %v2840 = vadd.f32 %v622, %v2837
  %v2841 = vxor.u32 %v2627, 2147483648
  %v2842 = vmul.f32 %v2841, 1.442695
  %v2843 = vpow.pop %v2842
  %v2844 = vadd.f32 %v2843, 1.0
  %v2845 = vrcp.pop %v2844
  %v2846 = vmul.f32 1.0, %v2845
  %v2847 = vxor.u32 %v2698, 2147483648
  %v2848 = vmul.f32 %v2847, 1.442695
  %v2849 = vpow.pop %v2848
  %v2850 = vadd.f32 %v2849, 1.0
  %v2851 = vrcp.pop %v2850
  %v2852 = vmul.f32 1.0, %v2851
  %v2853 = vtanh.pop %v2769
  %v2854 = vxor.u32 %v2840, 2147483648
  %v2855 = vmul.f32 %v2854, 1.442695
  %v2856 = vpow.pop %v2855
  %v2857 = vadd.f32 %v2856, 1.0
  %v2858 = vrcp.pop %v2857
  %v2859 = vmul.f32 1.0, %v2858
  %v2860 = vmul.f32 %v2852, %v2549
  %v2861 = vmul.f32 %v2846, %v2853
  %v2862 = vadd.f32 %v2860, %v2861
  %v2863 = vtanh.pop %v2862
  %v2864 = vmul.f32 %v2859, %v2863
  %s2865 = scalar_lea.vmem [#allocation2], 12
  %2866 = vst.msk [vmem:[%s2865] sm:$0x3] %vm987, %v2864
  %v2868 = vsel %vm90, %v2864, 0
  %2870 = vmatprep.subr.mxu0 0.0
  %2871 = vmatpush1.msra.mxu0 %v37
  %2872 = vmatprep.subr.mxu0 0.0
  %2873 = vmatpush1.msra.mxu0 %v38
  %2874 = vmatprep.subr.mxu0 0.0
  %2875 = vmatpush1.msra.mxu0 %v39
  %2876 = vmatprep.subr.mxu0 0.0
  %2877 = vmatpush1.msra.mxu0 %v40
  %2878 = vmatprep.subr.mxu0 0.0
  %2879 = vmatpush1.msra.mxu0 0.0
  %2880 = vmatprep.subr.mxu0 0.0
  %2881 = vmatpush1.msra.mxu0 0.0
  %2882 = vmatprep.subr.mxu0 0.0
  %2883 = vmatpush1.msra.mxu0 0.0
  %2884 = vmatprep.subr.mxu0 0.0
  %2885 = vmatpush1.msra.mxu0 0.0
  %2886 = vmatprep.subr.mxu0 0.0
  %2887 = vmatpush1.msra.mxu0 0.0
  %2888 = vmatprep.subr.mxu0 0.0
  %2889 = vmatpush1.msra.mxu0 0.0
  %2890 = vmatprep.subr.mxu0 0.0
  %2891 = vmatpush1.msra.mxu0 0.0
  %2892 = vmatprep.subr.mxu0 0.0
  %2893 = vmatpush1.msra.mxu0 0.0
  %2894 = vmatprep.subr.mxu0 0.0
  %2895 = vmatpush1.msra.mxu0 0.0
  %2896 = vmatprep.subr.mxu0 0.0
  %2897 = vmatpush1.msra.mxu0 0.0
  %2898 = vmatprep.subr.mxu0 0.0
  %2899 = vmatpush1.msra.mxu0 0.0
  %2900 = vmatprep.subr.mxu0 0.0
  %2901 = vmatpush1.msra.mxu0 0.0
  %2902 = vmatprep.subr.mxu0 0.0
  %2903 = vmatpush1.msra.mxu0 0.0
  %2904 = vmatprep.subr.mxu0 0.0
  %2905 = vmatpush1.msra.mxu0 0.0
  %2906 = vmatprep.subr.mxu0 0.0
  %2907 = vmatpush1.msra.mxu0 0.0
  %2908 = vmatprep.subr.mxu0 0.0
  %2909 = vmatpush1.msra.mxu0 0.0
  %2910 = vmatprep.subr.mxu0 0.0
  %2911 = vmatpush1.msra.mxu0 0.0
  %2912 = vmatprep.subr.mxu0 0.0
  %2913 = vmatpush1.msra.mxu0 0.0
  %2914 = vmatprep.subr.mxu0 0.0
  %2915 = vmatpush1.msra.mxu0 0.0
  %2916 = vmatprep.subr.mxu0 0.0
  %2917 = vmatpush1.msra.mxu0 0.0
  %2918 = vmatprep.subr.mxu0 0.0
  %2919 = vmatpush1.msra.mxu0 0.0
  %2920 = vmatprep.subr.mxu0 0.0
  %2921 = vmatpush1.msra.mxu0 0.0
  %2922 = vmatprep.subr.mxu0 0.0
  %2923 = vmatpush1.msra.mxu0 0.0
  %2924 = vmatprep.subr.mxu0 0.0
  %2925 = vmatpush1.msra.mxu0 0.0
  %2926 = vmatprep.subr.mxu0 0.0
  %2927 = vmatpush1.msra.mxu0 0.0
  %2928 = vmatprep.subr.mxu0 0.0
  %2929 = vmatpush1.msra.mxu0 0.0
  %2930 = vmatprep.subr.mxu0 0.0
  %2931 = vmatpush1.msra.mxu0 0.0
  %2932 = vmatprep.subr.mxu0 0.0
  %2933 = vmatpush1.msra.mxu0 0.0
  %2934 = vmatprep.mubr.f32.mxu0 0.0
  %2935 = vmatmul.mubr.f32.gmra.mrb[0].mxu0 %v2868
  %v2936 = vpop.f32.mrb[0].mxu0
  %v2937 = vadd.f32 0.0, %v2936
  %v2938 = vpop.f32.mrb[0].mxu0
  %2939 = vdwg.mxu0
  %v2940 = vadd.f32 %v205, %v2937
  %2941 = vmatprep.subr.mxu0 0.0
  %2942 = vmatpush1.msra.mxu0 %v715
  %2943 = vmatprep.subr.mxu0 0.0
  %2944 = vmatpush1.msra.mxu0 %v717
  %2945 = vmatprep.subr.mxu0 0.0
  %2946 = vmatpush1.msra.mxu0 %v719
  %2947 = vmatprep.subr.mxu0 0.0
  %2948 = vmatpush1.msra.mxu0 %v721
  %2949 = vmatprep.subr.mxu0 0.0
  %2950 = vmatpush1.msra.mxu0 0.0
  %2951 = vmatprep.subr.mxu0 0.0
  %2952 = vmatpush1.msra.mxu0 0.0
  %2953 = vmatprep.subr.mxu0 0.0
  %2954 = vmatpush1.msra.mxu0 0.0
  %2955 = vmatprep.subr.mxu0 0.0
  %2956 = vmatpush1.msra.mxu0 0.0
  %2957 = vmatprep.subr.mxu0 0.0
  %2958 = vmatpush1.msra.mxu0 0.0
  %2959 = vmatprep.subr.mxu0 0.0
  %2960 = vmatpush1.msra.mxu0 0.0
  %2961 = vmatprep.subr.mxu0 0.0
  %2962 = vmatpush1.msra.mxu0 0.0
  %2963 = vmatprep.subr.mxu0 0.0
  %2964 = vmatpush1.msra.mxu0 0.0
  %2965 = vmatprep.subr.mxu0 0.0
  %2966 = vmatpush1.msra.mxu0 0.0
  %2967 = vmatprep.subr.mxu0 0.0
  %2968 = vmatpush1.msra.mxu0 0.0
  %2969 = vmatprep.subr.mxu0 0.0
  %2970 = vmatpush1.msra.mxu0 0.0
  %2971 = vmatprep.subr.mxu0 0.0
  %2972 = vmatpush1.msra.mxu0 0.0
  %2973 = vmatprep.subr.mxu0 0.0
  %2974 = vmatpush1.msra.mxu0 0.0
  %2975 = vmatprep.subr.mxu0 0.0
  %2976 = vmatpush1.msra.mxu0 0.0
  %2977 = vmatprep.subr.mxu0 0.0
  %2978 = vmatpush1.msra.mxu0 0.0
  %2979 = vmatprep.subr.mxu0 0.0
  %2980 = vmatpush1.msra.mxu0 0.0
  %2981 = vmatprep.subr.mxu0 0.0
  %2982 = vmatpush1.msra.mxu0 0.0
  %2983 = vmatprep.subr.mxu0 0.0
  %2984 = vmatpush1.msra.mxu0 0.0
  %2985 = vmatprep.subr.mxu0 0.0
  %2986 = vmatpush1.msra.mxu0 0.0
  %2987 = vmatprep.subr.mxu0 0.0
  %2988 = vmatpush1.msra.mxu0 0.0
  %2989 = vmatprep.subr.mxu0 0.0
  %2990 = vmatpush1.msra.mxu0 0.0
  %2991 = vmatprep.subr.mxu0 0.0
  %2992 = vmatpush1.msra.mxu0 0.0
  %2993 = vmatprep.subr.mxu0 0.0
  %2994 = vmatpush1.msra.mxu0 0.0
  %2995 = vmatprep.subr.mxu0 0.0
  %2996 = vmatpush1.msra.mxu0 0.0
  %2997 = vmatprep.subr.mxu0 0.0
  %2998 = vmatpush1.msra.mxu0 0.0
  %2999 = vmatprep.subr.mxu0 0.0
  %3000 = vmatpush1.msra.mxu0 0.0
  %3001 = vmatprep.subr.mxu0 0.0
  %3002 = vmatpush1.msra.mxu0 0.0
  %3003 = vmatprep.subr.mxu0 0.0
  %3004 = vmatpush1.msra.mxu0 0.0
  %3005 = vmatprep.mubr.f32.mxu0 0.0
  %3006 = vmatmul.mubr.f32.gmra.mrb[0].mxu0 %v2868
  %v3007 = vpop.f32.mrb[0].mxu0
  %v3008 = vadd.f32 0.0, %v3007
  %v3009 = vpop.f32.mrb[0].mxu0
  %3010 = vdwg.mxu0
  %v3011 = vadd.f32 %v343, %v3008
  %3012 = vmatprep.subr.mxu0 0.0
  %3013 = vmatpush1.msra.mxu0 %v798
  %3014 = vmatprep.subr.mxu0 0.0
  %3015 = vmatpush1.msra.mxu0 %v800
  %3016 = vmatprep.subr.mxu0 0.0
  %3017 = vmatpush1.msra.mxu0 %v802
  %3018 = vmatprep.subr.mxu0 0.0
  %3019 = vmatpush1.msra.mxu0 %v804
  %3020 = vmatprep.subr.mxu0 0.0
  %3021 = vmatpush1.msra.mxu0 0.0
  %3022 = vmatprep.subr.mxu0 0.0
  %3023 = vmatpush1.msra.mxu0 0.0
  %3024 = vmatprep.subr.mxu0 0.0
  %3025 = vmatpush1.msra.mxu0 0.0
  %3026 = vmatprep.subr.mxu0 0.0
  %3027 = vmatpush1.msra.mxu0 0.0
  %3028 = vmatprep.subr.mxu0 0.0
  %3029 = vmatpush1.msra.mxu0 0.0
  %3030 = vmatprep.subr.mxu0 0.0
  %3031 = vmatpush1.msra.mxu0 0.0
  %3032 = vmatprep.subr.mxu0 0.0
  %3033 = vmatpush1.msra.mxu0 0.0
  %3034 = vmatprep.subr.mxu0 0.0
  %3035 = vmatpush1.msra.mxu0 0.0
  %3036 = vmatprep.subr.mxu0 0.0
  %3037 = vmatpush1.msra.mxu0 0.0
  %3038 = vmatprep.subr.mxu0 0.0
  %3039 = vmatpush1.msra.mxu0 0.0
  %3040 = vmatprep.subr.mxu0 0.0
  %3041 = vmatpush1.msra.mxu0 0.0
  %3042 = vmatprep.subr.mxu0 0.0
  %3043 = vmatpush1.msra.mxu0 0.0
  %3044 = vmatprep.subr.mxu0 0.0
  %3045 = vmatpush1.msra.mxu0 0.0
  %3046 = vmatprep.subr.mxu0 0.0
  %3047 = vmatpush1.msra.mxu0 0.0
  %3048 = vmatprep.subr.mxu0 0.0
  %3049 = vmatpush1.msra.mxu0 0.0
  %3050 = vmatprep.subr.mxu0 0.0
  %3051 = vmatpush1.msra.mxu0 0.0
  %3052 = vmatprep.subr.mxu0 0.0
  %3053 = vmatpush1.msra.mxu0 0.0
  %3054 = vmatprep.subr.mxu0 0.0
  %3055 = vmatpush1.msra.mxu0 0.0
  %3056 = vmatprep.subr.mxu0 0.0
  %3057 = vmatpush1.msra.mxu0 0.0
  %3058 = vmatprep.subr.mxu0 0.0
  %3059 = vmatpush1.msra.mxu0 0.0
  %3060 = vmatprep.subr.mxu0 0.0
  %3061 = vmatpush1.msra.mxu0 0.0
  %3062 = vmatprep.subr.mxu0 0.0
  %3063 = vmatpush1.msra.mxu0 0.0
  %3064 = vmatprep.subr.mxu0 0.0
  %3065 = vmatpush1.msra.mxu0 0.0
  %3066 = vmatprep.subr.mxu0 0.0
  %3067 = vmatpush1.msra.mxu0 0.0
  %3068 = vmatprep.subr.mxu0 0.0
  %3069 = vmatpush1.msra.mxu0 0.0
  %3070 = vmatprep.subr.mxu0 0.0
  %3071 = vmatpush1.msra.mxu0 0.0
  %3072 = vmatprep.subr.mxu0 0.0
  %3073 = vmatpush1.msra.mxu0 0.0
  %3074 = vmatprep.subr.mxu0 0.0
  %3075 = vmatpush1.msra.mxu0 0.0
  %3076 = vmatprep.mubr.f32.mxu0 0.0
  %3077 = vmatmul.mubr.f32.gmra.mrb[0].mxu0 %v2868
  %v3078 = vpop.f32.mrb[0].mxu0
  %v3079 = vadd.f32 0.0, %v3078
  %v3080 = vpop.f32.mrb[0].mxu0
  %3081 = vdwg.mxu0
  %v3082 = vadd.f32 %v487, %v3079
  %3083 = vmatprep.subr.mxu0 0.0
  %3084 = vmatpush1.msra.mxu0 %v881
  %3085 = vmatprep.subr.mxu0 0.0
  %3086 = vmatpush1.msra.mxu0 %v883
  %3087 = vmatprep.subr.mxu0 0.0
  %3088 = vmatpush1.msra.mxu0 %v885
  %3089 = vmatprep.subr.mxu0 0.0
  %3090 = vmatpush1.msra.mxu0 %v887
  %3091 = vmatprep.subr.mxu0 0.0
  %3092 = vmatpush1.msra.mxu0 0.0
  %3093 = vmatprep.subr.mxu0 0.0
  %3094 = vmatpush1.msra.mxu0 0.0
  %3095 = vmatprep.subr.mxu0 0.0
  %3096 = vmatpush1.msra.mxu0 0.0
  %3097 = vmatprep.subr.mxu0 0.0
  %3098 = vmatpush1.msra.mxu0 0.0
  %3099 = vmatprep.subr.mxu0 0.0
  %3100 = vmatpush1.msra.mxu0 0.0
  %3101 = vmatprep.subr.mxu0 0.0
  %3102 = vmatpush1.msra.mxu0 0.0
  %3103 = vmatprep.subr.mxu0 0.0
  %3104 = vmatpush1.msra.mxu0 0.0
  %3105 = vmatprep.subr.mxu0 0.0
  %3106 = vmatpush1.msra.mxu0 0.0
  %3107 = vmatprep.subr.mxu0 0.0
  %3108 = vmatpush1.msra.mxu0 0.0
  %3109 = vmatprep.subr.mxu0 0.0
  %3110 = vmatpush1.msra.mxu0 0.0
  %3111 = vmatprep.subr.mxu0 0.0
  %3112 = vmatpush1.msra.mxu0 0.0
  %3113 = vmatprep.subr.mxu0 0.0
  %3114 = vmatpush1.msra.mxu0 0.0
  %3115 = vmatprep.subr.mxu0 0.0
  %3116 = vmatpush1.msra.mxu0 0.0
  %3117 = vmatprep.subr.mxu0 0.0
  %3118 = vmatpush1.msra.mxu0 0.0
  %3119 = vmatprep.subr.mxu0 0.0
  %3120 = vmatpush1.msra.mxu0 0.0
  %3121 = vmatprep.subr.mxu0 0.0
  %3122 = vmatpush1.msra.mxu0 0.0
  %3123 = vmatprep.subr.mxu0 0.0
  %3124 = vmatpush1.msra.mxu0 0.0
  %3125 = vmatprep.subr.mxu0 0.0
  %3126 = vmatpush1.msra.mxu0 0.0
  %3127 = vmatprep.subr.mxu0 0.0
  %3128 = vmatpush1.msra.mxu0 0.0
  %3129 = vmatprep.subr.mxu0 0.0
  %3130 = vmatpush1.msra.mxu0 0.0
  %3131 = vmatprep.subr.mxu0 0.0
  %3132 = vmatpush1.msra.mxu0 0.0
  %3133 = vmatprep.subr.mxu0 0.0
  %3134 = vmatpush1.msra.mxu0 0.0
  %3135 = vmatprep.subr.mxu0 0.0
  %3136 = vmatpush1.msra.mxu0 0.0
  %3137 = vmatprep.subr.mxu0 0.0
  %3138 = vmatpush1.msra.mxu0 0.0
  %3139 = vmatprep.subr.mxu0 0.0
  %3140 = vmatpush1.msra.mxu0 0.0
  %3141 = vmatprep.subr.mxu0 0.0
  %3142 = vmatpush1.msra.mxu0 0.0
  %3143 = vmatprep.subr.mxu0 0.0
  %3144 = vmatpush1.msra.mxu0 0.0
  %3145 = vmatprep.subr.mxu0 0.0
  %3146 = vmatpush1.msra.mxu0 0.0
  %3147 = vmatprep.mubr.f32.mxu0 0.0
  %3148 = vmatmul.mubr.f32.gmra.mrb[0].mxu0 %v2868
  %v3149 = vpop.f32.mrb[0].mxu0
  %v3150 = vadd.f32 0.0, %v3149
  %v3151 = vpop.f32.mrb[0].mxu0
  %3152 = vdwg.mxu0
  %v3153 = vadd.f32 %v624, %v3150
  %v3154 = vxor.u32 %v2940, 2147483648
  %v3155 = vmul.f32 %v3154, 1.442695
  %v3156 = vpow.pop %v3155
  %v3157 = vadd.f32 %v3156, 1.0
  %v3158 = vrcp.pop %v3157
  %v3159 = vmul.f32 1.0, %v3158
  %v3160 = vxor.u32 %v3011, 2147483648
  %v3161 = vmul.f32 %v3160, 1.442695
  %v3162 = vpow.pop %v3161
  %v3163 = vadd.f32 %v3162, 1.0
  %v3164 = vrcp.pop %v3163
  %v3165 = vmul.f32 1.0, %v3164
  %v3166 = vtanh.pop %v3082
  %v3167 = vxor.u32 %v3153, 2147483648
  %v3168 = vmul.f32 %v3167, 1.442695
  %v3169 = vpow.pop %v3168
  %v3170 = vadd.f32 %v3169, 1.0
  %v3171 = vrcp.pop %v3170
  %v3172 = vmul.f32 1.0, %v3171
  %v3173 = vmul.f32 %v3165, %v2862
  %v3174 = vmul.f32 %v3159, %v3166
  %v3175 = vadd.f32 %v3173, %v3174
  %v3176 = vtanh.pop %v3175
  %v3177 = vmul.f32 %v3172, %v3176
  %s3178 = scalar_lea.vmem [#allocation2], 14
  %3179 = vst.msk [vmem:[%s3178] sm:$0x3] %vm987, %v3177
  %v3180 = vld [vmem:[#allocation2] sm:$0x3]
  %v3181 = vld [vmem:[#allocation2 + $0x2] sm:$0x3]
  %v3182 = vld [vmem:[#allocation2 + $0x4] sm:$0x3]
  %v3183 = vld [vmem:[#allocation2 + $0x6] sm:$0x3]
  %v3184 = vld [vmem:[#allocation2 + $0x8] sm:$0x3]
  %v3185 = vld [vmem:[#allocation2 + $0xa] sm:$0x3]
  %v3186 = vld [vmem:[#allocation2 + $0xc] sm:$0x3]
  %v3187 = vld [vmem:[#allocation2 + $0xe] sm:$0x3]
  %v3196 = vcombine.low %v3180, %v3181
  %v3197 = vcombine.low %v3182, %v3183
  %v3199 = vunpack.c.l.s4 1983009808
  %v3200 = vunpack.c.0.s8 %v3199
  %v3201 = vlaneseq
  %v3202 = vshrl.u32 %v3201, 7
  %v3203 = vsub.s32 %v3200, %v3202
  %v3204 = vrot.slane %v3196, %v3203
  %v3206 = vunpack.c.l.s4 1983009808
  %v3207 = vunpack.c.0.s8 %v3206
  %v3208 = vlaneseq
  %v3209 = vshrl.u32 %v3208, 7
  %v3210 = vsub.s32 %v3207, %v3209
  %v3211 = vrot.slane %v3197, %v3210
  %v3212 = vcombine.low %v3204, %v3211
  %v3213 = vcombine.low %v3184, %v3185
  %v3214 = vcombine.low %v3186, %v3187
  %v3216 = vunpack.c.l.s4 1983009808
  %v3217 = vunpack.c.0.s8 %v3216
  %v3218 = vlaneseq
  %v3219 = vshrl.u32 %v3218, 7
  %v3220 = vsub.s32 %v3217, %v3219
  %v3221 = vrot.slane %v3213, %v3220
  %v3223 = vunpack.c.l.s4 1983009808
  %v3224 = vunpack.c.0.s8 %v3223
  %v3225 = vlaneseq
  %v3226 = vshrl.u32 %v3225, 7
  %v3227 = vsub.s32 %v3224, %v3226
  %v3228 = vrot.slane %v3214, %v3227
  %v3229 = vcombine.low %v3221, %v3228
  %v3230 = vsel %vm90, %v3212, 0
  %v3232 = vsel %vm90, %v3229, 0
  %3234 = vmatprep.subr.mxu0 0.0
  %3235 = vmatpush1.msra.mxu0 %v33
  %3236 = vmatprep.subr.mxu0 0.0
  %3237 = vmatpush1.msra.mxu0 %v34
  %3238 = vmatprep.subr.mxu0 0.0
  %3239 = vmatpush1.msra.mxu0 %v35
  %3240 = vmatprep.subr.mxu0 0.0
  %3241 = vmatpush1.msra.mxu0 %v36
  %3242 = vmatprep.subr.mxu0 0.0
  %3243 = vmatpush1.msra.mxu0 0.0
  %3244 = vmatprep.subr.mxu0 0.0
  %3245 = vmatpush1.msra.mxu0 0.0
  %3246 = vmatprep.subr.mxu0 0.0
  %3247 = vmatpush1.msra.mxu0 0.0
  %3248 = vmatprep.subr.mxu0 0.0
  %3249 = vmatpush1.msra.mxu0 0.0
  %3250 = vmatprep.subr.mxu0 0.0
  %3251 = vmatpush1.msra.mxu0 0.0
  %3252 = vmatprep.subr.mxu0 0.0
  %3253 = vmatpush1.msra.mxu0 0.0
  %3254 = vmatprep.subr.mxu0 0.0
  %3255 = vmatpush1.msra.mxu0 0.0
  %3256 = vmatprep.subr.mxu0 0.0
  %3257 = vmatpush1.msra.mxu0 0.0
  %3258 = vmatprep.subr.mxu0 0.0
  %3259 = vmatpush1.msra.mxu0 0.0
  %3260 = vmatprep.subr.mxu0 0.0
  %3261 = vmatpush1.msra.mxu0 0.0
  %3262 = vmatprep.subr.mxu0 0.0
  %3263 = vmatpush1.msra.mxu0 0.0
  %3264 = vmatprep.subr.mxu0 0.0
  %3265 = vmatpush1.msra.mxu0 0.0
  %3266 = vmatprep.subr.mxu0 0.0
  %3267 = vmatpush1.msra.mxu0 0.0
  %3268 = vmatprep.subr.mxu0 0.0
  %3269 = vmatpush1.msra.mxu0 0.0
  %3270 = vmatprep.subr.mxu0 0.0
  %3271 = vmatpush1.msra.mxu0 0.0
  %3272 = vmatprep.subr.mxu0 0.0
  %3273 = vmatpush1.msra.mxu0 0.0
  %3274 = vmatprep.subr.mxu0 0.0
  %3275 = vmatpush1.msra.mxu0 0.0
  %3276 = vmatprep.subr.mxu0 0.0
  %3277 = vmatpush1.msra.mxu0 0.0
  %3278 = vmatprep.subr.mxu0 0.0
  %3279 = vmatpush1.msra.mxu0 0.0
  %3280 = vmatprep.subr.mxu0 0.0
  %3281 = vmatpush1.msra.mxu0 0.0
  %3282 = vmatprep.subr.mxu0 0.0
  %3283 = vmatpush1.msra.mxu0 0.0
  %3284 = vmatprep.subr.mxu0 0.0
  %3285 = vmatpush1.msra.mxu0 0.0
  %3286 = vmatprep.subr.mxu0 0.0
  %3287 = vmatpush1.msra.mxu0 0.0
  %3288 = vmatprep.subr.mxu0 0.0
  %3289 = vmatpush1.msra.mxu0 0.0
  %3290 = vmatprep.subr.mxu0 0.0
  %3291 = vmatpush1.msra.mxu0 0.0
  %3292 = vmatprep.subr.mxu0 0.0
  %3293 = vmatpush1.msra.mxu0 0.0
  %3294 = vmatprep.subr.mxu0 0.0
  %3295 = vmatpush1.msra.mxu0 0.0
  %3296 = vmatprep.subr.mxu0 0.0
  %3297 = vmatpush1.msra.mxu0 0.0
  %3298 = vmatprep.mubr.f32.mxu0 0.0
  %3299 = vmatmul.mubr.f32.gmra.mrb[0].mxu0 %v3230
  %v3300 = vpop.f32.mrb[0].mxu0
  %v3301 = vadd.f32 0.0, %v3300
  %v3302 = vpop.f32.mrb[0].mxu0
  %3303 = vmatprep.mubr.f32.mxu0 0.0
  %3304 = vmatmul.mubr.f32.gmra.mrb[0].mxu0 %v3232
  %v3305 = vpop.f32.mrb[0].mxu0
  %v3306 = vadd.f32 0.0, %v3305
  %v3307 = vpop.f32.mrb[0].mxu0
  %3308 = vdwg.mxu0
  %v3311 = vcombine.high %v3301, %v3301
  %v3313 = vunpack.c.l.s4 1983009808
  %v3314 = vunpack.c.0.s8 %v3313
  %v3315 = vlaneseq
  %v3316 = vshrl.u32 %v3315, 7
  %v3317 = vsub.s32 %v3314, %v3316
  %v3318 = vrot.slane %v3301, %v3317
  %v3320 = vunpack.c.l.s4 1983009808
  %v3321 = vunpack.c.0.s8 %v3320
  %v3322 = vlaneseq
  %v3323 = vshrl.u32 %v3322, 7
  %v3324 = vsub.s32 %v3321, %v3323
  %v3325 = vrot.slane %v3311, %v3324
  %v3326 = vcombine.high %v3318, %v3318
  %v3327 = vcombine.high %v3325, %v3325
  %v3328 = vcombine.high %v3306, %v3306
  %v3330 = vunpack.c.l.s4 1983009808
  %v3331 = vunpack.c.0.s8 %v3330
  %v3332 = vlaneseq
  %v3333 = vshrl.u32 %v3332, 7
  %v3334 = vsub.s32 %v3331, %v3333
  %v3335 = vrot.slane %v3306, %v3334
  %v3337 = vunpack.c.l.s4 1983009808
  %v3338 = vunpack.c.0.s8 %v3337
  %v3339 = vlaneseq
  %v3340 = vshrl.u32 %v3339, 7
  %v3341 = vsub.s32 %v3338, %v3340
  %v3342 = vrot.slane %v3328, %v3341
  %v3343 = vcombine.high %v3335, %v3335
  %v3344 = vcombine.high %v3342, %v3342
  %v3353 = vadd.f32 %v187, %v3318
  %v3354 = vadd.f32 %v186, %v3326
  %v3355 = vadd.f32 %v188, %v3325
  %v3356 = vadd.f32 %v196, %v3327
  %v3357 = vadd.f32 %v204, %v3335
  %v3358 = vadd.f32 %v203, %v3343
  %v3359 = vadd.f32 %v205, %v3342
  %v3360 = vadd.f32 %v46, %v3344
  %3361 = vmatprep.subr.mxu0 0.0
  %3362 = vmatpush1.msra.mxu0 %v219
  %3363 = vmatprep.subr.mxu0 0.0
  %3364 = vmatpush1.msra.mxu0 %v221
  %3365 = vmatprep.subr.mxu0 0.0
  %3366 = vmatpush1.msra.mxu0 %v223
  %3367 = vmatprep.subr.mxu0 0.0
  %3368 = vmatpush1.msra.mxu0 %v225
  %3369 = vmatprep.subr.mxu0 0.0
  %3370 = vmatpush1.msra.mxu0 0.0
  %3371 = vmatprep.subr.mxu0 0.0
  %3372 = vmatpush1.msra.mxu0 0.0
  %3373 = vmatprep.subr.mxu0 0.0
  %3374 = vmatpush1.msra.mxu0 0.0
  %3375 = vmatprep.subr.mxu0 0.0
  %3376 = vmatpush1.msra.mxu0 0.0
  %3377 = vmatprep.subr.mxu0 0.0
  %3378 = vmatpush1.msra.mxu0 0.0
  %3379 = vmatprep.subr.mxu0 0.0
  %3380 = vmatpush1.msra.mxu0 0.0
  %3381 = vmatprep.subr.mxu0 0.0
  %3382 = vmatpush1.msra.mxu0 0.0
  %3383 = vmatprep.subr.mxu0 0.0
  %3384 = vmatpush1.msra.mxu0 0.0
  %3385 = vmatprep.subr.mxu0 0.0
  %3386 = vmatpush1.msra.mxu0 0.0
  %3387 = vmatprep.subr.mxu0 0.0
  %3388 = vmatpush1.msra.mxu0 0.0
  %3389 = vmatprep.subr.mxu0 0.0
  %3390 = vmatpush1.msra.mxu0 0.0
  %3391 = vmatprep.subr.mxu0 0.0
  %3392 = vmatpush1.msra.mxu0 0.0
  %3393 = vmatprep.subr.mxu0 0.0
  %3394 = vmatpush1.msra.mxu0 0.0
  %3395 = vmatprep.subr.mxu0 0.0
  %3396 = vmatpush1.msra.mxu0 0.0
  %3397 = vmatprep.subr.mxu0 0.0
  %3398 = vmatpush1.msra.mxu0 0.0
  %3399 = vmatprep.subr.mxu0 0.0
  %3400 = vmatpush1.msra.mxu0 0.0
  %3401 = vmatprep.subr.mxu0 0.0
  %3402 = vmatpush1.msra.mxu0 0.0
  %3403 = vmatprep.subr.mxu0 0.0
  %3404 = vmatpush1.msra.mxu0 0.0
  %3405 = vmatprep.subr.mxu0 0.0
  %3406 = vmatpush1.msra.mxu0 0.0
  %3407 = vmatprep.subr.mxu0 0.0
  %3408 = vmatpush1.msra.mxu0 0.0
  %3409 = vmatprep.subr.mxu0 0.0
  %3410 = vmatpush1.msra.mxu0 0.0
  %3411 = vmatprep.subr.mxu0 0.0
  %3412 = vmatpush1.msra.mxu0 0.0
  %3413 = vmatprep.subr.mxu0 0.0
  %3414 = vmatpush1.msra.mxu0 0.0
  %3415 = vmatprep.subr.mxu0 0.0
  %3416 = vmatpush1.msra.mxu0 0.0
  %3417 = vmatprep.subr.mxu0 0.0
  %3418 = vmatpush1.msra.mxu0 0.0
  %3419 = vmatprep.subr.mxu0 0.0
  %3420 = vmatpush1.msra.mxu0 0.0
  %3421 = vmatprep.subr.mxu0 0.0
  %3422 = vmatpush1.msra.mxu0 0.0
  %3423 = vmatprep.subr.mxu0 0.0
  %3424 = vmatpush1.msra.mxu0 0.0
  %3425 = vmatprep.mubr.f32.mxu0 0.0
  %3426 = vmatmul.mubr.f32.gmra.mrb[0].mxu0 %v3230
  %v3427 = vpop.f32.mrb[0].mxu0
  %v3428 = vadd.f32 0.0, %v3427
  %v3429 = vpop.f32.mrb[0].mxu0
  %3430 = vmatprep.mubr.f32.mxu0 0.0
  %3431 = vmatmul.mubr.f32.gmra.mrb[0].mxu0 %v3232
  %v3432 = vpop.f32.mrb[0].mxu0
  %v3433 = vadd.f32 0.0, %v3432
  %v3434 = vpop.f32.mrb[0].mxu0
  %3435 = vdwg.mxu0
  %v3438 = vcombine.high %v3428, %v3428
  %v3440 = vunpack.c.l.s4 1983009808
  %v3441 = vunpack.c.0.s8 %v3440
  %v3442 = vlaneseq
  %v3443 = vshrl.u32 %v3442, 7
  %v3444 = vsub.s32 %v3441, %v3443
  %v3445 = vrot.slane %v3428, %v3444
  %v3447 = vunpack.c.l.s4 1983009808
  %v3448 = vunpack.c.0.s8 %v3447
  %v3449 = vlaneseq
  %v3450 = vshrl.u32 %v3449, 7
  %v3451 = vsub.s32 %v3448, %v3450
  %v3452 = vrot.slane %v3438, %v3451
  %v3453 = vcombine.high %v3445, %v3445
  %v3454 = vcombine.high %v3452, %v3452
  %v3455 = vcombine.high %v3433, %v3433
  %v3457 = vunpack.c.l.s4 1983009808
  %v3458 = vunpack.c.0.s8 %v3457
  %v3459 = vlaneseq
  %v3460 = vshrl.u32 %v3459, 7
  %v3461 = vsub.s32 %v3458, %v3460
  %v3462 = vrot.slane %v3433, %v3461
  %v3464 = vunpack.c.l.s4 1983009808
  %v3465 = vunpack.c.0.s8 %v3464
  %v3466 = vlaneseq
  %v3467 = vshrl.u32 %v3466, 7
  %v3468 = vsub.s32 %v3465, %v3467
  %v3469 = vrot.slane %v3455, %v3468
  %v3470 = vcombine.high %v3462, %v3462
  %v3471 = vcombine.high %v3469, %v3469
  %v3480 = vadd.f32 %v325, %v3445
  %v3481 = vadd.f32 %v324, %v3453
  %v3482 = vadd.f32 %v326, %v3452
  %v3483 = vadd.f32 %v334, %v3454
  %v3484 = vadd.f32 %v342, %v3462
  %v3485 = vadd.f32 %v341, %v3470
  %v3486 = vadd.f32 %v343, %v3469
  %v3487 = vadd.f32 %v360, %v3471
  %3488 = vmatprep.subr.mxu0 0.0
  %3489 = vmatpush1.msra.mxu0 %v363
  %3490 = vmatprep.subr.mxu0 0.0
  %3491 = vmatpush1.msra.mxu0 %v365
  %3492 = vmatprep.subr.mxu0 0.0
  %3493 = vmatpush1.msra.mxu0 %v367
  %3494 = vmatprep.subr.mxu0 0.0
  %3495 = vmatpush1.msra.mxu0 %v369
  %3496 = vmatprep.subr.mxu0 0.0
  %3497 = vmatpush1.msra.mxu0 0.0
  %3498 = vmatprep.subr.mxu0 0.0
  %3499 = vmatpush1.msra.mxu0 0.0
  %3500 = vmatprep.subr.mxu0 0.0
  %3501 = vmatpush1.msra.mxu0 0.0
  %3502 = vmatprep.subr.mxu0 0.0
  %3503 = vmatpush1.msra.mxu0 0.0
  %3504 = vmatprep.subr.mxu0 0.0
  %3505 = vmatpush1.msra.mxu0 0.0
  %3506 = vmatprep.subr.mxu0 0.0
  %3507 = vmatpush1.msra.mxu0 0.0
  %3508 = vmatprep.subr.mxu0 0.0
  %3509 = vmatpush1.msra.mxu0 0.0
  %3510 = vmatprep.subr.mxu0 0.0
  %3511 = vmatpush1.msra.mxu0 0.0
  %3512 = vmatprep.subr.mxu0 0.0
  %3513 = vmatpush1.msra.mxu0 0.0
  %3514 = vmatprep.subr.mxu0 0.0
  %3515 = vmatpush1.msra.mxu0 0.0
  %3516 = vmatprep.subr.mxu0 0.0
  %3517 = vmatpush1.msra.mxu0 0.0
  %3518 = vmatprep.subr.mxu0 0.0
  %3519 = vmatpush1.msra.mxu0 0.0
  %3520 = vmatprep.subr.mxu0 0.0
  %3521 = vmatpush1.msra.mxu0 0.0
  %3522 = vmatprep.subr.mxu0 0.0
  %3523 = vmatpush1.msra.mxu0 0.0
  %3524 = vmatprep.subr.mxu0 0.0
  %3525 = vmatpush1.msra.mxu0 0.0
  %3526 = vmatprep.subr.mxu0 0.0
  %3527 = vmatpush1.msra.mxu0 0.0
  %3528 = vmatprep.subr.mxu0 0.0
  %3529 = vmatpush1.msra.mxu0 0.0
  %3530 = vmatprep.subr.mxu0 0.0
  %3531 = vmatpush1.msra.mxu0 0.0
  %3532 = vmatprep.subr.mxu0 0.0
  %3533 = vmatpush1.msra.mxu0 0.0
  %3534 = vmatprep.subr.mxu0 0.0
  %3535 = vmatpush1.msra.mxu0 0.0
  %3536 = vmatprep.subr.mxu0 0.0
  %3537 = vmatpush1.msra.mxu0 0.0
  %3538 = vmatprep.subr.mxu0 0.0
  %3539 = vmatpush1.msra.mxu0 0.0
  %3540 = vmatprep.subr.mxu0 0.0
  %3541 = vmatpush1.msra.mxu0 0.0
  %3542 = vmatprep.subr.mxu0 0.0
  %3543 = vmatpush1.msra.mxu0 0.0
  %3544 = vmatprep.subr.mxu0 0.0
  %3545 = vmatpush1.msra.mxu0 0.0
  %3546 = vmatprep.subr.mxu0 0.0
  %3547 = vmatpush1.msra.mxu0 0.0
  %3548 = vmatprep.subr.mxu0 0.0
  %3549 = vmatpush1.msra.mxu0 0.0
  %3550 = vmatprep.subr.mxu0 0.0
  %3551 = vmatpush1.msra.mxu0 0.0
  %3552 = vmatprep.mubr.f32.mxu0 0.0
  %3553 = vmatmul.mubr.f32.gmra.mrb[0].mxu0 %v3230
  %v3554 = vpop.f32.mrb[0].mxu0
  %v3555 = vadd.f32 0.0, %v3554
  %v3556 = vpop.f32.mrb[0].mxu0
  %3557 = vmatprep.mubr.f32.mxu0 0.0
  %3558 = vmatmul.mubr.f32.gmra.mrb[0].mxu0 %v3232
  %v3559 = vpop.f32.mrb[0].mxu0
  %v3560 = vadd.f32 0.0, %v3559
  %v3561 = vpop.f32.mrb[0].mxu0
  %3562 = vdwg.mxu0
  %v3565 = vcombine.high %v3555, %v3555
  %v3567 = vunpack.c.l.s4 1983009808
  %v3568 = vunpack.c.0.s8 %v3567
  %v3569 = vlaneseq
  %v3570 = vshrl.u32 %v3569, 7
  %v3571 = vsub.s32 %v3568, %v3570
  %v3572 = vrot.slane %v3555, %v3571
  %v3574 = vunpack.c.l.s4 1983009808
  %v3575 = vunpack.c.0.s8 %v3574
  %v3576 = vlaneseq
  %v3577 = vshrl.u32 %v3576, 7
  %v3578 = vsub.s32 %v3575, %v3577
  %v3579 = vrot.slane %v3565, %v3578
  %v3580 = vcombine.high %v3572, %v3572
  %v3581 = vcombine.high %v3579, %v3579
  %v3582 = vcombine.high %v3560, %v3560
  %v3584 = vunpack.c.l.s4 1983009808
  %v3585 = vunpack.c.0.s8 %v3584
  %v3586 = vlaneseq
  %v3587 = vshrl.u32 %v3586, 7
  %v3588 = vsub.s32 %v3585, %v3587
  %v3589 = vrot.slane %v3560, %v3588
  %v3591 = vunpack.c.l.s4 1983009808
  %v3592 = vunpack.c.0.s8 %v3591
  %v3593 = vlaneseq
  %v3594 = vshrl.u32 %v3593, 7
  %v3595 = vsub.s32 %v3592, %v3594
  %v3596 = vrot.slane %v3582, %v3595
  %v3597 = vcombine.high %v3589, %v3589
  %v3598 = vcombine.high %v3596, %v3596
  %v3607 = vadd.f32 %v469, %v3572
  %v3608 = vadd.f32 %v468, %v3580
  %v3609 = vadd.f32 %v470, %v3579
  %v3610 = vadd.f32 %v478, %v3581
  %v3611 = vadd.f32 %v486, %v3589
  %v3612 = vadd.f32 %v485, %v3597
  %v3613 = vadd.f32 %v487, %v3596
  %v3614 = vadd.f32 %v497, %v3598
  %3615 = vmatprep.subr.mxu0 0.0
  %3616 = vmatpush1.msra.mxu0 %v500
  %3617 = vmatprep.subr.mxu0 0.0
  %3618 = vmatpush1.msra.mxu0 %v502
  %3619 = vmatprep.subr.mxu0 0.0
  %3620 = vmatpush1.msra.mxu0 %v504
  %3621 = vmatprep.subr.mxu0 0.0
  %3622 = vmatpush1.msra.mxu0 %v506
  %3623 = vmatprep.subr.mxu0 0.0
  %3624 = vmatpush1.msra.mxu0 0.0
  %3625 = vmatprep.subr.mxu0 0.0
  %3626 = vmatpush1.msra.mxu0 0.0
  %3627 = vmatprep.subr.mxu0 0.0
  %3628 = vmatpush1.msra.mxu0 0.0
  %3629 = vmatprep.subr.mxu0 0.0
  %3630 = vmatpush1.msra.mxu0 0.0
  %3631 = vmatprep.subr.mxu0 0.0
  %3632 = vmatpush1.msra.mxu0 0.0
  %3633 = vmatprep.subr.mxu0 0.0
  %3634 = vmatpush1.msra.mxu0 0.0
  %3635 = vmatprep.subr.mxu0 0.0
  %3636 = vmatpush1.msra.mxu0 0.0
  %3637 = vmatprep.subr.mxu0 0.0
  %3638 = vmatpush1.msra.mxu0 0.0
  %3639 = vmatprep.subr.mxu0 0.0
  %3640 = vmatpush1.msra.mxu0 0.0
  %3641 = vmatprep.subr.mxu0 0.0
  %3642 = vmatpush1.msra.mxu0 0.0
  %3643 = vmatprep.subr.mxu0 0.0
  %3644 = vmatpush1.msra.mxu0 0.0
  %3645 = vmatprep.subr.mxu0 0.0
  %3646 = vmatpush1.msra.mxu0 0.0
  %3647 = vmatprep.subr.mxu0 0.0
  %3648 = vmatpush1.msra.mxu0 0.0
  %3649 = vmatprep.subr.mxu0 0.0
  %3650 = vmatpush1.msra.mxu0 0.0
  %3651 = vmatprep.subr.mxu0 0.0
  %3652 = vmatpush1.msra.mxu0 0.0
  %3653 = vmatprep.subr.mxu0 0.0
  %3654 = vmatpush1.msra.mxu0 0.0
  %3655 = vmatprep.subr.mxu0 0.0
  %3656 = vmatpush1.msra.mxu0 0.0
  %3657 = vmatprep.subr.mxu0 0.0
  %3658 = vmatpush1.msra.mxu0 0.0
  %3659 = vmatprep.subr.mxu0 0.0
  %3660 = vmatpush1.msra.mxu0 0.0
  %3661 = vmatprep.subr.mxu0 0.0
  %3662 = vmatpush1.msra.mxu0 0.0
  %3663 = vmatprep.subr.mxu0 0.0
  %3664 = vmatpush1.msra.mxu0 0.0
  %3665 = vmatprep.subr.mxu0 0.0
  %3666 = vmatpush1.msra.mxu0 0.0
  %3667 = vmatprep.subr.mxu0 0.0
  %3668 = vmatpush1.msra.mxu0 0.0
  %3669 = vmatprep.subr.mxu0 0.0
  %3670 = vmatpush1.msra.mxu0 0.0
  %3671 = vmatprep.subr.mxu0 0.0
  %3672 = vmatpush1.msra.mxu0 0.0
  %3673 = vmatprep.subr.mxu0 0.0
  %3674 = vmatpush1.msra.mxu0 0.0
  %3675 = vmatprep.subr.mxu0 0.0
  %3676 = vmatpush1.msra.mxu0 0.0
  %3677 = vmatprep.subr.mxu0 0.0
  %3678 = vmatpush1.msra.mxu0 0.0
  %3679 = vmatprep.mubr.f32.mxu0 0.0
  %3680 = vmatmul.mubr.f32.gmra.mrb[0].mxu0 %v3230
  %v3681 = vpop.f32.mrb[0].mxu0
  %v3682 = vadd.f32 0.0, %v3681
  %v3683 = vpop.f32.mrb[0].mxu0
  %3684 = vmatprep.mubr.f32.mxu0 0.0
  %3685 = vmatmul.mubr.f32.gmra.mrb[0].mxu0 %v3232
  %v3686 = vpop.f32.mrb[0].mxu0
  %v3687 = vadd.f32 0.0, %v3686
  %v3688 = vpop.f32.mrb[0].mxu0
  %3689 = vdwg.mxu0
  %v3692 = vcombine.high %v3682, %v3682
  %v3694 = vunpack.c.l.s4 1983009808
  %v3695 = vunpack.c.0.s8 %v3694
  %v3696 = vlaneseq
  %v3697 = vshrl.u32 %v3696, 7
  %v3698 = vsub.s32 %v3695, %v3697
  %v3699 = vrot.slane %v3682, %v3698
  %v3701 = vunpack.c.l.s4 1983009808
  %v3702 = vunpack.c.0.s8 %v3701
  %v3703 = vlaneseq
  %v3704 = vshrl.u32 %v3703, 7
  %v3705 = vsub.s32 %v3702, %v3704
  %v3706 = vrot.slane %v3692, %v3705
  %v3707 = vcombine.high %v3699, %v3699
  %v3708 = vcombine.high %v3706, %v3706
  %v3709 = vcombine.high %v3687, %v3687
  %v3711 = vunpack.c.l.s4 1983009808
  %v3712 = vunpack.c.0.s8 %v3711
  %v3713 = vlaneseq
  %v3714 = vshrl.u32 %v3713, 7
  %v3715 = vsub.s32 %v3712, %v3714
  %v3716 = vrot.slane %v3687, %v3715
  %v3718 = vunpack.c.l.s4 1983009808
  %v3719 = vunpack.c.0.s8 %v3718
  %v3720 = vlaneseq
  %v3721 = vshrl.u32 %v3720, 7
  %v3722 = vsub.s32 %v3719, %v3721
  %v3723 = vrot.slane %v3709, %v3722
  %v3724 = vcombine.high %v3716, %v3716
  %v3725 = vcombine.high %v3723, %v3723
  %v3734 = vadd.f32 %v606, %v3699
  %v3735 = vadd.f32 %v605, %v3707
  %v3736 = vadd.f32 %v607, %v3706
  %v3737 = vadd.f32 %v615, %v3708
  %v3738 = vadd.f32 %v623, %v3716
  %v3739 = vadd.f32 %v622, %v3724
  %v3740 = vadd.f32 %v624, %v3723
  %v3741 = vadd.f32 %v634, %v3725
  %v3743 = vsel %vm90, %v3177, 0
  %3745 = vmatprep.subr.mxu0 0.0
  %3746 = vmatpush1.msra.mxu0 %v37
  %3747 = vmatprep.subr.mxu0 0.0
  %3748 = vmatpush1.msra.mxu0 %v38
  %3749 = vmatprep.subr.mxu0 0.0
  %3750 = vmatpush1.msra.mxu0 %v39
  %3751 = vmatprep.subr.mxu0 0.0
  %3752 = vmatpush1.msra.mxu0 %v40
  %3753 = vmatprep.subr.mxu0 0.0
  %3754 = vmatpush1.msra.mxu0 0.0
  %3755 = vmatprep.subr.mxu0 0.0
  %3756 = vmatpush1.msra.mxu0 0.0
  %3757 = vmatprep.subr.mxu0 0.0
  %3758 = vmatpush1.msra.mxu0 0.0
  %3759 = vmatprep.subr.mxu0 0.0
  %3760 = vmatpush1.msra.mxu0 0.0
  %3761 = vmatprep.subr.mxu0 0.0
  %3762 = vmatpush1.msra.mxu0 0.0
  %3763 = vmatprep.subr.mxu0 0.0
  %3764 = vmatpush1.msra.mxu0 0.0
  %3765 = vmatprep.subr.mxu0 0.0
  %3766 = vmatpush1.msra.mxu0 0.0
  %3767 = vmatprep.subr.mxu0 0.0
  %3768 = vmatpush1.msra.mxu0 0.0
  %3769 = vmatprep.subr.mxu0 0.0
  %3770 = vmatpush1.msra.mxu0 0.0
  %3771 = vmatprep.subr.mxu0 0.0
  %3772 = vmatpush1.msra.mxu0 0.0
  %3773 = vmatprep.subr.mxu0 0.0
  %3774 = vmatpush1.msra.mxu0 0.0
  %3775 = vmatprep.subr.mxu0 0.0
  %3776 = vmatpush1.msra.mxu0 0.0
  %3777 = vmatprep.subr.mxu0 0.0
  %3778 = vmatpush1.msra.mxu0 0.0
  %3779 = vmatprep.subr.mxu0 0.0
  %3780 = vmatpush1.msra.mxu0 0.0
  %3781 = vmatprep.subr.mxu0 0.0
  %3782 = vmatpush1.msra.mxu0 0.0
  %3783 = vmatprep.subr.mxu0 0.0
  %3784 = vmatpush1.msra.mxu0 0.0
  %3785 = vmatprep.subr.mxu0 0.0
  %3786 = vmatpush1.msra.mxu0 0.0
  %3787 = vmatprep.subr.mxu0 0.0
  %3788 = vmatpush1.msra.mxu0 0.0
  %3789 = vmatprep.subr.mxu0 0.0
  %3790 = vmatpush1.msra.mxu0 0.0
  %3791 = vmatprep.subr.mxu0 0.0
  %3792 = vmatpush1.msra.mxu0 0.0
  %3793 = vmatprep.subr.mxu0 0.0
  %3794 = vmatpush1.msra.mxu0 0.0
  %3795 = vmatprep.subr.mxu0 0.0
  %3796 = vmatpush1.msra.mxu0 0.0
  %3797 = vmatprep.subr.mxu0 0.0
  %3798 = vmatpush1.msra.mxu0 0.0
  %3799 = vmatprep.subr.mxu0 0.0
  %3800 = vmatpush1.msra.mxu0 0.0
  %3801 = vmatprep.subr.mxu0 0.0
  %3802 = vmatpush1.msra.mxu0 0.0
  %3803 = vmatprep.subr.mxu0 0.0
  %3804 = vmatpush1.msra.mxu0 0.0
  %3805 = vmatprep.subr.mxu0 0.0
  %3806 = vmatpush1.msra.mxu0 0.0
  %3807 = vmatprep.subr.mxu0 0.0
  %3808 = vmatpush1.msra.mxu0 0.0
  %3809 = vmatprep.mubr.f32.mxu0 0.0
  %3810 = vmatmul.mubr.f32.gmra.mrb[0].mxu0 %v3743
  %v3811 = vpop.f32.mrb[0].mxu0
  %v3812 = vadd.f32 0.0, %v3811
  %v3813 = vpop.f32.mrb[0].mxu0
  %3814 = vdwg.mxu0
  %v3815 = vadd.f32 %v3353, %v3812
  %3816 = vmatprep.subr.mxu0 0.0
  %3817 = vmatpush1.msra.mxu0 %v715
  %3818 = vmatprep.subr.mxu0 0.0
  %3819 = vmatpush1.msra.mxu0 %v717
  %3820 = vmatprep.subr.mxu0 0.0
  %3821 = vmatpush1.msra.mxu0 %v719
  %3822 = vmatprep.subr.mxu0 0.0
  %3823 = vmatpush1.msra.mxu0 %v721
  %3824 = vmatprep.subr.mxu0 0.0
  %3825 = vmatpush1.msra.mxu0 0.0
  %3826 = vmatprep.subr.mxu0 0.0
  %3827 = vmatpush1.msra.mxu0 0.0
  %3828 = vmatprep.subr.mxu0 0.0
  %3829 = vmatpush1.msra.mxu0 0.0
  %3830 = vmatprep.subr.mxu0 0.0
  %3831 = vmatpush1.msra.mxu0 0.0
  %3832 = vmatprep.subr.mxu0 0.0
  %3833 = vmatpush1.msra.mxu0 0.0
  %3834 = vmatprep.subr.mxu0 0.0
  %3835 = vmatpush1.msra.mxu0 0.0
  %3836 = vmatprep.subr.mxu0 0.0
  %3837 = vmatpush1.msra.mxu0 0.0
  %3838 = vmatprep.subr.mxu0 0.0
  %3839 = vmatpush1.msra.mxu0 0.0
  %3840 = vmatprep.subr.mxu0 0.0
  %3841 = vmatpush1.msra.mxu0 0.0
  %3842 = vmatprep.subr.mxu0 0.0
  %3843 = vmatpush1.msra.mxu0 0.0
  %3844 = vmatprep.subr.mxu0 0.0
  %3845 = vmatpush1.msra.mxu0 0.0
  %3846 = vmatprep.subr.mxu0 0.0
  %3847 = vmatpush1.msra.mxu0 0.0
  %3848 = vmatprep.subr.mxu0 0.0
  %3849 = vmatpush1.msra.mxu0 0.0
  %3850 = vmatprep.subr.mxu0 0.0
  %3851 = vmatpush1.msra.mxu0 0.0
  %3852 = vmatprep.subr.mxu0 0.0
  %3853 = vmatpush1.msra.mxu0 0.0
  %3854 = vmatprep.subr.mxu0 0.0
  %3855 = vmatpush1.msra.mxu0 0.0
  %3856 = vmatprep.subr.mxu0 0.0
  %3857 = vmatpush1.msra.mxu0 0.0
  %3858 = vmatprep.subr.mxu0 0.0
  %3859 = vmatpush1.msra.mxu0 0.0
  %3860 = vmatprep.subr.mxu0 0.0
  %3861 = vmatpush1.msra.mxu0 0.0
  %3862 = vmatprep.subr.mxu0 0.0
  %3863 = vmatpush1.msra.mxu0 0.0
  %3864 = vmatprep.subr.mxu0 0.0
  %3865 = vmatpush1.msra.mxu0 0.0
  %3866 = vmatprep.subr.mxu0 0.0
  %3867 = vmatpush1.msra.mxu0 0.0
  %3868 = vmatprep.subr.mxu0 0.0
  %3869 = vmatpush1.msra.mxu0 0.0
  %3870 = vmatprep.subr.mxu0 0.0
  %3871 = vmatpush1.msra.mxu0 0.0
  %3872 = vmatprep.subr.mxu0 0.0
  %3873 = vmatpush1.msra.mxu0 0.0
  %3874 = vmatprep.subr.mxu0 0.0
  %3875 = vmatpush1.msra.mxu0 0.0
  %3876 = vmatprep.subr.mxu0 0.0
  %3877 = vmatpush1.msra.mxu0 0.0
  %3878 = vmatprep.subr.mxu0 0.0
  %3879 = vmatpush1.msra.mxu0 0.0
  %3880 = vmatprep.mubr.f32.mxu0 0.0
  %3881 = vmatmul.mubr.f32.gmra.mrb[0].mxu0 %v3743
  %v3882 = vpop.f32.mrb[0].mxu0
  %v3883 = vadd.f32 0.0, %v3882
  %v3884 = vpop.f32.mrb[0].mxu0
  %3885 = vdwg.mxu0
  %v3886 = vadd.f32 %v3480, %v3883
  %3887 = vmatprep.subr.mxu0 0.0
  %3888 = vmatpush1.msra.mxu0 %v798
  %3889 = vmatprep.subr.mxu0 0.0
  %3890 = vmatpush1.msra.mxu0 %v800
  %3891 = vmatprep.subr.mxu0 0.0
  %3892 = vmatpush1.msra.mxu0 %v802
  %3893 = vmatprep.subr.mxu0 0.0
  %3894 = vmatpush1.msra.mxu0 %v804
  %3895 = vmatprep.subr.mxu0 0.0
  %3896 = vmatpush1.msra.mxu0 0.0
  %3897 = vmatprep.subr.mxu0 0.0
  %3898 = vmatpush1.msra.mxu0 0.0
  %3899 = vmatprep.subr.mxu0 0.0
  %3900 = vmatpush1.msra.mxu0 0.0
  %3901 = vmatprep.subr.mxu0 0.0
  %3902 = vmatpush1.msra.mxu0 0.0
  %3903 = vmatprep.subr.mxu0 0.0
  %3904 = vmatpush1.msra.mxu0 0.0
  %3905 = vmatprep.subr.mxu0 0.0
  %3906 = vmatpush1.msra.mxu0 0.0
  %3907 = vmatprep.subr.mxu0 0.0
  %3908 = vmatpush1.msra.mxu0 0.0
  %3909 = vmatprep.subr.mxu0 0.0
  %3910 = vmatpush1.msra.mxu0 0.0
  %3911 = vmatprep.subr.mxu0 0.0
  %3912 = vmatpush1.msra.mxu0 0.0
  %3913 = vmatprep.subr.mxu0 0.0
  %3914 = vmatpush1.msra.mxu0 0.0
  %3915 = vmatprep.subr.mxu0 0.0
  %3916 = vmatpush1.msra.mxu0 0.0
  %3917 = vmatprep.subr.mxu0 0.0
  %3918 = vmatpush1.msra.mxu0 0.0
  %3919 = vmatprep.subr.mxu0 0.0
  %3920 = vmatpush1.msra.mxu0 0.0
  %3921 = vmatprep.subr.mxu0 0.0
  %3922 = vmatpush1.msra.mxu0 0.0
  %3923 = vmatprep.subr.mxu0 0.0
  %3924 = vmatpush1.msra.mxu0 0.0
  %3925 = vmatprep.subr.mxu0 0.0
  %3926 = vmatpush1.msra.mxu0 0.0
  %3927 = vmatprep.subr.mxu0 0.0
  %3928 = vmatpush1.msra.mxu0 0.0
  %3929 = vmatprep.subr.mxu0 0.0
  %3930 = vmatpush1.msra.mxu0 0.0
  %3931 = vmatprep.subr.mxu0 0.0
  %3932 = vmatpush1.msra.mxu0 0.0
  %3933 = vmatprep.subr.mxu0 0.0
  %3934 = vmatpush1.msra.mxu0 0.0
  %3935 = vmatprep.subr.mxu0 0.0
  %3936 = vmatpush1.msra.mxu0 0.0
  %3937 = vmatprep.subr.mxu0 0.0
  %3938 = vmatpush1.msra.mxu0 0.0
  %3939 = vmatprep.subr.mxu0 0.0
  %3940 = vmatpush1.msra.mxu0 0.0
  %3941 = vmatprep.subr.mxu0 0.0
  %3942 = vmatpush1.msra.mxu0 0.0
  %3943 = vmatprep.subr.mxu0 0.0
  %3944 = vmatpush1.msra.mxu0 0.0
  %3945 = vmatprep.subr.mxu0 0.0
  %3946 = vmatpush1.msra.mxu0 0.0
  %3947 = vmatprep.subr.mxu0 0.0
  %3948 = vmatpush1.msra.mxu0 0.0
  %3949 = vmatprep.subr.mxu0 0.0
  %3950 = vmatpush1.msra.mxu0 0.0
  %3951 = vmatprep.mubr.f32.mxu0 0.0
  %3952 = vmatmul.mubr.f32.gmra.mrb[0].mxu0 %v3743
  %v3953 = vpop.f32.mrb[0].mxu0
  %v3954 = vadd.f32 0.0, %v3953
  %v3955 = vpop.f32.mrb[0].mxu0
  %3956 = vdwg.mxu0
  %v3957 = vadd.f32 %v3607, %v3954
  %3958 = vmatprep.subr.mxu0 0.0
  %3959 = vmatpush1.msra.mxu0 %v881
  %3960 = vmatprep.subr.mxu0 0.0
  %3961 = vmatpush1.msra.mxu0 %v883
  %3962 = vmatprep.subr.mxu0 0.0
  %3963 = vmatpush1.msra.mxu0 %v885
  %3964 = vmatprep.subr.mxu0 0.0
  %3965 = vmatpush1.msra.mxu0 %v887
  %3966 = vmatprep.subr.mxu0 0.0
  %3967 = vmatpush1.msra.mxu0 0.0
  %3968 = vmatprep.subr.mxu0 0.0
  %3969 = vmatpush1.msra.mxu0 0.0
  %3970 = vmatprep.subr.mxu0 0.0
  %3971 = vmatpush1.msra.mxu0 0.0
  %3972 = vmatprep.subr.mxu0 0.0
  %3973 = vmatpush1.msra.mxu0 0.0
  %3974 = vmatprep.subr.mxu0 0.0
  %3975 = vmatpush1.msra.mxu0 0.0
  %3976 = vmatprep.subr.mxu0 0.0
  %3977 = vmatpush1.msra.mxu0 0.0
  %3978 = vmatprep.subr.mxu0 0.0
  %3979 = vmatpush1.msra.mxu0 0.0
  %3980 = vmatprep.subr.mxu0 0.0
  %3981 = vmatpush1.msra.mxu0 0.0
  %3982 = vmatprep.subr.mxu0 0.0
  %3983 = vmatpush1.msra.mxu0 0.0
  %3984 = vmatprep.subr.mxu0 0.0
  %3985 = vmatpush1.msra.mxu0 0.0
  %3986 = vmatprep.subr.mxu0 0.0
  %3987 = vmatpush1.msra.mxu0 0.0
  %3988 = vmatprep.subr.mxu0 0.0
  %3989 = vmatpush1.msra.mxu0 0.0
  %3990 = vmatprep.subr.mxu0 0.0
  %3991 = vmatpush1.msra.mxu0 0.0
  %3992 = vmatprep.subr.mxu0 0.0
  %3993 = vmatpush1.msra.mxu0 0.0
  %3994 = vmatprep.subr.mxu0 0.0
  %3995 = vmatpush1.msra.mxu0 0.0
  %3996 = vmatprep.subr.mxu0 0.0
  %3997 = vmatpush1.msra.mxu0 0.0
  %3998 = vmatprep.subr.mxu0 0.0
  %3999 = vmatpush1.msra.mxu0 0.0
  %4000 = vmatprep.subr.mxu0 0.0
  %4001 = vmatpush1.msra.mxu0 0.0
  %4002 = vmatprep.subr.mxu0 0.0
  %4003 = vmatpush1.msra.mxu0 0.0
  %4004 = vmatprep.subr.mxu0 0.0
  %4005 = vmatpush1.msra.mxu0 0.0
  %4006 = vmatprep.subr.mxu0 0.0
  %4007 = vmatpush1.msra.mxu0 0.0
  %4008 = vmatprep.subr.mxu0 0.0
  %4009 = vmatpush1.msra.mxu0 0.0
  %4010 = vmatprep.subr.mxu0 0.0
  %4011 = vmatpush1.msra.mxu0 0.0
  %4012 = vmatprep.subr.mxu0 0.0
  %4013 = vmatpush1.msra.mxu0 0.0
  %4014 = vmatprep.subr.mxu0 0.0
  %4015 = vmatpush1.msra.mxu0 0.0
  %4016 = vmatprep.subr.mxu0 0.0
  %4017 = vmatpush1.msra.mxu0 0.0
  %4018 = vmatprep.subr.mxu0 0.0
  %4019 = vmatpush1.msra.mxu0 0.0
  %4020 = vmatprep.subr.mxu0 0.0
  %4021 = vmatpush1.msra.mxu0 0.0
  %4022 = vmatprep.mubr.f32.mxu0 0.0
  %4023 = vmatmul.mubr.f32.gmra.mrb[0].mxu0 %v3743
  %v4024 = vpop.f32.mrb[0].mxu0
  %v4025 = vadd.f32 0.0, %v4024
  %v4026 = vpop.f32.mrb[0].mxu0
  %4027 = vdwg.mxu0
  %v4028 = vadd.f32 %v3734, %v4025
  %v4029 = vxor.u32 %v3815, 2147483648
  %v4030 = vmul.f32 %v4029, 1.442695
  %v4031 = vpow.pop %v4030
  %v4032 = vadd.f32 %v4031, 1.0
  %v4033 = vrcp.pop %v4032
  %v4034 = vmul.f32 1.0, %v4033
  %v4035 = vxor.u32 %v3886, 2147483648
  %v4036 = vmul.f32 %v4035, 1.442695
  %v4037 = vpow.pop %v4036
  %v4038 = vadd.f32 %v4037, 1.0
  %v4039 = vrcp.pop %v4038
  %v4040 = vmul.f32 1.0, %v4039
  %v4041 = vtanh.pop %v3957
  %v4042 = vxor.u32 %v4028, 2147483648
  %v4043 = vmul.f32 %v4042, 1.442695
  %v4044 = vpow.pop %v4043
  %v4045 = vadd.f32 %v4044, 1.0
  %v4046 = vrcp.pop %v4045
  %v4047 = vmul.f32 1.0, %v4046
  %v4048 = vmul.f32 %v4040, %v3175
  %v4049 = vmul.f32 %v4034, %v4041
  %v4050 = vadd.f32 %v4048, %v4049
  %v4051 = vtanh.pop %v4050
  %v4052 = vmul.f32 %v4047, %v4051
  %4053 = vst.msk [vmem:[#allocation3] sm:$0x3] %vm987, %v4052
  %v4055 = vsel %vm90, %v4052, 0
  %4057 = vmatprep.subr.mxu0 0.0
  %4058 = vmatpush1.msra.mxu0 %v37
  %4059 = vmatprep.subr.mxu0 0.0
  %4060 = vmatpush1.msra.mxu0 %v38
  %4061 = vmatprep.subr.mxu0 0.0
  %4062 = vmatpush1.msra.mxu0 %v39
  %4063 = vmatprep.subr.mxu0 0.0
  %4064 = vmatpush1.msra.mxu0 %v40
  %4065 = vmatprep.subr.mxu0 0.0
  %4066 = vmatpush1.msra.mxu0 0.0
  %4067 = vmatprep.subr.mxu0 0.0
  %4068 = vmatpush1.msra.mxu0 0.0
  %4069 = vmatprep.subr.mxu0 0.0
  %4070 = vmatpush1.msra.mxu0 0.0
  %4071 = vmatprep.subr.mxu0 0.0
  %4072 = vmatpush1.msra.mxu0 0.0
  %4073 = vmatprep.subr.mxu0 0.0
  %4074 = vmatpush1.msra.mxu0 0.0
  %4075 = vmatprep.subr.mxu0 0.0
  %4076 = vmatpush1.msra.mxu0 0.0
  %4077 = vmatprep.subr.mxu0 0.0
  %4078 = vmatpush1.msra.mxu0 0.0
  %4079 = vmatprep.subr.mxu0 0.0
  %4080 = vmatpush1.msra.mxu0 0.0
  %4081 = vmatprep.subr.mxu0 0.0
  %4082 = vmatpush1.msra.mxu0 0.0
  %4083 = vmatprep.subr.mxu0 0.0
  %4084 = vmatpush1.msra.mxu0 0.0
  %4085 = vmatprep.subr.mxu0 0.0
  %4086 = vmatpush1.msra.mxu0 0.0
  %4087 = vmatprep.subr.mxu0 0.0
  %4088 = vmatpush1.msra.mxu0 0.0
  %4089 = vmatprep.subr.mxu0 0.0
  %4090 = vmatpush1.msra.mxu0 0.0
  %4091 = vmatprep.subr.mxu0 0.0
  %4092 = vmatpush1.msra.mxu0 0.0
  %4093 = vmatprep.subr.mxu0 0.0
  %4094 = vmatpush1.msra.mxu0 0.0
  %4095 = vmatprep.subr.mxu0 0.0
  %4096 = vmatpush1.msra.mxu0 0.0
  %4097 = vmatprep.subr.mxu0 0.0
  %4098 = vmatpush1.msra.mxu0 0.0
  %4099 = vmatprep.subr.mxu0 0.0
  %4100 = vmatpush1.msra.mxu0 0.0
  %4101 = vmatprep.subr.mxu0 0.0
  %4102 = vmatpush1.msra.mxu0 0.0
  %4103 = vmatprep.subr.mxu0 0.0
  %4104 = vmatpush1.msra.mxu0 0.0
  %4105 = vmatprep.subr.mxu0 0.0
  %4106 = vmatpush1.msra.mxu0 0.0
  %4107 = vmatprep.subr.mxu0 0.0
  %4108 = vmatpush1.msra.mxu0 0.0
  %4109 = vmatprep.subr.mxu0 0.0
  %4110 = vmatpush1.msra.mxu0 0.0
  %4111 = vmatprep.subr.mxu0 0.0
  %4112 = vmatpush1.msra.mxu0 0.0
  %4113 = vmatprep.subr.mxu0 0.0
  %4114 = vmatpush1.msra.mxu0 0.0
  %4115 = vmatprep.subr.mxu0 0.0
  %4116 = vmatpush1.msra.mxu0 0.0
  %4117 = vmatprep.subr.mxu0 0.0
  %4118 = vmatpush1.msra.mxu0 0.0
  %4119 = vmatprep.subr.mxu0 0.0
  %4120 = vmatpush1.msra.mxu0 0.0
  %4121 = vmatprep.mubr.f32.mxu0 0.0
  %4122 = vmatmul.mubr.f32.gmra.mrb[0].mxu0 %v4055
  %v4123 = vpop.f32.mrb[0].mxu0
  %v4124 = vadd.f32 0.0, %v4123
  %v4125 = vpop.f32.mrb[0].mxu0
  %4126 = vdwg.mxu0
  %v4127 = vadd.f32 %v3354, %v4124
  %4128 = vmatprep.subr.mxu0 0.0
  %4129 = vmatpush1.msra.mxu0 %v715
  %4130 = vmatprep.subr.mxu0 0.0
  %4131 = vmatpush1.msra.mxu0 %v717
  %4132 = vmatprep.subr.mxu0 0.0
  %4133 = vmatpush1.msra.mxu0 %v719
  %4134 = vmatprep.subr.mxu0 0.0
  %4135 = vmatpush1.msra.mxu0 %v721
  %4136 = vmatprep.subr.mxu0 0.0
  %4137 = vmatpush1.msra.mxu0 0.0
  %4138 = vmatprep.subr.mxu0 0.0
  %4139 = vmatpush1.msra.mxu0 0.0
  %4140 = vmatprep.subr.mxu0 0.0
  %4141 = vmatpush1.msra.mxu0 0.0
  %4142 = vmatprep.subr.mxu0 0.0
  %4143 = vmatpush1.msra.mxu0 0.0
  %4144 = vmatprep.subr.mxu0 0.0
  %4145 = vmatpush1.msra.mxu0 0.0
  %4146 = vmatprep.subr.mxu0 0.0
  %4147 = vmatpush1.msra.mxu0 0.0
  %4148 = vmatprep.subr.mxu0 0.0
  %4149 = vmatpush1.msra.mxu0 0.0
  %4150 = vmatprep.subr.mxu0 0.0
  %4151 = vmatpush1.msra.mxu0 0.0
  %4152 = vmatprep.subr.mxu0 0.0
  %4153 = vmatpush1.msra.mxu0 0.0
  %4154 = vmatprep.subr.mxu0 0.0
  %4155 = vmatpush1.msra.mxu0 0.0
  %4156 = vmatprep.subr.mxu0 0.0
  %4157 = vmatpush1.msra.mxu0 0.0
  %4158 = vmatprep.subr.mxu0 0.0
  %4159 = vmatpush1.msra.mxu0 0.0
  %4160 = vmatprep.subr.mxu0 0.0
  %4161 = vmatpush1.msra.mxu0 0.0
  %4162 = vmatprep.subr.mxu0 0.0
  %4163 = vmatpush1.msra.mxu0 0.0
  %4164 = vmatprep.subr.mxu0 0.0
  %4165 = vmatpush1.msra.mxu0 0.0
  %4166 = vmatprep.subr.mxu0 0.0
  %4167 = vmatpush1.msra.mxu0 0.0
  %4168 = vmatprep.subr.mxu0 0.0
  %4169 = vmatpush1.msra.mxu0 0.0
  %4170 = vmatprep.subr.mxu0 0.0
  %4171 = vmatpush1.msra.mxu0 0.0
  %4172 = vmatprep.subr.mxu0 0.0
  %4173 = vmatpush1.msra.mxu0 0.0
  %4174 = vmatprep.subr.mxu0 0.0
  %4175 = vmatpush1.msra.mxu0 0.0
  %4176 = vmatprep.subr.mxu0 0.0
  %4177 = vmatpush1.msra.mxu0 0.0
  %4178 = vmatprep.subr.mxu0 0.0
  %4179 = vmatpush1.msra.mxu0 0.0
  %4180 = vmatprep.subr.mxu0 0.0
  %4181 = vmatpush1.msra.mxu0 0.0
  %4182 = vmatprep.subr.mxu0 0.0
  %4183 = vmatpush1.msra.mxu0 0.0
  %4184 = vmatprep.subr.mxu0 0.0
  %4185 = vmatpush1.msra.mxu0 0.0
  %4186 = vmatprep.subr.mxu0 0.0
  %4187 = vmatpush1.msra.mxu0 0.0
  %4188 = vmatprep.subr.mxu0 0.0
  %4189 = vmatpush1.msra.mxu0 0.0
  %4190 = vmatprep.subr.mxu0 0.0
  %4191 = vmatpush1.msra.mxu0 0.0
  %4192 = vmatprep.mubr.f32.mxu0 0.0
  %4193 = vmatmul.mubr.f32.gmra.mrb[0].mxu0 %v4055
  %v4194 = vpop.f32.mrb[0].mxu0
  %v4195 = vadd.f32 0.0, %v4194
  %v4196 = vpop.f32.mrb[0].mxu0
  %4197 = vdwg.mxu0
  %v4198 = vadd.f32 %v3481, %v4195
  %4199 = vmatprep.subr.mxu0 0.0
  %4200 = vmatpush1.msra.mxu0 %v798
  %4201 = vmatprep.subr.mxu0 0.0
  %4202 = vmatpush1.msra.mxu0 %v800
  %4203 = vmatprep.subr.mxu0 0.0
  %4204 = vmatpush1.msra.mxu0 %v802
  %4205 = vmatprep.subr.mxu0 0.0
  %4206 = vmatpush1.msra.mxu0 %v804
  %4207 = vmatprep.subr.mxu0 0.0
  %4208 = vmatpush1.msra.mxu0 0.0
  %4209 = vmatprep.subr.mxu0 0.0
  %4210 = vmatpush1.msra.mxu0 0.0
  %4211 = vmatprep.subr.mxu0 0.0
  %4212 = vmatpush1.msra.mxu0 0.0
  %4213 = vmatprep.subr.mxu0 0.0
  %4214 = vmatpush1.msra.mxu0 0.0
  %4215 = vmatprep.subr.mxu0 0.0
  %4216 = vmatpush1.msra.mxu0 0.0
  %4217 = vmatprep.subr.mxu0 0.0
  %4218 = vmatpush1.msra.mxu0 0.0
  %4219 = vmatprep.subr.mxu0 0.0
  %4220 = vmatpush1.msra.mxu0 0.0
  %4221 = vmatprep.subr.mxu0 0.0
  %4222 = vmatpush1.msra.mxu0 0.0
  %4223 = vmatprep.subr.mxu0 0.0
  %4224 = vmatpush1.msra.mxu0 0.0
  %4225 = vmatprep.subr.mxu0 0.0
  %4226 = vmatpush1.msra.mxu0 0.0
  %4227 = vmatprep.subr.mxu0 0.0
  %4228 = vmatpush1.msra.mxu0 0.0
  %4229 = vmatprep.subr.mxu0 0.0
  %4230 = vmatpush1.msra.mxu0 0.0
  %4231 = vmatprep.subr.mxu0 0.0
  %4232 = vmatpush1.msra.mxu0 0.0
  %4233 = vmatprep.subr.mxu0 0.0
  %4234 = vmatpush1.msra.mxu0 0.0
  %4235 = vmatprep.subr.mxu0 0.0
  %4236 = vmatpush1.msra.mxu0 0.0
  %4237 = vmatprep.subr.mxu0 0.0
  %4238 = vmatpush1.msra.mxu0 0.0
  %4239 = vmatprep.subr.mxu0 0.0
  %4240 = vmatpush1.msra.mxu0 0.0
  %4241 = vmatprep.subr.mxu0 0.0
  %4242 = vmatpush1.msra.mxu0 0.0
  %4243 = vmatprep.subr.mxu0 0.0
  %4244 = vmatpush1.msra.mxu0 0.0
  %4245 = vmatprep.subr.mxu0 0.0
  %4246 = vmatpush1.msra.mxu0 0.0
  %4247 = vmatprep.subr.mxu0 0.0
  %4248 = vmatpush1.msra.mxu0 0.0
  %4249 = vmatprep.subr.mxu0 0.0
  %4250 = vmatpush1.msra.mxu0 0.0
  %4251 = vmatprep.subr.mxu0 0.0
  %4252 = vmatpush1.msra.mxu0 0.0
  %4253 = vmatprep.subr.mxu0 0.0
  %4254 = vmatpush1.msra.mxu0 0.0
  %4255 = vmatprep.subr.mxu0 0.0
  %4256 = vmatpush1.msra.mxu0 0.0
  %4257 = vmatprep.subr.mxu0 0.0
  %4258 = vmatpush1.msra.mxu0 0.0
  %4259 = vmatprep.subr.mxu0 0.0
  %4260 = vmatpush1.msra.mxu0 0.0
  %4261 = vmatprep.subr.mxu0 0.0
  %4262 = vmatpush1.msra.mxu0 0.0
  %4263 = vmatprep.mubr.f32.mxu0 0.0
  %4264 = vmatmul.mubr.f32.gmra.mrb[0].mxu0 %v4055
  %v4265 = vpop.f32.mrb[0].mxu0
  %v4266 = vadd.f32 0.0, %v4265
  %v4267 = vpop.f32.mrb[0].mxu0
  %4268 = vdwg.mxu0
  %v4269 = vadd.f32 %v3608, %v4266
  %4270 = vmatprep.subr.mxu0 0.0
  %4271 = vmatpush1.msra.mxu0 %v881
  %4272 = vmatprep.subr.mxu0 0.0
  %4273 = vmatpush1.msra.mxu0 %v883
  %4274 = vmatprep.subr.mxu0 0.0
  %4275 = vmatpush1.msra.mxu0 %v885
  %4276 = vmatprep.subr.mxu0 0.0
  %4277 = vmatpush1.msra.mxu0 %v887
  %4278 = vmatprep.subr.mxu0 0.0
  %4279 = vmatpush1.msra.mxu0 0.0
  %4280 = vmatprep.subr.mxu0 0.0
  %4281 = vmatpush1.msra.mxu0 0.0
  %4282 = vmatprep.subr.mxu0 0.0
  %4283 = vmatpush1.msra.mxu0 0.0
  %4284 = vmatprep.subr.mxu0 0.0
  %4285 = vmatpush1.msra.mxu0 0.0
  %4286 = vmatprep.subr.mxu0 0.0
  %4287 = vmatpush1.msra.mxu0 0.0
  %4288 = vmatprep.subr.mxu0 0.0
  %4289 = vmatpush1.msra.mxu0 0.0
  %4290 = vmatprep.subr.mxu0 0.0
  %4291 = vmatpush1.msra.mxu0 0.0
  %4292 = vmatprep.subr.mxu0 0.0
  %4293 = vmatpush1.msra.mxu0 0.0
  %4294 = vmatprep.subr.mxu0 0.0
  %4295 = vmatpush1.msra.mxu0 0.0
  %4296 = vmatprep.subr.mxu0 0.0
  %4297 = vmatpush1.msra.mxu0 0.0
  %4298 = vmatprep.subr.mxu0 0.0
  %4299 = vmatpush1.msra.mxu0 0.0
  %4300 = vmatprep.subr.mxu0 0.0
  %4301 = vmatpush1.msra.mxu0 0.0
  %4302 = vmatprep.subr.mxu0 0.0
  %4303 = vmatpush1.msra.mxu0 0.0
  %4304 = vmatprep.subr.mxu0 0.0
  %4305 = vmatpush1.msra.mxu0 0.0
  %4306 = vmatprep.subr.mxu0 0.0
  %4307 = vmatpush1.msra.mxu0 0.0
  %4308 = vmatprep.subr.mxu0 0.0
  %4309 = vmatpush1.msra.mxu0 0.0
  %4310 = vmatprep.subr.mxu0 0.0
  %4311 = vmatpush1.msra.mxu0 0.0
  %4312 = vmatprep.subr.mxu0 0.0
  %4313 = vmatpush1.msra.mxu0 0.0
  %4314 = vmatprep.subr.mxu0 0.0
  %4315 = vmatpush1.msra.mxu0 0.0
  %4316 = vmatprep.subr.mxu0 0.0
  %4317 = vmatpush1.msra.mxu0 0.0
  %4318 = vmatprep.subr.mxu0 0.0
  %4319 = vmatpush1.msra.mxu0 0.0
  %4320 = vmatprep.subr.mxu0 0.0
  %4321 = vmatpush1.msra.mxu0 0.0
  %4322 = vmatprep.subr.mxu0 0.0
  %4323 = vmatpush1.msra.mxu0 0.0
  %4324 = vmatprep.subr.mxu0 0.0
  %4325 = vmatpush1.msra.mxu0 0.0
  %4326 = vmatprep.subr.mxu0 0.0
  %4327 = vmatpush1.msra.mxu0 0.0
  %4328 = vmatprep.subr.mxu0 0.0
  %4329 = vmatpush1.msra.mxu0 0.0
  %4330 = vmatprep.subr.mxu0 0.0
  %4331 = vmatpush1.msra.mxu0 0.0
  %4332 = vmatprep.subr.mxu0 0.0
  %4333 = vmatpush1.msra.mxu0 0.0
  %4334 = vmatprep.mubr.f32.mxu0 0.0
  %4335 = vmatmul.mubr.f32.gmra.mrb[0].mxu0 %v4055
  %v4336 = vpop.f32.mrb[0].mxu0
  %v4337 = vadd.f32 0.0, %v4336
  %v4338 = vpop.f32.mrb[0].mxu0
  %4339 = vdwg.mxu0
  %v4340 = vadd.f32 %v3735, %v4337
  %v4341 = vxor.u32 %v4127, 2147483648
  %v4342 = vmul.f32 %v4341, 1.442695
  %v4343 = vpow.pop %v4342
  %v4344 = vadd.f32 %v4343, 1.0
  %v4345 = vrcp.pop %v4344
  %v4346 = vmul.f32 1.0, %v4345
  %v4347 = vxor.u32 %v4198, 2147483648
  %v4348 = vmul.f32 %v4347, 1.442695
  %v4349 = vpow.pop %v4348
  %v4350 = vadd.f32 %v4349, 1.0
  %v4351 = vrcp.pop %v4350
  %v4352 = vmul.f32 1.0, %v4351
  %v4353 = vtanh.pop %v4269
  %v4354 = vxor.u32 %v4340, 2147483648
  %v4355 = vmul.f32 %v4354, 1.442695
  %v4356 = vpow.pop %v4355
  %v4357 = vadd.f32 %v4356, 1.0
  %v4358 = vrcp.pop %v4357
  %v4359 = vmul.f32 1.0, %v4358
  %v4360 = vmul.f32 %v4352, %v4050
  %v4361 = vmul.f32 %v4346, %v4353
  %v4362 = vadd.f32 %v4360, %v4361
  %v4363 = vtanh.pop %v4362
  %v4364 = vmul.f32 %v4359, %v4363
  %s4365 = scalar_lea.vmem [#allocation3], 2
  %4366 = vst.msk [vmem:[%s4365] sm:$0x3] %vm987, %v4364
  %v4368 = vsel %vm90, %v4364, 0
  %4370 = vmatprep.subr.mxu0 0.0
  %4371 = vmatpush1.msra.mxu0 %v37
  %4372 = vmatprep.subr.mxu0 0.0
  %4373 = vmatpush1.msra.mxu0 %v38
  %4374 = vmatprep.subr.mxu0 0.0
  %4375 = vmatpush1.msra.mxu0 %v39
  %4376 = vmatprep.subr.mxu0 0.0
  %4377 = vmatpush1.msra.mxu0 %v40
  %4378 = vmatprep.subr.mxu0 0.0
  %4379 = vmatpush1.msra.mxu0 0.0
  %4380 = vmatprep.subr.mxu0 0.0
  %4381 = vmatpush1.msra.mxu0 0.0
  %4382 = vmatprep.subr.mxu0 0.0
  %4383 = vmatpush1.msra.mxu0 0.0
  %4384 = vmatprep.subr.mxu0 0.0
  %4385 = vmatpush1.msra.mxu0 0.0
  %4386 = vmatprep.subr.mxu0 0.0
  %4387 = vmatpush1.msra.mxu0 0.0
  %4388 = vmatprep.subr.mxu0 0.0
  %4389 = vmatpush1.msra.mxu0 0.0
  %4390 = vmatprep.subr.mxu0 0.0
  %4391 = vmatpush1.msra.mxu0 0.0
  %4392 = vmatprep.subr.mxu0 0.0
  %4393 = vmatpush1.msra.mxu0 0.0
  %4394 = vmatprep.subr.mxu0 0.0
  %4395 = vmatpush1.msra.mxu0 0.0
  %4396 = vmatprep.subr.mxu0 0.0
  %4397 = vmatpush1.msra.mxu0 0.0
  %4398 = vmatprep.subr.mxu0 0.0
  %4399 = vmatpush1.msra.mxu0 0.0
  %4400 = vmatprep.subr.mxu0 0.0
  %4401 = vmatpush1.msra.mxu0 0.0
  %4402 = vmatprep.subr.mxu0 0.0
  %4403 = vmatpush1.msra.mxu0 0.0
  %4404 = vmatprep.subr.mxu0 0.0
  %4405 = vmatpush1.msra.mxu0 0.0
  %4406 = vmatprep.subr.mxu0 0.0
  %4407 = vmatpush1.msra.mxu0 0.0
  %4408 = vmatprep.subr.mxu0 0.0
  %4409 = vmatpush1.msra.mxu0 0.0
  %4410 = vmatprep.subr.mxu0 0.0
  %4411 = vmatpush1.msra.mxu0 0.0
  %4412 = vmatprep.subr.mxu0 0.0
  %4413 = vmatpush1.msra.mxu0 0.0
  %4414 = vmatprep.subr.mxu0 0.0
  %4415 = vmatpush1.msra.mxu0 0.0
  %4416 = vmatprep.subr.mxu0 0.0
  %4417 = vmatpush1.msra.mxu0 0.0
  %4418 = vmatprep.subr.mxu0 0.0
  %4419 = vmatpush1.msra.mxu0 0.0
  %4420 = vmatprep.subr.mxu0 0.0
  %4421 = vmatpush1.msra.mxu0 0.0
  %4422 = vmatprep.subr.mxu0 0.0
  %4423 = vmatpush1.msra.mxu0 0.0
  %4424 = vmatprep.subr.mxu0 0.0
  %4425 = vmatpush1.msra.mxu0 0.0
  %4426 = vmatprep.subr.mxu0 0.0
  %4427 = vmatpush1.msra.mxu0 0.0
  %4428 = vmatprep.subr.mxu0 0.0
  %4429 = vmatpush1.msra.mxu0 0.0
  %4430 = vmatprep.subr.mxu0 0.0
  %4431 = vmatpush1.msra.mxu0 0.0
  %4432 = vmatprep.subr.mxu0 0.0
  %4433 = vmatpush1.msra.mxu0 0.0
  %4434 = vmatprep.mubr.f32.mxu0 0.0
  %4435 = vmatmul.mubr.f32.gmra.mrb[0].mxu0 %v4368
  %v4436 = vpop.f32.mrb[0].mxu0
  %v4437 = vadd.f32 0.0, %v4436
  %v4438 = vpop.f32.mrb[0].mxu0
  %4439 = vdwg.mxu0
  %v4440 = vadd.f32 %v3355, %v4437
  %4441 = vmatprep.subr.mxu0 0.0
  %4442 = vmatpush1.msra.mxu0 %v715
  %4443 = vmatprep.subr.mxu0 0.0
  %4444 = vmatpush1.msra.mxu0 %v717
  %4445 = vmatprep.subr.mxu0 0.0
  %4446 = vmatpush1.msra.mxu0 %v719
  %4447 = vmatprep.subr.mxu0 0.0
  %4448 = vmatpush1.msra.mxu0 %v721
  %4449 = vmatprep.subr.mxu0 0.0
  %4450 = vmatpush1.msra.mxu0 0.0
  %4451 = vmatprep.subr.mxu0 0.0
  %4452 = vmatpush1.msra.mxu0 0.0
  %4453 = vmatprep.subr.mxu0 0.0
  %4454 = vmatpush1.msra.mxu0 0.0
  %4455 = vmatprep.subr.mxu0 0.0
  %4456 = vmatpush1.msra.mxu0 0.0
  %4457 = vmatprep.subr.mxu0 0.0
  %4458 = vmatpush1.msra.mxu0 0.0
  %4459 = vmatprep.subr.mxu0 0.0
  %4460 = vmatpush1.msra.mxu0 0.0
  %4461 = vmatprep.subr.mxu0 0.0
  %4462 = vmatpush1.msra.mxu0 0.0
  %4463 = vmatprep.subr.mxu0 0.0
  %4464 = vmatpush1.msra.mxu0 0.0
  %4465 = vmatprep.subr.mxu0 0.0
  %4466 = vmatpush1.msra.mxu0 0.0
  %4467 = vmatprep.subr.mxu0 0.0
  %4468 = vmatpush1.msra.mxu0 0.0
  %4469 = vmatprep.subr.mxu0 0.0
  %4470 = vmatpush1.msra.mxu0 0.0
  %4471 = vmatprep.subr.mxu0 0.0
  %4472 = vmatpush1.msra.mxu0 0.0
  %4473 = vmatprep.subr.mxu0 0.0
  %4474 = vmatpush1.msra.mxu0 0.0
  %4475 = vmatprep.subr.mxu0 0.0
  %4476 = vmatpush1.msra.mxu0 0.0
  %4477 = vmatprep.subr.mxu0 0.0
  %4478 = vmatpush1.msra.mxu0 0.0
  %4479 = vmatprep.subr.mxu0 0.0
  %4480 = vmatpush1.msra.mxu0 0.0
  %4481 = vmatprep.subr.mxu0 0.0
  %4482 = vmatpush1.msra.mxu0 0.0
  %4483 = vmatprep.subr.mxu0 0.0
  %4484 = vmatpush1.msra.mxu0 0.0
  %4485 = vmatprep.subr.mxu0 0.0
  %4486 = vmatpush1.msra.mxu0 0.0
  %4487 = vmatprep.subr.mxu0 0.0
  %4488 = vmatpush1.msra.mxu0 0.0
  %4489 = vmatprep.subr.mxu0 0.0
  %4490 = vmatpush1.msra.mxu0 0.0
  %4491 = vmatprep.subr.mxu0 0.0
  %4492 = vmatpush1.msra.mxu0 0.0
  %4493 = vmatprep.subr.mxu0 0.0
  %4494 = vmatpush1.msra.mxu0 0.0
  %4495 = vmatprep.subr.mxu0 0.0
  %4496 = vmatpush1.msra.mxu0 0.0
  %4497 = vmatprep.subr.mxu0 0.0
  %4498 = vmatpush1.msra.mxu0 0.0
  %4499 = vmatprep.subr.mxu0 0.0
  %4500 = vmatpush1.msra.mxu0 0.0
  %4501 = vmatprep.subr.mxu0 0.0
  %4502 = vmatpush1.msra.mxu0 0.0
  %4503 = vmatprep.subr.mxu0 0.0
  %4504 = vmatpush1.msra.mxu0 0.0
  %4505 = vmatprep.mubr.f32.mxu0 0.0
  %4506 = vmatmul.mubr.f32.gmra.mrb[0].mxu0 %v4368
  %v4507 = vpop.f32.mrb[0].mxu0
  %v4508 = vadd.f32 0.0, %v4507
  %v4509 = vpop.f32.mrb[0].mxu0
  %4510 = vdwg.mxu0
  %v4511 = vadd.f32 %v3482, %v4508
  %4512 = vmatprep.subr.mxu0 0.0
  %4513 = vmatpush1.msra.mxu0 %v798
  %4514 = vmatprep.subr.mxu0 0.0
  %4515 = vmatpush1.msra.mxu0 %v800
  %4516 = vmatprep.subr.mxu0 0.0
  %4517 = vmatpush1.msra.mxu0 %v802
  %4518 = vmatprep.subr.mxu0 0.0
  %4519 = vmatpush1.msra.mxu0 %v804
  %4520 = vmatprep.subr.mxu0 0.0
  %4521 = vmatpush1.msra.mxu0 0.0
  %4522 = vmatprep.subr.mxu0 0.0
  %4523 = vmatpush1.msra.mxu0 0.0
  %4524 = vmatprep.subr.mxu0 0.0
  %4525 = vmatpush1.msra.mxu0 0.0
  %4526 = vmatprep.subr.mxu0 0.0
  %4527 = vmatpush1.msra.mxu0 0.0
  %4528 = vmatprep.subr.mxu0 0.0
  %4529 = vmatpush1.msra.mxu0 0.0
  %4530 = vmatprep.subr.mxu0 0.0
  %4531 = vmatpush1.msra.mxu0 0.0
  %4532 = vmatprep.subr.mxu0 0.0
  %4533 = vmatpush1.msra.mxu0 0.0
  %4534 = vmatprep.subr.mxu0 0.0
  %4535 = vmatpush1.msra.mxu0 0.0
  %4536 = vmatprep.subr.mxu0 0.0
  %4537 = vmatpush1.msra.mxu0 0.0
  %4538 = vmatprep.subr.mxu0 0.0
  %4539 = vmatpush1.msra.mxu0 0.0
  %4540 = vmatprep.subr.mxu0 0.0
  %4541 = vmatpush1.msra.mxu0 0.0
  %4542 = vmatprep.subr.mxu0 0.0
  %4543 = vmatpush1.msra.mxu0 0.0
  %4544 = vmatprep.subr.mxu0 0.0
  %4545 = vmatpush1.msra.mxu0 0.0
  %4546 = vmatprep.subr.mxu0 0.0
  %4547 = vmatpush1.msra.mxu0 0.0
  %4548 = vmatprep.subr.mxu0 0.0
  %4549 = vmatpush1.msra.mxu0 0.0
  %4550 = vmatprep.subr.mxu0 0.0
  %4551 = vmatpush1.msra.mxu0 0.0
  %4552 = vmatprep.subr.mxu0 0.0
  %4553 = vmatpush1.msra.mxu0 0.0
  %4554 = vmatprep.subr.mxu0 0.0
  %4555 = vmatpush1.msra.mxu0 0.0
  %4556 = vmatprep.subr.mxu0 0.0
  %4557 = vmatpush1.msra.mxu0 0.0
  %4558 = vmatprep.subr.mxu0 0.0
  %4559 = vmatpush1.msra.mxu0 0.0
  %4560 = vmatprep.subr.mxu0 0.0
  %4561 = vmatpush1.msra.mxu0 0.0
  %4562 = vmatprep.subr.mxu0 0.0
  %4563 = vmatpush1.msra.mxu0 0.0
  %4564 = vmatprep.subr.mxu0 0.0
  %4565 = vmatpush1.msra.mxu0 0.0
  %4566 = vmatprep.subr.mxu0 0.0
  %4567 = vmatpush1.msra.mxu0 0.0
  %4568 = vmatprep.subr.mxu0 0.0
  %4569 = vmatpush1.msra.mxu0 0.0
  %4570 = vmatprep.subr.mxu0 0.0
  %4571 = vmatpush1.msra.mxu0 0.0
  %4572 = vmatprep.subr.mxu0 0.0
  %4573 = vmatpush1.msra.mxu0 0.0
  %4574 = vmatprep.subr.mxu0 0.0
  %4575 = vmatpush1.msra.mxu0 0.0
  %4576 = vmatprep.mubr.f32.mxu0 0.0
  %4577 = vmatmul.mubr.f32.gmra.mrb[0].mxu0 %v4368
  %v4578 = vpop.f32.mrb[0].mxu0
  %v4579 = vadd.f32 0.0, %v4578
  %v4580 = vpop.f32.mrb[0].mxu0
  %4581 = vdwg.mxu0
  %v4582 = vadd.f32 %v3609, %v4579
  %4583 = vmatprep.subr.mxu0 0.0
  %4584 = vmatpush1.msra.mxu0 %v881
  %4585 = vmatprep.subr.mxu0 0.0
  %4586 = vmatpush1.msra.mxu0 %v883
  %4587 = vmatprep.subr.mxu0 0.0
  %4588 = vmatpush1.msra.mxu0 %v885
  %4589 = vmatprep.subr.mxu0 0.0
  %4590 = vmatpush1.msra.mxu0 %v887
  %4591 = vmatprep.subr.mxu0 0.0
  %4592 = vmatpush1.msra.mxu0 0.0
  %4593 = vmatprep.subr.mxu0 0.0
  %4594 = vmatpush1.msra.mxu0 0.0
  %4595 = vmatprep.subr.mxu0 0.0
  %4596 = vmatpush1.msra.mxu0 0.0
  %4597 = vmatprep.subr.mxu0 0.0
  %4598 = vmatpush1.msra.mxu0 0.0
  %4599 = vmatprep.subr.mxu0 0.0
  %4600 = vmatpush1.msra.mxu0 0.0
  %4601 = vmatprep.subr.mxu0 0.0
  %4602 = vmatpush1.msra.mxu0 0.0
  %4603 = vmatprep.subr.mxu0 0.0
  %4604 = vmatpush1.msra.mxu0 0.0
  %4605 = vmatprep.subr.mxu0 0.0
  %4606 = vmatpush1.msra.mxu0 0.0
  %4607 = vmatprep.subr.mxu0 0.0
  %4608 = vmatpush1.msra.mxu0 0.0
  %4609 = vmatprep.subr.mxu0 0.0
  %4610 = vmatpush1.msra.mxu0 0.0
  %4611 = vmatprep.subr.mxu0 0.0
  %4612 = vmatpush1.msra.mxu0 0.0
  %4613 = vmatprep.subr.mxu0 0.0
  %4614 = vmatpush1.msra.mxu0 0.0
  %4615 = vmatprep.subr.mxu0 0.0
  %4616 = vmatpush1.msra.mxu0 0.0
  %4617 = vmatprep.subr.mxu0 0.0
  %4618 = vmatpush1.msra.mxu0 0.0
  %4619 = vmatprep.subr.mxu0 0.0
  %4620 = vmatpush1.msra.mxu0 0.0
  %4621 = vmatprep.subr.mxu0 0.0
  %4622 = vmatpush1.msra.mxu0 0.0
  %4623 = vmatprep.subr.mxu0 0.0
  %4624 = vmatpush1.msra.mxu0 0.0
  %4625 = vmatprep.subr.mxu0 0.0
  %4626 = vmatpush1.msra.mxu0 0.0
  %4627 = vmatprep.subr.mxu0 0.0
  %4628 = vmatpush1.msra.mxu0 0.0
  %4629 = vmatprep.subr.mxu0 0.0
  %4630 = vmatpush1.msra.mxu0 0.0
  %4631 = vmatprep.subr.mxu0 0.0
  %4632 = vmatpush1.msra.mxu0 0.0
  %4633 = vmatprep.subr.mxu0 0.0
  %4634 = vmatpush1.msra.mxu0 0.0
  %4635 = vmatprep.subr.mxu0 0.0
  %4636 = vmatpush1.msra.mxu0 0.0
  %4637 = vmatprep.subr.mxu0 0.0
  %4638 = vmatpush1.msra.mxu0 0.0
  %4639 = vmatprep.subr.mxu0 0.0
  %4640 = vmatpush1.msra.mxu0 0.0
  %4641 = vmatprep.subr.mxu0 0.0
  %4642 = vmatpush1.msra.mxu0 0.0
  %4643 = vmatprep.subr.mxu0 0.0
  %4644 = vmatpush1.msra.mxu0 0.0
  %4645 = vmatprep.subr.mxu0 0.0
  %4646 = vmatpush1.msra.mxu0 0.0
  %4647 = vmatprep.mubr.f32.mxu0 0.0
  %4648 = vmatmul.mubr.f32.gmra.mrb[0].mxu0 %v4368
  %v4649 = vpop.f32.mrb[0].mxu0
  %v4650 = vadd.f32 0.0, %v4649
  %v4651 = vpop.f32.mrb[0].mxu0
  %4652 = vdwg.mxu0
  %v4653 = vadd.f32 %v3736, %v4650
  %v4654 = vxor.u32 %v4440, 2147483648
  %v4655 = vmul.f32 %v4654, 1.442695
  %v4656 = vpow.pop %v4655
  %v4657 = vadd.f32 %v4656, 1.0
  %v4658 = vrcp.pop %v4657
  %v4659 = vmul.f32 1.0, %v4658
  %v4660 = vxor.u32 %v4511, 2147483648
  %v4661 = vmul.f32 %v4660, 1.442695
  %v4662 = vpow.pop %v4661
  %v4663 = vadd.f32 %v4662, 1.0
  %v4664 = vrcp.pop %v4663
  %v4665 = vmul.f32 1.0, %v4664
  %v4666 = vtanh.pop %v4582
  %v4667 = vxor.u32 %v4653, 2147483648
  %v4668 = vmul.f32 %v4667, 1.442695
  %v4669 = vpow.pop %v4668
  %v4670 = vadd.f32 %v4669, 1.0
  %v4671 = vrcp.pop %v4670
  %v4672 = vmul.f32 1.0, %v4671
  %v4673 = vmul.f32 %v4665, %v4362
  %v4674 = vmul.f32 %v4659, %v4666
  %v4675 = vadd.f32 %v4673, %v4674
  %v4676 = vtanh.pop %v4675
  %v4677 = vmul.f32 %v4672, %v4676
  %s4678 = scalar_lea.vmem [#allocation3], 4
  %4679 = vst.msk [vmem:[%s4678] sm:$0x3] %vm987, %v4677
  %v4681 = vsel %vm90, %v4677, 0
  %4683 = vmatprep.subr.mxu0 0.0
  %4684 = vmatpush1.msra.mxu0 %v37
  %4685 = vmatprep.subr.mxu0 0.0
  %4686 = vmatpush1.msra.mxu0 %v38
  %4687 = vmatprep.subr.mxu0 0.0
  %4688 = vmatpush1.msra.mxu0 %v39
  %4689 = vmatprep.subr.mxu0 0.0
  %4690 = vmatpush1.msra.mxu0 %v40
  %4691 = vmatprep.subr.mxu0 0.0
  %4692 = vmatpush1.msra.mxu0 0.0
  %4693 = vmatprep.subr.mxu0 0.0
  %4694 = vmatpush1.msra.mxu0 0.0
  %4695 = vmatprep.subr.mxu0 0.0
  %4696 = vmatpush1.msra.mxu0 0.0
  %4697 = vmatprep.subr.mxu0 0.0
  %4698 = vmatpush1.msra.mxu0 0.0
  %4699 = vmatprep.subr.mxu0 0.0
  %4700 = vmatpush1.msra.mxu0 0.0
  %4701 = vmatprep.subr.mxu0 0.0
  %4702 = vmatpush1.msra.mxu0 0.0
  %4703 = vmatprep.subr.mxu0 0.0
  %4704 = vmatpush1.msra.mxu0 0.0
  %4705 = vmatprep.subr.mxu0 0.0
  %4706 = vmatpush1.msra.mxu0 0.0
  %4707 = vmatprep.subr.mxu0 0.0
  %4708 = vmatpush1.msra.mxu0 0.0
  %4709 = vmatprep.subr.mxu0 0.0
  %4710 = vmatpush1.msra.mxu0 0.0
  %4711 = vmatprep.subr.mxu0 0.0
  %4712 = vmatpush1.msra.mxu0 0.0
  %4713 = vmatprep.subr.mxu0 0.0
  %4714 = vmatpush1.msra.mxu0 0.0
  %4715 = vmatprep.subr.mxu0 0.0
  %4716 = vmatpush1.msra.mxu0 0.0
  %4717 = vmatprep.subr.mxu0 0.0
  %4718 = vmatpush1.msra.mxu0 0.0
  %4719 = vmatprep.subr.mxu0 0.0
  %4720 = vmatpush1.msra.mxu0 0.0
  %4721 = vmatprep.subr.mxu0 0.0
  %4722 = vmatpush1.msra.mxu0 0.0
  %4723 = vmatprep.subr.mxu0 0.0
  %4724 = vmatpush1.msra.mxu0 0.0
  %4725 = vmatprep.subr.mxu0 0.0
  %4726 = vmatpush1.msra.mxu0 0.0
  %4727 = vmatprep.subr.mxu0 0.0
  %4728 = vmatpush1.msra.mxu0 0.0
  %4729 = vmatprep.subr.mxu0 0.0
  %4730 = vmatpush1.msra.mxu0 0.0
  %4731 = vmatprep.subr.mxu0 0.0
  %4732 = vmatpush1.msra.mxu0 0.0
  %4733 = vmatprep.subr.mxu0 0.0
  %4734 = vmatpush1.msra.mxu0 0.0
  %4735 = vmatprep.subr.mxu0 0.0
  %4736 = vmatpush1.msra.mxu0 0.0
  %4737 = vmatprep.subr.mxu0 0.0
  %4738 = vmatpush1.msra.mxu0 0.0
  %4739 = vmatprep.subr.mxu0 0.0
  %4740 = vmatpush1.msra.mxu0 0.0
  %4741 = vmatprep.subr.mxu0 0.0
  %4742 = vmatpush1.msra.mxu0 0.0
  %4743 = vmatprep.subr.mxu0 0.0
  %4744 = vmatpush1.msra.mxu0 0.0
  %4745 = vmatprep.subr.mxu0 0.0
  %4746 = vmatpush1.msra.mxu0 0.0
  %4747 = vmatprep.mubr.f32.mxu0 0.0
  %4748 = vmatmul.mubr.f32.gmra.mrb[0].mxu0 %v4681
  %v4749 = vpop.f32.mrb[0].mxu0
  %v4750 = vadd.f32 0.0, %v4749
  %v4751 = vpop.f32.mrb[0].mxu0
  %4752 = vdwg.mxu0
  %v4753 = vadd.f32 %v3356, %v4750
  %4754 = vmatprep.subr.mxu0 0.0
  %4755 = vmatpush1.msra.mxu0 %v715
  %4756 = vmatprep.subr.mxu0 0.0
  %4757 = vmatpush1.msra.mxu0 %v717
  %4758 = vmatprep.subr.mxu0 0.0
  %4759 = vmatpush1.msra.mxu0 %v719
  %4760 = vmatprep.subr.mxu0 0.0
  %4761 = vmatpush1.msra.mxu0 %v721
  %4762 = vmatprep.subr.mxu0 0.0
  %4763 = vmatpush1.msra.mxu0 0.0
  %4764 = vmatprep.subr.mxu0 0.0
  %4765 = vmatpush1.msra.mxu0 0.0
  %4766 = vmatprep.subr.mxu0 0.0
  %4767 = vmatpush1.msra.mxu0 0.0
  %4768 = vmatprep.subr.mxu0 0.0
  %4769 = vmatpush1.msra.mxu0 0.0
  %4770 = vmatprep.subr.mxu0 0.0
  %4771 = vmatpush1.msra.mxu0 0.0
  %4772 = vmatprep.subr.mxu0 0.0
  %4773 = vmatpush1.msra.mxu0 0.0
  %4774 = vmatprep.subr.mxu0 0.0
  %4775 = vmatpush1.msra.mxu0 0.0
  %4776 = vmatprep.subr.mxu0 0.0
  %4777 = vmatpush1.msra.mxu0 0.0
  %4778 = vmatprep.subr.mxu0 0.0
  %4779 = vmatpush1.msra.mxu0 0.0
  %4780 = vmatprep.subr.mxu0 0.0
  %4781 = vmatpush1.msra.mxu0 0.0
  %4782 = vmatprep.subr.mxu0 0.0
  %4783 = vmatpush1.msra.mxu0 0.0
  %4784 = vmatprep.subr.mxu0 0.0
  %4785 = vmatpush1.msra.mxu0 0.0
  %4786 = vmatprep.subr.mxu0 0.0
  %4787 = vmatpush1.msra.mxu0 0.0
  %4788 = vmatprep.subr.mxu0 0.0
  %4789 = vmatpush1.msra.mxu0 0.0
  %4790 = vmatprep.subr.mxu0 0.0
  %4791 = vmatpush1.msra.mxu0 0.0
  %4792 = vmatprep.subr.mxu0 0.0
  %4793 = vmatpush1.msra.mxu0 0.0
  %4794 = vmatprep.subr.mxu0 0.0
  %4795 = vmatpush1.msra.mxu0 0.0
  %4796 = vmatprep.subr.mxu0 0.0
  %4797 = vmatpush1.msra.mxu0 0.0
  %4798 = vmatprep.subr.mxu0 0.0
  %4799 = vmatpush1.msra.mxu0 0.0
  %4800 = vmatprep.subr.mxu0 0.0
  %4801 = vmatpush1.msra.mxu0 0.0
  %4802 = vmatprep.subr.mxu0 0.0
  %4803 = vmatpush1.msra.mxu0 0.0
  %4804 = vmatprep.subr.mxu0 0.0
  %4805 = vmatpush1.msra.mxu0 0.0
  %4806 = vmatprep.subr.mxu0 0.0
  %4807 = vmatpush1.msra.mxu0 0.0
  %4808 = vmatprep.subr.mxu0 0.0
  %4809 = vmatpush1.msra.mxu0 0.0
  %4810 = vmatprep.subr.mxu0 0.0
  %4811 = vmatpush1.msra.mxu0 0.0
  %4812 = vmatprep.subr.mxu0 0.0
  %4813 = vmatpush1.msra.mxu0 0.0
  %4814 = vmatprep.subr.mxu0 0.0
  %4815 = vmatpush1.msra.mxu0 0.0
  %4816 = vmatprep.subr.mxu0 0.0
  %4817 = vmatpush1.msra.mxu0 0.0
  %4818 = vmatprep.mubr.f32.mxu0 0.0
  %4819 = vmatmul.mubr.f32.gmra.mrb[0].mxu0 %v4681
  %v4820 = vpop.f32.mrb[0].mxu0
  %v4821 = vadd.f32 0.0, %v4820
  %v4822 = vpop.f32.mrb[0].mxu0
  %4823 = vdwg.mxu0
  %v4824 = vadd.f32 %v3483, %v4821
  %4825 = vmatprep.subr.mxu0 0.0
  %4826 = vmatpush1.msra.mxu0 %v798
  %4827 = vmatprep.subr.mxu0 0.0
  %4828 = vmatpush1.msra.mxu0 %v800
  %4829 = vmatprep.subr.mxu0 0.0
  %4830 = vmatpush1.msra.mxu0 %v802
  %4831 = vmatprep.subr.mxu0 0.0
  %4832 = vmatpush1.msra.mxu0 %v804
  %4833 = vmatprep.subr.mxu0 0.0
  %4834 = vmatpush1.msra.mxu0 0.0
  %4835 = vmatprep.subr.mxu0 0.0
  %4836 = vmatpush1.msra.mxu0 0.0
  %4837 = vmatprep.subr.mxu0 0.0
  %4838 = vmatpush1.msra.mxu0 0.0
  %4839 = vmatprep.subr.mxu0 0.0
  %4840 = vmatpush1.msra.mxu0 0.0
  %4841 = vmatprep.subr.mxu0 0.0
  %4842 = vmatpush1.msra.mxu0 0.0
  %4843 = vmatprep.subr.mxu0 0.0
  %4844 = vmatpush1.msra.mxu0 0.0
  %4845 = vmatprep.subr.mxu0 0.0
  %4846 = vmatpush1.msra.mxu0 0.0
  %4847 = vmatprep.subr.mxu0 0.0
  %4848 = vmatpush1.msra.mxu0 0.0
  %4849 = vmatprep.subr.mxu0 0.0
  %4850 = vmatpush1.msra.mxu0 0.0
  %4851 = vmatprep.subr.mxu0 0.0
  %4852 = vmatpush1.msra.mxu0 0.0
  %4853 = vmatprep.subr.mxu0 0.0
  %4854 = vmatpush1.msra.mxu0 0.0
  %4855 = vmatprep.subr.mxu0 0.0
  %4856 = vmatpush1.msra.mxu0 0.0
  %4857 = vmatprep.subr.mxu0 0.0
  %4858 = vmatpush1.msra.mxu0 0.0
  %4859 = vmatprep.subr.mxu0 0.0
  %4860 = vmatpush1.msra.mxu0 0.0
  %4861 = vmatprep.subr.mxu0 0.0
  %4862 = vmatpush1.msra.mxu0 0.0
  %4863 = vmatprep.subr.mxu0 0.0
  %4864 = vmatpush1.msra.mxu0 0.0
  %4865 = vmatprep.subr.mxu0 0.0
  %4866 = vmatpush1.msra.mxu0 0.0
  %4867 = vmatprep.subr.mxu0 0.0
  %4868 = vmatpush1.msra.mxu0 0.0
  %4869 = vmatprep.subr.mxu0 0.0
  %4870 = vmatpush1.msra.mxu0 0.0
  %4871 = vmatprep.subr.mxu0 0.0
  %4872 = vmatpush1.msra.mxu0 0.0
  %4873 = vmatprep.subr.mxu0 0.0
  %4874 = vmatpush1.msra.mxu0 0.0
  %4875 = vmatprep.subr.mxu0 0.0
  %4876 = vmatpush1.msra.mxu0 0.0
  %4877 = vmatprep.subr.mxu0 0.0
  %4878 = vmatpush1.msra.mxu0 0.0
  %4879 = vmatprep.subr.mxu0 0.0
  %4880 = vmatpush1.msra.mxu0 0.0
  %4881 = vmatprep.subr.mxu0 0.0
  %4882 = vmatpush1.msra.mxu0 0.0
  %4883 = vmatprep.subr.mxu0 0.0
  %4884 = vmatpush1.msra.mxu0 0.0
  %4885 = vmatprep.subr.mxu0 0.0
  %4886 = vmatpush1.msra.mxu0 0.0
  %4887 = vmatprep.subr.mxu0 0.0
  %4888 = vmatpush1.msra.mxu0 0.0
  %4889 = vmatprep.mubr.f32.mxu0 0.0
  %4890 = vmatmul.mubr.f32.gmra.mrb[0].mxu0 %v4681
  %v4891 = vpop.f32.mrb[0].mxu0
  %v4892 = vadd.f32 0.0, %v4891
  %v4893 = vpop.f32.mrb[0].mxu0
  %4894 = vdwg.mxu0
  %v4895 = vadd.f32 %v3610, %v4892
  %4896 = vmatprep.subr.mxu0 0.0
  %4897 = vmatpush1.msra.mxu0 %v881
  %4898 = vmatprep.subr.mxu0 0.0
  %4899 = vmatpush1.msra.mxu0 %v883
  %4900 = vmatprep.subr.mxu0 0.0
  %4901 = vmatpush1.msra.mxu0 %v885
  %4902 = vmatprep.subr.mxu0 0.0
  %4903 = vmatpush1.msra.mxu0 %v887
  %4904 = vmatprep.subr.mxu0 0.0
  %4905 = vmatpush1.msra.mxu0 0.0
  %4906 = vmatprep.subr.mxu0 0.0
  %4907 = vmatpush1.msra.mxu0 0.0
  %4908 = vmatprep.subr.mxu0 0.0
  %4909 = vmatpush1.msra.mxu0 0.0
  %4910 = vmatprep.subr.mxu0 0.0
  %4911 = vmatpush1.msra.mxu0 0.0
  %4912 = vmatprep.subr.mxu0 0.0
  %4913 = vmatpush1.msra.mxu0 0.0
  %4914 = vmatprep.subr.mxu0 0.0
  %4915 = vmatpush1.msra.mxu0 0.0
  %4916 = vmatprep.subr.mxu0 0.0
  %4917 = vmatpush1.msra.mxu0 0.0
  %4918 = vmatprep.subr.mxu0 0.0
  %4919 = vmatpush1.msra.mxu0 0.0
  %4920 = vmatprep.subr.mxu0 0.0
  %4921 = vmatpush1.msra.mxu0 0.0
  %4922 = vmatprep.subr.mxu0 0.0
  %4923 = vmatpush1.msra.mxu0 0.0
  %4924 = vmatprep.subr.mxu0 0.0
  %4925 = vmatpush1.msra.mxu0 0.0
  %4926 = vmatprep.subr.mxu0 0.0
  %4927 = vmatpush1.msra.mxu0 0.0
  %4928 = vmatprep.subr.mxu0 0.0
  %4929 = vmatpush1.msra.mxu0 0.0
  %4930 = vmatprep.subr.mxu0 0.0
  %4931 = vmatpush1.msra.mxu0 0.0
  %4932 = vmatprep.subr.mxu0 0.0
  %4933 = vmatpush1.msra.mxu0 0.0
  %4934 = vmatprep.subr.mxu0 0.0
  %4935 = vmatpush1.msra.mxu0 0.0
  %4936 = vmatprep.subr.mxu0 0.0
  %4937 = vmatpush1.msra.mxu0 0.0
  %4938 = vmatprep.subr.mxu0 0.0
  %4939 = vmatpush1.msra.mxu0 0.0
  %4940 = vmatprep.subr.mxu0 0.0
  %4941 = vmatpush1.msra.mxu0 0.0
  %4942 = vmatprep.subr.mxu0 0.0
  %4943 = vmatpush1.msra.mxu0 0.0
  %4944 = vmatprep.subr.mxu0 0.0
  %4945 = vmatpush1.msra.mxu0 0.0
  %4946 = vmatprep.subr.mxu0 0.0
  %4947 = vmatpush1.msra.mxu0 0.0
  %4948 = vmatprep.subr.mxu0 0.0
  %4949 = vmatpush1.msra.mxu0 0.0
  %4950 = vmatprep.subr.mxu0 0.0
  %4951 = vmatpush1.msra.mxu0 0.0
  %4952 = vmatprep.subr.mxu0 0.0
  %4953 = vmatpush1.msra.mxu0 0.0
  %4954 = vmatprep.subr.mxu0 0.0
  %4955 = vmatpush1.msra.mxu0 0.0
  %4956 = vmatprep.subr.mxu0 0.0
  %4957 = vmatpush1.msra.mxu0 0.0
  %4958 = vmatprep.subr.mxu0 0.0
  %4959 = vmatpush1.msra.mxu0 0.0
  %4960 = vmatprep.mubr.f32.mxu0 0.0
  %4961 = vmatmul.mubr.f32.gmra.mrb[0].mxu0 %v4681
  %v4962 = vpop.f32.mrb[0].mxu0
  %v4963 = vadd.f32 0.0, %v4962
  %v4964 = vpop.f32.mrb[0].mxu0
  %4965 = vdwg.mxu0
  %v4966 = vadd.f32 %v3737, %v4963
  %v4967 = vxor.u32 %v4753, 2147483648
  %v4968 = vmul.f32 %v4967, 1.442695
  %v4969 = vpow.pop %v4968
  %v4970 = vadd.f32 %v4969, 1.0
  %v4971 = vrcp.pop %v4970
  %v4972 = vmul.f32 1.0, %v4971
  %v4973 = vxor.u32 %v4824, 2147483648
  %v4974 = vmul.f32 %v4973, 1.442695
  %v4975 = vpow.pop %v4974
  %v4976 = vadd.f32 %v4975, 1.0
  %v4977 = vrcp.pop %v4976
  %v4978 = vmul.f32 1.0, %v4977
  %v4979 = vtanh.pop %v4895
  %v4980 = vxor.u32 %v4966, 2147483648
  %v4981 = vmul.f32 %v4980, 1.442695
  %v4982 = vpow.pop %v4981
  %v4983 = vadd.f32 %v4982, 1.0
  %v4984 = vrcp.pop %v4983
  %v4985 = vmul.f32 1.0, %v4984
  %v4986 = vmul.f32 %v4978, %v4675
  %v4987 = vmul.f32 %v4972, %v4979
  %v4988 = vadd.f32 %v4986, %v4987
  %v4989 = vtanh.pop %v4988
  %v4990 = vmul.f32 %v4985, %v4989
  %s4991 = scalar_lea.vmem [#allocation3], 6
  %4992 = vst.msk [vmem:[%s4991] sm:$0x3] %vm987, %v4990
  %v4994 = vsel %vm90, %v4990, 0
  %4996 = vmatprep.subr.mxu0 0.0
  %4997 = vmatpush1.msra.mxu0 %v37
  %4998 = vmatprep.subr.mxu0 0.0
  %4999 = vmatpush1.msra.mxu0 %v38
  %5000 = vmatprep.subr.mxu0 0.0
  %5001 = vmatpush1.msra.mxu0 %v39
  %5002 = vmatprep.subr.mxu0 0.0
  %5003 = vmatpush1.msra.mxu0 %v40
  %5004 = vmatprep.subr.mxu0 0.0
  %5005 = vmatpush1.msra.mxu0 0.0
  %5006 = vmatprep.subr.mxu0 0.0
  %5007 = vmatpush1.msra.mxu0 0.0
  %5008 = vmatprep.subr.mxu0 0.0
  %5009 = vmatpush1.msra.mxu0 0.0
  %5010 = vmatprep.subr.mxu0 0.0
  %5011 = vmatpush1.msra.mxu0 0.0
  %5012 = vmatprep.subr.mxu0 0.0
  %5013 = vmatpush1.msra.mxu0 0.0
  %5014 = vmatprep.subr.mxu0 0.0
  %5015 = vmatpush1.msra.mxu0 0.0
  %5016 = vmatprep.subr.mxu0 0.0
  %5017 = vmatpush1.msra.mxu0 0.0
  %5018 = vmatprep.subr.mxu0 0.0
  %5019 = vmatpush1.msra.mxu0 0.0
  %5020 = vmatprep.subr.mxu0 0.0
  %5021 = vmatpush1.msra.mxu0 0.0
  %5022 = vmatprep.subr.mxu0 0.0
  %5023 = vmatpush1.msra.mxu0 0.0
  %5024 = vmatprep.subr.mxu0 0.0
  %5025 = vmatpush1.msra.mxu0 0.0
  %5026 = vmatprep.subr.mxu0 0.0
  %5027 = vmatpush1.msra.mxu0 0.0
  %5028 = vmatprep.subr.mxu0 0.0
  %5029 = vmatpush1.msra.mxu0 0.0
  %5030 = vmatprep.subr.mxu0 0.0
  %5031 = vmatpush1.msra.mxu0 0.0
  %5032 = vmatprep.subr.mxu0 0.0
  %5033 = vmatpush1.msra.mxu0 0.0
  %5034 = vmatprep.subr.mxu0 0.0
  %5035 = vmatpush1.msra.mxu0 0.0
  %5036 = vmatprep.subr.mxu0 0.0
  %5037 = vmatpush1.msra.mxu0 0.0
  %5038 = vmatprep.subr.mxu0 0.0
  %5039 = vmatpush1.msra.mxu0 0.0
  %5040 = vmatprep.subr.mxu0 0.0
  %5041 = vmatpush1.msra.mxu0 0.0
  %5042 = vmatprep.subr.mxu0 0.0
  %5043 = vmatpush1.msra.mxu0 0.0
  %5044 = vmatprep.subr.mxu0 0.0
  %5045 = vmatpush1.msra.mxu0 0.0
  %5046 = vmatprep.subr.mxu0 0.0
  %5047 = vmatpush1.msra.mxu0 0.0
  %5048 = vmatprep.subr.mxu0 0.0
  %5049 = vmatpush1.msra.mxu0 0.0
  %5050 = vmatprep.subr.mxu0 0.0
  %5051 = vmatpush1.msra.mxu0 0.0
  %5052 = vmatprep.subr.mxu0 0.0
  %5053 = vmatpush1.msra.mxu0 0.0
  %5054 = vmatprep.subr.mxu0 0.0
  %5055 = vmatpush1.msra.mxu0 0.0
  %5056 = vmatprep.subr.mxu0 0.0
  %5057 = vmatpush1.msra.mxu0 0.0
  %5058 = vmatprep.subr.mxu0 0.0
  %5059 = vmatpush1.msra.mxu0 0.0
  %5060 = vmatprep.mubr.f32.mxu0 0.0
  %5061 = vmatmul.mubr.f32.gmra.mrb[0].mxu0 %v4994
  %v5062 = vpop.f32.mrb[0].mxu0
  %v5063 = vadd.f32 0.0, %v5062
  %v5064 = vpop.f32.mrb[0].mxu0
  %5065 = vdwg.mxu0
  %v5066 = vadd.f32 %v3357, %v5063
  %5067 = vmatprep.subr.mxu0 0.0
  %5068 = vmatpush1.msra.mxu0 %v715
  %5069 = vmatprep.subr.mxu0 0.0
  %5070 = vmatpush1.msra.mxu0 %v717
  %5071 = vmatprep.subr.mxu0 0.0
  %5072 = vmatpush1.msra.mxu0 %v719
  %5073 = vmatprep.subr.mxu0 0.0
  %5074 = vmatpush1.msra.mxu0 %v721
  %5075 = vmatprep.subr.mxu0 0.0
  %5076 = vmatpush1.msra.mxu0 0.0
  %5077 = vmatprep.subr.mxu0 0.0
  %5078 = vmatpush1.msra.mxu0 0.0
  %5079 = vmatprep.subr.mxu0 0.0
  %5080 = vmatpush1.msra.mxu0 0.0
  %5081 = vmatprep.subr.mxu0 0.0
  %5082 = vmatpush1.msra.mxu0 0.0
  %5083 = vmatprep.subr.mxu0 0.0
  %5084 = vmatpush1.msra.mxu0 0.0
  %5085 = vmatprep.subr.mxu0 0.0
  %5086 = vmatpush1.msra.mxu0 0.0
  %5087 = vmatprep.subr.mxu0 0.0
  %5088 = vmatpush1.msra.mxu0 0.0
  %5089 = vmatprep.subr.mxu0 0.0
  %5090 = vmatpush1.msra.mxu0 0.0
  %5091 = vmatprep.subr.mxu0 0.0
  %5092 = vmatpush1.msra.mxu0 0.0
  %5093 = vmatprep.subr.mxu0 0.0
  %5094 = vmatpush1.msra.mxu0 0.0
  %5095 = vmatprep.subr.mxu0 0.0
  %5096 = vmatpush1.msra.mxu0 0.0
  %5097 = vmatprep.subr.mxu0 0.0
  %5098 = vmatpush1.msra.mxu0 0.0
  %5099 = vmatprep.subr.mxu0 0.0
  %5100 = vmatpush1.msra.mxu0 0.0
  %5101 = vmatprep.subr.mxu0 0.0
  %5102 = vmatpush1.msra.mxu0 0.0
  %5103 = vmatprep.subr.mxu0 0.0
  %5104 = vmatpush1.msra.mxu0 0.0
  %5105 = vmatprep.subr.mxu0 0.0
  %5106 = vmatpush1.msra.mxu0 0.0
  %5107 = vmatprep.subr.mxu0 0.0
  %5108 = vmatpush1.msra.mxu0 0.0
  %5109 = vmatprep.subr.mxu0 0.0
  %5110 = vmatpush1.msra.mxu0 0.0
  %5111 = vmatprep.subr.mxu0 0.0
  %5112 = vmatpush1.msra.mxu0 0.0
  %5113 = vmatprep.subr.mxu0 0.0
  %5114 = vmatpush1.msra.mxu0 0.0
  %5115 = vmatprep.subr.mxu0 0.0
  %5116 = vmatpush1.msra.mxu0 0.0
  %5117 = vmatprep.subr.mxu0 0.0
  %5118 = vmatpush1.msra.mxu0 0.0
  %5119 = vmatprep.subr.mxu0 0.0
  %5120 = vmatpush1.msra.mxu0 0.0
  %5121 = vmatprep.subr.mxu0 0.0
  %5122 = vmatpush1.msra.mxu0 0.0
  %5123 = vmatprep.subr.mxu0 0.0
  %5124 = vmatpush1.msra.mxu0 0.0
  %5125 = vmatprep.subr.mxu0 0.0
  %5126 = vmatpush1.msra.mxu0 0.0
  %5127 = vmatprep.subr.mxu0 0.0
  %5128 = vmatpush1.msra.mxu0 0.0
  %5129 = vmatprep.subr.mxu0 0.0
  %5130 = vmatpush1.msra.mxu0 0.0
  %5131 = vmatprep.mubr.f32.mxu0 0.0
  %5132 = vmatmul.mubr.f32.gmra.mrb[0].mxu0 %v4994
  %v5133 = vpop.f32.mrb[0].mxu0
  %v5134 = vadd.f32 0.0, %v5133
  %v5135 = vpop.f32.mrb[0].mxu0
  %5136 = vdwg.mxu0
  %v5137 = vadd.f32 %v3484, %v5134
  %5138 = vmatprep.subr.mxu0 0.0
  %5139 = vmatpush1.msra.mxu0 %v798
  %5140 = vmatprep.subr.mxu0 0.0
  %5141 = vmatpush1.msra.mxu0 %v800
  %5142 = vmatprep.subr.mxu0 0.0
  %5143 = vmatpush1.msra.mxu0 %v802
  %5144 = vmatprep.subr.mxu0 0.0
  %5145 = vmatpush1.msra.mxu0 %v804
  %5146 = vmatprep.subr.mxu0 0.0
  %5147 = vmatpush1.msra.mxu0 0.0
  %5148 = vmatprep.subr.mxu0 0.0
  %5149 = vmatpush1.msra.mxu0 0.0
  %5150 = vmatprep.subr.mxu0 0.0
  %5151 = vmatpush1.msra.mxu0 0.0
  %5152 = vmatprep.subr.mxu0 0.0
  %5153 = vmatpush1.msra.mxu0 0.0
  %5154 = vmatprep.subr.mxu0 0.0
  %5155 = vmatpush1.msra.mxu0 0.0
  %5156 = vmatprep.subr.mxu0 0.0
  %5157 = vmatpush1.msra.mxu0 0.0
  %5158 = vmatprep.subr.mxu0 0.0
  %5159 = vmatpush1.msra.mxu0 0.0
  %5160 = vmatprep.subr.mxu0 0.0
  %5161 = vmatpush1.msra.mxu0 0.0
  %5162 = vmatprep.subr.mxu0 0.0
  %5163 = vmatpush1.msra.mxu0 0.0
  %5164 = vmatprep.subr.mxu0 0.0
  %5165 = vmatpush1.msra.mxu0 0.0
  %5166 = vmatprep.subr.mxu0 0.0
  %5167 = vmatpush1.msra.mxu0 0.0
  %5168 = vmatprep.subr.mxu0 0.0
  %5169 = vmatpush1.msra.mxu0 0.0
  %5170 = vmatprep.subr.mxu0 0.0
  %5171 = vmatpush1.msra.mxu0 0.0
  %5172 = vmatprep.subr.mxu0 0.0
  %5173 = vmatpush1.msra.mxu0 0.0
  %5174 = vmatprep.subr.mxu0 0.0
  %5175 = vmatpush1.msra.mxu0 0.0
  %5176 = vmatprep.subr.mxu0 0.0
  %5177 = vmatpush1.msra.mxu0 0.0
  %5178 = vmatprep.subr.mxu0 0.0
  %5179 = vmatpush1.msra.mxu0 0.0
  %5180 = vmatprep.subr.mxu0 0.0
  %5181 = vmatpush1.msra.mxu0 0.0
  %5182 = vmatprep.subr.mxu0 0.0
  %5183 = vmatpush1.msra.mxu0 0.0
  %5184 = vmatprep.subr.mxu0 0.0
  %5185 = vmatpush1.msra.mxu0 0.0
  %5186 = vmatprep.subr.mxu0 0.0
  %5187 = vmatpush1.msra.mxu0 0.0
  %5188 = vmatprep.subr.mxu0 0.0
  %5189 = vmatpush1.msra.mxu0 0.0
  %5190 = vmatprep.subr.mxu0 0.0
  %5191 = vmatpush1.msra.mxu0 0.0
  %5192 = vmatprep.subr.mxu0 0.0
  %5193 = vmatpush1.msra.mxu0 0.0
  %5194 = vmatprep.subr.mxu0 0.0
  %5195 = vmatpush1.msra.mxu0 0.0
  %5196 = vmatprep.subr.mxu0 0.0
  %5197 = vmatpush1.msra.mxu0 0.0
  %5198 = vmatprep.subr.mxu0 0.0
  %5199 = vmatpush1.msra.mxu0 0.0
  %5200 = vmatprep.subr.mxu0 0.0
  %5201 = vmatpush1.msra.mxu0 0.0
  %5202 = vmatprep.mubr.f32.mxu0 0.0
  %5203 = vmatmul.mubr.f32.gmra.mrb[0].mxu0 %v4994
  %v5204 = vpop.f32.mrb[0].mxu0
  %v5205 = vadd.f32 0.0, %v5204
  %v5206 = vpop.f32.mrb[0].mxu0
  %5207 = vdwg.mxu0
  %v5208 = vadd.f32 %v3611, %v5205
  %5209 = vmatprep.subr.mxu0 0.0
  %5210 = vmatpush1.msra.mxu0 %v881
  %5211 = vmatprep.subr.mxu0 0.0
  %5212 = vmatpush1.msra.mxu0 %v883
  %5213 = vmatprep.subr.mxu0 0.0
  %5214 = vmatpush1.msra.mxu0 %v885
  %5215 = vmatprep.subr.mxu0 0.0
  %5216 = vmatpush1.msra.mxu0 %v887
  %5217 = vmatprep.subr.mxu0 0.0
  %5218 = vmatpush1.msra.mxu0 0.0
  %5219 = vmatprep.subr.mxu0 0.0
  %5220 = vmatpush1.msra.mxu0 0.0
  %5221 = vmatprep.subr.mxu0 0.0
  %5222 = vmatpush1.msra.mxu0 0.0
  %5223 = vmatprep.subr.mxu0 0.0
  %5224 = vmatpush1.msra.mxu0 0.0
  %5225 = vmatprep.subr.mxu0 0.0
  %5226 = vmatpush1.msra.mxu0 0.0
  %5227 = vmatprep.subr.mxu0 0.0
  %5228 = vmatpush1.msra.mxu0 0.0
  %5229 = vmatprep.subr.mxu0 0.0
  %5230 = vmatpush1.msra.mxu0 0.0
  %5231 = vmatprep.subr.mxu0 0.0
  %5232 = vmatpush1.msra.mxu0 0.0
  %5233 = vmatprep.subr.mxu0 0.0
  %5234 = vmatpush1.msra.mxu0 0.0
  %5235 = vmatprep.subr.mxu0 0.0
  %5236 = vmatpush1.msra.mxu0 0.0
  %5237 = vmatprep.subr.mxu0 0.0
  %5238 = vmatpush1.msra.mxu0 0.0
  %5239 = vmatprep.subr.mxu0 0.0
  %5240 = vmatpush1.msra.mxu0 0.0
  %5241 = vmatprep.subr.mxu0 0.0
  %5242 = vmatpush1.msra.mxu0 0.0
  %5243 = vmatprep.subr.mxu0 0.0
  %5244 = vmatpush1.msra.mxu0 0.0
  %5245 = vmatprep.subr.mxu0 0.0
  %5246 = vmatpush1.msra.mxu0 0.0
  %5247 = vmatprep.subr.mxu0 0.0
  %5248 = vmatpush1.msra.mxu0 0.0
  %5249 = vmatprep.subr.mxu0 0.0
  %5250 = vmatpush1.msra.mxu0 0.0
  %5251 = vmatprep.subr.mxu0 0.0
  %5252 = vmatpush1.msra.mxu0 0.0
  %5253 = vmatprep.subr.mxu0 0.0
  %5254 = vmatpush1.msra.mxu0 0.0
  %5255 = vmatprep.subr.mxu0 0.0
  %5256 = vmatpush1.msra.mxu0 0.0
  %5257 = vmatprep.subr.mxu0 0.0
  %5258 = vmatpush1.msra.mxu0 0.0
  %5259 = vmatprep.subr.mxu0 0.0
  %5260 = vmatpush1.msra.mxu0 0.0
  %5261 = vmatprep.subr.mxu0 0.0
  %5262 = vmatpush1.msra.mxu0 0.0
  %5263 = vmatprep.subr.mxu0 0.0
  %5264 = vmatpush1.msra.mxu0 0.0
  %5265 = vmatprep.subr.mxu0 0.0
  %5266 = vmatpush1.msra.mxu0 0.0
  %5267 = vmatprep.subr.mxu0 0.0
  %5268 = vmatpush1.msra.mxu0 0.0
  %5269 = vmatprep.subr.mxu0 0.0
  %5270 = vmatpush1.msra.mxu0 0.0
  %5271 = vmatprep.subr.mxu0 0.0
  %5272 = vmatpush1.msra.mxu0 0.0
  %5273 = vmatprep.mubr.f32.mxu0 0.0
  %5274 = vmatmul.mubr.f32.gmra.mrb[0].mxu0 %v4994
  %v5275 = vpop.f32.mrb[0].mxu0
  %v5276 = vadd.f32 0.0, %v5275
  %v5277 = vpop.f32.mrb[0].mxu0
  %5278 = vdwg.mxu0
  %v5279 = vadd.f32 %v3738, %v5276
  %v5280 = vxor.u32 %v5066, 2147483648
  %v5281 = vmul.f32 %v5280, 1.442695
  %v5282 = vpow.pop %v5281
  %v5283 = vadd.f32 %v5282, 1.0
  %v5284 = vrcp.pop %v5283
  %v5285 = vmul.f32 1.0, %v5284
  %v5286 = vxor.u32 %v5137, 2147483648
  %v5287 = vmul.f32 %v5286, 1.442695
  %v5288 = vpow.pop %v5287
  %v5289 = vadd.f32 %v5288, 1.0
  %v5290 = vrcp.pop %v5289
  %v5291 = vmul.f32 1.0, %v5290
  %v5292 = vtanh.pop %v5208
  %v5293 = vxor.u32 %v5279, 2147483648
  %v5294 = vmul.f32 %v5293, 1.442695
  %v5295 = vpow.pop %v5294
  %v5296 = vadd.f32 %v5295, 1.0
  %v5297 = vrcp.pop %v5296
  %v5298 = vmul.f32 1.0, %v5297
  %v5299 = vmul.f32 %v5291, %v4988
  %v5300 = vmul.f32 %v5285, %v5292
  %v5301 = vadd.f32 %v5299, %v5300
  %v5302 = vtanh.pop %v5301
  %v5303 = vmul.f32 %v5298, %v5302
  %s5304 = scalar_lea.vmem [#allocation3], 8
  %5305 = vst.msk [vmem:[%s5304] sm:$0x3] %vm987, %v5303
  %v5307 = vsel %vm90, %v5303, 0
  %5309 = vmatprep.subr.mxu0 0.0
  %5310 = vmatpush1.msra.mxu0 %v37
  %5311 = vmatprep.subr.mxu0 0.0
  %5312 = vmatpush1.msra.mxu0 %v38
  %5313 = vmatprep.subr.mxu0 0.0
  %5314 = vmatpush1.msra.mxu0 %v39
  %5315 = vmatprep.subr.mxu0 0.0
  %5316 = vmatpush1.msra.mxu0 %v40
  %5317 = vmatprep.subr.mxu0 0.0
  %5318 = vmatpush1.msra.mxu0 0.0
  %5319 = vmatprep.subr.mxu0 0.0
  %5320 = vmatpush1.msra.mxu0 0.0
  %5321 = vmatprep.subr.mxu0 0.0
  %5322 = vmatpush1.msra.mxu0 0.0
  %5323 = vmatprep.subr.mxu0 0.0
  %5324 = vmatpush1.msra.mxu0 0.0
  %5325 = vmatprep.subr.mxu0 0.0
  %5326 = vmatpush1.msra.mxu0 0.0
  %5327 = vmatprep.subr.mxu0 0.0
  %5328 = vmatpush1.msra.mxu0 0.0
  %5329 = vmatprep.subr.mxu0 0.0
  %5330 = vmatpush1.msra.mxu0 0.0
  %5331 = vmatprep.subr.mxu0 0.0
  %5332 = vmatpush1.msra.mxu0 0.0
  %5333 = vmatprep.subr.mxu0 0.0
  %5334 = vmatpush1.msra.mxu0 0.0
  %5335 = vmatprep.subr.mxu0 0.0
  %5336 = vmatpush1.msra.mxu0 0.0
  %5337 = vmatprep.subr.mxu0 0.0
  %5338 = vmatpush1.msra.mxu0 0.0
  %5339 = vmatprep.subr.mxu0 0.0
  %5340 = vmatpush1.msra.mxu0 0.0
  %5341 = vmatprep.subr.mxu0 0.0
  %5342 = vmatpush1.msra.mxu0 0.0
  %5343 = vmatprep.subr.mxu0 0.0
  %5344 = vmatpush1.msra.mxu0 0.0
  %5345 = vmatprep.subr.mxu0 0.0
  %5346 = vmatpush1.msra.mxu0 0.0
  %5347 = vmatprep.subr.mxu0 0.0
  %5348 = vmatpush1.msra.mxu0 0.0
  %5349 = vmatprep.subr.mxu0 0.0
  %5350 = vmatpush1.msra.mxu0 0.0
  %5351 = vmatprep.subr.mxu0 0.0
  %5352 = vmatpush1.msra.mxu0 0.0
  %5353 = vmatprep.subr.mxu0 0.0
  %5354 = vmatpush1.msra.mxu0 0.0
  %5355 = vmatprep.subr.mxu0 0.0
  %5356 = vmatpush1.msra.mxu0 0.0
  %5357 = vmatprep.subr.mxu0 0.0
  %5358 = vmatpush1.msra.mxu0 0.0
  %5359 = vmatprep.subr.mxu0 0.0
  %5360 = vmatpush1.msra.mxu0 0.0
  %5361 = vmatprep.subr.mxu0 0.0
  %5362 = vmatpush1.msra.mxu0 0.0
  %5363 = vmatprep.subr.mxu0 0.0
  %5364 = vmatpush1.msra.mxu0 0.0
  %5365 = vmatprep.subr.mxu0 0.0
  %5366 = vmatpush1.msra.mxu0 0.0
  %5367 = vmatprep.subr.mxu0 0.0
  %5368 = vmatpush1.msra.mxu0 0.0
  %5369 = vmatprep.subr.mxu0 0.0
  %5370 = vmatpush1.msra.mxu0 0.0
  %5371 = vmatprep.subr.mxu0 0.0
  %5372 = vmatpush1.msra.mxu0 0.0
  %5373 = vmatprep.mubr.f32.mxu0 0.0
  %5374 = vmatmul.mubr.f32.gmra.mrb[0].mxu0 %v5307
  %v5375 = vpop.f32.mrb[0].mxu0
  %v5376 = vadd.f32 0.0, %v5375
  %v5377 = vpop.f32.mrb[0].mxu0
  %5378 = vdwg.mxu0
  %v5379 = vadd.f32 %v3358, %v5376
  %5380 = vmatprep.subr.mxu0 0.0
  %5381 = vmatpush1.msra.mxu0 %v715
  %5382 = vmatprep.subr.mxu0 0.0
  %5383 = vmatpush1.msra.mxu0 %v717
  %5384 = vmatprep.subr.mxu0 0.0
  %5385 = vmatpush1.msra.mxu0 %v719
  %5386 = vmatprep.subr.mxu0 0.0
  %5387 = vmatpush1.msra.mxu0 %v721
  %5388 = vmatprep.subr.mxu0 0.0
  %5389 = vmatpush1.msra.mxu0 0.0
  %5390 = vmatprep.subr.mxu0 0.0
  %5391 = vmatpush1.msra.mxu0 0.0
  %5392 = vmatprep.subr.mxu0 0.0
  %5393 = vmatpush1.msra.mxu0 0.0
  %5394 = vmatprep.subr.mxu0 0.0
  %5395 = vmatpush1.msra.mxu0 0.0
  %5396 = vmatprep.subr.mxu0 0.0
  %5397 = vmatpush1.msra.mxu0 0.0
  %5398 = vmatprep.subr.mxu0 0.0
  %5399 = vmatpush1.msra.mxu0 0.0
  %5400 = vmatprep.subr.mxu0 0.0
  %5401 = vmatpush1.msra.mxu0 0.0
  %5402 = vmatprep.subr.mxu0 0.0
  %5403 = vmatpush1.msra.mxu0 0.0
  %5404 = vmatprep.subr.mxu0 0.0
  %5405 = vmatpush1.msra.mxu0 0.0
  %5406 = vmatprep.subr.mxu0 0.0
  %5407 = vmatpush1.msra.mxu0 0.0
  %5408 = vmatprep.subr.mxu0 0.0
  %5409 = vmatpush1.msra.mxu0 0.0
  %5410 = vmatprep.subr.mxu0 0.0
  %5411 = vmatpush1.msra.mxu0 0.0
  %5412 = vmatprep.subr.mxu0 0.0
  %5413 = vmatpush1.msra.mxu0 0.0
  %5414 = vmatprep.subr.mxu0 0.0
  %5415 = vmatpush1.msra.mxu0 0.0
  %5416 = vmatprep.subr.mxu0 0.0
  %5417 = vmatpush1.msra.mxu0 0.0
  %5418 = vmatprep.subr.mxu0 0.0
  %5419 = vmatpush1.msra.mxu0 0.0
  %5420 = vmatprep.subr.mxu0 0.0
  %5421 = vmatpush1.msra.mxu0 0.0
  %5422 = vmatprep.subr.mxu0 0.0
  %5423 = vmatpush1.msra.mxu0 0.0
  %5424 = vmatprep.subr.mxu0 0.0
  %5425 = vmatpush1.msra.mxu0 0.0
  %5426 = vmatprep.subr.mxu0 0.0
  %5427 = vmatpush1.msra.mxu0 0.0
  %5428 = vmatprep.subr.mxu0 0.0
  %5429 = vmatpush1.msra.mxu0 0.0
  %5430 = vmatprep.subr.mxu0 0.0
  %5431 = vmatpush1.msra.mxu0 0.0
  %5432 = vmatprep.subr.mxu0 0.0
  %5433 = vmatpush1.msra.mxu0 0.0
  %5434 = vmatprep.subr.mxu0 0.0
  %5435 = vmatpush1.msra.mxu0 0.0
  %5436 = vmatprep.subr.mxu0 0.0
  %5437 = vmatpush1.msra.mxu0 0.0
  %5438 = vmatprep.subr.mxu0 0.0
  %5439 = vmatpush1.msra.mxu0 0.0
  %5440 = vmatprep.subr.mxu0 0.0
  %5441 = vmatpush1.msra.mxu0 0.0
  %5442 = vmatprep.subr.mxu0 0.0
  %5443 = vmatpush1.msra.mxu0 0.0
  %5444 = vmatprep.mubr.f32.mxu0 0.0
  %5445 = vmatmul.mubr.f32.gmra.mrb[0].mxu0 %v5307
  %v5446 = vpop.f32.mrb[0].mxu0
  %v5447 = vadd.f32 0.0, %v5446
  %v5448 = vpop.f32.mrb[0].mxu0
  %5449 = vdwg.mxu0
  %v5450 = vadd.f32 %v3485, %v5447
  %5451 = vmatprep.subr.mxu0 0.0
  %5452 = vmatpush1.msra.mxu0 %v798
  %5453 = vmatprep.subr.mxu0 0.0
  %5454 = vmatpush1.msra.mxu0 %v800
  %5455 = vmatprep.subr.mxu0 0.0
  %5456 = vmatpush1.msra.mxu0 %v802
  %5457 = vmatprep.subr.mxu0 0.0
  %5458 = vmatpush1.msra.mxu0 %v804
  %5459 = vmatprep.subr.mxu0 0.0
  %5460 = vmatpush1.msra.mxu0 0.0
  %5461 = vmatprep.subr.mxu0 0.0
  %5462 = vmatpush1.msra.mxu0 0.0
  %5463 = vmatprep.subr.mxu0 0.0
  %5464 = vmatpush1.msra.mxu0 0.0
  %5465 = vmatprep.subr.mxu0 0.0
  %5466 = vmatpush1.msra.mxu0 0.0
  %5467 = vmatprep.subr.mxu0 0.0
  %5468 = vmatpush1.msra.mxu0 0.0
  %5469 = vmatprep.subr.mxu0 0.0
  %5470 = vmatpush1.msra.mxu0 0.0
  %5471 = vmatprep.subr.mxu0 0.0
  %5472 = vmatpush1.msra.mxu0 0.0
  %5473 = vmatprep.subr.mxu0 0.0
  %5474 = vmatpush1.msra.mxu0 0.0
  %5475 = vmatprep.subr.mxu0 0.0
  %5476 = vmatpush1.msra.mxu0 0.0
  %5477 = vmatprep.subr.mxu0 0.0
  %5478 = vmatpush1.msra.mxu0 0.0
  %5479 = vmatprep.subr.mxu0 0.0
  %5480 = vmatpush1.msra.mxu0 0.0
  %5481 = vmatprep.subr.mxu0 0.0
  %5482 = vmatpush1.msra.mxu0 0.0
  %5483 = vmatprep.subr.mxu0 0.0
  %5484 = vmatpush1.msra.mxu0 0.0
  %5485 = vmatprep.subr.mxu0 0.0
  %5486 = vmatpush1.msra.mxu0 0.0
  %5487 = vmatprep.subr.mxu0 0.0
  %5488 = vmatpush1.msra.mxu0 0.0
  %5489 = vmatprep.subr.mxu0 0.0
  %5490 = vmatpush1.msra.mxu0 0.0
  %5491 = vmatprep.subr.mxu0 0.0
  %5492 = vmatpush1.msra.mxu0 0.0
  %5493 = vmatprep.subr.mxu0 0.0
  %5494 = vmatpush1.msra.mxu0 0.0
  %5495 = vmatprep.subr.mxu0 0.0
  %5496 = vmatpush1.msra.mxu0 0.0
  %5497 = vmatprep.subr.mxu0 0.0
  %5498 = vmatpush1.msra.mxu0 0.0
  %5499 = vmatprep.subr.mxu0 0.0
  %5500 = vmatpush1.msra.mxu0 0.0
  %5501 = vmatprep.subr.mxu0 0.0
  %5502 = vmatpush1.msra.mxu0 0.0
  %5503 = vmatprep.subr.mxu0 0.0
  %5504 = vmatpush1.msra.mxu0 0.0
  %5505 = vmatprep.subr.mxu0 0.0
  %5506 = vmatpush1.msra.mxu0 0.0
  %5507 = vmatprep.subr.mxu0 0.0
  %5508 = vmatpush1.msra.mxu0 0.0
  %5509 = vmatprep.subr.mxu0 0.0
  %5510 = vmatpush1.msra.mxu0 0.0
  %5511 = vmatprep.subr.mxu0 0.0
  %5512 = vmatpush1.msra.mxu0 0.0
  %5513 = vmatprep.subr.mxu0 0.0
  %5514 = vmatpush1.msra.mxu0 0.0
  %5515 = vmatprep.mubr.f32.mxu0 0.0
  %5516 = vmatmul.mubr.f32.gmra.mrb[0].mxu0 %v5307
  %v5517 = vpop.f32.mrb[0].mxu0
  %v5518 = vadd.f32 0.0, %v5517
  %v5519 = vpop.f32.mrb[0].mxu0
  %5520 = vdwg.mxu0
  %v5521 = vadd.f32 %v3612, %v5518
  %5522 = vmatprep.subr.mxu0 0.0
  %5523 = vmatpush1.msra.mxu0 %v881
  %5524 = vmatprep.subr.mxu0 0.0
  %5525 = vmatpush1.msra.mxu0 %v883
  %5526 = vmatprep.subr.mxu0 0.0
  %5527 = vmatpush1.msra.mxu0 %v885
  %5528 = vmatprep.subr.mxu0 0.0
  %5529 = vmatpush1.msra.mxu0 %v887
  %5530 = vmatprep.subr.mxu0 0.0
  %5531 = vmatpush1.msra.mxu0 0.0
  %5532 = vmatprep.subr.mxu0 0.0
  %5533 = vmatpush1.msra.mxu0 0.0
  %5534 = vmatprep.subr.mxu0 0.0
  %5535 = vmatpush1.msra.mxu0 0.0
  %5536 = vmatprep.subr.mxu0 0.0
  %5537 = vmatpush1.msra.mxu0 0.0
  %5538 = vmatprep.subr.mxu0 0.0
  %5539 = vmatpush1.msra.mxu0 0.0
  %5540 = vmatprep.subr.mxu0 0.0
  %5541 = vmatpush1.msra.mxu0 0.0
  %5542 = vmatprep.subr.mxu0 0.0
  %5543 = vmatpush1.msra.mxu0 0.0
  %5544 = vmatprep.subr.mxu0 0.0
  %5545 = vmatpush1.msra.mxu0 0.0
  %5546 = vmatprep.subr.mxu0 0.0
  %5547 = vmatpush1.msra.mxu0 0.0
  %5548 = vmatprep.subr.mxu0 0.0
  %5549 = vmatpush1.msra.mxu0 0.0
  %5550 = vmatprep.subr.mxu0 0.0
  %5551 = vmatpush1.msra.mxu0 0.0
  %5552 = vmatprep.subr.mxu0 0.0
  %5553 = vmatpush1.msra.mxu0 0.0
  %5554 = vmatprep.subr.mxu0 0.0
  %5555 = vmatpush1.msra.mxu0 0.0
  %5556 = vmatprep.subr.mxu0 0.0
  %5557 = vmatpush1.msra.mxu0 0.0
  %5558 = vmatprep.subr.mxu0 0.0
  %5559 = vmatpush1.msra.mxu0 0.0
  %5560 = vmatprep.subr.mxu0 0.0
  %5561 = vmatpush1.msra.mxu0 0.0
  %5562 = vmatprep.subr.mxu0 0.0
  %5563 = vmatpush1.msra.mxu0 0.0
  %5564 = vmatprep.subr.mxu0 0.0
  %5565 = vmatpush1.msra.mxu0 0.0
  %5566 = vmatprep.subr.mxu0 0.0
  %5567 = vmatpush1.msra.mxu0 0.0
  %5568 = vmatprep.subr.mxu0 0.0
  %5569 = vmatpush1.msra.mxu0 0.0
  %5570 = vmatprep.subr.mxu0 0.0
  %5571 = vmatpush1.msra.mxu0 0.0
  %5572 = vmatprep.subr.mxu0 0.0
  %5573 = vmatpush1.msra.mxu0 0.0
  %5574 = vmatprep.subr.mxu0 0.0
  %5575 = vmatpush1.msra.mxu0 0.0
  %5576 = vmatprep.subr.mxu0 0.0
  %5577 = vmatpush1.msra.mxu0 0.0
  %5578 = vmatprep.subr.mxu0 0.0
  %5579 = vmatpush1.msra.mxu0 0.0
  %5580 = vmatprep.subr.mxu0 0.0
  %5581 = vmatpush1.msra.mxu0 0.0
  %5582 = vmatprep.subr.mxu0 0.0
  %5583 = vmatpush1.msra.mxu0 0.0
  %5584 = vmatprep.subr.mxu0 0.0
  %5585 = vmatpush1.msra.mxu0 0.0
  %5586 = vmatprep.mubr.f32.mxu0 0.0
  %5587 = vmatmul.mubr.f32.gmra.mrb[0].mxu0 %v5307
  %v5588 = vpop.f32.mrb[0].mxu0
  %v5589 = vadd.f32 0.0, %v5588
  %v5590 = vpop.f32.mrb[0].mxu0
  %5591 = vdwg.mxu0
  %v5592 = vadd.f32 %v3739, %v5589
  %v5593 = vxor.u32 %v5379, 2147483648
  %v5594 = vmul.f32 %v5593, 1.442695
  %v5595 = vpow.pop %v5594
  %v5596 = vadd.f32 %v5595, 1.0
  %v5597 = vrcp.pop %v5596
  %v5598 = vmul.f32 1.0, %v5597
  %v5599 = vxor.u32 %v5450, 2147483648
  %v5600 = vmul.f32 %v5599, 1.442695
  %v5601 = vpow.pop %v5600
  %v5602 = vadd.f32 %v5601, 1.0
  %v5603 = vrcp.pop %v5602
  %v5604 = vmul.f32 1.0, %v5603
  %v5605 = vtanh.pop %v5521
  %v5606 = vxor.u32 %v5592, 2147483648
  %v5607 = vmul.f32 %v5606, 1.442695
  %v5608 = vpow.pop %v5607
  %v5609 = vadd.f32 %v5608, 1.0
  %v5610 = vrcp.pop %v5609
  %v5611 = vmul.f32 1.0, %v5610
  %v5612 = vmul.f32 %v5604, %v5301
  %v5613 = vmul.f32 %v5598, %v5605
  %v5614 = vadd.f32 %v5612, %v5613
  %v5615 = vtanh.pop %v5614
  %v5616 = vmul.f32 %v5611, %v5615
  %s5617 = scalar_lea.vmem [#allocation3], 10
  %5618 = vst.msk [vmem:[%s5617] sm:$0x3] %vm987, %v5616
  %v5620 = vsel %vm90, %v5616, 0
  %5622 = vmatprep.subr.mxu0 0.0
  %5623 = vmatpush1.msra.mxu0 %v37
  %5624 = vmatprep.subr.mxu0 0.0
  %5625 = vmatpush1.msra.mxu0 %v38
  %5626 = vmatprep.subr.mxu0 0.0
  %5627 = vmatpush1.msra.mxu0 %v39
  %5628 = vmatprep.subr.mxu0 0.0
  %5629 = vmatpush1.msra.mxu0 %v40
  %5630 = vmatprep.subr.mxu0 0.0
  %5631 = vmatpush1.msra.mxu0 0.0
  %5632 = vmatprep.subr.mxu0 0.0
  %5633 = vmatpush1.msra.mxu0 0.0
  %5634 = vmatprep.subr.mxu0 0.0
  %5635 = vmatpush1.msra.mxu0 0.0
  %5636 = vmatprep.subr.mxu0 0.0
  %5637 = vmatpush1.msra.mxu0 0.0
  %5638 = vmatprep.subr.mxu0 0.0
  %5639 = vmatpush1.msra.mxu0 0.0
  %5640 = vmatprep.subr.mxu0 0.0
  %5641 = vmatpush1.msra.mxu0 0.0
  %5642 = vmatprep.subr.mxu0 0.0
  %5643 = vmatpush1.msra.mxu0 0.0
  %5644 = vmatprep.subr.mxu0 0.0
  %5645 = vmatpush1.msra.mxu0 0.0
  %5646 = vmatprep.subr.mxu0 0.0
  %5647 = vmatpush1.msra.mxu0 0.0
  %5648 = vmatprep.subr.mxu0 0.0
  %5649 = vmatpush1.msra.mxu0 0.0
  %5650 = vmatprep.subr.mxu0 0.0
  %5651 = vmatpush1.msra.mxu0 0.0
  %5652 = vmatprep.subr.mxu0 0.0
  %5653 = vmatpush1.msra.mxu0 0.0
  %5654 = vmatprep.subr.mxu0 0.0
  %5655 = vmatpush1.msra.mxu0 0.0
  %5656 = vmatprep.subr.mxu0 0.0
  %5657 = vmatpush1.msra.mxu0 0.0
  %5658 = vmatprep.subr.mxu0 0.0
  %5659 = vmatpush1.msra.mxu0 0.0
  %5660 = vmatprep.subr.mxu0 0.0
  %5661 = vmatpush1.msra.mxu0 0.0
  %5662 = vmatprep.subr.mxu0 0.0
  %5663 = vmatpush1.msra.mxu0 0.0
  %5664 = vmatprep.subr.mxu0 0.0
  %5665 = vmatpush1.msra.mxu0 0.0
  %5666 = vmatprep.subr.mxu0 0.0
  %5667 = vmatpush1.msra.mxu0 0.0
  %5668 = vmatprep.subr.mxu0 0.0
  %5669 = vmatpush1.msra.mxu0 0.0
  %5670 = vmatprep.subr.mxu0 0.0
  %5671 = vmatpush1.msra.mxu0 0.0
  %5672 = vmatprep.subr.mxu0 0.0
  %5673 = vmatpush1.msra.mxu0 0.0
  %5674 = vmatprep.subr.mxu0 0.0
  %5675 = vmatpush1.msra.mxu0 0.0
  %5676 = vmatprep.subr.mxu0 0.0
  %5677 = vmatpush1.msra.mxu0 0.0
  %5678 = vmatprep.subr.mxu0 0.0
  %5679 = vmatpush1.msra.mxu0 0.0
  %5680 = vmatprep.subr.mxu0 0.0
  %5681 = vmatpush1.msra.mxu0 0.0
  %5682 = vmatprep.subr.mxu0 0.0
  %5683 = vmatpush1.msra.mxu0 0.0
  %5684 = vmatprep.subr.mxu0 0.0
  %5685 = vmatpush1.msra.mxu0 0.0
  %5686 = vmatprep.mubr.f32.mxu0 0.0
  %5687 = vmatmul.mubr.f32.gmra.mrb[0].mxu0 %v5620
  %v5688 = vpop.f32.mrb[0].mxu0
  %v5689 = vadd.f32 0.0, %v5688
  %v5690 = vpop.f32.mrb[0].mxu0
  %5691 = vdwg.mxu0
  %v5692 = vadd.f32 %v3359, %v5689
  %5693 = vmatprep.subr.mxu0 0.0
  %5694 = vmatpush1.msra.mxu0 %v715
  %5695 = vmatprep.subr.mxu0 0.0
  %5696 = vmatpush1.msra.mxu0 %v717
  %5697 = vmatprep.subr.mxu0 0.0
  %5698 = vmatpush1.msra.mxu0 %v719
  %5699 = vmatprep.subr.mxu0 0.0
  %5700 = vmatpush1.msra.mxu0 %v721
  %5701 = vmatprep.subr.mxu0 0.0
  %5702 = vmatpush1.msra.mxu0 0.0
  %5703 = vmatprep.subr.mxu0 0.0
  %5704 = vmatpush1.msra.mxu0 0.0
  %5705 = vmatprep.subr.mxu0 0.0
  %5706 = vmatpush1.msra.mxu0 0.0
  %5707 = vmatprep.subr.mxu0 0.0
  %5708 = vmatpush1.msra.mxu0 0.0
  %5709 = vmatprep.subr.mxu0 0.0
  %5710 = vmatpush1.msra.mxu0 0.0
  %5711 = vmatprep.subr.mxu0 0.0
  %5712 = vmatpush1.msra.mxu0 0.0
  %5713 = vmatprep.subr.mxu0 0.0
  %5714 = vmatpush1.msra.mxu0 0.0
  %5715 = vmatprep.subr.mxu0 0.0
  %5716 = vmatpush1.msra.mxu0 0.0
  %5717 = vmatprep.subr.mxu0 0.0
  %5718 = vmatpush1.msra.mxu0 0.0
  %5719 = vmatprep.subr.mxu0 0.0
  %5720 = vmatpush1.msra.mxu0 0.0
  %5721 = vmatprep.subr.mxu0 0.0
  %5722 = vmatpush1.msra.mxu0 0.0
  %5723 = vmatprep.subr.mxu0 0.0
  %5724 = vmatpush1.msra.mxu0 0.0
  %5725 = vmatprep.subr.mxu0 0.0
  %5726 = vmatpush1.msra.mxu0 0.0
  %5727 = vmatprep.subr.mxu0 0.0
  %5728 = vmatpush1.msra.mxu0 0.0
  %5729 = vmatprep.subr.mxu0 0.0
  %5730 = vmatpush1.msra.mxu0 0.0
  %5731 = vmatprep.subr.mxu0 0.0
  %5732 = vmatpush1.msra.mxu0 0.0
  %5733 = vmatprep.subr.mxu0 0.0
  %5734 = vmatpush1.msra.mxu0 0.0
  %5735 = vmatprep.subr.mxu0 0.0
  %5736 = vmatpush1.msra.mxu0 0.0
  %5737 = vmatprep.subr.mxu0 0.0
  %5738 = vmatpush1.msra.mxu0 0.0
  %5739 = vmatprep.subr.mxu0 0.0
  %5740 = vmatpush1.msra.mxu0 0.0
  %5741 = vmatprep.subr.mxu0 0.0
  %5742 = vmatpush1.msra.mxu0 0.0
  %5743 = vmatprep.subr.mxu0 0.0
  %5744 = vmatpush1.msra.mxu0 0.0
  %5745 = vmatprep.subr.mxu0 0.0
  %5746 = vmatpush1.msra.mxu0 0.0
  %5747 = vmatprep.subr.mxu0 0.0
  %5748 = vmatpush1.msra.mxu0 0.0
  %5749 = vmatprep.subr.mxu0 0.0
  %5750 = vmatpush1.msra.mxu0 0.0
  %5751 = vmatprep.subr.mxu0 0.0
  %5752 = vmatpush1.msra.mxu0 0.0
  %5753 = vmatprep.subr.mxu0 0.0
  %5754 = vmatpush1.msra.mxu0 0.0
  %5755 = vmatprep.subr.mxu0 0.0
  %5756 = vmatpush1.msra.mxu0 0.0
  %5757 = vmatprep.mubr.f32.mxu0 0.0
  %5758 = vmatmul.mubr.f32.gmra.mrb[0].mxu0 %v5620
  %v5759 = vpop.f32.mrb[0].mxu0
  %v5760 = vadd.f32 0.0, %v5759
  %v5761 = vpop.f32.mrb[0].mxu0
  %5762 = vdwg.mxu0
  %v5763 = vadd.f32 %v3486, %v5760
  %5764 = vmatprep.subr.mxu0 0.0
  %5765 = vmatpush1.msra.mxu0 %v798
  %5766 = vmatprep.subr.mxu0 0.0
  %5767 = vmatpush1.msra.mxu0 %v800
  %5768 = vmatprep.subr.mxu0 0.0
  %5769 = vmatpush1.msra.mxu0 %v802
  %5770 = vmatprep.subr.mxu0 0.0
  %5771 = vmatpush1.msra.mxu0 %v804
  %5772 = vmatprep.subr.mxu0 0.0
  %5773 = vmatpush1.msra.mxu0 0.0
  %5774 = vmatprep.subr.mxu0 0.0
  %5775 = vmatpush1.msra.mxu0 0.0
  %5776 = vmatprep.subr.mxu0 0.0
  %5777 = vmatpush1.msra.mxu0 0.0
  %5778 = vmatprep.subr.mxu0 0.0
  %5779 = vmatpush1.msra.mxu0 0.0
  %5780 = vmatprep.subr.mxu0 0.0
  %5781 = vmatpush1.msra.mxu0 0.0
  %5782 = vmatprep.subr.mxu0 0.0
  %5783 = vmatpush1.msra.mxu0 0.0
  %5784 = vmatprep.subr.mxu0 0.0
  %5785 = vmatpush1.msra.mxu0 0.0
  %5786 = vmatprep.subr.mxu0 0.0
  %5787 = vmatpush1.msra.mxu0 0.0
  %5788 = vmatprep.subr.mxu0 0.0
  %5789 = vmatpush1.msra.mxu0 0.0
  %5790 = vmatprep.subr.mxu0 0.0
  %5791 = vmatpush1.msra.mxu0 0.0
  %5792 = vmatprep.subr.mxu0 0.0
  %5793 = vmatpush1.msra.mxu0 0.0
  %5794 = vmatprep.subr.mxu0 0.0
  %5795 = vmatpush1.msra.mxu0 0.0
  %5796 = vmatprep.subr.mxu0 0.0
  %5797 = vmatpush1.msra.mxu0 0.0
  %5798 = vmatprep.subr.mxu0 0.0
  %5799 = vmatpush1.msra.mxu0 0.0
  %5800 = vmatprep.subr.mxu0 0.0
  %5801 = vmatpush1.msra.mxu0 0.0
  %5802 = vmatprep.subr.mxu0 0.0
  %5803 = vmatpush1.msra.mxu0 0.0
  %5804 = vmatprep.subr.mxu0 0.0
  %5805 = vmatpush1.msra.mxu0 0.0
  %5806 = vmatprep.subr.mxu0 0.0
  %5807 = vmatpush1.msra.mxu0 0.0
  %5808 = vmatprep.subr.mxu0 0.0
  %5809 = vmatpush1.msra.mxu0 0.0
  %5810 = vmatprep.subr.mxu0 0.0
  %5811 = vmatpush1.msra.mxu0 0.0
  %5812 = vmatprep.subr.mxu0 0.0
  %5813 = vmatpush1.msra.mxu0 0.0
  %5814 = vmatprep.subr.mxu0 0.0
  %5815 = vmatpush1.msra.mxu0 0.0
  %5816 = vmatprep.subr.mxu0 0.0
  %5817 = vmatpush1.msra.mxu0 0.0
  %5818 = vmatprep.subr.mxu0 0.0
  %5819 = vmatpush1.msra.mxu0 0.0
  %5820 = vmatprep.subr.mxu0 0.0
  %5821 = vmatpush1.msra.mxu0 0.0
  %5822 = vmatprep.subr.mxu0 0.0
  %5823 = vmatpush1.msra.mxu0 0.0
  %5824 = vmatprep.subr.mxu0 0.0
  %5825 = vmatpush1.msra.mxu0 0.0
  %5826 = vmatprep.subr.mxu0 0.0
  %5827 = vmatpush1.msra.mxu0 0.0
  %5828 = vmatprep.mubr.f32.mxu0 0.0
  %5829 = vmatmul.mubr.f32.gmra.mrb[0].mxu0 %v5620
  %v5830 = vpop.f32.mrb[0].mxu0
  %v5831 = vadd.f32 0.0, %v5830
  %v5832 = vpop.f32.mrb[0].mxu0
  %5833 = vdwg.mxu0
  %v5834 = vadd.f32 %v3613, %v5831
  %5835 = vmatprep.subr.mxu0 0.0
  %5836 = vmatpush1.msra.mxu0 %v881
  %5837 = vmatprep.subr.mxu0 0.0
  %5838 = vmatpush1.msra.mxu0 %v883
  %5839 = vmatprep.subr.mxu0 0.0
  %5840 = vmatpush1.msra.mxu0 %v885
  %5841 = vmatprep.subr.mxu0 0.0
  %5842 = vmatpush1.msra.mxu0 %v887
  %5843 = vmatprep.subr.mxu0 0.0
  %5844 = vmatpush1.msra.mxu0 0.0
  %5845 = vmatprep.subr.mxu0 0.0
  %5846 = vmatpush1.msra.mxu0 0.0
  %5847 = vmatprep.subr.mxu0 0.0
  %5848 = vmatpush1.msra.mxu0 0.0
  %5849 = vmatprep.subr.mxu0 0.0
  %5850 = vmatpush1.msra.mxu0 0.0
  %5851 = vmatprep.subr.mxu0 0.0
  %5852 = vmatpush1.msra.mxu0 0.0
  %5853 = vmatprep.subr.mxu0 0.0
  %5854 = vmatpush1.msra.mxu0 0.0
  %5855 = vmatprep.subr.mxu0 0.0
  %5856 = vmatpush1.msra.mxu0 0.0
  %5857 = vmatprep.subr.mxu0 0.0
  %5858 = vmatpush1.msra.mxu0 0.0
  %5859 = vmatprep.subr.mxu0 0.0
  %5860 = vmatpush1.msra.mxu0 0.0
  %5861 = vmatprep.subr.mxu0 0.0
  %5862 = vmatpush1.msra.mxu0 0.0
  %5863 = vmatprep.subr.mxu0 0.0
  %5864 = vmatpush1.msra.mxu0 0.0
  %5865 = vmatprep.subr.mxu0 0.0
  %5866 = vmatpush1.msra.mxu0 0.0
  %5867 = vmatprep.subr.mxu0 0.0
  %5868 = vmatpush1.msra.mxu0 0.0
  %5869 = vmatprep.subr.mxu0 0.0
  %5870 = vmatpush1.msra.mxu0 0.0
  %5871 = vmatprep.subr.mxu0 0.0
  %5872 = vmatpush1.msra.mxu0 0.0
  %5873 = vmatprep.subr.mxu0 0.0
  %5874 = vmatpush1.msra.mxu0 0.0
  %5875 = vmatprep.subr.mxu0 0.0
  %5876 = vmatpush1.msra.mxu0 0.0
  %5877 = vmatprep.subr.mxu0 0.0
  %5878 = vmatpush1.msra.mxu0 0.0
  %5879 = vmatprep.subr.mxu0 0.0
  %5880 = vmatpush1.msra.mxu0 0.0
  %5881 = vmatprep.subr.mxu0 0.0
  %5882 = vmatpush1.msra.mxu0 0.0
  %5883 = vmatprep.subr.mxu0 0.0
  %5884 = vmatpush1.msra.mxu0 0.0
  %5885 = vmatprep.subr.mxu0 0.0
  %5886 = vmatpush1.msra.mxu0 0.0
  %5887 = vmatprep.subr.mxu0 0.0
  %5888 = vmatpush1.msra.mxu0 0.0
  %5889 = vmatprep.subr.mxu0 0.0
  %5890 = vmatpush1.msra.mxu0 0.0
  %5891 = vmatprep.subr.mxu0 0.0
  %5892 = vmatpush1.msra.mxu0 0.0
  %5893 = vmatprep.subr.mxu0 0.0
  %5894 = vmatpush1.msra.mxu0 0.0
  %5895 = vmatprep.subr.mxu0 0.0
  %5896 = vmatpush1.msra.mxu0 0.0
  %5897 = vmatprep.subr.mxu0 0.0
  %5898 = vmatpush1.msra.mxu0 0.0
  %5899 = vmatprep.mubr.f32.mxu0 0.0
  %5900 = vmatmul.mubr.f32.gmra.mrb[0].mxu0 %v5620
  %v5901 = vpop.f32.mrb[0].mxu0
  %v5902 = vadd.f32 0.0, %v5901
  %v5903 = vpop.f32.mrb[0].mxu0
  %5904 = vdwg.mxu0
  %v5905 = vadd.f32 %v3740, %v5902
  %v5906 = vxor.u32 %v5692, 2147483648
  %v5907 = vmul.f32 %v5906, 1.442695
  %v5908 = vpow.pop %v5907
  %v5909 = vadd.f32 %v5908, 1.0
  %v5910 = vrcp.pop %v5909
  %v5911 = vmul.f32 1.0, %v5910
  %v5912 = vxor.u32 %v5763, 2147483648
  %v5913 = vmul.f32 %v5912, 1.442695
  %v5914 = vpow.pop %v5913
  %v5915 = vadd.f32 %v5914, 1.0
  %v5916 = vrcp.pop %v5915
  %v5917 = vmul.f32 1.0, %v5916
  %v5918 = vtanh.pop %v5834
  %v5919 = vxor.u32 %v5905, 2147483648
  %v5920 = vmul.f32 %v5919, 1.442695
  %v5921 = vpow.pop %v5920
  %v5922 = vadd.f32 %v5921, 1.0
  %v5923 = vrcp.pop %v5922
  %v5924 = vmul.f32 1.0, %v5923
  %v5925 = vmul.f32 %v5917, %v5614
  %v5926 = vmul.f32 %v5911, %v5918
  %v5927 = vadd.f32 %v5925, %v5926
  %v5928 = vtanh.pop %v5927
  %v5929 = vmul.f32 %v5924, %v5928
  %s5930 = scalar_lea.vmem [#allocation3], 12
  %5931 = vst.msk [vmem:[%s5930] sm:$0x3] %vm987, %v5929
  %v5933 = vsel %vm90, %v5929, 0
  %5935 = vmatprep.subr.mxu0 0.0
  %5936 = vmatpush1.msra.mxu0 %v37
  %5937 = vmatprep.subr.mxu0 0.0
  %5938 = vmatpush1.msra.mxu0 %v38
  %5939 = vmatprep.subr.mxu0 0.0
  %5940 = vmatpush1.msra.mxu0 %v39
  %5941 = vmatprep.subr.mxu0 0.0
  %5942 = vmatpush1.msra.mxu0 %v40
  %5943 = vmatprep.subr.mxu0 0.0
  %5944 = vmatpush1.msra.mxu0 0.0
  %5945 = vmatprep.subr.mxu0 0.0
  %5946 = vmatpush1.msra.mxu0 0.0
  %5947 = vmatprep.subr.mxu0 0.0
  %5948 = vmatpush1.msra.mxu0 0.0
  %5949 = vmatprep.subr.mxu0 0.0
  %5950 = vmatpush1.msra.mxu0 0.0
  %5951 = vmatprep.subr.mxu0 0.0
  %5952 = vmatpush1.msra.mxu0 0.0
  %5953 = vmatprep.subr.mxu0 0.0
  %5954 = vmatpush1.msra.mxu0 0.0
  %5955 = vmatprep.subr.mxu0 0.0
  %5956 = vmatpush1.msra.mxu0 0.0
  %5957 = vmatprep.subr.mxu0 0.0
  %5958 = vmatpush1.msra.mxu0 0.0
  %5959 = vmatprep.subr.mxu0 0.0
  %5960 = vmatpush1.msra.mxu0 0.0
  %5961 = vmatprep.subr.mxu0 0.0
  %5962 = vmatpush1.msra.mxu0 0.0
  %5963 = vmatprep.subr.mxu0 0.0
  %5964 = vmatpush1.msra.mxu0 0.0
  %5965 = vmatprep.subr.mxu0 0.0
  %5966 = vmatpush1.msra.mxu0 0.0
  %5967 = vmatprep.subr.mxu0 0.0
  %5968 = vmatpush1.msra.mxu0 0.0
  %5969 = vmatprep.subr.mxu0 0.0
  %5970 = vmatpush1.msra.mxu0 0.0
  %5971 = vmatprep.subr.mxu0 0.0
  %5972 = vmatpush1.msra.mxu0 0.0
  %5973 = vmatprep.subr.mxu0 0.0
  %5974 = vmatpush1.msra.mxu0 0.0
  %5975 = vmatprep.subr.mxu0 0.0
  %5976 = vmatpush1.msra.mxu0 0.0
  %5977 = vmatprep.subr.mxu0 0.0
  %5978 = vmatpush1.msra.mxu0 0.0
  %5979 = vmatprep.subr.mxu0 0.0
  %5980 = vmatpush1.msra.mxu0 0.0
  %5981 = vmatprep.subr.mxu0 0.0
  %5982 = vmatpush1.msra.mxu0 0.0
  %5983 = vmatprep.subr.mxu0 0.0
  %5984 = vmatpush1.msra.mxu0 0.0
  %5985 = vmatprep.subr.mxu0 0.0
  %5986 = vmatpush1.msra.mxu0 0.0
  %5987 = vmatprep.subr.mxu0 0.0
  %5988 = vmatpush1.msra.mxu0 0.0
  %5989 = vmatprep.subr.mxu0 0.0
  %5990 = vmatpush1.msra.mxu0 0.0
  %5991 = vmatprep.subr.mxu0 0.0
  %5992 = vmatpush1.msra.mxu0 0.0
  %5993 = vmatprep.subr.mxu0 0.0
  %5994 = vmatpush1.msra.mxu0 0.0
  %5995 = vmatprep.subr.mxu0 0.0
  %5996 = vmatpush1.msra.mxu0 0.0
  %5997 = vmatprep.subr.mxu0 0.0
  %5998 = vmatpush1.msra.mxu0 0.0
  %5999 = vmatprep.mubr.f32.mxu0 0.0
  %6000 = vmatmul.mubr.f32.gmra.mrb[0].mxu0 %v5933
  %v6001 = vpop.f32.mrb[0].mxu0
  %v6002 = vadd.f32 0.0, %v6001
  %v6003 = vpop.f32.mrb[0].mxu0
  %6004 = vdwg.mxu0
  %v6005 = vadd.f32 %v3360, %v6002
  %6006 = vmatprep.subr.mxu0 0.0
  %6007 = vmatpush1.msra.mxu0 %v715
  %6008 = vmatprep.subr.mxu0 0.0
  %6009 = vmatpush1.msra.mxu0 %v717
  %6010 = vmatprep.subr.mxu0 0.0
  %6011 = vmatpush1.msra.mxu0 %v719
  %6012 = vmatprep.subr.mxu0 0.0
  %6013 = vmatpush1.msra.mxu0 %v721
  %6014 = vmatprep.subr.mxu0 0.0
  %6015 = vmatpush1.msra.mxu0 0.0
  %6016 = vmatprep.subr.mxu0 0.0
  %6017 = vmatpush1.msra.mxu0 0.0
  %6018 = vmatprep.subr.mxu0 0.0
  %6019 = vmatpush1.msra.mxu0 0.0
  %6020 = vmatprep.subr.mxu0 0.0
  %6021 = vmatpush1.msra.mxu0 0.0
  %6022 = vmatprep.subr.mxu0 0.0
  %6023 = vmatpush1.msra.mxu0 0.0
  %6024 = vmatprep.subr.mxu0 0.0
  %6025 = vmatpush1.msra.mxu0 0.0
  %6026 = vmatprep.subr.mxu0 0.0
  %6027 = vmatpush1.msra.mxu0 0.0
  %6028 = vmatprep.subr.mxu0 0.0
  %6029 = vmatpush1.msra.mxu0 0.0
  %6030 = vmatprep.subr.mxu0 0.0
  %6031 = vmatpush1.msra.mxu0 0.0
  %6032 = vmatprep.subr.mxu0 0.0
  %6033 = vmatpush1.msra.mxu0 0.0
  %6034 = vmatprep.subr.mxu0 0.0
  %6035 = vmatpush1.msra.mxu0 0.0
  %6036 = vmatprep.subr.mxu0 0.0
  %6037 = vmatpush1.msra.mxu0 0.0
  %6038 = vmatprep.subr.mxu0 0.0
  %6039 = vmatpush1.msra.mxu0 0.0
  %6040 = vmatprep.subr.mxu0 0.0
  %6041 = vmatpush1.msra.mxu0 0.0
  %6042 = vmatprep.subr.mxu0 0.0
  %6043 = vmatpush1.msra.mxu0 0.0
  %6044 = vmatprep.subr.mxu0 0.0
  %6045 = vmatpush1.msra.mxu0 0.0
  %6046 = vmatprep.subr.mxu0 0.0
  %6047 = vmatpush1.msra.mxu0 0.0
  %6048 = vmatprep.subr.mxu0 0.0
  %6049 = vmatpush1.msra.mxu0 0.0
  %6050 = vmatprep.subr.mxu0 0.0
  %6051 = vmatpush1.msra.mxu0 0.0
  %6052 = vmatprep.subr.mxu0 0.0
  %6053 = vmatpush1.msra.mxu0 0.0
  %6054 = vmatprep.subr.mxu0 0.0
  %6055 = vmatpush1.msra.mxu0 0.0
  %6056 = vmatprep.subr.mxu0 0.0
  %6057 = vmatpush1.msra.mxu0 0.0
  %6058 = vmatprep.subr.mxu0 0.0
  %6059 = vmatpush1.msra.mxu0 0.0
  %6060 = vmatprep.subr.mxu0 0.0
  %6061 = vmatpush1.msra.mxu0 0.0
  %6062 = vmatprep.subr.mxu0 0.0
  %6063 = vmatpush1.msra.mxu0 0.0
  %6064 = vmatprep.subr.mxu0 0.0
  %6065 = vmatpush1.msra.mxu0 0.0
  %6066 = vmatprep.subr.mxu0 0.0
  %6067 = vmatpush1.msra.mxu0 0.0
  %6068 = vmatprep.subr.mxu0 0.0
  %6069 = vmatpush1.msra.mxu0 0.0
  %6070 = vmatprep.mubr.f32.mxu0 0.0
  %6071 = vmatmul.mubr.f32.gmra.mrb[0].mxu0 %v5933
  %v6072 = vpop.f32.mrb[0].mxu0
  %v6073 = vadd.f32 0.0, %v6072
  %v6074 = vpop.f32.mrb[0].mxu0
  %6075 = vdwg.mxu0
  %v6076 = vadd.f32 %v3487, %v6073
  %6077 = vmatprep.subr.mxu0 0.0
  %6078 = vmatpush1.msra.mxu0 %v798
  %6079 = vmatprep.subr.mxu0 0.0
  %6080 = vmatpush1.msra.mxu0 %v800
  %6081 = vmatprep.subr.mxu0 0.0
  %6082 = vmatpush1.msra.mxu0 %v802
  %6083 = vmatprep.subr.mxu0 0.0
  %6084 = vmatpush1.msra.mxu0 %v804
  %6085 = vmatprep.subr.mxu0 0.0
  %6086 = vmatpush1.msra.mxu0 0.0
  %6087 = vmatprep.subr.mxu0 0.0
  %6088 = vmatpush1.msra.mxu0 0.0
  %6089 = vmatprep.subr.mxu0 0.0
  %6090 = vmatpush1.msra.mxu0 0.0
  %6091 = vmatprep.subr.mxu0 0.0
  %6092 = vmatpush1.msra.mxu0 0.0
  %6093 = vmatprep.subr.mxu0 0.0
  %6094 = vmatpush1.msra.mxu0 0.0
  %6095 = vmatprep.subr.mxu0 0.0
  %6096 = vmatpush1.msra.mxu0 0.0
  %6097 = vmatprep.subr.mxu0 0.0
  %6098 = vmatpush1.msra.mxu0 0.0
  %6099 = vmatprep.subr.mxu0 0.0
  %6100 = vmatpush1.msra.mxu0 0.0
  %6101 = vmatprep.subr.mxu0 0.0
  %6102 = vmatpush1.msra.mxu0 0.0
  %6103 = vmatprep.subr.mxu0 0.0
  %6104 = vmatpush1.msra.mxu0 0.0
  %6105 = vmatprep.subr.mxu0 0.0
  %6106 = vmatpush1.msra.mxu0 0.0
  %6107 = vmatprep.subr.mxu0 0.0
  %6108 = vmatpush1.msra.mxu0 0.0
  %6109 = vmatprep.subr.mxu0 0.0
  %6110 = vmatpush1.msra.mxu0 0.0
  %6111 = vmatprep.subr.mxu0 0.0
  %6112 = vmatpush1.msra.mxu0 0.0
  %6113 = vmatprep.subr.mxu0 0.0
  %6114 = vmatpush1.msra.mxu0 0.0
  %6115 = vmatprep.subr.mxu0 0.0
  %6116 = vmatpush1.msra.mxu0 0.0
  %6117 = vmatprep.subr.mxu0 0.0
  %6118 = vmatpush1.msra.mxu0 0.0
  %6119 = vmatprep.subr.mxu0 0.0
  %6120 = vmatpush1.msra.mxu0 0.0
  %6121 = vmatprep.subr.mxu0 0.0
  %6122 = vmatpush1.msra.mxu0 0.0
  %6123 = vmatprep.subr.mxu0 0.0
  %6124 = vmatpush1.msra.mxu0 0.0
  %6125 = vmatprep.subr.mxu0 0.0
  %6126 = vmatpush1.msra.mxu0 0.0
  %6127 = vmatprep.subr.mxu0 0.0
  %6128 = vmatpush1.msra.mxu0 0.0
  %6129 = vmatprep.subr.mxu0 0.0
  %6130 = vmatpush1.msra.mxu0 0.0
  %6131 = vmatprep.subr.mxu0 0.0
  %6132 = vmatpush1.msra.mxu0 0.0
  %6133 = vmatprep.subr.mxu0 0.0
  %6134 = vmatpush1.msra.mxu0 0.0
  %6135 = vmatprep.subr.mxu0 0.0
  %6136 = vmatpush1.msra.mxu0 0.0
  %6137 = vmatprep.subr.mxu0 0.0
  %6138 = vmatpush1.msra.mxu0 0.0
  %6139 = vmatprep.subr.mxu0 0.0
  %6140 = vmatpush1.msra.mxu0 0.0
  %6141 = vmatprep.mubr.f32.mxu0 0.0
  %6142 = vmatmul.mubr.f32.gmra.mrb[0].mxu0 %v5933
  %v6143 = vpop.f32.mrb[0].mxu0
  %v6144 = vadd.f32 0.0, %v6143
  %v6145 = vpop.f32.mrb[0].mxu0
  %6146 = vdwg.mxu0
  %v6147 = vadd.f32 %v3614, %v6144
  %6148 = vmatprep.subr.mxu0 0.0
  %6149 = vmatpush1.msra.mxu0 %v881
  %6150 = vmatprep.subr.mxu0 0.0
  %6151 = vmatpush1.msra.mxu0 %v883
  %6152 = vmatprep.subr.mxu0 0.0
  %6153 = vmatpush1.msra.mxu0 %v885
  %6154 = vmatprep.subr.mxu0 0.0
  %6155 = vmatpush1.msra.mxu0 %v887
  %6156 = vmatprep.subr.mxu0 0.0
  %6157 = vmatpush1.msra.mxu0 0.0
  %6158 = vmatprep.subr.mxu0 0.0
  %6159 = vmatpush1.msra.mxu0 0.0
  %6160 = vmatprep.subr.mxu0 0.0
  %6161 = vmatpush1.msra.mxu0 0.0
  %6162 = vmatprep.subr.mxu0 0.0
  %6163 = vmatpush1.msra.mxu0 0.0
  %6164 = vmatprep.subr.mxu0 0.0
  %6165 = vmatpush1.msra.mxu0 0.0
  %6166 = vmatprep.subr.mxu0 0.0
  %6167 = vmatpush1.msra.mxu0 0.0
  %6168 = vmatprep.subr.mxu0 0.0
  %6169 = vmatpush1.msra.mxu0 0.0
  %6170 = vmatprep.subr.mxu0 0.0
  %6171 = vmatpush1.msra.mxu0 0.0
  %6172 = vmatprep.subr.mxu0 0.0
  %6173 = vmatpush1.msra.mxu0 0.0
  %6174 = vmatprep.subr.mxu0 0.0
  %6175 = vmatpush1.msra.mxu0 0.0
  %6176 = vmatprep.subr.mxu0 0.0
  %6177 = vmatpush1.msra.mxu0 0.0
  %6178 = vmatprep.subr.mxu0 0.0
  %6179 = vmatpush1.msra.mxu0 0.0
  %6180 = vmatprep.subr.mxu0 0.0
  %6181 = vmatpush1.msra.mxu0 0.0
  %6182 = vmatprep.subr.mxu0 0.0
  %6183 = vmatpush1.msra.mxu0 0.0
  %6184 = vmatprep.subr.mxu0 0.0
  %6185 = vmatpush1.msra.mxu0 0.0
  %6186 = vmatprep.subr.mxu0 0.0
  %6187 = vmatpush1.msra.mxu0 0.0
  %6188 = vmatprep.subr.mxu0 0.0
  %6189 = vmatpush1.msra.mxu0 0.0
  %6190 = vmatprep.subr.mxu0 0.0
  %6191 = vmatpush1.msra.mxu0 0.0
  %6192 = vmatprep.subr.mxu0 0.0
  %6193 = vmatpush1.msra.mxu0 0.0
  %6194 = vmatprep.subr.mxu0 0.0
  %6195 = vmatpush1.msra.mxu0 0.0
  %6196 = vmatprep.subr.mxu0 0.0
  %6197 = vmatpush1.msra.mxu0 0.0
  %6198 = vmatprep.subr.mxu0 0.0
  %6199 = vmatpush1.msra.mxu0 0.0
  %6200 = vmatprep.subr.mxu0 0.0
  %6201 = vmatpush1.msra.mxu0 0.0
  %6202 = vmatprep.subr.mxu0 0.0
  %6203 = vmatpush1.msra.mxu0 0.0
  %6204 = vmatprep.subr.mxu0 0.0
  %6205 = vmatpush1.msra.mxu0 0.0
  %6206 = vmatprep.subr.mxu0 0.0
  %6207 = vmatpush1.msra.mxu0 0.0
  %6208 = vmatprep.subr.mxu0 0.0
  %6209 = vmatpush1.msra.mxu0 0.0
  %6210 = vmatprep.subr.mxu0 0.0
  %6211 = vmatpush1.msra.mxu0 0.0
  %6212 = vmatprep.mubr.f32.mxu0 0.0
  %6213 = vmatmul.mubr.f32.gmra.mrb[0].mxu0 %v5933
  %v6214 = vpop.f32.mrb[0].mxu0
  %v6215 = vadd.f32 0.0, %v6214
  %v6216 = vpop.f32.mrb[0].mxu0
  %6217 = vdwg.mxu0
  %v6218 = vadd.f32 %v3741, %v6215
  %v6219 = vxor.u32 %v6005, 2147483648
  %v6220 = vmul.f32 %v6219, 1.442695
  %v6221 = vpow.pop %v6220
  %v6222 = vadd.f32 %v6221, 1.0
  %v6223 = vrcp.pop %v6222
  %v6224 = vmul.f32 1.0, %v6223
  %v6225 = vxor.u32 %v6076, 2147483648
  %v6226 = vmul.f32 %v6225, 1.442695
  %v6227 = vpow.pop %v6226
  %v6228 = vadd.f32 %v6227, 1.0
  %v6229 = vrcp.pop %v6228
  %v6230 = vmul.f32 1.0, %v6229
  %v6231 = vtanh.pop %v6147
  %v6232 = vxor.u32 %v6218, 2147483648
  %v6233 = vmul.f32 %v6232, 1.442695
  %v6234 = vpow.pop %v6233
  %v6235 = vadd.f32 %v6234, 1.0
  %v6236 = vrcp.pop %v6235
  %v6237 = vmul.f32 1.0, %v6236
  %v6238 = vmul.f32 %v6230, %v5927
  %v6239 = vmul.f32 %v6224, %v6231
  %v6240 = vadd.f32 %v6238, %v6239
  %v6241 = vtanh.pop %v6240
  %v6242 = vmul.f32 %v6237, %v6241
  %s6243 = scalar_lea.vmem [#allocation3], 14
  %6244 = vst.msk [vmem:[%s6243] sm:$0x3] %vm987, %v6242
  %v6245 = vld [vmem:[#allocation3] sm:$0x3]
  %v6246 = vld [vmem:[#allocation3 + $0x2] sm:$0x3]
  %v6247 = vld [vmem:[#allocation3 + $0x4] sm:$0x3]
  %v6248 = vld [vmem:[#allocation3 + $0x6] sm:$0x3]
  %v6249 = vld [vmem:[#allocation3 + $0x8] sm:$0x3]
  %v6250 = vld [vmem:[#allocation3 + $0xa] sm:$0x3]
  %v6251 = vld [vmem:[#allocation3 + $0xc] sm:$0x3]
  %v6252 = vld [vmem:[#allocation3 + $0xe] sm:$0x3]
  %v6261 = vcombine.low %v6245, %v6246
  %v6262 = vcombine.low %v6247, %v6248
  %v6264 = vunpack.c.l.s4 1983009808
  %v6265 = vunpack.c.0.s8 %v6264
  %v6266 = vlaneseq
  %v6267 = vshrl.u32 %v6266, 7
  %v6268 = vsub.s32 %v6265, %v6267
  %v6269 = vrot.slane %v6261, %v6268
  %v6271 = vunpack.c.l.s4 1983009808
  %v6272 = vunpack.c.0.s8 %v6271
  %v6273 = vlaneseq
  %v6274 = vshrl.u32 %v6273, 7
  %v6275 = vsub.s32 %v6272, %v6274
  %v6276 = vrot.slane %v6262, %v6275
  %v6277 = vcombine.low %v6269, %v6276
  %v6278 = vcombine.low %v6249, %v6250
  %v6279 = vcombine.low %v6251, %v6252
  %v6281 = vunpack.c.l.s4 1983009808
  %v6282 = vunpack.c.0.s8 %v6281
  %v6283 = vlaneseq
  %v6284 = vshrl.u32 %v6283, 7
  %v6285 = vsub.s32 %v6282, %v6284
  %v6286 = vrot.slane %v6278, %v6285
  %v6288 = vunpack.c.l.s4 1983009808
  %v6289 = vunpack.c.0.s8 %v6288
  %v6290 = vlaneseq
  %v6291 = vshrl.u32 %v6290, 7
  %v6292 = vsub.s32 %v6289, %v6291
  %v6293 = vrot.slane %v6279, %v6292
  %v6294 = vcombine.low %v6286, %v6293
  %v6295 = vsel %vm90, %v6277, 0
  %v6297 = vsel %vm90, %v6294, 0
  %6299 = vmatprep.subr.mxu0 0.0
  %6300 = vmatpush1.msra.mxu0 %v33
  %6301 = vmatprep.subr.mxu0 0.0
  %6302 = vmatpush1.msra.mxu0 %v34
  %6303 = vmatprep.subr.mxu0 0.0
  %6304 = vmatpush1.msra.mxu0 %v35
  %6305 = vmatprep.subr.mxu0 0.0
  %6306 = vmatpush1.msra.mxu0 %v36
  %6307 = vmatprep.subr.mxu0 0.0
  %6308 = vmatpush1.msra.mxu0 0.0
  %6309 = vmatprep.subr.mxu0 0.0
  %6310 = vmatpush1.msra.mxu0 0.0
  %6311 = vmatprep.subr.mxu0 0.0
  %6312 = vmatpush1.msra.mxu0 0.0
  %6313 = vmatprep.subr.mxu0 0.0
  %6314 = vmatpush1.msra.mxu0 0.0
  %6315 = vmatprep.subr.mxu0 0.0
  %6316 = vmatpush1.msra.mxu0 0.0
  %6317 = vmatprep.subr.mxu0 0.0
  %6318 = vmatpush1.msra.mxu0 0.0
  %6319 = vmatprep.subr.mxu0 0.0
  %6320 = vmatpush1.msra.mxu0 0.0
  %6321 = vmatprep.subr.mxu0 0.0
  %6322 = vmatpush1.msra.mxu0 0.0
  %6323 = vmatprep.subr.mxu0 0.0
  %6324 = vmatpush1.msra.mxu0 0.0
  %6325 = vmatprep.subr.mxu0 0.0
  %6326 = vmatpush1.msra.mxu0 0.0
  %6327 = vmatprep.subr.mxu0 0.0
  %6328 = vmatpush1.msra.mxu0 0.0
  %6329 = vmatprep.subr.mxu0 0.0
  %6330 = vmatpush1.msra.mxu0 0.0
  %6331 = vmatprep.subr.mxu0 0.0
  %6332 = vmatpush1.msra.mxu0 0.0
  %6333 = vmatprep.subr.mxu0 0.0
  %6334 = vmatpush1.msra.mxu0 0.0
  %6335 = vmatprep.subr.mxu0 0.0
  %6336 = vmatpush1.msra.mxu0 0.0
  %6337 = vmatprep.subr.mxu0 0.0
  %6338 = vmatpush1.msra.mxu0 0.0
  %6339 = vmatprep.subr.mxu0 0.0
  %6340 = vmatpush1.msra.mxu0 0.0
  %6341 = vmatprep.subr.mxu0 0.0
  %6342 = vmatpush1.msra.mxu0 0.0
  %6343 = vmatprep.subr.mxu0 0.0
  %6344 = vmatpush1.msra.mxu0 0.0
  %6345 = vmatprep.subr.mxu0 0.0
  %6346 = vmatpush1.msra.mxu0 0.0
  %6347 = vmatprep.subr.mxu0 0.0
  %6348 = vmatpush1.msra.mxu0 0.0
  %6349 = vmatprep.subr.mxu0 0.0
  %6350 = vmatpush1.msra.mxu0 0.0
  %6351 = vmatprep.subr.mxu0 0.0
  %6352 = vmatpush1.msra.mxu0 0.0
  %6353 = vmatprep.subr.mxu0 0.0
  %6354 = vmatpush1.msra.mxu0 0.0
  %6355 = vmatprep.subr.mxu0 0.0
  %6356 = vmatpush1.msra.mxu0 0.0
  %6357 = vmatprep.subr.mxu0 0.0
  %6358 = vmatpush1.msra.mxu0 0.0
  %6359 = vmatprep.subr.mxu0 0.0
  %6360 = vmatpush1.msra.mxu0 0.0
  %6361 = vmatprep.subr.mxu0 0.0
  %6362 = vmatpush1.msra.mxu0 0.0
  %6363 = vmatprep.mubr.f32.mxu0 0.0
  %6364 = vmatmul.mubr.f32.gmra.mrb[0].mxu0 %v6295
  %v6365 = vpop.f32.mrb[0].mxu0
  %v6366 = vadd.f32 0.0, %v6365
  %v6367 = vpop.f32.mrb[0].mxu0
  %6368 = vmatprep.mubr.f32.mxu0 0.0
  %6369 = vmatmul.mubr.f32.gmra.mrb[0].mxu0 %v6297
  %v6370 = vpop.f32.mrb[0].mxu0
  %v6371 = vadd.f32 0.0, %v6370
  %v6372 = vpop.f32.mrb[0].mxu0
  %6373 = vdwg.mxu0
  %v6376 = vcombine.high %v6366, %v6366
  %v6378 = vunpack.c.l.s4 1983009808
  %v6379 = vunpack.c.0.s8 %v6378
  %v6380 = vlaneseq
  %v6381 = vshrl.u32 %v6380, 7
  %v6382 = vsub.s32 %v6379, %v6381
  %v6383 = vrot.slane %v6366, %v6382
  %v6385 = vunpack.c.l.s4 1983009808
  %v6386 = vunpack.c.0.s8 %v6385
  %v6387 = vlaneseq
  %v6388 = vshrl.u32 %v6387, 7
  %v6389 = vsub.s32 %v6386, %v6388
  %v6390 = vrot.slane %v6376, %v6389
  %v6391 = vcombine.high %v6383, %v6383
  %v6392 = vcombine.high %v6390, %v6390
  %v6393 = vcombine.high %v6371, %v6371
  %v6395 = vunpack.c.l.s4 1983009808
  %v6396 = vunpack.c.0.s8 %v6395
  %v6397 = vlaneseq
  %v6398 = vshrl.u32 %v6397, 7
  %v6399 = vsub.s32 %v6396, %v6398
  %v6400 = vrot.slane %v6371, %v6399
  %v6402 = vunpack.c.l.s4 1983009808
  %v6403 = vunpack.c.0.s8 %v6402
  %v6404 = vlaneseq
  %v6405 = vshrl.u32 %v6404, 7
  %v6406 = vsub.s32 %v6403, %v6405
  %v6407 = vrot.slane %v6393, %v6406
  %v6408 = vcombine.high %v6400, %v6400
  %v6409 = vcombine.high %v6407, %v6407
  %v6418 = vadd.f32 %v186, %v6383
  %v6419 = vadd.f32 %v188, %v6391
  %v6420 = vadd.f32 %v196, %v6390
  %v6421 = vadd.f32 %v204, %v6392
  %v6422 = vadd.f32 %v203, %v6400
  %v6423 = vadd.f32 %v205, %v6408
  %v6424 = vadd.f32 %v46, %v6407
  %v6425 = vadd.f32 %v46, %v6409
  %6426 = vmatprep.subr.mxu0 0.0
  %6427 = vmatpush1.msra.mxu0 %v219
  %6428 = vmatprep.subr.mxu0 0.0
  %6429 = vmatpush1.msra.mxu0 %v221
  %6430 = vmatprep.subr.mxu0 0.0
  %6431 = vmatpush1.msra.mxu0 %v223
  %6432 = vmatprep.subr.mxu0 0.0
  %6433 = vmatpush1.msra.mxu0 %v225
  %6434 = vmatprep.subr.mxu0 0.0
  %6435 = vmatpush1.msra.mxu0 0.0
  %6436 = vmatprep.subr.mxu0 0.0
  %6437 = vmatpush1.msra.mxu0 0.0
  %6438 = vmatprep.subr.mxu0 0.0
  %6439 = vmatpush1.msra.mxu0 0.0
  %6440 = vmatprep.subr.mxu0 0.0
  %6441 = vmatpush1.msra.mxu0 0.0
  %6442 = vmatprep.subr.mxu0 0.0
  %6443 = vmatpush1.msra.mxu0 0.0
  %6444 = vmatprep.subr.mxu0 0.0
  %6445 = vmatpush1.msra.mxu0 0.0
  %6446 = vmatprep.subr.mxu0 0.0
  %6447 = vmatpush1.msra.mxu0 0.0
  %6448 = vmatprep.subr.mxu0 0.0
  %6449 = vmatpush1.msra.mxu0 0.0
  %6450 = vmatprep.subr.mxu0 0.0
  %6451 = vmatpush1.msra.mxu0 0.0
  %6452 = vmatprep.subr.mxu0 0.0
  %6453 = vmatpush1.msra.mxu0 0.0
  %6454 = vmatprep.subr.mxu0 0.0
  %6455 = vmatpush1.msra.mxu0 0.0
  %6456 = vmatprep.subr.mxu0 0.0
  %6457 = vmatpush1.msra.mxu0 0.0
  %6458 = vmatprep.subr.mxu0 0.0
  %6459 = vmatpush1.msra.mxu0 0.0
  %6460 = vmatprep.subr.mxu0 0.0
  %6461 = vmatpush1.msra.mxu0 0.0
  %6462 = vmatprep.subr.mxu0 0.0
  %6463 = vmatpush1.msra.mxu0 0.0
  %6464 = vmatprep.subr.mxu0 0.0
  %6465 = vmatpush1.msra.mxu0 0.0
  %6466 = vmatprep.subr.mxu0 0.0
  %6467 = vmatpush1.msra.mxu0 0.0
  %6468 = vmatprep.subr.mxu0 0.0
  %6469 = vmatpush1.msra.mxu0 0.0
  %6470 = vmatprep.subr.mxu0 0.0
  %6471 = vmatpush1.msra.mxu0 0.0
  %6472 = vmatprep.subr.mxu0 0.0
  %6473 = vmatpush1.msra.mxu0 0.0
  %6474 = vmatprep.subr.mxu0 0.0
  %6475 = vmatpush1.msra.mxu0 0.0
  %6476 = vmatprep.subr.mxu0 0.0
  %6477 = vmatpush1.msra.mxu0 0.0
  %6478 = vmatprep.subr.mxu0 0.0
  %6479 = vmatpush1.msra.mxu0 0.0
  %6480 = vmatprep.subr.mxu0 0.0
  %6481 = vmatpush1.msra.mxu0 0.0
  %6482 = vmatprep.subr.mxu0 0.0
  %6483 = vmatpush1.msra.mxu0 0.0
  %6484 = vmatprep.subr.mxu0 0.0
  %6485 = vmatpush1.msra.mxu0 0.0
  %6486 = vmatprep.subr.mxu0 0.0
  %6487 = vmatpush1.msra.mxu0 0.0
  %6488 = vmatprep.subr.mxu0 0.0
  %6489 = vmatpush1.msra.mxu0 0.0
  %6490 = vmatprep.mubr.f32.mxu0 0.0
  %6491 = vmatmul.mubr.f32.gmra.mrb[0].mxu0 %v6295
  %v6492 = vpop.f32.mrb[0].mxu0
  %v6493 = vadd.f32 0.0, %v6492
  %v6494 = vpop.f32.mrb[0].mxu0
  %6495 = vmatprep.mubr.f32.mxu0 0.0
  %6496 = vmatmul.mubr.f32.gmra.mrb[0].mxu0 %v6297
  %v6497 = vpop.f32.mrb[0].mxu0
  %v6498 = vadd.f32 0.0, %v6497
  %v6499 = vpop.f32.mrb[0].mxu0
  %6500 = vdwg.mxu0
  %v6503 = vcombine.high %v6493, %v6493
  %v6505 = vunpack.c.l.s4 1983009808
  %v6506 = vunpack.c.0.s8 %v6505
  %v6507 = vlaneseq
  %v6508 = vshrl.u32 %v6507, 7
  %v6509 = vsub.s32 %v6506, %v6508
  %v6510 = vrot.slane %v6493, %v6509
  %v6512 = vunpack.c.l.s4 1983009808
  %v6513 = vunpack.c.0.s8 %v6512
  %v6514 = vlaneseq
  %v6515 = vshrl.u32 %v6514, 7
  %v6516 = vsub.s32 %v6513, %v6515
  %v6517 = vrot.slane %v6503, %v6516
  %v6518 = vcombine.high %v6510, %v6510
  %v6519 = vcombine.high %v6517, %v6517
  %v6520 = vcombine.high %v6498, %v6498
  %v6522 = vunpack.c.l.s4 1983009808
  %v6523 = vunpack.c.0.s8 %v6522
  %v6524 = vlaneseq
  %v6525 = vshrl.u32 %v6524, 7
  %v6526 = vsub.s32 %v6523, %v6525
  %v6527 = vrot.slane %v6498, %v6526
  %v6529 = vunpack.c.l.s4 1983009808
  %v6530 = vunpack.c.0.s8 %v6529
  %v6531 = vlaneseq
  %v6532 = vshrl.u32 %v6531, 7
  %v6533 = vsub.s32 %v6530, %v6532
  %v6534 = vrot.slane %v6520, %v6533
  %v6535 = vcombine.high %v6527, %v6527
  %v6536 = vcombine.high %v6534, %v6534
  %v6545 = vadd.f32 %v324, %v6510
  %v6546 = vadd.f32 %v326, %v6518
  %v6547 = vadd.f32 %v334, %v6517
  %v6548 = vadd.f32 %v342, %v6519
  %v6549 = vadd.f32 %v341, %v6527
  %v6550 = vadd.f32 %v343, %v6535
  %v6551 = vadd.f32 %v360, %v6534
  %v6552 = vadd.f32 %v360, %v6536
  %6553 = vmatprep.subr.mxu0 0.0
  %6554 = vmatpush1.msra.mxu0 %v363
  %6555 = vmatprep.subr.mxu0 0.0
  %6556 = vmatpush1.msra.mxu0 %v365
  %6557 = vmatprep.subr.mxu0 0.0
  %6558 = vmatpush1.msra.mxu0 %v367
  %6559 = vmatprep.subr.mxu0 0.0
  %6560 = vmatpush1.msra.mxu0 %v369
  %6561 = vmatprep.subr.mxu0 0.0
  %6562 = vmatpush1.msra.mxu0 0.0
  %6563 = vmatprep.subr.mxu0 0.0
  %6564 = vmatpush1.msra.mxu0 0.0
  %6565 = vmatprep.subr.mxu0 0.0
  %6566 = vmatpush1.msra.mxu0 0.0
  %6567 = vmatprep.subr.mxu0 0.0
  %6568 = vmatpush1.msra.mxu0 0.0
  %6569 = vmatprep.subr.mxu0 0.0
  %6570 = vmatpush1.msra.mxu0 0.0
  %6571 = vmatprep.subr.mxu0 0.0
  %6572 = vmatpush1.msra.mxu0 0.0
  %6573 = vmatprep.subr.mxu0 0.0
  %6574 = vmatpush1.msra.mxu0 0.0
  %6575 = vmatprep.subr.mxu0 0.0
  %6576 = vmatpush1.msra.mxu0 0.0
  %6577 = vmatprep.subr.mxu0 0.0
  %6578 = vmatpush1.msra.mxu0 0.0
  %6579 = vmatprep.subr.mxu0 0.0
  %6580 = vmatpush1.msra.mxu0 0.0
  %6581 = vmatprep.subr.mxu0 0.0
  %6582 = vmatpush1.msra.mxu0 0.0
  %6583 = vmatprep.subr.mxu0 0.0
  %6584 = vmatpush1.msra.mxu0 0.0
  %6585 = vmatprep.subr.mxu0 0.0
  %6586 = vmatpush1.msra.mxu0 0.0
  %6587 = vmatprep.subr.mxu0 0.0
  %6588 = vmatpush1.msra.mxu0 0.0
  %6589 = vmatprep.subr.mxu0 0.0
  %6590 = vmatpush1.msra.mxu0 0.0
  %6591 = vmatprep.subr.mxu0 0.0
  %6592 = vmatpush1.msra.mxu0 0.0
  %6593 = vmatprep.subr.mxu0 0.0
  %6594 = vmatpush1.msra.mxu0 0.0
  %6595 = vmatprep.subr.mxu0 0.0
  %6596 = vmatpush1.msra.mxu0 0.0
  %6597 = vmatprep.subr.mxu0 0.0
  %6598 = vmatpush1.msra.mxu0 0.0
  %6599 = vmatprep.subr.mxu0 0.0
  %6600 = vmatpush1.msra.mxu0 0.0
  %6601 = vmatprep.subr.mxu0 0.0
  %6602 = vmatpush1.msra.mxu0 0.0
  %6603 = vmatprep.subr.mxu0 0.0
  %6604 = vmatpush1.msra.mxu0 0.0
  %6605 = vmatprep.subr.mxu0 0.0
  %6606 = vmatpush1.msra.mxu0 0.0
  %6607 = vmatprep.subr.mxu0 0.0
  %6608 = vmatpush1.msra.mxu0 0.0
  %6609 = vmatprep.subr.mxu0 0.0
  %6610 = vmatpush1.msra.mxu0 0.0
  %6611 = vmatprep.subr.mxu0 0.0
  %6612 = vmatpush1.msra.mxu0 0.0
  %6613 = vmatprep.subr.mxu0 0.0
  %6614 = vmatpush1.msra.mxu0 0.0
  %6615 = vmatprep.subr.mxu0 0.0
  %6616 = vmatpush1.msra.mxu0 0.0
  %6617 = vmatprep.mubr.f32.mxu0 0.0
  %6618 = vmatmul.mubr.f32.gmra.mrb[0].mxu0 %v6295
  %v6619 = vpop.f32.mrb[0].mxu0
  %v6620 = vadd.f32 0.0, %v6619
  %v6621 = vpop.f32.mrb[0].mxu0
  %6622 = vmatprep.mubr.f32.mxu0 0.0
  %6623 = vmatmul.mubr.f32.gmra.mrb[0].mxu0 %v6297
  %v6624 = vpop.f32.mrb[0].mxu0
  %v6625 = vadd.f32 0.0, %v6624
  %v6626 = vpop.f32.mrb[0].mxu0
  %6627 = vdwg.mxu0
  %v6630 = vcombine.high %v6620, %v6620
  %v6632 = vunpack.c.l.s4 1983009808
  %v6633 = vunpack.c.0.s8 %v6632
  %v6634 = vlaneseq
  %v6635 = vshrl.u32 %v6634, 7
  %v6636 = vsub.s32 %v6633, %v6635
  %v6637 = vrot.slane %v6620, %v6636
  %v6639 = vunpack.c.l.s4 1983009808
  %v6640 = vunpack.c.0.s8 %v6639
  %v6641 = vlaneseq
  %v6642 = vshrl.u32 %v6641, 7
  %v6643 = vsub.s32 %v6640, %v6642
  %v6644 = vrot.slane %v6630, %v6643
  %v6645 = vcombine.high %v6637, %v6637
  %v6646 = vcombine.high %v6644, %v6644
  %v6647 = vcombine.high %v6625, %v6625
  %v6649 = vunpack.c.l.s4 1983009808
  %v6650 = vunpack.c.0.s8 %v6649
  %v6651 = vlaneseq
  %v6652 = vshrl.u32 %v6651, 7
  %v6653 = vsub.s32 %v6650, %v6652
  %v6654 = vrot.slane %v6625, %v6653
  %v6656 = vunpack.c.l.s4 1983009808
  %v6657 = vunpack.c.0.s8 %v6656
  %v6658 = vlaneseq
  %v6659 = vshrl.u32 %v6658, 7
  %v6660 = vsub.s32 %v6657, %v6659
  %v6661 = vrot.slane %v6647, %v6660
  %v6662 = vcombine.high %v6654, %v6654
  %v6663 = vcombine.high %v6661, %v6661
  %v6672 = vadd.f32 %v468, %v6637
  %v6673 = vadd.f32 %v470, %v6645
  %v6674 = vadd.f32 %v478, %v6644
  %v6675 = vadd.f32 %v486, %v6646
  %v6676 = vadd.f32 %v485, %v6654
  %v6677 = vadd.f32 %v487, %v6662
  %v6678 = vadd.f32 %v497, %v6661
  %v6679 = vadd.f32 %v497, %v6663
  %6680 = vmatprep.subr.mxu0 0.0
  %6681 = vmatpush1.msra.mxu0 %v500
  %6682 = vmatprep.subr.mxu0 0.0
  %6683 = vmatpush1.msra.mxu0 %v502
  %6684 = vmatprep.subr.mxu0 0.0
  %6685 = vmatpush1.msra.mxu0 %v504
  %6686 = vmatprep.subr.mxu0 0.0
  %6687 = vmatpush1.msra.mxu0 %v506
  %6688 = vmatprep.subr.mxu0 0.0
  %6689 = vmatpush1.msra.mxu0 0.0
  %6690 = vmatprep.subr.mxu0 0.0
  %6691 = vmatpush1.msra.mxu0 0.0
  %6692 = vmatprep.subr.mxu0 0.0
  %6693 = vmatpush1.msra.mxu0 0.0
  %6694 = vmatprep.subr.mxu0 0.0
  %6695 = vmatpush1.msra.mxu0 0.0
  %6696 = vmatprep.subr.mxu0 0.0
  %6697 = vmatpush1.msra.mxu0 0.0
  %6698 = vmatprep.subr.mxu0 0.0
  %6699 = vmatpush1.msra.mxu0 0.0
  %6700 = vmatprep.subr.mxu0 0.0
  %6701 = vmatpush1.msra.mxu0 0.0
  %6702 = vmatprep.subr.mxu0 0.0
  %6703 = vmatpush1.msra.mxu0 0.0
  %6704 = vmatprep.subr.mxu0 0.0
  %6705 = vmatpush1.msra.mxu0 0.0
  %6706 = vmatprep.subr.mxu0 0.0
  %6707 = vmatpush1.msra.mxu0 0.0
  %6708 = vmatprep.subr.mxu0 0.0
  %6709 = vmatpush1.msra.mxu0 0.0
  %6710 = vmatprep.subr.mxu0 0.0
  %6711 = vmatpush1.msra.mxu0 0.0
  %6712 = vmatprep.subr.mxu0 0.0
  %6713 = vmatpush1.msra.mxu0 0.0
  %6714 = vmatprep.subr.mxu0 0.0
  %6715 = vmatpush1.msra.mxu0 0.0
  %6716 = vmatprep.subr.mxu0 0.0
  %6717 = vmatpush1.msra.mxu0 0.0
  %6718 = vmatprep.subr.mxu0 0.0
  %6719 = vmatpush1.msra.mxu0 0.0
  %6720 = vmatprep.subr.mxu0 0.0
  %6721 = vmatpush1.msra.mxu0 0.0
  %6722 = vmatprep.subr.mxu0 0.0
  %6723 = vmatpush1.msra.mxu0 0.0
  %6724 = vmatprep.subr.mxu0 0.0
  %6725 = vmatpush1.msra.mxu0 0.0
  %6726 = vmatprep.subr.mxu0 0.0
  %6727 = vmatpush1.msra.mxu0 0.0
  %6728 = vmatprep.subr.mxu0 0.0
  %6729 = vmatpush1.msra.mxu0 0.0
  %6730 = vmatprep.subr.mxu0 0.0
  %6731 = vmatpush1.msra.mxu0 0.0
  %6732 = vmatprep.subr.mxu0 0.0
  %6733 = vmatpush1.msra.mxu0 0.0
  %6734 = vmatprep.subr.mxu0 0.0
  %6735 = vmatpush1.msra.mxu0 0.0
  %6736 = vmatprep.subr.mxu0 0.0
  %6737 = vmatpush1.msra.mxu0 0.0
  %6738 = vmatprep.subr.mxu0 0.0
  %6739 = vmatpush1.msra.mxu0 0.0
  %6740 = vmatprep.subr.mxu0 0.0
  %6741 = vmatpush1.msra.mxu0 0.0
  %6742 = vmatprep.subr.mxu0 0.0
  %6743 = vmatpush1.msra.mxu0 0.0
  %6744 = vmatprep.mubr.f32.mxu0 0.0
  %6745 = vmatmul.mubr.f32.gmra.mrb[0].mxu0 %v6295
  %v6746 = vpop.f32.mrb[0].mxu0
  %v6747 = vadd.f32 0.0, %v6746
  %v6748 = vpop.f32.mrb[0].mxu0
  %6749 = vmatprep.mubr.f32.mxu0 0.0
  %6750 = vmatmul.mubr.f32.gmra.mrb[0].mxu0 %v6297
  %v6751 = vpop.f32.mrb[0].mxu0
  %v6752 = vadd.f32 0.0, %v6751
  %v6753 = vpop.f32.mrb[0].mxu0
  %6754 = vdwg.mxu0
  %v6757 = vcombine.high %v6747, %v6747
  %v6759 = vunpack.c.l.s4 1983009808
  %v6760 = vunpack.c.0.s8 %v6759
  %v6761 = vlaneseq
  %v6762 = vshrl.u32 %v6761, 7
  %v6763 = vsub.s32 %v6760, %v6762
  %v6764 = vrot.slane %v6747, %v6763
  %v6766 = vunpack.c.l.s4 1983009808
  %v6767 = vunpack.c.0.s8 %v6766
  %v6768 = vlaneseq
  %v6769 = vshrl.u32 %v6768, 7
  %v6770 = vsub.s32 %v6767, %v6769
  %v6771 = vrot.slane %v6757, %v6770
  %v6772 = vcombine.high %v6764, %v6764
  %v6773 = vcombine.high %v6771, %v6771
  %v6774 = vcombine.high %v6752, %v6752
  %v6776 = vunpack.c.l.s4 1983009808
  %v6777 = vunpack.c.0.s8 %v6776
  %v6778 = vlaneseq
  %v6779 = vshrl.u32 %v6778, 7
  %v6780 = vsub.s32 %v6777, %v6779
  %v6781 = vrot.slane %v6752, %v6780
  %v6783 = vunpack.c.l.s4 1983009808
  %v6784 = vunpack.c.0.s8 %v6783
  %v6785 = vlaneseq
  %v6786 = vshrl.u32 %v6785, 7
  %v6787 = vsub.s32 %v6784, %v6786
  %v6788 = vrot.slane %v6774, %v6787
  %v6789 = vcombine.high %v6781, %v6781
  %v6790 = vcombine.high %v6788, %v6788
  %v6799 = vadd.f32 %v605, %v6764
  %v6800 = vadd.f32 %v607, %v6772
  %v6801 = vadd.f32 %v615, %v6771
  %v6802 = vadd.f32 %v623, %v6773
  %v6803 = vadd.f32 %v622, %v6781
  %v6804 = vadd.f32 %v624, %v6789
  %v6805 = vadd.f32 %v634, %v6788
  %v6806 = vadd.f32 %v634, %v6790
  %v6808 = vsel %vm90, %v6242, 0
  %6810 = vmatprep.subr.mxu0 0.0
  %6811 = vmatpush1.msra.mxu0 %v37
  %6812 = vmatprep.subr.mxu0 0.0
  %6813 = vmatpush1.msra.mxu0 %v38
  %6814 = vmatprep.subr.mxu0 0.0
  %6815 = vmatpush1.msra.mxu0 %v39
  %6816 = vmatprep.subr.mxu0 0.0
  %6817 = vmatpush1.msra.mxu0 %v40
  %6818 = vmatprep.subr.mxu0 0.0
  %6819 = vmatpush1.msra.mxu0 0.0
  %6820 = vmatprep.subr.mxu0 0.0
  %6821 = vmatpush1.msra.mxu0 0.0
  %6822 = vmatprep.subr.mxu0 0.0
  %6823 = vmatpush1.msra.mxu0 0.0
  %6824 = vmatprep.subr.mxu0 0.0
  %6825 = vmatpush1.msra.mxu0 0.0
  %6826 = vmatprep.subr.mxu0 0.0
  %6827 = vmatpush1.msra.mxu0 0.0
  %6828 = vmatprep.subr.mxu0 0.0
  %6829 = vmatpush1.msra.mxu0 0.0
  %6830 = vmatprep.subr.mxu0 0.0
  %6831 = vmatpush1.msra.mxu0 0.0
  %6832 = vmatprep.subr.mxu0 0.0
  %6833 = vmatpush1.msra.mxu0 0.0
  %6834 = vmatprep.subr.mxu0 0.0
  %6835 = vmatpush1.msra.mxu0 0.0
  %6836 = vmatprep.subr.mxu0 0.0
  %6837 = vmatpush1.msra.mxu0 0.0
  %6838 = vmatprep.subr.mxu0 0.0
  %6839 = vmatpush1.msra.mxu0 0.0
  %6840 = vmatprep.subr.mxu0 0.0
  %6841 = vmatpush1.msra.mxu0 0.0
  %6842 = vmatprep.subr.mxu0 0.0
  %6843 = vmatpush1.msra.mxu0 0.0
  %6844 = vmatprep.subr.mxu0 0.0
  %6845 = vmatpush1.msra.mxu0 0.0
  %6846 = vmatprep.subr.mxu0 0.0
  %6847 = vmatpush1.msra.mxu0 0.0
  %6848 = vmatprep.subr.mxu0 0.0
  %6849 = vmatpush1.msra.mxu0 0.0
  %6850 = vmatprep.subr.mxu0 0.0
  %6851 = vmatpush1.msra.mxu0 0.0
  %6852 = vmatprep.subr.mxu0 0.0
  %6853 = vmatpush1.msra.mxu0 0.0
  %6854 = vmatprep.subr.mxu0 0.0
  %6855 = vmatpush1.msra.mxu0 0.0
  %6856 = vmatprep.subr.mxu0 0.0
  %6857 = vmatpush1.msra.mxu0 0.0
  %6858 = vmatprep.subr.mxu0 0.0
  %6859 = vmatpush1.msra.mxu0 0.0
  %6860 = vmatprep.subr.mxu0 0.0
  %6861 = vmatpush1.msra.mxu0 0.0
  %6862 = vmatprep.subr.mxu0 0.0
  %6863 = vmatpush1.msra.mxu0 0.0
  %6864 = vmatprep.subr.mxu0 0.0
  %6865 = vmatpush1.msra.mxu0 0.0
  %6866 = vmatprep.subr.mxu0 0.0
  %6867 = vmatpush1.msra.mxu0 0.0
  %6868 = vmatprep.subr.mxu0 0.0
  %6869 = vmatpush1.msra.mxu0 0.0
  %6870 = vmatprep.subr.mxu0 0.0
  %6871 = vmatpush1.msra.mxu0 0.0
  %6872 = vmatprep.subr.mxu0 0.0
  %6873 = vmatpush1.msra.mxu0 0.0
  %6874 = vmatprep.mubr.f32.mxu0 0.0
  %6875 = vmatmul.mubr.f32.gmra.mrb[0].mxu0 %v6808
  %v6876 = vpop.f32.mrb[0].mxu0
  %v6877 = vadd.f32 0.0, %v6876
  %v6878 = vpop.f32.mrb[0].mxu0
  %6879 = vdwg.mxu0
  %v6880 = vadd.f32 %v6418, %v6877
  %6881 = vmatprep.subr.mxu0 0.0
  %6882 = vmatpush1.msra.mxu0 %v715
  %6883 = vmatprep.subr.mxu0 0.0
  %6884 = vmatpush1.msra.mxu0 %v717
  %6885 = vmatprep.subr.mxu0 0.0
  %6886 = vmatpush1.msra.mxu0 %v719
  %6887 = vmatprep.subr.mxu0 0.0
  %6888 = vmatpush1.msra.mxu0 %v721
  %6889 = vmatprep.subr.mxu0 0.0
  %6890 = vmatpush1.msra.mxu0 0.0
  %6891 = vmatprep.subr.mxu0 0.0
  %6892 = vmatpush1.msra.mxu0 0.0
  %6893 = vmatprep.subr.mxu0 0.0
  %6894 = vmatpush1.msra.mxu0 0.0
  %6895 = vmatprep.subr.mxu0 0.0
  %6896 = vmatpush1.msra.mxu0 0.0
  %6897 = vmatprep.subr.mxu0 0.0
  %6898 = vmatpush1.msra.mxu0 0.0
  %6899 = vmatprep.subr.mxu0 0.0
  %6900 = vmatpush1.msra.mxu0 0.0
  %6901 = vmatprep.subr.mxu0 0.0
  %6902 = vmatpush1.msra.mxu0 0.0
  %6903 = vmatprep.subr.mxu0 0.0
  %6904 = vmatpush1.msra.mxu0 0.0
  %6905 = vmatprep.subr.mxu0 0.0
  %6906 = vmatpush1.msra.mxu0 0.0
  %6907 = vmatprep.subr.mxu0 0.0
  %6908 = vmatpush1.msra.mxu0 0.0
  %6909 = vmatprep.subr.mxu0 0.0
  %6910 = vmatpush1.msra.mxu0 0.0
  %6911 = vmatprep.subr.mxu0 0.0
  %6912 = vmatpush1.msra.mxu0 0.0
  %6913 = vmatprep.subr.mxu0 0.0
  %6914 = vmatpush1.msra.mxu0 0.0
  %6915 = vmatprep.subr.mxu0 0.0
  %6916 = vmatpush1.msra.mxu0 0.0
  %6917 = vmatprep.subr.mxu0 0.0
  %6918 = vmatpush1.msra.mxu0 0.0
  %6919 = vmatprep.subr.mxu0 0.0
  %6920 = vmatpush1.msra.mxu0 0.0
  %6921 = vmatprep.subr.mxu0 0.0
  %6922 = vmatpush1.msra.mxu0 0.0
  %6923 = vmatprep.subr.mxu0 0.0
  %6924 = vmatpush1.msra.mxu0 0.0
  %6925 = vmatprep.subr.mxu0 0.0
  %6926 = vmatpush1.msra.mxu0 0.0
  %6927 = vmatprep.subr.mxu0 0.0
  %6928 = vmatpush1.msra.mxu0 0.0
  %6929 = vmatprep.subr.mxu0 0.0
  %6930 = vmatpush1.msra.mxu0 0.0
  %6931 = vmatprep.subr.mxu0 0.0
  %6932 = vmatpush1.msra.mxu0 0.0
  %6933 = vmatprep.subr.mxu0 0.0
  %6934 = vmatpush1.msra.mxu0 0.0
  %6935 = vmatprep.subr.mxu0 0.0
  %6936 = vmatpush1.msra.mxu0 0.0
  %6937 = vmatprep.subr.mxu0 0.0
  %6938 = vmatpush1.msra.mxu0 0.0
  %6939 = vmatprep.subr.mxu0 0.0
  %6940 = vmatpush1.msra.mxu0 0.0
  %6941 = vmatprep.subr.mxu0 0.0
  %6942 = vmatpush1.msra.mxu0 0.0
  %6943 = vmatprep.subr.mxu0 0.0
  %6944 = vmatpush1.msra.mxu0 0.0
  %6945 = vmatprep.mubr.f32.mxu0 0.0
  %6946 = vmatmul.mubr.f32.gmra.mrb[0].mxu0 %v6808
  %v6947 = vpop.f32.mrb[0].mxu0
  %v6948 = vadd.f32 0.0, %v6947
  %v6949 = vpop.f32.mrb[0].mxu0
  %6950 = vdwg.mxu0
  %v6951 = vadd.f32 %v6545, %v6948
  %6952 = vmatprep.subr.mxu0 0.0
  %6953 = vmatpush1.msra.mxu0 %v798
  %6954 = vmatprep.subr.mxu0 0.0
  %6955 = vmatpush1.msra.mxu0 %v800
  %6956 = vmatprep.subr.mxu0 0.0
  %6957 = vmatpush1.msra.mxu0 %v802
  %6958 = vmatprep.subr.mxu0 0.0
  %6959 = vmatpush1.msra.mxu0 %v804
  %6960 = vmatprep.subr.mxu0 0.0
  %6961 = vmatpush1.msra.mxu0 0.0
  %6962 = vmatprep.subr.mxu0 0.0
  %6963 = vmatpush1.msra.mxu0 0.0
  %6964 = vmatprep.subr.mxu0 0.0
  %6965 = vmatpush1.msra.mxu0 0.0
  %6966 = vmatprep.subr.mxu0 0.0
  %6967 = vmatpush1.msra.mxu0 0.0
  %6968 = vmatprep.subr.mxu0 0.0
  %6969 = vmatpush1.msra.mxu0 0.0
  %6970 = vmatprep.subr.mxu0 0.0
  %6971 = vmatpush1.msra.mxu0 0.0
  %6972 = vmatprep.subr.mxu0 0.0
  %6973 = vmatpush1.msra.mxu0 0.0
  %6974 = vmatprep.subr.mxu0 0.0
  %6975 = vmatpush1.msra.mxu0 0.0
  %6976 = vmatprep.subr.mxu0 0.0
  %6977 = vmatpush1.msra.mxu0 0.0
  %6978 = vmatprep.subr.mxu0 0.0
  %6979 = vmatpush1.msra.mxu0 0.0
  %6980 = vmatprep.subr.mxu0 0.0
  %6981 = vmatpush1.msra.mxu0 0.0
  %6982 = vmatprep.subr.mxu0 0.0
  %6983 = vmatpush1.msra.mxu0 0.0
  %6984 = vmatprep.subr.mxu0 0.0
  %6985 = vmatpush1.msra.mxu0 0.0
  %6986 = vmatprep.subr.mxu0 0.0
  %6987 = vmatpush1.msra.mxu0 0.0
  %6988 = vmatprep.subr.mxu0 0.0
  %6989 = vmatpush1.msra.mxu0 0.0
  %6990 = vmatprep.subr.mxu0 0.0
  %6991 = vmatpush1.msra.mxu0 0.0
  %6992 = vmatprep.subr.mxu0 0.0
  %6993 = vmatpush1.msra.mxu0 0.0
  %6994 = vmatprep.subr.mxu0 0.0
  %6995 = vmatpush1.msra.mxu0 0.0
  %6996 = vmatprep.subr.mxu0 0.0
  %6997 = vmatpush1.msra.mxu0 0.0
  %6998 = vmatprep.subr.mxu0 0.0
  %6999 = vmatpush1.msra.mxu0 0.0
  %7000 = vmatprep.subr.mxu0 0.0
  %7001 = vmatpush1.msra.mxu0 0.0
  %7002 = vmatprep.subr.mxu0 0.0
  %7003 = vmatpush1.msra.mxu0 0.0
  %7004 = vmatprep.subr.mxu0 0.0
  %7005 = vmatpush1.msra.mxu0 0.0
  %7006 = vmatprep.subr.mxu0 0.0
  %7007 = vmatpush1.msra.mxu0 0.0
  %7008 = vmatprep.subr.mxu0 0.0
  %7009 = vmatpush1.msra.mxu0 0.0
  %7010 = vmatprep.subr.mxu0 0.0
  %7011 = vmatpush1.msra.mxu0 0.0
  %7012 = vmatprep.subr.mxu0 0.0
  %7013 = vmatpush1.msra.mxu0 0.0
  %7014 = vmatprep.subr.mxu0 0.0
  %7015 = vmatpush1.msra.mxu0 0.0
  %7016 = vmatprep.mubr.f32.mxu0 0.0
  %7017 = vmatmul.mubr.f32.gmra.mrb[0].mxu0 %v6808
  %v7018 = vpop.f32.mrb[0].mxu0
  %v7019 = vadd.f32 0.0, %v7018
  %v7020 = vpop.f32.mrb[0].mxu0
  %7021 = vdwg.mxu0
  %v7022 = vadd.f32 %v6672, %v7019
  %7023 = vmatprep.subr.mxu0 0.0
  %7024 = vmatpush1.msra.mxu0 %v881
  %7025 = vmatprep.subr.mxu0 0.0
  %7026 = vmatpush1.msra.mxu0 %v883
  %7027 = vmatprep.subr.mxu0 0.0
  %7028 = vmatpush1.msra.mxu0 %v885
  %7029 = vmatprep.subr.mxu0 0.0
  %7030 = vmatpush1.msra.mxu0 %v887
  %7031 = vmatprep.subr.mxu0 0.0
  %7032 = vmatpush1.msra.mxu0 0.0
  %7033 = vmatprep.subr.mxu0 0.0
  %7034 = vmatpush1.msra.mxu0 0.0
  %7035 = vmatprep.subr.mxu0 0.0
  %7036 = vmatpush1.msra.mxu0 0.0
  %7037 = vmatprep.subr.mxu0 0.0
  %7038 = vmatpush1.msra.mxu0 0.0
  %7039 = vmatprep.subr.mxu0 0.0
  %7040 = vmatpush1.msra.mxu0 0.0
  %7041 = vmatprep.subr.mxu0 0.0
  %7042 = vmatpush1.msra.mxu0 0.0
  %7043 = vmatprep.subr.mxu0 0.0
  %7044 = vmatpush1.msra.mxu0 0.0
  %7045 = vmatprep.subr.mxu0 0.0
  %7046 = vmatpush1.msra.mxu0 0.0
  %7047 = vmatprep.subr.mxu0 0.0
  %7048 = vmatpush1.msra.mxu0 0.0
  %7049 = vmatprep.subr.mxu0 0.0
  %7050 = vmatpush1.msra.mxu0 0.0
  %7051 = vmatprep.subr.mxu0 0.0
  %7052 = vmatpush1.msra.mxu0 0.0
  %7053 = vmatprep.subr.mxu0 0.0
  %7054 = vmatpush1.msra.mxu0 0.0
  %7055 = vmatprep.subr.mxu0 0.0
  %7056 = vmatpush1.msra.mxu0 0.0
  %7057 = vmatprep.subr.mxu0 0.0
  %7058 = vmatpush1.msra.mxu0 0.0
  %7059 = vmatprep.subr.mxu0 0.0
  %7060 = vmatpush1.msra.mxu0 0.0
  %7061 = vmatprep.subr.mxu0 0.0
  %7062 = vmatpush1.msra.mxu0 0.0
  %7063 = vmatprep.subr.mxu0 0.0
  %7064 = vmatpush1.msra.mxu0 0.0
  %7065 = vmatprep.subr.mxu0 0.0
  %7066 = vmatpush1.msra.mxu0 0.0
  %7067 = vmatprep.subr.mxu0 0.0
  %7068 = vmatpush1.msra.mxu0 0.0
  %7069 = vmatprep.subr.mxu0 0.0
  %7070 = vmatpush1.msra.mxu0 0.0
  %7071 = vmatprep.subr.mxu0 0.0
  %7072 = vmatpush1.msra.mxu0 0.0
  %7073 = vmatprep.subr.mxu0 0.0
  %7074 = vmatpush1.msra.mxu0 0.0
  %7075 = vmatprep.subr.mxu0 0.0
  %7076 = vmatpush1.msra.mxu0 0.0
  %7077 = vmatprep.subr.mxu0 0.0
  %7078 = vmatpush1.msra.mxu0 0.0
  %7079 = vmatprep.subr.mxu0 0.0
  %7080 = vmatpush1.msra.mxu0 0.0
  %7081 = vmatprep.subr.mxu0 0.0
  %7082 = vmatpush1.msra.mxu0 0.0
  %7083 = vmatprep.subr.mxu0 0.0
  %7084 = vmatpush1.msra.mxu0 0.0
  %7085 = vmatprep.subr.mxu0 0.0
  %7086 = vmatpush1.msra.mxu0 0.0
  %7087 = vmatprep.mubr.f32.mxu0 0.0
  %7088 = vmatmul.mubr.f32.gmra.mrb[0].mxu0 %v6808
  %v7089 = vpop.f32.mrb[0].mxu0
  %v7090 = vadd.f32 0.0, %v7089
  %v7091 = vpop.f32.mrb[0].mxu0
  %7092 = vdwg.mxu0
  %v7093 = vadd.f32 %v6799, %v7090
  %v7094 = vxor.u32 %v6880, 2147483648
  %v7095 = vmul.f32 %v7094, 1.442695
  %v7096 = vpow.pop %v7095
  %v7097 = vadd.f32 %v7096, 1.0
  %v7098 = vrcp.pop %v7097
  %v7099 = vmul.f32 1.0, %v7098
  %v7100 = vxor.u32 %v6951, 2147483648
  %v7101 = vmul.f32 %v7100, 1.442695
  %v7102 = vpow.pop %v7101
  %v7103 = vadd.f32 %v7102, 1.0
  %v7104 = vrcp.pop %v7103
  %v7105 = vmul.f32 1.0, %v7104
  %v7106 = vtanh.pop %v7022
  %v7107 = vxor.u32 %v7093, 2147483648
  %v7108 = vmul.f32 %v7107, 1.442695
  %v7109 = vpow.pop %v7108
  %v7110 = vadd.f32 %v7109, 1.0
  %v7111 = vrcp.pop %v7110
  %v7112 = vmul.f32 1.0, %v7111
  %v7113 = vmul.f32 %v7105, %v6240
  %v7114 = vmul.f32 %v7099, %v7106
  %v7115 = vadd.f32 %v7113, %v7114
  %v7116 = vtanh.pop %v7115
  %v7117 = vmul.f32 %v7112, %v7116
  %7118 = vst.msk [vmem:[#allocation4] sm:$0x3] %vm987, %v7117
  %v7120 = vsel %vm90, %v7117, 0
  %7122 = vmatprep.subr.mxu0 0.0
  %7123 = vmatpush1.msra.mxu0 %v37
  %7124 = vmatprep.subr.mxu0 0.0
  %7125 = vmatpush1.msra.mxu0 %v38
  %7126 = vmatprep.subr.mxu0 0.0
  %7127 = vmatpush1.msra.mxu0 %v39
  %7128 = vmatprep.subr.mxu0 0.0
  %7129 = vmatpush1.msra.mxu0 %v40
  %7130 = vmatprep.subr.mxu0 0.0
  %7131 = vmatpush1.msra.mxu0 0.0
  %7132 = vmatprep.subr.mxu0 0.0
  %7133 = vmatpush1.msra.mxu0 0.0
  %7134 = vmatprep.subr.mxu0 0.0
  %7135 = vmatpush1.msra.mxu0 0.0
  %7136 = vmatprep.subr.mxu0 0.0
  %7137 = vmatpush1.msra.mxu0 0.0
  %7138 = vmatprep.subr.mxu0 0.0
  %7139 = vmatpush1.msra.mxu0 0.0
  %7140 = vmatprep.subr.mxu0 0.0
  %7141 = vmatpush1.msra.mxu0 0.0
  %7142 = vmatprep.subr.mxu0 0.0
  %7143 = vmatpush1.msra.mxu0 0.0
  %7144 = vmatprep.subr.mxu0 0.0
  %7145 = vmatpush1.msra.mxu0 0.0
  %7146 = vmatprep.subr.mxu0 0.0
  %7147 = vmatpush1.msra.mxu0 0.0
  %7148 = vmatprep.subr.mxu0 0.0
  %7149 = vmatpush1.msra.mxu0 0.0
  %7150 = vmatprep.subr.mxu0 0.0
  %7151 = vmatpush1.msra.mxu0 0.0
  %7152 = vmatprep.subr.mxu0 0.0
  %7153 = vmatpush1.msra.mxu0 0.0
  %7154 = vmatprep.subr.mxu0 0.0
  %7155 = vmatpush1.msra.mxu0 0.0
  %7156 = vmatprep.subr.mxu0 0.0
  %7157 = vmatpush1.msra.mxu0 0.0
  %7158 = vmatprep.subr.mxu0 0.0
  %7159 = vmatpush1.msra.mxu0 0.0
  %7160 = vmatprep.subr.mxu0 0.0
  %7161 = vmatpush1.msra.mxu0 0.0
  %7162 = vmatprep.subr.mxu0 0.0
  %7163 = vmatpush1.msra.mxu0 0.0
  %7164 = vmatprep.subr.mxu0 0.0
  %7165 = vmatpush1.msra.mxu0 0.0
  %7166 = vmatprep.subr.mxu0 0.0
  %7167 = vmatpush1.msra.mxu0 0.0
  %7168 = vmatprep.subr.mxu0 0.0
  %7169 = vmatpush1.msra.mxu0 0.0
  %7170 = vmatprep.subr.mxu0 0.0
  %7171 = vmatpush1.msra.mxu0 0.0
  %7172 = vmatprep.subr.mxu0 0.0
  %7173 = vmatpush1.msra.mxu0 0.0
  %7174 = vmatprep.subr.mxu0 0.0
  %7175 = vmatpush1.msra.mxu0 0.0
  %7176 = vmatprep.subr.mxu0 0.0
  %7177 = vmatpush1.msra.mxu0 0.0
  %7178 = vmatprep.subr.mxu0 0.0
  %7179 = vmatpush1.msra.mxu0 0.0
  %7180 = vmatprep.subr.mxu0 0.0
  %7181 = vmatpush1.msra.mxu0 0.0
  %7182 = vmatprep.subr.mxu0 0.0
  %7183 = vmatpush1.msra.mxu0 0.0
  %7184 = vmatprep.subr.mxu0 0.0
  %7185 = vmatpush1.msra.mxu0 0.0
  %7186 = vmatprep.mubr.f32.mxu0 0.0
  %7187 = vmatmul.mubr.f32.gmra.mrb[0].mxu0 %v7120
  %v7188 = vpop.f32.mrb[0].mxu0
  %v7189 = vadd.f32 0.0, %v7188
  %v7190 = vpop.f32.mrb[0].mxu0
  %7191 = vdwg.mxu0
  %v7192 = vadd.f32 %v6419, %v7189
  %7193 = vmatprep.subr.mxu0 0.0
  %7194 = vmatpush1.msra.mxu0 %v715
  %7195 = vmatprep.subr.mxu0 0.0
  %7196 = vmatpush1.msra.mxu0 %v717
  %7197 = vmatprep.subr.mxu0 0.0
  %7198 = vmatpush1.msra.mxu0 %v719
  %7199 = vmatprep.subr.mxu0 0.0
  %7200 = vmatpush1.msra.mxu0 %v721
  %7201 = vmatprep.subr.mxu0 0.0
  %7202 = vmatpush1.msra.mxu0 0.0
  %7203 = vmatprep.subr.mxu0 0.0
  %7204 = vmatpush1.msra.mxu0 0.0
  %7205 = vmatprep.subr.mxu0 0.0
  %7206 = vmatpush1.msra.mxu0 0.0
  %7207 = vmatprep.subr.mxu0 0.0
  %7208 = vmatpush1.msra.mxu0 0.0
  %7209 = vmatprep.subr.mxu0 0.0
  %7210 = vmatpush1.msra.mxu0 0.0
  %7211 = vmatprep.subr.mxu0 0.0
  %7212 = vmatpush1.msra.mxu0 0.0
  %7213 = vmatprep.subr.mxu0 0.0
  %7214 = vmatpush1.msra.mxu0 0.0
  %7215 = vmatprep.subr.mxu0 0.0
  %7216 = vmatpush1.msra.mxu0 0.0
  %7217 = vmatprep.subr.mxu0 0.0
  %7218 = vmatpush1.msra.mxu0 0.0
  %7219 = vmatprep.subr.mxu0 0.0
  %7220 = vmatpush1.msra.mxu0 0.0
  %7221 = vmatprep.subr.mxu0 0.0
  %7222 = vmatpush1.msra.mxu0 0.0
  %7223 = vmatprep.subr.mxu0 0.0
  %7224 = vmatpush1.msra.mxu0 0.0
  %7225 = vmatprep.subr.mxu0 0.0
  %7226 = vmatpush1.msra.mxu0 0.0
  %7227 = vmatprep.subr.mxu0 0.0
  %7228 = vmatpush1.msra.mxu0 0.0
  %7229 = vmatprep.subr.mxu0 0.0
  %7230 = vmatpush1.msra.mxu0 0.0
  %7231 = vmatprep.subr.mxu0 0.0
  %7232 = vmatpush1.msra.mxu0 0.0
  %7233 = vmatprep.subr.mxu0 0.0
  %7234 = vmatpush1.msra.mxu0 0.0
  %7235 = vmatprep.subr.mxu0 0.0
  %7236 = vmatpush1.msra.mxu0 0.0
  %7237 = vmatprep.subr.mxu0 0.0
  %7238 = vmatpush1.msra.mxu0 0.0
  %7239 = vmatprep.subr.mxu0 0.0
  %7240 = vmatpush1.msra.mxu0 0.0
  %7241 = vmatprep.subr.mxu0 0.0
  %7242 = vmatpush1.msra.mxu0 0.0
  %7243 = vmatprep.subr.mxu0 0.0
  %7244 = vmatpush1.msra.mxu0 0.0
  %7245 = vmatprep.subr.mxu0 0.0
  %7246 = vmatpush1.msra.mxu0 0.0
  %7247 = vmatprep.subr.mxu0 0.0
  %7248 = vmatpush1.msra.mxu0 0.0
  %7249 = vmatprep.subr.mxu0 0.0
  %7250 = vmatpush1.msra.mxu0 0.0
  %7251 = vmatprep.subr.mxu0 0.0
  %7252 = vmatpush1.msra.mxu0 0.0
  %7253 = vmatprep.subr.mxu0 0.0
  %7254 = vmatpush1.msra.mxu0 0.0
  %7255 = vmatprep.subr.mxu0 0.0
  %7256 = vmatpush1.msra.mxu0 0.0
  %7257 = vmatprep.mubr.f32.mxu0 0.0
  %7258 = vmatmul.mubr.f32.gmra.mrb[0].mxu0 %v7120
  %v7259 = vpop.f32.mrb[0].mxu0
  %v7260 = vadd.f32 0.0, %v7259
  %v7261 = vpop.f32.mrb[0].mxu0
  %7262 = vdwg.mxu0
  %v7263 = vadd.f32 %v6546, %v7260
  %7264 = vmatprep.subr.mxu0 0.0
  %7265 = vmatpush1.msra.mxu0 %v798
  %7266 = vmatprep.subr.mxu0 0.0
  %7267 = vmatpush1.msra.mxu0 %v800
  %7268 = vmatprep.subr.mxu0 0.0
  %7269 = vmatpush1.msra.mxu0 %v802
  %7270 = vmatprep.subr.mxu0 0.0
  %7271 = vmatpush1.msra.mxu0 %v804
  %7272 = vmatprep.subr.mxu0 0.0
  %7273 = vmatpush1.msra.mxu0 0.0
  %7274 = vmatprep.subr.mxu0 0.0
  %7275 = vmatpush1.msra.mxu0 0.0
  %7276 = vmatprep.subr.mxu0 0.0
  %7277 = vmatpush1.msra.mxu0 0.0
  %7278 = vmatprep.subr.mxu0 0.0
  %7279 = vmatpush1.msra.mxu0 0.0
  %7280 = vmatprep.subr.mxu0 0.0
  %7281 = vmatpush1.msra.mxu0 0.0
  %7282 = vmatprep.subr.mxu0 0.0
  %7283 = vmatpush1.msra.mxu0 0.0
  %7284 = vmatprep.subr.mxu0 0.0
  %7285 = vmatpush1.msra.mxu0 0.0
  %7286 = vmatprep.subr.mxu0 0.0
  %7287 = vmatpush1.msra.mxu0 0.0
  %7288 = vmatprep.subr.mxu0 0.0
  %7289 = vmatpush1.msra.mxu0 0.0
  %7290 = vmatprep.subr.mxu0 0.0
  %7291 = vmatpush1.msra.mxu0 0.0
  %7292 = vmatprep.subr.mxu0 0.0
  %7293 = vmatpush1.msra.mxu0 0.0
  %7294 = vmatprep.subr.mxu0 0.0
  %7295 = vmatpush1.msra.mxu0 0.0
  %7296 = vmatprep.subr.mxu0 0.0
  %7297 = vmatpush1.msra.mxu0 0.0
  %7298 = vmatprep.subr.mxu0 0.0
  %7299 = vmatpush1.msra.mxu0 0.0
  %7300 = vmatprep.subr.mxu0 0.0
  %7301 = vmatpush1.msra.mxu0 0.0
  %7302 = vmatprep.subr.mxu0 0.0
  %7303 = vmatpush1.msra.mxu0 0.0
  %7304 = vmatprep.subr.mxu0 0.0
  %7305 = vmatpush1.msra.mxu0 0.0
  %7306 = vmatprep.subr.mxu0 0.0
  %7307 = vmatpush1.msra.mxu0 0.0
  %7308 = vmatprep.subr.mxu0 0.0
  %7309 = vmatpush1.msra.mxu0 0.0
  %7310 = vmatprep.subr.mxu0 0.0
  %7311 = vmatpush1.msra.mxu0 0.0
  %7312 = vmatprep.subr.mxu0 0.0
  %7313 = vmatpush1.msra.mxu0 0.0
  %7314 = vmatprep.subr.mxu0 0.0
  %7315 = vmatpush1.msra.mxu0 0.0
  %7316 = vmatprep.subr.mxu0 0.0
  %7317 = vmatpush1.msra.mxu0 0.0
  %7318 = vmatprep.subr.mxu0 0.0
  %7319 = vmatpush1.msra.mxu0 0.0
  %7320 = vmatprep.subr.mxu0 0.0
  %7321 = vmatpush1.msra.mxu0 0.0
  %7322 = vmatprep.subr.mxu0 0.0
  %7323 = vmatpush1.msra.mxu0 0.0
  %7324 = vmatprep.subr.mxu0 0.0
  %7325 = vmatpush1.msra.mxu0 0.0
  %7326 = vmatprep.subr.mxu0 0.0
  %7327 = vmatpush1.msra.mxu0 0.0
  %7328 = vmatprep.mubr.f32.mxu0 0.0
  %7329 = vmatmul.mubr.f32.gmra.mrb[0].mxu0 %v7120
  %v7330 = vpop.f32.mrb[0].mxu0
  %v7331 = vadd.f32 0.0, %v7330
  %v7332 = vpop.f32.mrb[0].mxu0
  %7333 = vdwg.mxu0
  %v7334 = vadd.f32 %v6673, %v7331
  %7335 = vmatprep.subr.mxu0 0.0
  %7336 = vmatpush1.msra.mxu0 %v881
  %7337 = vmatprep.subr.mxu0 0.0
  %7338 = vmatpush1.msra.mxu0 %v883
  %7339 = vmatprep.subr.mxu0 0.0
  %7340 = vmatpush1.msra.mxu0 %v885
  %7341 = vmatprep.subr.mxu0 0.0
  %7342 = vmatpush1.msra.mxu0 %v887
  %7343 = vmatprep.subr.mxu0 0.0
  %7344 = vmatpush1.msra.mxu0 0.0
  %7345 = vmatprep.subr.mxu0 0.0
  %7346 = vmatpush1.msra.mxu0 0.0
  %7347 = vmatprep.subr.mxu0 0.0
  %7348 = vmatpush1.msra.mxu0 0.0
  %7349 = vmatprep.subr.mxu0 0.0
  %7350 = vmatpush1.msra.mxu0 0.0
  %7351 = vmatprep.subr.mxu0 0.0
  %7352 = vmatpush1.msra.mxu0 0.0
  %7353 = vmatprep.subr.mxu0 0.0
  %7354 = vmatpush1.msra.mxu0 0.0
  %7355 = vmatprep.subr.mxu0 0.0
  %7356 = vmatpush1.msra.mxu0 0.0
  %7357 = vmatprep.subr.mxu0 0.0
  %7358 = vmatpush1.msra.mxu0 0.0
  %7359 = vmatprep.subr.mxu0 0.0
  %7360 = vmatpush1.msra.mxu0 0.0
  %7361 = vmatprep.subr.mxu0 0.0
  %7362 = vmatpush1.msra.mxu0 0.0
  %7363 = vmatprep.subr.mxu0 0.0
  %7364 = vmatpush1.msra.mxu0 0.0
  %7365 = vmatprep.subr.mxu0 0.0
  %7366 = vmatpush1.msra.mxu0 0.0
  %7367 = vmatprep.subr.mxu0 0.0
  %7368 = vmatpush1.msra.mxu0 0.0
  %7369 = vmatprep.subr.mxu0 0.0
  %7370 = vmatpush1.msra.mxu0 0.0
  %7371 = vmatprep.subr.mxu0 0.0
  %7372 = vmatpush1.msra.mxu0 0.0
  %7373 = vmatprep.subr.mxu0 0.0
  %7374 = vmatpush1.msra.mxu0 0.0
  %7375 = vmatprep.subr.mxu0 0.0
  %7376 = vmatpush1.msra.mxu0 0.0
  %7377 = vmatprep.subr.mxu0 0.0
  %7378 = vmatpush1.msra.mxu0 0.0
  %7379 = vmatprep.subr.mxu0 0.0
  %7380 = vmatpush1.msra.mxu0 0.0
  %7381 = vmatprep.subr.mxu0 0.0
  %7382 = vmatpush1.msra.mxu0 0.0
  %7383 = vmatprep.subr.mxu0 0.0
  %7384 = vmatpush1.msra.mxu0 0.0
  %7385 = vmatprep.subr.mxu0 0.0
  %7386 = vmatpush1.msra.mxu0 0.0
  %7387 = vmatprep.subr.mxu0 0.0
  %7388 = vmatpush1.msra.mxu0 0.0
  %7389 = vmatprep.subr.mxu0 0.0
  %7390 = vmatpush1.msra.mxu0 0.0
  %7391 = vmatprep.subr.mxu0 0.0
  %7392 = vmatpush1.msra.mxu0 0.0
  %7393 = vmatprep.subr.mxu0 0.0
  %7394 = vmatpush1.msra.mxu0 0.0
  %7395 = vmatprep.subr.mxu0 0.0
  %7396 = vmatpush1.msra.mxu0 0.0
  %7397 = vmatprep.subr.mxu0 0.0
  %7398 = vmatpush1.msra.mxu0 0.0
  %7399 = vmatprep.mubr.f32.mxu0 0.0
  %7400 = vmatmul.mubr.f32.gmra.mrb[0].mxu0 %v7120
  %v7401 = vpop.f32.mrb[0].mxu0
  %v7402 = vadd.f32 0.0, %v7401
  %v7403 = vpop.f32.mrb[0].mxu0
  %7404 = vdwg.mxu0
  %v7405 = vadd.f32 %v6800, %v7402
  %v7406 = vxor.u32 %v7192, 2147483648
  %v7407 = vmul.f32 %v7406, 1.442695
  %v7408 = vpow.pop %v7407
  %v7409 = vadd.f32 %v7408, 1.0
  %v7410 = vrcp.pop %v7409
  %v7411 = vmul.f32 1.0, %v7410
  %v7412 = vxor.u32 %v7263, 2147483648
  %v7413 = vmul.f32 %v7412, 1.442695
  %v7414 = vpow.pop %v7413
  %v7415 = vadd.f32 %v7414, 1.0
  %v7416 = vrcp.pop %v7415
  %v7417 = vmul.f32 1.0, %v7416
  %v7418 = vtanh.pop %v7334
  %v7419 = vxor.u32 %v7405, 2147483648
  %v7420 = vmul.f32 %v7419, 1.442695
  %v7421 = vpow.pop %v7420
  %v7422 = vadd.f32 %v7421, 1.0
  %v7423 = vrcp.pop %v7422
  %v7424 = vmul.f32 1.0, %v7423
  %v7425 = vmul.f32 %v7417, %v7115
  %v7426 = vmul.f32 %v7411, %v7418
  %v7427 = vadd.f32 %v7425, %v7426
  %v7428 = vtanh.pop %v7427
  %v7429 = vmul.f32 %v7424, %v7428
  %s7430 = scalar_lea.vmem [#allocation4], 2
  %7431 = vst.msk [vmem:[%s7430] sm:$0x3] %vm987, %v7429
  %v7433 = vsel %vm90, %v7429, 0
  %7435 = vmatprep.subr.mxu0 0.0
  %7436 = vmatpush1.msra.mxu0 %v37
  %7437 = vmatprep.subr.mxu0 0.0
  %7438 = vmatpush1.msra.mxu0 %v38
  %7439 = vmatprep.subr.mxu0 0.0
  %7440 = vmatpush1.msra.mxu0 %v39
  %7441 = vmatprep.subr.mxu0 0.0
  %7442 = vmatpush1.msra.mxu0 %v40
  %7443 = vmatprep.subr.mxu0 0.0
  %7444 = vmatpush1.msra.mxu0 0.0
  %7445 = vmatprep.subr.mxu0 0.0
  %7446 = vmatpush1.msra.mxu0 0.0
  %7447 = vmatprep.subr.mxu0 0.0
  %7448 = vmatpush1.msra.mxu0 0.0
  %7449 = vmatprep.subr.mxu0 0.0
  %7450 = vmatpush1.msra.mxu0 0.0
  %7451 = vmatprep.subr.mxu0 0.0
  %7452 = vmatpush1.msra.mxu0 0.0
  %7453 = vmatprep.subr.mxu0 0.0
  %7454 = vmatpush1.msra.mxu0 0.0
  %7455 = vmatprep.subr.mxu0 0.0
  %7456 = vmatpush1.msra.mxu0 0.0
  %7457 = vmatprep.subr.mxu0 0.0
  %7458 = vmatpush1.msra.mxu0 0.0
  %7459 = vmatprep.subr.mxu0 0.0
  %7460 = vmatpush1.msra.mxu0 0.0
  %7461 = vmatprep.subr.mxu0 0.0
  %7462 = vmatpush1.msra.mxu0 0.0
  %7463 = vmatprep.subr.mxu0 0.0
  %7464 = vmatpush1.msra.mxu0 0.0
  %7465 = vmatprep.subr.mxu0 0.0
  %7466 = vmatpush1.msra.mxu0 0.0
  %7467 = vmatprep.subr.mxu0 0.0
  %7468 = vmatpush1.msra.mxu0 0.0
  %7469 = vmatprep.subr.mxu0 0.0
  %7470 = vmatpush1.msra.mxu0 0.0
  %7471 = vmatprep.subr.mxu0 0.0
  %7472 = vmatpush1.msra.mxu0 0.0
  %7473 = vmatprep.subr.mxu0 0.0
  %7474 = vmatpush1.msra.mxu0 0.0
  %7475 = vmatprep.subr.mxu0 0.0
  %7476 = vmatpush1.msra.mxu0 0.0
  %7477 = vmatprep.subr.mxu0 0.0
  %7478 = vmatpush1.msra.mxu0 0.0
  %7479 = vmatprep.subr.mxu0 0.0
  %7480 = vmatpush1.msra.mxu0 0.0
  %7481 = vmatprep.subr.mxu0 0.0
  %7482 = vmatpush1.msra.mxu0 0.0
  %7483 = vmatprep.subr.mxu0 0.0
  %7484 = vmatpush1.msra.mxu0 0.0
  %7485 = vmatprep.subr.mxu0 0.0
  %7486 = vmatpush1.msra.mxu0 0.0
  %7487 = vmatprep.subr.mxu0 0.0
  %7488 = vmatpush1.msra.mxu0 0.0
  %7489 = vmatprep.subr.mxu0 0.0
  %7490 = vmatpush1.msra.mxu0 0.0
  %7491 = vmatprep.subr.mxu0 0.0
  %7492 = vmatpush1.msra.mxu0 0.0
  %7493 = vmatprep.subr.mxu0 0.0
  %7494 = vmatpush1.msra.mxu0 0.0
  %7495 = vmatprep.subr.mxu0 0.0
  %7496 = vmatpush1.msra.mxu0 0.0
  %7497 = vmatprep.subr.mxu0 0.0
  %7498 = vmatpush1.msra.mxu0 0.0
  %7499 = vmatprep.mubr.f32.mxu0 0.0
  %7500 = vmatmul.mubr.f32.gmra.mrb[0].mxu0 %v7433
  %v7501 = vpop.f32.mrb[0].mxu0
  %v7502 = vadd.f32 0.0, %v7501
  %v7503 = vpop.f32.mrb[0].mxu0
  %7504 = vdwg.mxu0
  %v7505 = vadd.f32 %v6420, %v7502
  %7506 = vmatprep.subr.mxu0 0.0
  %7507 = vmatpush1.msra.mxu0 %v715
  %7508 = vmatprep.subr.mxu0 0.0
  %7509 = vmatpush1.msra.mxu0 %v717
  %7510 = vmatprep.subr.mxu0 0.0
  %7511 = vmatpush1.msra.mxu0 %v719
  %7512 = vmatprep.subr.mxu0 0.0
  %7513 = vmatpush1.msra.mxu0 %v721
  %7514 = vmatprep.subr.mxu0 0.0
  %7515 = vmatpush1.msra.mxu0 0.0
  %7516 = vmatprep.subr.mxu0 0.0
  %7517 = vmatpush1.msra.mxu0 0.0
  %7518 = vmatprep.subr.mxu0 0.0
  %7519 = vmatpush1.msra.mxu0 0.0
  %7520 = vmatprep.subr.mxu0 0.0
  %7521 = vmatpush1.msra.mxu0 0.0
  %7522 = vmatprep.subr.mxu0 0.0
  %7523 = vmatpush1.msra.mxu0 0.0
  %7524 = vmatprep.subr.mxu0 0.0
  %7525 = vmatpush1.msra.mxu0 0.0
  %7526 = vmatprep.subr.mxu0 0.0
  %7527 = vmatpush1.msra.mxu0 0.0
  %7528 = vmatprep.subr.mxu0 0.0
  %7529 = vmatpush1.msra.mxu0 0.0
  %7530 = vmatprep.subr.mxu0 0.0
  %7531 = vmatpush1.msra.mxu0 0.0
  %7532 = vmatprep.subr.mxu0 0.0
  %7533 = vmatpush1.msra.mxu0 0.0
  %7534 = vmatprep.subr.mxu0 0.0
  %7535 = vmatpush1.msra.mxu0 0.0
  %7536 = vmatprep.subr.mxu0 0.0
  %7537 = vmatpush1.msra.mxu0 0.0
  %7538 = vmatprep.subr.mxu0 0.0
  %7539 = vmatpush1.msra.mxu0 0.0
  %7540 = vmatprep.subr.mxu0 0.0
  %7541 = vmatpush1.msra.mxu0 0.0
  %7542 = vmatprep.subr.mxu0 0.0
  %7543 = vmatpush1.msra.mxu0 0.0
  %7544 = vmatprep.subr.mxu0 0.0
  %7545 = vmatpush1.msra.mxu0 0.0
  %7546 = vmatprep.subr.mxu0 0.0
  %7547 = vmatpush1.msra.mxu0 0.0
  %7548 = vmatprep.subr.mxu0 0.0
  %7549 = vmatpush1.msra.mxu0 0.0
  %7550 = vmatprep.subr.mxu0 0.0
  %7551 = vmatpush1.msra.mxu0 0.0
  %7552 = vmatprep.subr.mxu0 0.0
  %7553 = vmatpush1.msra.mxu0 0.0
  %7554 = vmatprep.subr.mxu0 0.0
  %7555 = vmatpush1.msra.mxu0 0.0
  %7556 = vmatprep.subr.mxu0 0.0
  %7557 = vmatpush1.msra.mxu0 0.0
  %7558 = vmatprep.subr.mxu0 0.0
  %7559 = vmatpush1.msra.mxu0 0.0
  %7560 = vmatprep.subr.mxu0 0.0
  %7561 = vmatpush1.msra.mxu0 0.0
  %7562 = vmatprep.subr.mxu0 0.0
  %7563 = vmatpush1.msra.mxu0 0.0
  %7564 = vmatprep.subr.mxu0 0.0
  %7565 = vmatpush1.msra.mxu0 0.0
  %7566 = vmatprep.subr.mxu0 0.0
  %7567 = vmatpush1.msra.mxu0 0.0
  %7568 = vmatprep.subr.mxu0 0.0
  %7569 = vmatpush1.msra.mxu0 0.0
  %7570 = vmatprep.mubr.f32.mxu0 0.0
  %7571 = vmatmul.mubr.f32.gmra.mrb[0].mxu0 %v7433
  %v7572 = vpop.f32.mrb[0].mxu0
  %v7573 = vadd.f32 0.0, %v7572
  %v7574 = vpop.f32.mrb[0].mxu0
  %7575 = vdwg.mxu0
  %v7576 = vadd.f32 %v6547, %v7573
  %7577 = vmatprep.subr.mxu0 0.0
  %7578 = vmatpush1.msra.mxu0 %v798
  %7579 = vmatprep.subr.mxu0 0.0
  %7580 = vmatpush1.msra.mxu0 %v800
  %7581 = vmatprep.subr.mxu0 0.0
  %7582 = vmatpush1.msra.mxu0 %v802
  %7583 = vmatprep.subr.mxu0 0.0
  %7584 = vmatpush1.msra.mxu0 %v804
  %7585 = vmatprep.subr.mxu0 0.0
  %7586 = vmatpush1.msra.mxu0 0.0
  %7587 = vmatprep.subr.mxu0 0.0
  %7588 = vmatpush1.msra.mxu0 0.0
  %7589 = vmatprep.subr.mxu0 0.0
  %7590 = vmatpush1.msra.mxu0 0.0
  %7591 = vmatprep.subr.mxu0 0.0
  %7592 = vmatpush1.msra.mxu0 0.0
  %7593 = vmatprep.subr.mxu0 0.0
  %7594 = vmatpush1.msra.mxu0 0.0
  %7595 = vmatprep.subr.mxu0 0.0
  %7596 = vmatpush1.msra.mxu0 0.0
  %7597 = vmatprep.subr.mxu0 0.0
  %7598 = vmatpush1.msra.mxu0 0.0
  %7599 = vmatprep.subr.mxu0 0.0
  %7600 = vmatpush1.msra.mxu0 0.0
  %7601 = vmatprep.subr.mxu0 0.0
  %7602 = vmatpush1.msra.mxu0 0.0
  %7603 = vmatprep.subr.mxu0 0.0
  %7604 = vmatpush1.msra.mxu0 0.0
  %7605 = vmatprep.subr.mxu0 0.0
  %7606 = vmatpush1.msra.mxu0 0.0
  %7607 = vmatprep.subr.mxu0 0.0
  %7608 = vmatpush1.msra.mxu0 0.0
  %7609 = vmatprep.subr.mxu0 0.0
  %7610 = vmatpush1.msra.mxu0 0.0
  %7611 = vmatprep.subr.mxu0 0.0
  %7612 = vmatpush1.msra.mxu0 0.0
  %7613 = vmatprep.subr.mxu0 0.0
  %7614 = vmatpush1.msra.mxu0 0.0
  %7615 = vmatprep.subr.mxu0 0.0
  %7616 = vmatpush1.msra.mxu0 0.0
  %7617 = vmatprep.subr.mxu0 0.0
  %7618 = vmatpush1.msra.mxu0 0.0
  %7619 = vmatprep.subr.mxu0 0.0
  %7620 = vmatpush1.msra.mxu0 0.0
  %7621 = vmatprep.subr.mxu0 0.0
  %7622 = vmatpush1.msra.mxu0 0.0
  %7623 = vmatprep.subr.mxu0 0.0
  %7624 = vmatpush1.msra.mxu0 0.0
  %7625 = vmatprep.subr.mxu0 0.0
  %7626 = vmatpush1.msra.mxu0 0.0
  %7627 = vmatprep.subr.mxu0 0.0
  %7628 = vmatpush1.msra.mxu0 0.0
  %7629 = vmatprep.subr.mxu0 0.0
  %7630 = vmatpush1.msra.mxu0 0.0
  %7631 = vmatprep.subr.mxu0 0.0
  %7632 = vmatpush1.msra.mxu0 0.0
  %7633 = vmatprep.subr.mxu0 0.0
  %7634 = vmatpush1.msra.mxu0 0.0
  %7635 = vmatprep.subr.mxu0 0.0
  %7636 = vmatpush1.msra.mxu0 0.0
  %7637 = vmatprep.subr.mxu0 0.0
  %7638 = vmatpush1.msra.mxu0 0.0
  %7639 = vmatprep.subr.mxu0 0.0
  %7640 = vmatpush1.msra.mxu0 0.0
  %7641 = vmatprep.mubr.f32.mxu0 0.0
  %7642 = vmatmul.mubr.f32.gmra.mrb[0].mxu0 %v7433
  %v7643 = vpop.f32.mrb[0].mxu0
  %v7644 = vadd.f32 0.0, %v7643
  %v7645 = vpop.f32.mrb[0].mxu0
  %7646 = vdwg.mxu0
  %v7647 = vadd.f32 %v6674, %v7644
  %7648 = vmatprep.subr.mxu0 0.0
  %7649 = vmatpush1.msra.mxu0 %v881
  %7650 = vmatprep.subr.mxu0 0.0
  %7651 = vmatpush1.msra.mxu0 %v883
  %7652 = vmatprep.subr.mxu0 0.0
  %7653 = vmatpush1.msra.mxu0 %v885
  %7654 = vmatprep.subr.mxu0 0.0
  %7655 = vmatpush1.msra.mxu0 %v887
  %7656 = vmatprep.subr.mxu0 0.0
  %7657 = vmatpush1.msra.mxu0 0.0
  %7658 = vmatprep.subr.mxu0 0.0
  %7659 = vmatpush1.msra.mxu0 0.0
  %7660 = vmatprep.subr.mxu0 0.0
  %7661 = vmatpush1.msra.mxu0 0.0
  %7662 = vmatprep.subr.mxu0 0.0
  %7663 = vmatpush1.msra.mxu0 0.0
  %7664 = vmatprep.subr.mxu0 0.0
  %7665 = vmatpush1.msra.mxu0 0.0
  %7666 = vmatprep.subr.mxu0 0.0
  %7667 = vmatpush1.msra.mxu0 0.0
  %7668 = vmatprep.subr.mxu0 0.0
  %7669 = vmatpush1.msra.mxu0 0.0
  %7670 = vmatprep.subr.mxu0 0.0
  %7671 = vmatpush1.msra.mxu0 0.0
  %7672 = vmatprep.subr.mxu0 0.0
  %7673 = vmatpush1.msra.mxu0 0.0
  %7674 = vmatprep.subr.mxu0 0.0
  %7675 = vmatpush1.msra.mxu0 0.0
  %7676 = vmatprep.subr.mxu0 0.0
  %7677 = vmatpush1.msra.mxu0 0.0
  %7678 = vmatprep.subr.mxu0 0.0
  %7679 = vmatpush1.msra.mxu0 0.0
  %7680 = vmatprep.subr.mxu0 0.0
  %7681 = vmatpush1.msra.mxu0 0.0
  %7682 = vmatprep.subr.mxu0 0.0
  %7683 = vmatpush1.msra.mxu0 0.0
  %7684 = vmatprep.subr.mxu0 0.0
  %7685 = vmatpush1.msra.mxu0 0.0
  %7686 = vmatprep.subr.mxu0 0.0
  %7687 = vmatpush1.msra.mxu0 0.0
  %7688 = vmatprep.subr.mxu0 0.0
  %7689 = vmatpush1.msra.mxu0 0.0
  %7690 = vmatprep.subr.mxu0 0.0
  %7691 = vmatpush1.msra.mxu0 0.0
  %7692 = vmatprep.subr.mxu0 0.0
  %7693 = vmatpush1.msra.mxu0 0.0
  %7694 = vmatprep.subr.mxu0 0.0
  %7695 = vmatpush1.msra.mxu0 0.0
  %7696 = vmatprep.subr.mxu0 0.0
  %7697 = vmatpush1.msra.mxu0 0.0
  %7698 = vmatprep.subr.mxu0 0.0
  %7699 = vmatpush1.msra.mxu0 0.0
  %7700 = vmatprep.subr.mxu0 0.0
  %7701 = vmatpush1.msra.mxu0 0.0
  %7702 = vmatprep.subr.mxu0 0.0
  %7703 = vmatpush1.msra.mxu0 0.0
  %7704 = vmatprep.subr.mxu0 0.0
  %7705 = vmatpush1.msra.mxu0 0.0
  %7706 = vmatprep.subr.mxu0 0.0
  %7707 = vmatpush1.msra.mxu0 0.0
  %7708 = vmatprep.subr.mxu0 0.0
  %7709 = vmatpush1.msra.mxu0 0.0
  %7710 = vmatprep.subr.mxu0 0.0
  %7711 = vmatpush1.msra.mxu0 0.0
  %7712 = vmatprep.mubr.f32.mxu0 0.0
  %7713 = vmatmul.mubr.f32.gmra.mrb[0].mxu0 %v7433
  %v7714 = vpop.f32.mrb[0].mxu0
  %v7715 = vadd.f32 0.0, %v7714
  %v7716 = vpop.f32.mrb[0].mxu0
  %7717 = vdwg.mxu0
  %v7718 = vadd.f32 %v6801, %v7715
  %v7719 = vxor.u32 %v7505, 2147483648
  %v7720 = vmul.f32 %v7719, 1.442695
  %v7721 = vpow.pop %v7720
  %v7722 = vadd.f32 %v7721, 1.0
  %v7723 = vrcp.pop %v7722
  %v7724 = vmul.f32 1.0, %v7723
  %v7725 = vxor.u32 %v7576, 2147483648
  %v7726 = vmul.f32 %v7725, 1.442695
  %v7727 = vpow.pop %v7726
  %v7728 = vadd.f32 %v7727, 1.0
  %v7729 = vrcp.pop %v7728
  %v7730 = vmul.f32 1.0, %v7729
  %v7731 = vtanh.pop %v7647
  %v7732 = vxor.u32 %v7718, 2147483648
  %v7733 = vmul.f32 %v7732, 1.442695
  %v7734 = vpow.pop %v7733
  %v7735 = vadd.f32 %v7734, 1.0
  %v7736 = vrcp.pop %v7735
  %v7737 = vmul.f32 1.0, %v7736
  %v7738 = vmul.f32 %v7730, %v7427
  %v7739 = vmul.f32 %v7724, %v7731
  %v7740 = vadd.f32 %v7738, %v7739
  %v7741 = vtanh.pop %v7740
  %v7742 = vmul.f32 %v7737, %v7741
  %s7743 = scalar_lea.vmem [#allocation4], 4
  %7744 = vst.msk [vmem:[%s7743] sm:$0x3] %vm987, %v7742
  %v7746 = vsel %vm90, %v7742, 0
  %7748 = vmatprep.subr.mxu0 0.0
  %7749 = vmatpush1.msra.mxu0 %v37
  %7750 = vmatprep.subr.mxu0 0.0
  %7751 = vmatpush1.msra.mxu0 %v38
  %7752 = vmatprep.subr.mxu0 0.0
  %7753 = vmatpush1.msra.mxu0 %v39
  %7754 = vmatprep.subr.mxu0 0.0
  %7755 = vmatpush1.msra.mxu0 %v40
  %7756 = vmatprep.subr.mxu0 0.0
  %7757 = vmatpush1.msra.mxu0 0.0
  %7758 = vmatprep.subr.mxu0 0.0
  %7759 = vmatpush1.msra.mxu0 0.0
  %7760 = vmatprep.subr.mxu0 0.0
  %7761 = vmatpush1.msra.mxu0 0.0
  %7762 = vmatprep.subr.mxu0 0.0
  %7763 = vmatpush1.msra.mxu0 0.0
  %7764 = vmatprep.subr.mxu0 0.0
  %7765 = vmatpush1.msra.mxu0 0.0
  %7766 = vmatprep.subr.mxu0 0.0
  %7767 = vmatpush1.msra.mxu0 0.0
  %7768 = vmatprep.subr.mxu0 0.0
  %7769 = vmatpush1.msra.mxu0 0.0
  %7770 = vmatprep.subr.mxu0 0.0
  %7771 = vmatpush1.msra.mxu0 0.0
  %7772 = vmatprep.subr.mxu0 0.0
  %7773 = vmatpush1.msra.mxu0 0.0
  %7774 = vmatprep.subr.mxu0 0.0
  %7775 = vmatpush1.msra.mxu0 0.0
  %7776 = vmatprep.subr.mxu0 0.0
  %7777 = vmatpush1.msra.mxu0 0.0
  %7778 = vmatprep.subr.mxu0 0.0
  %7779 = vmatpush1.msra.mxu0 0.0
  %7780 = vmatprep.subr.mxu0 0.0
  %7781 = vmatpush1.msra.mxu0 0.0
  %7782 = vmatprep.subr.mxu0 0.0
  %7783 = vmatpush1.msra.mxu0 0.0
  %7784 = vmatprep.subr.mxu0 0.0
  %7785 = vmatpush1.msra.mxu0 0.0
  %7786 = vmatprep.subr.mxu0 0.0
  %7787 = vmatpush1.msra.mxu0 0.0
  %7788 = vmatprep.subr.mxu0 0.0
  %7789 = vmatpush1.msra.mxu0 0.0
  %7790 = vmatprep.subr.mxu0 0.0
  %7791 = vmatpush1.msra.mxu0 0.0
  %7792 = vmatprep.subr.mxu0 0.0
  %7793 = vmatpush1.msra.mxu0 0.0
  %7794 = vmatprep.subr.mxu0 0.0
  %7795 = vmatpush1.msra.mxu0 0.0
  %7796 = vmatprep.subr.mxu0 0.0
  %7797 = vmatpush1.msra.mxu0 0.0
  %7798 = vmatprep.subr.mxu0 0.0
  %7799 = vmatpush1.msra.mxu0 0.0
  %7800 = vmatprep.subr.mxu0 0.0
  %7801 = vmatpush1.msra.mxu0 0.0
  %7802 = vmatprep.subr.mxu0 0.0
  %7803 = vmatpush1.msra.mxu0 0.0
  %7804 = vmatprep.subr.mxu0 0.0
  %7805 = vmatpush1.msra.mxu0 0.0
  %7806 = vmatprep.subr.mxu0 0.0
  %7807 = vmatpush1.msra.mxu0 0.0
  %7808 = vmatprep.subr.mxu0 0.0
  %7809 = vmatpush1.msra.mxu0 0.0
  %7810 = vmatprep.subr.mxu0 0.0
  %7811 = vmatpush1.msra.mxu0 0.0
  %7812 = vmatprep.mubr.f32.mxu0 0.0
  %7813 = vmatmul.mubr.f32.gmra.mrb[0].mxu0 %v7746
  %v7814 = vpop.f32.mrb[0].mxu0
  %v7815 = vadd.f32 0.0, %v7814
  %v7816 = vpop.f32.mrb[0].mxu0
  %7817 = vdwg.mxu0
  %v7818 = vadd.f32 %v6421, %v7815
  %7819 = vmatprep.subr.mxu0 0.0
  %7820 = vmatpush1.msra.mxu0 %v715
  %7821 = vmatprep.subr.mxu0 0.0
  %7822 = vmatpush1.msra.mxu0 %v717
  %7823 = vmatprep.subr.mxu0 0.0
  %7824 = vmatpush1.msra.mxu0 %v719
  %7825 = vmatprep.subr.mxu0 0.0
  %7826 = vmatpush1.msra.mxu0 %v721
  %7827 = vmatprep.subr.mxu0 0.0
  %7828 = vmatpush1.msra.mxu0 0.0
  %7829 = vmatprep.subr.mxu0 0.0
  %7830 = vmatpush1.msra.mxu0 0.0
  %7831 = vmatprep.subr.mxu0 0.0
  %7832 = vmatpush1.msra.mxu0 0.0
  %7833 = vmatprep.subr.mxu0 0.0
  %7834 = vmatpush1.msra.mxu0 0.0
  %7835 = vmatprep.subr.mxu0 0.0
  %7836 = vmatpush1.msra.mxu0 0.0
  %7837 = vmatprep.subr.mxu0 0.0
  %7838 = vmatpush1.msra.mxu0 0.0
  %7839 = vmatprep.subr.mxu0 0.0
  %7840 = vmatpush1.msra.mxu0 0.0
  %7841 = vmatprep.subr.mxu0 0.0
  %7842 = vmatpush1.msra.mxu0 0.0
  %7843 = vmatprep.subr.mxu0 0.0
  %7844 = vmatpush1.msra.mxu0 0.0
  %7845 = vmatprep.subr.mxu0 0.0
  %7846 = vmatpush1.msra.mxu0 0.0
  %7847 = vmatprep.subr.mxu0 0.0
  %7848 = vmatpush1.msra.mxu0 0.0
  %7849 = vmatprep.subr.mxu0 0.0
  %7850 = vmatpush1.msra.mxu0 0.0
  %7851 = vmatprep.subr.mxu0 0.0
  %7852 = vmatpush1.msra.mxu0 0.0
  %7853 = vmatprep.subr.mxu0 0.0
  %7854 = vmatpush1.msra.mxu0 0.0
  %7855 = vmatprep.subr.mxu0 0.0
  %7856 = vmatpush1.msra.mxu0 0.0
  %7857 = vmatprep.subr.mxu0 0.0
  %7858 = vmatpush1.msra.mxu0 0.0
  %7859 = vmatprep.subr.mxu0 0.0
  %7860 = vmatpush1.msra.mxu0 0.0
  %7861 = vmatprep.subr.mxu0 0.0
  %7862 = vmatpush1.msra.mxu0 0.0
  %7863 = vmatprep.subr.mxu0 0.0
  %7864 = vmatpush1.msra.mxu0 0.0
  %7865 = vmatprep.subr.mxu0 0.0
  %7866 = vmatpush1.msra.mxu0 0.0
  %7867 = vmatprep.subr.mxu0 0.0
  %7868 = vmatpush1.msra.mxu0 0.0
  %7869 = vmatprep.subr.mxu0 0.0
  %7870 = vmatpush1.msra.mxu0 0.0
  %7871 = vmatprep.subr.mxu0 0.0
  %7872 = vmatpush1.msra.mxu0 0.0
  %7873 = vmatprep.subr.mxu0 0.0
  %7874 = vmatpush1.msra.mxu0 0.0
  %7875 = vmatprep.subr.mxu0 0.0
  %7876 = vmatpush1.msra.mxu0 0.0
  %7877 = vmatprep.subr.mxu0 0.0
  %7878 = vmatpush1.msra.mxu0 0.0
  %7879 = vmatprep.subr.mxu0 0.0
  %7880 = vmatpush1.msra.mxu0 0.0
  %7881 = vmatprep.subr.mxu0 0.0
  %7882 = vmatpush1.msra.mxu0 0.0
  %7883 = vmatprep.mubr.f32.mxu0 0.0
  %7884 = vmatmul.mubr.f32.gmra.mrb[0].mxu0 %v7746
  %v7885 = vpop.f32.mrb[0].mxu0
  %v7886 = vadd.f32 0.0, %v7885
  %v7887 = vpop.f32.mrb[0].mxu0
  %7888 = vdwg.mxu0
  %v7889 = vadd.f32 %v6548, %v7886
  %7890 = vmatprep.subr.mxu0 0.0
  %7891 = vmatpush1.msra.mxu0 %v798
  %7892 = vmatprep.subr.mxu0 0.0
  %7893 = vmatpush1.msra.mxu0 %v800
  %7894 = vmatprep.subr.mxu0 0.0
  %7895 = vmatpush1.msra.mxu0 %v802
  %7896 = vmatprep.subr.mxu0 0.0
  %7897 = vmatpush1.msra.mxu0 %v804
  %7898 = vmatprep.subr.mxu0 0.0
  %7899 = vmatpush1.msra.mxu0 0.0
  %7900 = vmatprep.subr.mxu0 0.0
  %7901 = vmatpush1.msra.mxu0 0.0
  %7902 = vmatprep.subr.mxu0 0.0
  %7903 = vmatpush1.msra.mxu0 0.0
  %7904 = vmatprep.subr.mxu0 0.0
  %7905 = vmatpush1.msra.mxu0 0.0
  %7906 = vmatprep.subr.mxu0 0.0
  %7907 = vmatpush1.msra.mxu0 0.0
  %7908 = vmatprep.subr.mxu0 0.0
  %7909 = vmatpush1.msra.mxu0 0.0
  %7910 = vmatprep.subr.mxu0 0.0
  %7911 = vmatpush1.msra.mxu0 0.0
  %7912 = vmatprep.subr.mxu0 0.0
  %7913 = vmatpush1.msra.mxu0 0.0
  %7914 = vmatprep.subr.mxu0 0.0
  %7915 = vmatpush1.msra.mxu0 0.0
  %7916 = vmatprep.subr.mxu0 0.0
  %7917 = vmatpush1.msra.mxu0 0.0
  %7918 = vmatprep.subr.mxu0 0.0
  %7919 = vmatpush1.msra.mxu0 0.0
  %7920 = vmatprep.subr.mxu0 0.0
  %7921 = vmatpush1.msra.mxu0 0.0
  %7922 = vmatprep.subr.mxu0 0.0
  %7923 = vmatpush1.msra.mxu0 0.0
  %7924 = vmatprep.subr.mxu0 0.0
  %7925 = vmatpush1.msra.mxu0 0.0
  %7926 = vmatprep.subr.mxu0 0.0
  %7927 = vmatpush1.msra.mxu0 0.0
  %7928 = vmatprep.subr.mxu0 0.0
  %7929 = vmatpush1.msra.mxu0 0.0
  %7930 = vmatprep.subr.mxu0 0.0
  %7931 = vmatpush1.msra.mxu0 0.0
  %7932 = vmatprep.subr.mxu0 0.0
  %7933 = vmatpush1.msra.mxu0 0.0
  %7934 = vmatprep.subr.mxu0 0.0
  %7935 = vmatpush1.msra.mxu0 0.0
  %7936 = vmatprep.subr.mxu0 0.0
  %7937 = vmatpush1.msra.mxu0 0.0
  %7938 = vmatprep.subr.mxu0 0.0
  %7939 = vmatpush1.msra.mxu0 0.0
  %7940 = vmatprep.subr.mxu0 0.0
  %7941 = vmatpush1.msra.mxu0 0.0
  %7942 = vmatprep.subr.mxu0 0.0
  %7943 = vmatpush1.msra.mxu0 0.0
  %7944 = vmatprep.subr.mxu0 0.0
  %7945 = vmatpush1.msra.mxu0 0.0
  %7946 = vmatprep.subr.mxu0 0.0
  %7947 = vmatpush1.msra.mxu0 0.0
  %7948 = vmatprep.subr.mxu0 0.0
  %7949 = vmatpush1.msra.mxu0 0.0
  %7950 = vmatprep.subr.mxu0 0.0
  %7951 = vmatpush1.msra.mxu0 0.0
  %7952 = vmatprep.subr.mxu0 0.0
  %7953 = vmatpush1.msra.mxu0 0.0
  %7954 = vmatprep.mubr.f32.mxu0 0.0
  %7955 = vmatmul.mubr.f32.gmra.mrb[0].mxu0 %v7746
  %v7956 = vpop.f32.mrb[0].mxu0
  %v7957 = vadd.f32 0.0, %v7956
  %v7958 = vpop.f32.mrb[0].mxu0
  %7959 = vdwg.mxu0
  %v7960 = vadd.f32 %v6675, %v7957
  %7961 = vmatprep.subr.mxu0 0.0
  %7962 = vmatpush1.msra.mxu0 %v881
  %7963 = vmatprep.subr.mxu0 0.0
  %7964 = vmatpush1.msra.mxu0 %v883
  %7965 = vmatprep.subr.mxu0 0.0
  %7966 = vmatpush1.msra.mxu0 %v885
  %7967 = vmatprep.subr.mxu0 0.0
  %7968 = vmatpush1.msra.mxu0 %v887
  %7969 = vmatprep.subr.mxu0 0.0
  %7970 = vmatpush1.msra.mxu0 0.0
  %7971 = vmatprep.subr.mxu0 0.0
  %7972 = vmatpush1.msra.mxu0 0.0
  %7973 = vmatprep.subr.mxu0 0.0
  %7974 = vmatpush1.msra.mxu0 0.0
  %7975 = vmatprep.subr.mxu0 0.0
  %7976 = vmatpush1.msra.mxu0 0.0
  %7977 = vmatprep.subr.mxu0 0.0
  %7978 = vmatpush1.msra.mxu0 0.0
  %7979 = vmatprep.subr.mxu0 0.0
  %7980 = vmatpush1.msra.mxu0 0.0
  %7981 = vmatprep.subr.mxu0 0.0
  %7982 = vmatpush1.msra.mxu0 0.0
  %7983 = vmatprep.subr.mxu0 0.0
  %7984 = vmatpush1.msra.mxu0 0.0
  %7985 = vmatprep.subr.mxu0 0.0
  %7986 = vmatpush1.msra.mxu0 0.0
  %7987 = vmatprep.subr.mxu0 0.0
  %7988 = vmatpush1.msra.mxu0 0.0
  %7989 = vmatprep.subr.mxu0 0.0
  %7990 = vmatpush1.msra.mxu0 0.0
  %7991 = vmatprep.subr.mxu0 0.0
  %7992 = vmatpush1.msra.mxu0 0.0
  %7993 = vmatprep.subr.mxu0 0.0
  %7994 = vmatpush1.msra.mxu0 0.0
  %7995 = vmatprep.subr.mxu0 0.0
  %7996 = vmatpush1.msra.mxu0 0.0
  %7997 = vmatprep.subr.mxu0 0.0
  %7998 = vmatpush1.msra.mxu0 0.0
  %7999 = vmatprep.subr.mxu0 0.0
  %8000 = vmatpush1.msra.mxu0 0.0
  %8001 = vmatprep.subr.mxu0 0.0
  %8002 = vmatpush1.msra.mxu0 0.0
  %8003 = vmatprep.subr.mxu0 0.0
  %8004 = vmatpush1.msra.mxu0 0.0
  %8005 = vmatprep.subr.mxu0 0.0
  %8006 = vmatpush1.msra.mxu0 0.0
  %8007 = vmatprep.subr.mxu0 0.0
  %8008 = vmatpush1.msra.mxu0 0.0
  %8009 = vmatprep.subr.mxu0 0.0
  %8010 = vmatpush1.msra.mxu0 0.0
  %8011 = vmatprep.subr.mxu0 0.0
  %8012 = vmatpush1.msra.mxu0 0.0
  %8013 = vmatprep.subr.mxu0 0.0
  %8014 = vmatpush1.msra.mxu0 0.0
  %8015 = vmatprep.subr.mxu0 0.0
  %8016 = vmatpush1.msra.mxu0 0.0
  %8017 = vmatprep.subr.mxu0 0.0
  %8018 = vmatpush1.msra.mxu0 0.0
  %8019 = vmatprep.subr.mxu0 0.0
  %8020 = vmatpush1.msra.mxu0 0.0
  %8021 = vmatprep.subr.mxu0 0.0
  %8022 = vmatpush1.msra.mxu0 0.0
  %8023 = vmatprep.subr.mxu0 0.0
  %8024 = vmatpush1.msra.mxu0 0.0
  %8025 = vmatprep.mubr.f32.mxu0 0.0
  %8026 = vmatmul.mubr.f32.gmra.mrb[0].mxu0 %v7746
  %v8027 = vpop.f32.mrb[0].mxu0
  %v8028 = vadd.f32 0.0, %v8027
  %v8029 = vpop.f32.mrb[0].mxu0
  %8030 = vdwg.mxu0
  %v8031 = vadd.f32 %v6802, %v8028
  %v8032 = vxor.u32 %v7818, 2147483648
  %v8033 = vmul.f32 %v8032, 1.442695
  %v8034 = vpow.pop %v8033
  %v8035 = vadd.f32 %v8034, 1.0
  %v8036 = vrcp.pop %v8035
  %v8037 = vmul.f32 1.0, %v8036
  %v8038 = vxor.u32 %v7889, 2147483648
  %v8039 = vmul.f32 %v8038, 1.442695
  %v8040 = vpow.pop %v8039
  %v8041 = vadd.f32 %v8040, 1.0
  %v8042 = vrcp.pop %v8041
  %v8043 = vmul.f32 1.0, %v8042
  %v8044 = vtanh.pop %v7960
  %v8045 = vxor.u32 %v8031, 2147483648
  %v8046 = vmul.f32 %v8045, 1.442695
  %v8047 = vpow.pop %v8046
  %v8048 = vadd.f32 %v8047, 1.0
  %v8049 = vrcp.pop %v8048
  %v8050 = vmul.f32 1.0, %v8049
  %v8051 = vmul.f32 %v8043, %v7740
  %v8052 = vmul.f32 %v8037, %v8044
  %v8053 = vadd.f32 %v8051, %v8052
  %v8054 = vtanh.pop %v8053
  %v8055 = vmul.f32 %v8050, %v8054
  %s8056 = scalar_lea.vmem [#allocation4], 6
  %8057 = vst.msk [vmem:[%s8056] sm:$0x3] %vm987, %v8055
  %v8059 = vsel %vm90, %v8055, 0
  %8061 = vmatprep.subr.mxu0 0.0
  %8062 = vmatpush1.msra.mxu0 %v37
  %8063 = vmatprep.subr.mxu0 0.0
  %8064 = vmatpush1.msra.mxu0 %v38
  %8065 = vmatprep.subr.mxu0 0.0
  %8066 = vmatpush1.msra.mxu0 %v39
  %8067 = vmatprep.subr.mxu0 0.0
  %8068 = vmatpush1.msra.mxu0 %v40
  %8069 = vmatprep.subr.mxu0 0.0
  %8070 = vmatpush1.msra.mxu0 0.0
  %8071 = vmatprep.subr.mxu0 0.0
  %8072 = vmatpush1.msra.mxu0 0.0
  %8073 = vmatprep.subr.mxu0 0.0
  %8074 = vmatpush1.msra.mxu0 0.0
  %8075 = vmatprep.subr.mxu0 0.0
  %8076 = vmatpush1.msra.mxu0 0.0
  %8077 = vmatprep.subr.mxu0 0.0
  %8078 = vmatpush1.msra.mxu0 0.0
  %8079 = vmatprep.subr.mxu0 0.0
  %8080 = vmatpush1.msra.mxu0 0.0
  %8081 = vmatprep.subr.mxu0 0.0
  %8082 = vmatpush1.msra.mxu0 0.0
  %8083 = vmatprep.subr.mxu0 0.0
  %8084 = vmatpush1.msra.mxu0 0.0
  %8085 = vmatprep.subr.mxu0 0.0
  %8086 = vmatpush1.msra.mxu0 0.0
  %8087 = vmatprep.subr.mxu0 0.0
  %8088 = vmatpush1.msra.mxu0 0.0
  %8089 = vmatprep.subr.mxu0 0.0
  %8090 = vmatpush1.msra.mxu0 0.0
  %8091 = vmatprep.subr.mxu0 0.0
  %8092 = vmatpush1.msra.mxu0 0.0
  %8093 = vmatprep.subr.mxu0 0.0
  %8094 = vmatpush1.msra.mxu0 0.0
  %8095 = vmatprep.subr.mxu0 0.0
  %8096 = vmatpush1.msra.mxu0 0.0
  %8097 = vmatprep.subr.mxu0 0.0
  %8098 = vmatpush1.msra.mxu0 0.0
  %8099 = vmatprep.subr.mxu0 0.0
  %8100 = vmatpush1.msra.mxu0 0.0
  %8101 = vmatprep.subr.mxu0 0.0
  %8102 = vmatpush1.msra.mxu0 0.0
  %8103 = vmatprep.subr.mxu0 0.0
  %8104 = vmatpush1.msra.mxu0 0.0
  %8105 = vmatprep.subr.mxu0 0.0
  %8106 = vmatpush1.msra.mxu0 0.0
  %8107 = vmatprep.subr.mxu0 0.0
  %8108 = vmatpush1.msra.mxu0 0.0
  %8109 = vmatprep.subr.mxu0 0.0
  %8110 = vmatpush1.msra.mxu0 0.0
  %8111 = vmatprep.subr.mxu0 0.0
  %8112 = vmatpush1.msra.mxu0 0.0
  %8113 = vmatprep.subr.mxu0 0.0
  %8114 = vmatpush1.msra.mxu0 0.0
  %8115 = vmatprep.subr.mxu0 0.0
  %8116 = vmatpush1.msra.mxu0 0.0
  %8117 = vmatprep.subr.mxu0 0.0
  %8118 = vmatpush1.msra.mxu0 0.0
  %8119 = vmatprep.subr.mxu0 0.0
  %8120 = vmatpush1.msra.mxu0 0.0
  %8121 = vmatprep.subr.mxu0 0.0
  %8122 = vmatpush1.msra.mxu0 0.0
  %8123 = vmatprep.subr.mxu0 0.0
  %8124 = vmatpush1.msra.mxu0 0.0
  %8125 = vmatprep.mubr.f32.mxu0 0.0
  %8126 = vmatmul.mubr.f32.gmra.mrb[0].mxu0 %v8059
  %v8127 = vpop.f32.mrb[0].mxu0
  %v8128 = vadd.f32 0.0, %v8127
  %v8129 = vpop.f32.mrb[0].mxu0
  %8130 = vdwg.mxu0
  %v8131 = vadd.f32 %v6422, %v8128
  %8132 = vmatprep.subr.mxu0 0.0
  %8133 = vmatpush1.msra.mxu0 %v715
  %8134 = vmatprep.subr.mxu0 0.0
  %8135 = vmatpush1.msra.mxu0 %v717
  %8136 = vmatprep.subr.mxu0 0.0
  %8137 = vmatpush1.msra.mxu0 %v719
  %8138 = vmatprep.subr.mxu0 0.0
  %8139 = vmatpush1.msra.mxu0 %v721
  %8140 = vmatprep.subr.mxu0 0.0
  %8141 = vmatpush1.msra.mxu0 0.0
  %8142 = vmatprep.subr.mxu0 0.0
  %8143 = vmatpush1.msra.mxu0 0.0
  %8144 = vmatprep.subr.mxu0 0.0
  %8145 = vmatpush1.msra.mxu0 0.0
  %8146 = vmatprep.subr.mxu0 0.0
  %8147 = vmatpush1.msra.mxu0 0.0
  %8148 = vmatprep.subr.mxu0 0.0
  %8149 = vmatpush1.msra.mxu0 0.0
  %8150 = vmatprep.subr.mxu0 0.0
  %8151 = vmatpush1.msra.mxu0 0.0
  %8152 = vmatprep.subr.mxu0 0.0
  %8153 = vmatpush1.msra.mxu0 0.0
  %8154 = vmatprep.subr.mxu0 0.0
  %8155 = vmatpush1.msra.mxu0 0.0
  %8156 = vmatprep.subr.mxu0 0.0
  %8157 = vmatpush1.msra.mxu0 0.0
  %8158 = vmatprep.subr.mxu0 0.0
  %8159 = vmatpush1.msra.mxu0 0.0
  %8160 = vmatprep.subr.mxu0 0.0
  %8161 = vmatpush1.msra.mxu0 0.0
  %8162 = vmatprep.subr.mxu0 0.0
  %8163 = vmatpush1.msra.mxu0 0.0
  %8164 = vmatprep.subr.mxu0 0.0
  %8165 = vmatpush1.msra.mxu0 0.0
  %8166 = vmatprep.subr.mxu0 0.0
  %8167 = vmatpush1.msra.mxu0 0.0
  %8168 = vmatprep.subr.mxu0 0.0
  %8169 = vmatpush1.msra.mxu0 0.0
  %8170 = vmatprep.subr.mxu0 0.0
  %8171 = vmatpush1.msra.mxu0 0.0
  %8172 = vmatprep.subr.mxu0 0.0
  %8173 = vmatpush1.msra.mxu0 0.0
  %8174 = vmatprep.subr.mxu0 0.0
  %8175 = vmatpush1.msra.mxu0 0.0
  %8176 = vmatprep.subr.mxu0 0.0
  %8177 = vmatpush1.msra.mxu0 0.0
  %8178 = vmatprep.subr.mxu0 0.0
  %8179 = vmatpush1.msra.mxu0 0.0
  %8180 = vmatprep.subr.mxu0 0.0
  %8181 = vmatpush1.msra.mxu0 0.0
  %8182 = vmatprep.subr.mxu0 0.0
  %8183 = vmatpush1.msra.mxu0 0.0
  %8184 = vmatprep.subr.mxu0 0.0
  %8185 = vmatpush1.msra.mxu0 0.0
  %8186 = vmatprep.subr.mxu0 0.0
  %8187 = vmatpush1.msra.mxu0 0.0
  %8188 = vmatprep.subr.mxu0 0.0
  %8189 = vmatpush1.msra.mxu0 0.0
  %8190 = vmatprep.subr.mxu0 0.0
  %8191 = vmatpush1.msra.mxu0 0.0
  %8192 = vmatprep.subr.mxu0 0.0
  %8193 = vmatpush1.msra.mxu0 0.0
  %8194 = vmatprep.subr.mxu0 0.0
  %8195 = vmatpush1.msra.mxu0 0.0
  %8196 = vmatprep.mubr.f32.mxu0 0.0
  %8197 = vmatmul.mubr.f32.gmra.mrb[0].mxu0 %v8059
  %v8198 = vpop.f32.mrb[0].mxu0
  %v8199 = vadd.f32 0.0, %v8198
  %v8200 = vpop.f32.mrb[0].mxu0
  %8201 = vdwg.mxu0
  %v8202 = vadd.f32 %v6549, %v8199
  %8203 = vmatprep.subr.mxu0 0.0
  %8204 = vmatpush1.msra.mxu0 %v798
  %8205 = vmatprep.subr.mxu0 0.0
  %8206 = vmatpush1.msra.mxu0 %v800
  %8207 = vmatprep.subr.mxu0 0.0
  %8208 = vmatpush1.msra.mxu0 %v802
  %8209 = vmatprep.subr.mxu0 0.0
  %8210 = vmatpush1.msra.mxu0 %v804
  %8211 = vmatprep.subr.mxu0 0.0
  %8212 = vmatpush1.msra.mxu0 0.0
  %8213 = vmatprep.subr.mxu0 0.0
  %8214 = vmatpush1.msra.mxu0 0.0
  %8215 = vmatprep.subr.mxu0 0.0
  %8216 = vmatpush1.msra.mxu0 0.0
  %8217 = vmatprep.subr.mxu0 0.0
  %8218 = vmatpush1.msra.mxu0 0.0
  %8219 = vmatprep.subr.mxu0 0.0
  %8220 = vmatpush1.msra.mxu0 0.0
  %8221 = vmatprep.subr.mxu0 0.0
  %8222 = vmatpush1.msra.mxu0 0.0
  %8223 = vmatprep.subr.mxu0 0.0
  %8224 = vmatpush1.msra.mxu0 0.0
  %8225 = vmatprep.subr.mxu0 0.0
  %8226 = vmatpush1.msra.mxu0 0.0
  %8227 = vmatprep.subr.mxu0 0.0
  %8228 = vmatpush1.msra.mxu0 0.0
  %8229 = vmatprep.subr.mxu0 0.0
  %8230 = vmatpush1.msra.mxu0 0.0
  %8231 = vmatprep.subr.mxu0 0.0
  %8232 = vmatpush1.msra.mxu0 0.0
  %8233 = vmatprep.subr.mxu0 0.0
  %8234 = vmatpush1.msra.mxu0 0.0
  %8235 = vmatprep.subr.mxu0 0.0
  %8236 = vmatpush1.msra.mxu0 0.0
  %8237 = vmatprep.subr.mxu0 0.0
  %8238 = vmatpush1.msra.mxu0 0.0
  %8239 = vmatprep.subr.mxu0 0.0
  %8240 = vmatpush1.msra.mxu0 0.0
  %8241 = vmatprep.subr.mxu0 0.0
  %8242 = vmatpush1.msra.mxu0 0.0
  %8243 = vmatprep.subr.mxu0 0.0
  %8244 = vmatpush1.msra.mxu0 0.0
  %8245 = vmatprep.subr.mxu0 0.0
  %8246 = vmatpush1.msra.mxu0 0.0
  %8247 = vmatprep.subr.mxu0 0.0
  %8248 = vmatpush1.msra.mxu0 0.0
  %8249 = vmatprep.subr.mxu0 0.0
  %8250 = vmatpush1.msra.mxu0 0.0
  %8251 = vmatprep.subr.mxu0 0.0
  %8252 = vmatpush1.msra.mxu0 0.0
  %8253 = vmatprep.subr.mxu0 0.0
  %8254 = vmatpush1.msra.mxu0 0.0
  %8255 = vmatprep.subr.mxu0 0.0
  %8256 = vmatpush1.msra.mxu0 0.0
  %8257 = vmatprep.subr.mxu0 0.0
  %8258 = vmatpush1.msra.mxu0 0.0
  %8259 = vmatprep.subr.mxu0 0.0
  %8260 = vmatpush1.msra.mxu0 0.0
  %8261 = vmatprep.subr.mxu0 0.0
  %8262 = vmatpush1.msra.mxu0 0.0
  %8263 = vmatprep.subr.mxu0 0.0
  %8264 = vmatpush1.msra.mxu0 0.0
  %8265 = vmatprep.subr.mxu0 0.0
  %8266 = vmatpush1.msra.mxu0 0.0
  %8267 = vmatprep.mubr.f32.mxu0 0.0
  %8268 = vmatmul.mubr.f32.gmra.mrb[0].mxu0 %v8059
  %v8269 = vpop.f32.mrb[0].mxu0
  %v8270 = vadd.f32 0.0, %v8269
  %v8271 = vpop.f32.mrb[0].mxu0
  %8272 = vdwg.mxu0
  %v8273 = vadd.f32 %v6676, %v8270
  %8274 = vmatprep.subr.mxu0 0.0
  %8275 = vmatpush1.msra.mxu0 %v881
  %8276 = vmatprep.subr.mxu0 0.0
  %8277 = vmatpush1.msra.mxu0 %v883
  %8278 = vmatprep.subr.mxu0 0.0
  %8279 = vmatpush1.msra.mxu0 %v885
  %8280 = vmatprep.subr.mxu0 0.0
  %8281 = vmatpush1.msra.mxu0 %v887
  %8282 = vmatprep.subr.mxu0 0.0
  %8283 = vmatpush1.msra.mxu0 0.0
  %8284 = vmatprep.subr.mxu0 0.0
  %8285 = vmatpush1.msra.mxu0 0.0
  %8286 = vmatprep.subr.mxu0 0.0
  %8287 = vmatpush1.msra.mxu0 0.0
  %8288 = vmatprep.subr.mxu0 0.0
  %8289 = vmatpush1.msra.mxu0 0.0
  %8290 = vmatprep.subr.mxu0 0.0
  %8291 = vmatpush1.msra.mxu0 0.0
  %8292 = vmatprep.subr.mxu0 0.0
  %8293 = vmatpush1.msra.mxu0 0.0
  %8294 = vmatprep.subr.mxu0 0.0
  %8295 = vmatpush1.msra.mxu0 0.0
  %8296 = vmatprep.subr.mxu0 0.0
  %8297 = vmatpush1.msra.mxu0 0.0
  %8298 = vmatprep.subr.mxu0 0.0
  %8299 = vmatpush1.msra.mxu0 0.0
  %8300 = vmatprep.subr.mxu0 0.0
  %8301 = vmatpush1.msra.mxu0 0.0
  %8302 = vmatprep.subr.mxu0 0.0
  %8303 = vmatpush1.msra.mxu0 0.0
  %8304 = vmatprep.subr.mxu0 0.0
  %8305 = vmatpush1.msra.mxu0 0.0
  %8306 = vmatprep.subr.mxu0 0.0
  %8307 = vmatpush1.msra.mxu0 0.0
  %8308 = vmatprep.subr.mxu0 0.0
  %8309 = vmatpush1.msra.mxu0 0.0
  %8310 = vmatprep.subr.mxu0 0.0
  %8311 = vmatpush1.msra.mxu0 0.0
  %8312 = vmatprep.subr.mxu0 0.0
  %8313 = vmatpush1.msra.mxu0 0.0
  %8314 = vmatprep.subr.mxu0 0.0
  %8315 = vmatpush1.msra.mxu0 0.0
  %8316 = vmatprep.subr.mxu0 0.0
  %8317 = vmatpush1.msra.mxu0 0.0
  %8318 = vmatprep.subr.mxu0 0.0
  %8319 = vmatpush1.msra.mxu0 0.0
  %8320 = vmatprep.subr.mxu0 0.0
  %8321 = vmatpush1.msra.mxu0 0.0
  %8322 = vmatprep.subr.mxu0 0.0
  %8323 = vmatpush1.msra.mxu0 0.0
  %8324 = vmatprep.subr.mxu0 0.0
  %8325 = vmatpush1.msra.mxu0 0.0
  %8326 = vmatprep.subr.mxu0 0.0
  %8327 = vmatpush1.msra.mxu0 0.0
  %8328 = vmatprep.subr.mxu0 0.0
  %8329 = vmatpush1.msra.mxu0 0.0
  %8330 = vmatprep.subr.mxu0 0.0
  %8331 = vmatpush1.msra.mxu0 0.0
  %8332 = vmatprep.subr.mxu0 0.0
  %8333 = vmatpush1.msra.mxu0 0.0
  %8334 = vmatprep.subr.mxu0 0.0
  %8335 = vmatpush1.msra.mxu0 0.0
  %8336 = vmatprep.subr.mxu0 0.0
  %8337 = vmatpush1.msra.mxu0 0.0
  %8338 = vmatprep.mubr.f32.mxu0 0.0
  %8339 = vmatmul.mubr.f32.gmra.mrb[0].mxu0 %v8059
  %v8340 = vpop.f32.mrb[0].mxu0
  %v8341 = vadd.f32 0.0, %v8340
  %v8342 = vpop.f32.mrb[0].mxu0
  %8343 = vdwg.mxu0
  %v8344 = vadd.f32 %v6803, %v8341
  %v8345 = vxor.u32 %v8131, 2147483648
  %v8346 = vmul.f32 %v8345, 1.442695
  %v8347 = vpow.pop %v8346
  %v8348 = vadd.f32 %v8347, 1.0
  %v8349 = vrcp.pop %v8348
  %v8350 = vmul.f32 1.0, %v8349
  %v8351 = vxor.u32 %v8202, 2147483648
  %v8352 = vmul.f32 %v8351, 1.442695
  %v8353 = vpow.pop %v8352
  %v8354 = vadd.f32 %v8353, 1.0
  %v8355 = vrcp.pop %v8354
  %v8356 = vmul.f32 1.0, %v8355
  %v8357 = vtanh.pop %v8273
  %v8358 = vxor.u32 %v8344, 2147483648
  %v8359 = vmul.f32 %v8358, 1.442695
  %v8360 = vpow.pop %v8359
  %v8361 = vadd.f32 %v8360, 1.0
  %v8362 = vrcp.pop %v8361
  %v8363 = vmul.f32 1.0, %v8362
  %v8364 = vmul.f32 %v8356, %v8053
  %v8365 = vmul.f32 %v8350, %v8357
  %v8366 = vadd.f32 %v8364, %v8365
  %v8367 = vtanh.pop %v8366
  %v8368 = vmul.f32 %v8363, %v8367
  %s8369 = scalar_lea.vmem [#allocation4], 8
  %8370 = vst.msk [vmem:[%s8369] sm:$0x3] %vm987, %v8368
  %v8372 = vsel %vm90, %v8368, 0
  %8374 = vmatprep.subr.mxu0 0.0
  %8375 = vmatpush1.msra.mxu0 %v37
  %8376 = vmatprep.subr.mxu0 0.0
  %8377 = vmatpush1.msra.mxu0 %v38
  %8378 = vmatprep.subr.mxu0 0.0
  %8379 = vmatpush1.msra.mxu0 %v39
  %8380 = vmatprep.subr.mxu0 0.0
  %8381 = vmatpush1.msra.mxu0 %v40
  %8382 = vmatprep.subr.mxu0 0.0
  %8383 = vmatpush1.msra.mxu0 0.0
  %8384 = vmatprep.subr.mxu0 0.0
  %8385 = vmatpush1.msra.mxu0 0.0
  %8386 = vmatprep.subr.mxu0 0.0
  %8387 = vmatpush1.msra.mxu0 0.0
  %8388 = vmatprep.subr.mxu0 0.0
  %8389 = vmatpush1.msra.mxu0 0.0
  %8390 = vmatprep.subr.mxu0 0.0
  %8391 = vmatpush1.msra.mxu0 0.0
  %8392 = vmatprep.subr.mxu0 0.0
  %8393 = vmatpush1.msra.mxu0 0.0
  %8394 = vmatprep.subr.mxu0 0.0
  %8395 = vmatpush1.msra.mxu0 0.0
  %8396 = vmatprep.subr.mxu0 0.0
  %8397 = vmatpush1.msra.mxu0 0.0
  %8398 = vmatprep.subr.mxu0 0.0
  %8399 = vmatpush1.msra.mxu0 0.0
  %8400 = vmatprep.subr.mxu0 0.0
  %8401 = vmatpush1.msra.mxu0 0.0
  %8402 = vmatprep.subr.mxu0 0.0
  %8403 = vmatpush1.msra.mxu0 0.0
  %8404 = vmatprep.subr.mxu0 0.0
  %8405 = vmatpush1.msra.mxu0 0.0
  %8406 = vmatprep.subr.mxu0 0.0
  %8407 = vmatpush1.msra.mxu0 0.0
  %8408 = vmatprep.subr.mxu0 0.0
  %8409 = vmatpush1.msra.mxu0 0.0
  %8410 = vmatprep.subr.mxu0 0.0
  %8411 = vmatpush1.msra.mxu0 0.0
  %8412 = vmatprep.subr.mxu0 0.0
  %8413 = vmatpush1.msra.mxu0 0.0
  %8414 = vmatprep.subr.mxu0 0.0
  %8415 = vmatpush1.msra.mxu0 0.0
  %8416 = vmatprep.subr.mxu0 0.0
  %8417 = vmatpush1.msra.mxu0 0.0
  %8418 = vmatprep.subr.mxu0 0.0
  %8419 = vmatpush1.msra.mxu0 0.0
  %8420 = vmatprep.subr.mxu0 0.0
  %8421 = vmatpush1.msra.mxu0 0.0
  %8422 = vmatprep.subr.mxu0 0.0
  %8423 = vmatpush1.msra.mxu0 0.0
  %8424 = vmatprep.subr.mxu0 0.0
  %8425 = vmatpush1.msra.mxu0 0.0
  %8426 = vmatprep.subr.mxu0 0.0
  %8427 = vmatpush1.msra.mxu0 0.0
  %8428 = vmatprep.subr.mxu0 0.0
  %8429 = vmatpush1.msra.mxu0 0.0
  %8430 = vmatprep.subr.mxu0 0.0
  %8431 = vmatpush1.msra.mxu0 0.0
  %8432 = vmatprep.subr.mxu0 0.0
  %8433 = vmatpush1.msra.mxu0 0.0
  %8434 = vmatprep.subr.mxu0 0.0
  %8435 = vmatpush1.msra.mxu0 0.0
  %8436 = vmatprep.subr.mxu0 0.0
  %8437 = vmatpush1.msra.mxu0 0.0
  %8438 = vmatprep.mubr.f32.mxu0 0.0
  %8439 = vmatmul.mubr.f32.gmra.mrb[0].mxu0 %v8372
  %v8440 = vpop.f32.mrb[0].mxu0
  %v8441 = vadd.f32 0.0, %v8440
  %v8442 = vpop.f32.mrb[0].mxu0
  %8443 = vdwg.mxu0
  %v8444 = vadd.f32 %v6423, %v8441
  %8445 = vmatprep.subr.mxu0 0.0
  %8446 = vmatpush1.msra.mxu0 %v715
  %8447 = vmatprep.subr.mxu0 0.0
  %8448 = vmatpush1.msra.mxu0 %v717
  %8449 = vmatprep.subr.mxu0 0.0
  %8450 = vmatpush1.msra.mxu0 %v719
  %8451 = vmatprep.subr.mxu0 0.0
  %8452 = vmatpush1.msra.mxu0 %v721
  %8453 = vmatprep.subr.mxu0 0.0
  %8454 = vmatpush1.msra.mxu0 0.0
  %8455 = vmatprep.subr.mxu0 0.0
  %8456 = vmatpush1.msra.mxu0 0.0
  %8457 = vmatprep.subr.mxu0 0.0
  %8458 = vmatpush1.msra.mxu0 0.0
  %8459 = vmatprep.subr.mxu0 0.0
  %8460 = vmatpush1.msra.mxu0 0.0
  %8461 = vmatprep.subr.mxu0 0.0
  %8462 = vmatpush1.msra.mxu0 0.0
  %8463 = vmatprep.subr.mxu0 0.0
  %8464 = vmatpush1.msra.mxu0 0.0
  %8465 = vmatprep.subr.mxu0 0.0
  %8466 = vmatpush1.msra.mxu0 0.0
  %8467 = vmatprep.subr.mxu0 0.0
  %8468 = vmatpush1.msra.mxu0 0.0
  %8469 = vmatprep.subr.mxu0 0.0
  %8470 = vmatpush1.msra.mxu0 0.0
  %8471 = vmatprep.subr.mxu0 0.0
  %8472 = vmatpush1.msra.mxu0 0.0
  %8473 = vmatprep.subr.mxu0 0.0
  %8474 = vmatpush1.msra.mxu0 0.0
  %8475 = vmatprep.subr.mxu0 0.0
  %8476 = vmatpush1.msra.mxu0 0.0
  %8477 = vmatprep.subr.mxu0 0.0
  %8478 = vmatpush1.msra.mxu0 0.0
  %8479 = vmatprep.subr.mxu0 0.0
  %8480 = vmatpush1.msra.mxu0 0.0
  %8481 = vmatprep.subr.mxu0 0.0
  %8482 = vmatpush1.msra.mxu0 0.0
  %8483 = vmatprep.subr.mxu0 0.0
  %8484 = vmatpush1.msra.mxu0 0.0
  %8485 = vmatprep.subr.mxu0 0.0
  %8486 = vmatpush1.msra.mxu0 0.0
  %8487 = vmatprep.subr.mxu0 0.0
  %8488 = vmatpush1.msra.mxu0 0.0
  %8489 = vmatprep.subr.mxu0 0.0
  %8490 = vmatpush1.msra.mxu0 0.0
  %8491 = vmatprep.subr.mxu0 0.0
  %8492 = vmatpush1.msra.mxu0 0.0
  %8493 = vmatprep.subr.mxu0 0.0
  %8494 = vmatpush1.msra.mxu0 0.0
  %8495 = vmatprep.subr.mxu0 0.0
  %8496 = vmatpush1.msra.mxu0 0.0
  %8497 = vmatprep.subr.mxu0 0.0
  %8498 = vmatpush1.msra.mxu0 0.0
  %8499 = vmatprep.subr.mxu0 0.0
  %8500 = vmatpush1.msra.mxu0 0.0
  %8501 = vmatprep.subr.mxu0 0.0
  %8502 = vmatpush1.msra.mxu0 0.0
  %8503 = vmatprep.subr.mxu0 0.0
  %8504 = vmatpush1.msra.mxu0 0.0
  %8505 = vmatprep.subr.mxu0 0.0
  %8506 = vmatpush1.msra.mxu0 0.0
  %8507 = vmatprep.subr.mxu0 0.0
  %8508 = vmatpush1.msra.mxu0 0.0
  %8509 = vmatprep.mubr.f32.mxu0 0.0
  %8510 = vmatmul.mubr.f32.gmra.mrb[0].mxu0 %v8372
  %v8511 = vpop.f32.mrb[0].mxu0
  %v8512 = vadd.f32 0.0, %v8511
  %v8513 = vpop.f32.mrb[0].mxu0
  %8514 = vdwg.mxu0
  %v8515 = vadd.f32 %v6550, %v8512
  %8516 = vmatprep.subr.mxu0 0.0
  %8517 = vmatpush1.msra.mxu0 %v798
  %8518 = vmatprep.subr.mxu0 0.0
  %8519 = vmatpush1.msra.mxu0 %v800
  %8520 = vmatprep.subr.mxu0 0.0
  %8521 = vmatpush1.msra.mxu0 %v802
  %8522 = vmatprep.subr.mxu0 0.0
  %8523 = vmatpush1.msra.mxu0 %v804
  %8524 = vmatprep.subr.mxu0 0.0
  %8525 = vmatpush1.msra.mxu0 0.0
  %8526 = vmatprep.subr.mxu0 0.0
  %8527 = vmatpush1.msra.mxu0 0.0
  %8528 = vmatprep.subr.mxu0 0.0
  %8529 = vmatpush1.msra.mxu0 0.0
  %8530 = vmatprep.subr.mxu0 0.0
  %8531 = vmatpush1.msra.mxu0 0.0
  %8532 = vmatprep.subr.mxu0 0.0
  %8533 = vmatpush1.msra.mxu0 0.0
  %8534 = vmatprep.subr.mxu0 0.0
  %8535 = vmatpush1.msra.mxu0 0.0
  %8536 = vmatprep.subr.mxu0 0.0
  %8537 = vmatpush1.msra.mxu0 0.0
  %8538 = vmatprep.subr.mxu0 0.0
  %8539 = vmatpush1.msra.mxu0 0.0
  %8540 = vmatprep.subr.mxu0 0.0
  %8541 = vmatpush1.msra.mxu0 0.0
  %8542 = vmatprep.subr.mxu0 0.0
  %8543 = vmatpush1.msra.mxu0 0.0
  %8544 = vmatprep.subr.mxu0 0.0
  %8545 = vmatpush1.msra.mxu0 0.0
  %8546 = vmatprep.subr.mxu0 0.0
  %8547 = vmatpush1.msra.mxu0 0.0
  %8548 = vmatprep.subr.mxu0 0.0
  %8549 = vmatpush1.msra.mxu0 0.0
  %8550 = vmatprep.subr.mxu0 0.0
  %8551 = vmatpush1.msra.mxu0 0.0
  %8552 = vmatprep.subr.mxu0 0.0
  %8553 = vmatpush1.msra.mxu0 0.0
  %8554 = vmatprep.subr.mxu0 0.0
  %8555 = vmatpush1.msra.mxu0 0.0
  %8556 = vmatprep.subr.mxu0 0.0
  %8557 = vmatpush1.msra.mxu0 0.0
  %8558 = vmatprep.subr.mxu0 0.0
  %8559 = vmatpush1.msra.mxu0 0.0
  %8560 = vmatprep.subr.mxu0 0.0
  %8561 = vmatpush1.msra.mxu0 0.0
  %8562 = vmatprep.subr.mxu0 0.0
  %8563 = vmatpush1.msra.mxu0 0.0
  %8564 = vmatprep.subr.mxu0 0.0
  %8565 = vmatpush1.msra.mxu0 0.0
  %8566 = vmatprep.subr.mxu0 0.0
  %8567 = vmatpush1.msra.mxu0 0.0
  %8568 = vmatprep.subr.mxu0 0.0
  %8569 = vmatpush1.msra.mxu0 0.0
  %8570 = vmatprep.subr.mxu0 0.0
  %8571 = vmatpush1.msra.mxu0 0.0
  %8572 = vmatprep.subr.mxu0 0.0
  %8573 = vmatpush1.msra.mxu0 0.0
  %8574 = vmatprep.subr.mxu0 0.0
  %8575 = vmatpush1.msra.mxu0 0.0
  %8576 = vmatprep.subr.mxu0 0.0
  %8577 = vmatpush1.msra.mxu0 0.0
  %8578 = vmatprep.subr.mxu0 0.0
  %8579 = vmatpush1.msra.mxu0 0.0
  %8580 = vmatprep.mubr.f32.mxu0 0.0
  %8581 = vmatmul.mubr.f32.gmra.mrb[0].mxu0 %v8372
  %v8582 = vpop.f32.mrb[0].mxu0
  %v8583 = vadd.f32 0.0, %v8582
  %v8584 = vpop.f32.mrb[0].mxu0
  %8585 = vdwg.mxu0
  %v8586 = vadd.f32 %v6677, %v8583
  %8587 = vmatprep.subr.mxu0 0.0
  %8588 = vmatpush1.msra.mxu0 %v881
  %8589 = vmatprep.subr.mxu0 0.0
  %8590 = vmatpush1.msra.mxu0 %v883
  %8591 = vmatprep.subr.mxu0 0.0
  %8592 = vmatpush1.msra.mxu0 %v885
  %8593 = vmatprep.subr.mxu0 0.0
  %8594 = vmatpush1.msra.mxu0 %v887
  %8595 = vmatprep.subr.mxu0 0.0
  %8596 = vmatpush1.msra.mxu0 0.0
  %8597 = vmatprep.subr.mxu0 0.0
  %8598 = vmatpush1.msra.mxu0 0.0
  %8599 = vmatprep.subr.mxu0 0.0
  %8600 = vmatpush1.msra.mxu0 0.0
  %8601 = vmatprep.subr.mxu0 0.0
  %8602 = vmatpush1.msra.mxu0 0.0
  %8603 = vmatprep.subr.mxu0 0.0
  %8604 = vmatpush1.msra.mxu0 0.0
  %8605 = vmatprep.subr.mxu0 0.0
  %8606 = vmatpush1.msra.mxu0 0.0
  %8607 = vmatprep.subr.mxu0 0.0
  %8608 = vmatpush1.msra.mxu0 0.0
  %8609 = vmatprep.subr.mxu0 0.0
  %8610 = vmatpush1.msra.mxu0 0.0
  %8611 = vmatprep.subr.mxu0 0.0
  %8612 = vmatpush1.msra.mxu0 0.0
  %8613 = vmatprep.subr.mxu0 0.0
  %8614 = vmatpush1.msra.mxu0 0.0
  %8615 = vmatprep.subr.mxu0 0.0
  %8616 = vmatpush1.msra.mxu0 0.0
  %8617 = vmatprep.subr.mxu0 0.0
  %8618 = vmatpush1.msra.mxu0 0.0
  %8619 = vmatprep.subr.mxu0 0.0
  %8620 = vmatpush1.msra.mxu0 0.0
  %8621 = vmatprep.subr.mxu0 0.0
  %8622 = vmatpush1.msra.mxu0 0.0
  %8623 = vmatprep.subr.mxu0 0.0
  %8624 = vmatpush1.msra.mxu0 0.0
  %8625 = vmatprep.subr.mxu0 0.0
  %8626 = vmatpush1.msra.mxu0 0.0
  %8627 = vmatprep.subr.mxu0 0.0
  %8628 = vmatpush1.msra.mxu0 0.0
  %8629 = vmatprep.subr.mxu0 0.0
  %8630 = vmatpush1.msra.mxu0 0.0
  %8631 = vmatprep.subr.mxu0 0.0
  %8632 = vmatpush1.msra.mxu0 0.0
  %8633 = vmatprep.subr.mxu0 0.0
  %8634 = vmatpush1.msra.mxu0 0.0
  %8635 = vmatprep.subr.mxu0 0.0
  %8636 = vmatpush1.msra.mxu0 0.0
  %8637 = vmatprep.subr.mxu0 0.0
  %8638 = vmatpush1.msra.mxu0 0.0
  %8639 = vmatprep.subr.mxu0 0.0
  %8640 = vmatpush1.msra.mxu0 0.0
  %8641 = vmatprep.subr.mxu0 0.0
  %8642 = vmatpush1.msra.mxu0 0.0
  %8643 = vmatprep.subr.mxu0 0.0
  %8644 = vmatpush1.msra.mxu0 0.0
  %8645 = vmatprep.subr.mxu0 0.0
  %8646 = vmatpush1.msra.mxu0 0.0
  %8647 = vmatprep.subr.mxu0 0.0
  %8648 = vmatpush1.msra.mxu0 0.0
  %8649 = vmatprep.subr.mxu0 0.0
  %8650 = vmatpush1.msra.mxu0 0.0
  %8651 = vmatprep.mubr.f32.mxu0 0.0
  %8652 = vmatmul.mubr.f32.gmra.mrb[0].mxu0 %v8372
  %v8653 = vpop.f32.mrb[0].mxu0
  %v8654 = vadd.f32 0.0, %v8653
  %v8655 = vpop.f32.mrb[0].mxu0
  %8656 = vdwg.mxu0
  %v8657 = vadd.f32 %v6804, %v8654
  %v8658 = vxor.u32 %v8444, 2147483648
  %v8659 = vmul.f32 %v8658, 1.442695
  %v8660 = vpow.pop %v8659
  %v8661 = vadd.f32 %v8660, 1.0
  %v8662 = vrcp.pop %v8661
  %v8663 = vmul.f32 1.0, %v8662
  %v8664 = vxor.u32 %v8515, 2147483648
  %v8665 = vmul.f32 %v8664, 1.442695
  %v8666 = vpow.pop %v8665
  %v8667 = vadd.f32 %v8666, 1.0
  %v8668 = vrcp.pop %v8667
  %v8669 = vmul.f32 1.0, %v8668
  %v8670 = vtanh.pop %v8586
  %v8671 = vxor.u32 %v8657, 2147483648
  %v8672 = vmul.f32 %v8671, 1.442695
  %v8673 = vpow.pop %v8672
  %v8674 = vadd.f32 %v8673, 1.0
  %v8675 = vrcp.pop %v8674
  %v8676 = vmul.f32 1.0, %v8675
  %v8677 = vmul.f32 %v8669, %v8366
  %v8678 = vmul.f32 %v8663, %v8670
  %v8679 = vadd.f32 %v8677, %v8678
  %v8680 = vtanh.pop %v8679
  %v8681 = vmul.f32 %v8676, %v8680
  %s8682 = scalar_lea.vmem [#allocation4], 10
  %8683 = vst.msk [vmem:[%s8682] sm:$0x3] %vm987, %v8681
  %v8685 = vsel %vm90, %v8681, 0
  %8687 = vmatprep.subr.mxu0 0.0
  %8688 = vmatpush1.msra.mxu0 %v37
  %8689 = vmatprep.subr.mxu0 0.0
  %8690 = vmatpush1.msra.mxu0 %v38
  %8691 = vmatprep.subr.mxu0 0.0
  %8692 = vmatpush1.msra.mxu0 %v39
  %8693 = vmatprep.subr.mxu0 0.0
  %8694 = vmatpush1.msra.mxu0 %v40
  %8695 = vmatprep.subr.mxu0 0.0
  %8696 = vmatpush1.msra.mxu0 0.0
  %8697 = vmatprep.subr.mxu0 0.0
  %8698 = vmatpush1.msra.mxu0 0.0
  %8699 = vmatprep.subr.mxu0 0.0
  %8700 = vmatpush1.msra.mxu0 0.0
  %8701 = vmatprep.subr.mxu0 0.0
  %8702 = vmatpush1.msra.mxu0 0.0
  %8703 = vmatprep.subr.mxu0 0.0
  %8704 = vmatpush1.msra.mxu0 0.0
  %8705 = vmatprep.subr.mxu0 0.0
  %8706 = vmatpush1.msra.mxu0 0.0
  %8707 = vmatprep.subr.mxu0 0.0
  %8708 = vmatpush1.msra.mxu0 0.0
  %8709 = vmatprep.subr.mxu0 0.0
  %8710 = vmatpush1.msra.mxu0 0.0
  %8711 = vmatprep.subr.mxu0 0.0
  %8712 = vmatpush1.msra.mxu0 0.0
  %8713 = vmatprep.subr.mxu0 0.0
  %8714 = vmatpush1.msra.mxu0 0.0
  %8715 = vmatprep.subr.mxu0 0.0
  %8716 = vmatpush1.msra.mxu0 0.0
  %8717 = vmatprep.subr.mxu0 0.0
  %8718 = vmatpush1.msra.mxu0 0.0
  %8719 = vmatprep.subr.mxu0 0.0
  %8720 = vmatpush1.msra.mxu0 0.0
  %8721 = vmatprep.subr.mxu0 0.0
  %8722 = vmatpush1.msra.mxu0 0.0
  %8723 = vmatprep.subr.mxu0 0.0
  %8724 = vmatpush1.msra.mxu0 0.0
  %8725 = vmatprep.subr.mxu0 0.0
  %8726 = vmatpush1.msra.mxu0 0.0
  %8727 = vmatprep.subr.mxu0 0.0
  %8728 = vmatpush1.msra.mxu0 0.0
  %8729 = vmatprep.subr.mxu0 0.0
  %8730 = vmatpush1.msra.mxu0 0.0
  %8731 = vmatprep.subr.mxu0 0.0
  %8732 = vmatpush1.msra.mxu0 0.0
  %8733 = vmatprep.subr.mxu0 0.0
  %8734 = vmatpush1.msra.mxu0 0.0
  %8735 = vmatprep.subr.mxu0 0.0
  %8736 = vmatpush1.msra.mxu0 0.0
  %8737 = vmatprep.subr.mxu0 0.0
  %8738 = vmatpush1.msra.mxu0 0.0
  %8739 = vmatprep.subr.mxu0 0.0
  %8740 = vmatpush1.msra.mxu0 0.0
  %8741 = vmatprep.subr.mxu0 0.0
  %8742 = vmatpush1.msra.mxu0 0.0
  %8743 = vmatprep.subr.mxu0 0.0
  %8744 = vmatpush1.msra.mxu0 0.0
  %8745 = vmatprep.subr.mxu0 0.0
  %8746 = vmatpush1.msra.mxu0 0.0
  %8747 = vmatprep.subr.mxu0 0.0
  %8748 = vmatpush1.msra.mxu0 0.0
  %8749 = vmatprep.subr.mxu0 0.0
  %8750 = vmatpush1.msra.mxu0 0.0
  %8751 = vmatprep.mubr.f32.mxu0 0.0
  %8752 = vmatmul.mubr.f32.gmra.mrb[0].mxu0 %v8685
  %v8753 = vpop.f32.mrb[0].mxu0
  %v8754 = vadd.f32 0.0, %v8753
  %v8755 = vpop.f32.mrb[0].mxu0
  %8756 = vdwg.mxu0
  %v8757 = vadd.f32 %v6424, %v8754
  %8758 = vmatprep.subr.mxu0 0.0
  %8759 = vmatpush1.msra.mxu0 %v715
  %8760 = vmatprep.subr.mxu0 0.0
  %8761 = vmatpush1.msra.mxu0 %v717
  %8762 = vmatprep.subr.mxu0 0.0
  %8763 = vmatpush1.msra.mxu0 %v719
  %8764 = vmatprep.subr.mxu0 0.0
  %8765 = vmatpush1.msra.mxu0 %v721
  %8766 = vmatprep.subr.mxu0 0.0
  %8767 = vmatpush1.msra.mxu0 0.0
  %8768 = vmatprep.subr.mxu0 0.0
  %8769 = vmatpush1.msra.mxu0 0.0
  %8770 = vmatprep.subr.mxu0 0.0
  %8771 = vmatpush1.msra.mxu0 0.0
  %8772 = vmatprep.subr.mxu0 0.0
  %8773 = vmatpush1.msra.mxu0 0.0
  %8774 = vmatprep.subr.mxu0 0.0
  %8775 = vmatpush1.msra.mxu0 0.0
  %8776 = vmatprep.subr.mxu0 0.0
  %8777 = vmatpush1.msra.mxu0 0.0
  %8778 = vmatprep.subr.mxu0 0.0
  %8779 = vmatpush1.msra.mxu0 0.0
  %8780 = vmatprep.subr.mxu0 0.0
  %8781 = vmatpush1.msra.mxu0 0.0
  %8782 = vmatprep.subr.mxu0 0.0
  %8783 = vmatpush1.msra.mxu0 0.0
  %8784 = vmatprep.subr.mxu0 0.0
  %8785 = vmatpush1.msra.mxu0 0.0
  %8786 = vmatprep.subr.mxu0 0.0
  %8787 = vmatpush1.msra.mxu0 0.0
  %8788 = vmatprep.subr.mxu0 0.0
  %8789 = vmatpush1.msra.mxu0 0.0
  %8790 = vmatprep.subr.mxu0 0.0
  %8791 = vmatpush1.msra.mxu0 0.0
  %8792 = vmatprep.subr.mxu0 0.0
  %8793 = vmatpush1.msra.mxu0 0.0
  %8794 = vmatprep.subr.mxu0 0.0
  %8795 = vmatpush1.msra.mxu0 0.0
  %8796 = vmatprep.subr.mxu0 0.0
  %8797 = vmatpush1.msra.mxu0 0.0
  %8798 = vmatprep.subr.mxu0 0.0
  %8799 = vmatpush1.msra.mxu0 0.0
  %8800 = vmatprep.subr.mxu0 0.0
  %8801 = vmatpush1.msra.mxu0 0.0
  %8802 = vmatprep.subr.mxu0 0.0
  %8803 = vmatpush1.msra.mxu0 0.0
  %8804 = vmatprep.subr.mxu0 0.0
  %8805 = vmatpush1.msra.mxu0 0.0
  %8806 = vmatprep.subr.mxu0 0.0
  %8807 = vmatpush1.msra.mxu0 0.0
  %8808 = vmatprep.subr.mxu0 0.0
  %8809 = vmatpush1.msra.mxu0 0.0
  %8810 = vmatprep.subr.mxu0 0.0
  %8811 = vmatpush1.msra.mxu0 0.0
  %8812 = vmatprep.subr.mxu0 0.0
  %8813 = vmatpush1.msra.mxu0 0.0
  %8814 = vmatprep.subr.mxu0 0.0
  %8815 = vmatpush1.msra.mxu0 0.0
  %8816 = vmatprep.subr.mxu0 0.0
  %8817 = vmatpush1.msra.mxu0 0.0
  %8818 = vmatprep.subr.mxu0 0.0
  %8819 = vmatpush1.msra.mxu0 0.0
  %8820 = vmatprep.subr.mxu0 0.0
  %8821 = vmatpush1.msra.mxu0 0.0
  %8822 = vmatprep.mubr.f32.mxu0 0.0
  %8823 = vmatmul.mubr.f32.gmra.mrb[0].mxu0 %v8685
  %v8824 = vpop.f32.mrb[0].mxu0
  %v8825 = vadd.f32 0.0, %v8824
  %v8826 = vpop.f32.mrb[0].mxu0
  %8827 = vdwg.mxu0
  %v8828 = vadd.f32 %v6551, %v8825
  %8829 = vmatprep.subr.mxu0 0.0
  %8830 = vmatpush1.msra.mxu0 %v798
  %8831 = vmatprep.subr.mxu0 0.0
  %8832 = vmatpush1.msra.mxu0 %v800
  %8833 = vmatprep.subr.mxu0 0.0
  %8834 = vmatpush1.msra.mxu0 %v802
  %8835 = vmatprep.subr.mxu0 0.0
  %8836 = vmatpush1.msra.mxu0 %v804
  %8837 = vmatprep.subr.mxu0 0.0
  %8838 = vmatpush1.msra.mxu0 0.0
  %8839 = vmatprep.subr.mxu0 0.0
  %8840 = vmatpush1.msra.mxu0 0.0
  %8841 = vmatprep.subr.mxu0 0.0
  %8842 = vmatpush1.msra.mxu0 0.0
  %8843 = vmatprep.subr.mxu0 0.0
  %8844 = vmatpush1.msra.mxu0 0.0
  %8845 = vmatprep.subr.mxu0 0.0
  %8846 = vmatpush1.msra.mxu0 0.0
  %8847 = vmatprep.subr.mxu0 0.0
  %8848 = vmatpush1.msra.mxu0 0.0
  %8849 = vmatprep.subr.mxu0 0.0
  %8850 = vmatpush1.msra.mxu0 0.0
  %8851 = vmatprep.subr.mxu0 0.0
  %8852 = vmatpush1.msra.mxu0 0.0
  %8853 = vmatprep.subr.mxu0 0.0
  %8854 = vmatpush1.msra.mxu0 0.0
  %8855 = vmatprep.subr.mxu0 0.0
  %8856 = vmatpush1.msra.mxu0 0.0
  %8857 = vmatprep.subr.mxu0 0.0
  %8858 = vmatpush1.msra.mxu0 0.0
  %8859 = vmatprep.subr.mxu0 0.0
  %8860 = vmatpush1.msra.mxu0 0.0
  %8861 = vmatprep.subr.mxu0 0.0
  %8862 = vmatpush1.msra.mxu0 0.0
  %8863 = vmatprep.subr.mxu0 0.0
  %8864 = vmatpush1.msra.mxu0 0.0
  %8865 = vmatprep.subr.mxu0 0.0
  %8866 = vmatpush1.msra.mxu0 0.0
  %8867 = vmatprep.subr.mxu0 0.0
  %8868 = vmatpush1.msra.mxu0 0.0
  %8869 = vmatprep.subr.mxu0 0.0
  %8870 = vmatpush1.msra.mxu0 0.0
  %8871 = vmatprep.subr.mxu0 0.0
  %8872 = vmatpush1.msra.mxu0 0.0
  %8873 = vmatprep.subr.mxu0 0.0
  %8874 = vmatpush1.msra.mxu0 0.0
  %8875 = vmatprep.subr.mxu0 0.0
  %8876 = vmatpush1.msra.mxu0 0.0
  %8877 = vmatprep.subr.mxu0 0.0
  %8878 = vmatpush1.msra.mxu0 0.0
  %8879 = vmatprep.subr.mxu0 0.0
  %8880 = vmatpush1.msra.mxu0 0.0
  %8881 = vmatprep.subr.mxu0 0.0
  %8882 = vmatpush1.msra.mxu0 0.0
  %8883 = vmatprep.subr.mxu0 0.0
  %8884 = vmatpush1.msra.mxu0 0.0
  %8885 = vmatprep.subr.mxu0 0.0
  %8886 = vmatpush1.msra.mxu0 0.0
  %8887 = vmatprep.subr.mxu0 0.0
  %8888 = vmatpush1.msra.mxu0 0.0
  %8889 = vmatprep.subr.mxu0 0.0
  %8890 = vmatpush1.msra.mxu0 0.0
  %8891 = vmatprep.subr.mxu0 0.0
  %8892 = vmatpush1.msra.mxu0 0.0
  %8893 = vmatprep.mubr.f32.mxu0 0.0
  %8894 = vmatmul.mubr.f32.gmra.mrb[0].mxu0 %v8685
  %v8895 = vpop.f32.mrb[0].mxu0
  %v8896 = vadd.f32 0.0, %v8895
  %v8897 = vpop.f32.mrb[0].mxu0
  %8898 = vdwg.mxu0
  %v8899 = vadd.f32 %v6678, %v8896
  %8900 = vmatprep.subr.mxu0 0.0
  %8901 = vmatpush1.msra.mxu0 %v881
  %8902 = vmatprep.subr.mxu0 0.0
  %8903 = vmatpush1.msra.mxu0 %v883
  %8904 = vmatprep.subr.mxu0 0.0
  %8905 = vmatpush1.msra.mxu0 %v885
  %8906 = vmatprep.subr.mxu0 0.0
  %8907 = vmatpush1.msra.mxu0 %v887
  %8908 = vmatprep.subr.mxu0 0.0
  %8909 = vmatpush1.msra.mxu0 0.0
  %8910 = vmatprep.subr.mxu0 0.0
  %8911 = vmatpush1.msra.mxu0 0.0
  %8912 = vmatprep.subr.mxu0 0.0
  %8913 = vmatpush1.msra.mxu0 0.0
  %8914 = vmatprep.subr.mxu0 0.0
  %8915 = vmatpush1.msra.mxu0 0.0
  %8916 = vmatprep.subr.mxu0 0.0
  %8917 = vmatpush1.msra.mxu0 0.0
  %8918 = vmatprep.subr.mxu0 0.0
  %8919 = vmatpush1.msra.mxu0 0.0
  %8920 = vmatprep.subr.mxu0 0.0
  %8921 = vmatpush1.msra.mxu0 0.0
  %8922 = vmatprep.subr.mxu0 0.0
  %8923 = vmatpush1.msra.mxu0 0.0
  %8924 = vmatprep.subr.mxu0 0.0
  %8925 = vmatpush1.msra.mxu0 0.0
  %8926 = vmatprep.subr.mxu0 0.0
  %8927 = vmatpush1.msra.mxu0 0.0
  %8928 = vmatprep.subr.mxu0 0.0
  %8929 = vmatpush1.msra.mxu0 0.0
  %8930 = vmatprep.subr.mxu0 0.0
  %8931 = vmatpush1.msra.mxu0 0.0
  %8932 = vmatprep.subr.mxu0 0.0
  %8933 = vmatpush1.msra.mxu0 0.0
  %8934 = vmatprep.subr.mxu0 0.0
  %8935 = vmatpush1.msra.mxu0 0.0
  %8936 = vmatprep.subr.mxu0 0.0
  %8937 = vmatpush1.msra.mxu0 0.0
  %8938 = vmatprep.subr.mxu0 0.0
  %8939 = vmatpush1.msra.mxu0 0.0
  %8940 = vmatprep.subr.mxu0 0.0
  %8941 = vmatpush1.msra.mxu0 0.0
  %8942 = vmatprep.subr.mxu0 0.0
  %8943 = vmatpush1.msra.mxu0 0.0
  %8944 = vmatprep.subr.mxu0 0.0
  %8945 = vmatpush1.msra.mxu0 0.0
  %8946 = vmatprep.subr.mxu0 0.0
  %8947 = vmatpush1.msra.mxu0 0.0
  %8948 = vmatprep.subr.mxu0 0.0
  %8949 = vmatpush1.msra.mxu0 0.0
  %8950 = vmatprep.subr.mxu0 0.0
  %8951 = vmatpush1.msra.mxu0 0.0
  %8952 = vmatprep.subr.mxu0 0.0
  %8953 = vmatpush1.msra.mxu0 0.0
  %8954 = vmatprep.subr.mxu0 0.0
  %8955 = vmatpush1.msra.mxu0 0.0
  %8956 = vmatprep.subr.mxu0 0.0
  %8957 = vmatpush1.msra.mxu0 0.0
  %8958 = vmatprep.subr.mxu0 0.0
  %8959 = vmatpush1.msra.mxu0 0.0
  %8960 = vmatprep.subr.mxu0 0.0
  %8961 = vmatpush1.msra.mxu0 0.0
  %8962 = vmatprep.subr.mxu0 0.0
  %8963 = vmatpush1.msra.mxu0 0.0
  %8964 = vmatprep.mubr.f32.mxu0 0.0
  %8965 = vmatmul.mubr.f32.gmra.mrb[0].mxu0 %v8685
  %v8966 = vpop.f32.mrb[0].mxu0
  %v8967 = vadd.f32 0.0, %v8966
  %v8968 = vpop.f32.mrb[0].mxu0
  %8969 = vdwg.mxu0
  %v8970 = vadd.f32 %v6805, %v8967
  %v8971 = vxor.u32 %v8757, 2147483648
  %v8972 = vmul.f32 %v8971, 1.442695
  %v8973 = vpow.pop %v8972
  %v8974 = vadd.f32 %v8973, 1.0
  %v8975 = vrcp.pop %v8974
  %v8976 = vmul.f32 1.0, %v8975
  %v8977 = vxor.u32 %v8828, 2147483648
  %v8978 = vmul.f32 %v8977, 1.442695
  %v8979 = vpow.pop %v8978
  %v8980 = vadd.f32 %v8979, 1.0
  %v8981 = vrcp.pop %v8980
  %v8982 = vmul.f32 1.0, %v8981
  %v8983 = vtanh.pop %v8899
  %v8984 = vxor.u32 %v8970, 2147483648
  %v8985 = vmul.f32 %v8984, 1.442695
  %v8986 = vpow.pop %v8985
  %v8987 = vadd.f32 %v8986, 1.0
  %v8988 = vrcp.pop %v8987
  %v8989 = vmul.f32 1.0, %v8988
  %v8990 = vmul.f32 %v8982, %v8679
  %v8991 = vmul.f32 %v8976, %v8983
  %v8992 = vadd.f32 %v8990, %v8991
  %v8993 = vtanh.pop %v8992
  %v8994 = vmul.f32 %v8989, %v8993
  %s8995 = scalar_lea.vmem [#allocation4], 12
  %8996 = vst.msk [vmem:[%s8995] sm:$0x3] %vm987, %v8994
  %v8998 = vsel %vm90, %v8994, 0
  %9000 = vmatprep.subr.mxu0 0.0
  %9001 = vmatpush1.msra.mxu0 %v37
  %9002 = vmatprep.subr.mxu0 0.0
  %9003 = vmatpush1.msra.mxu0 %v38
  %9004 = vmatprep.subr.mxu0 0.0
  %9005 = vmatpush1.msra.mxu0 %v39
  %9006 = vmatprep.subr.mxu0 0.0
  %9007 = vmatpush1.msra.mxu0 %v40
  %9008 = vmatprep.subr.mxu0 0.0
  %9009 = vmatpush1.msra.mxu0 0.0
  %9010 = vmatprep.subr.mxu0 0.0
  %9011 = vmatpush1.msra.mxu0 0.0
  %9012 = vmatprep.subr.mxu0 0.0
  %9013 = vmatpush1.msra.mxu0 0.0
  %9014 = vmatprep.subr.mxu0 0.0
  %9015 = vmatpush1.msra.mxu0 0.0
  %9016 = vmatprep.subr.mxu0 0.0
  %9017 = vmatpush1.msra.mxu0 0.0
  %9018 = vmatprep.subr.mxu0 0.0
  %9019 = vmatpush1.msra.mxu0 0.0
  %9020 = vmatprep.subr.mxu0 0.0
  %9021 = vmatpush1.msra.mxu0 0.0
  %9022 = vmatprep.subr.mxu0 0.0
  %9023 = vmatpush1.msra.mxu0 0.0
  %9024 = vmatprep.subr.mxu0 0.0
  %9025 = vmatpush1.msra.mxu0 0.0
  %9026 = vmatprep.subr.mxu0 0.0
  %9027 = vmatpush1.msra.mxu0 0.0
  %9028 = vmatprep.subr.mxu0 0.0
  %9029 = vmatpush1.msra.mxu0 0.0
  %9030 = vmatprep.subr.mxu0 0.0
  %9031 = vmatpush1.msra.mxu0 0.0
  %9032 = vmatprep.subr.mxu0 0.0
  %9033 = vmatpush1.msra.mxu0 0.0
  %9034 = vmatprep.subr.mxu0 0.0
  %9035 = vmatpush1.msra.mxu0 0.0
  %9036 = vmatprep.subr.mxu0 0.0
  %9037 = vmatpush1.msra.mxu0 0.0
  %9038 = vmatprep.subr.mxu0 0.0
  %9039 = vmatpush1.msra.mxu0 0.0
  %9040 = vmatprep.subr.mxu0 0.0
  %9041 = vmatpush1.msra.mxu0 0.0
  %9042 = vmatprep.subr.mxu0 0.0
  %9043 = vmatpush1.msra.mxu0 0.0
  %9044 = vmatprep.subr.mxu0 0.0
  %9045 = vmatpush1.msra.mxu0 0.0
  %9046 = vmatprep.subr.mxu0 0.0
  %9047 = vmatpush1.msra.mxu0 0.0
  %9048 = vmatprep.subr.mxu0 0.0
  %9049 = vmatpush1.msra.mxu0 0.0
  %9050 = vmatprep.subr.mxu0 0.0
  %9051 = vmatpush1.msra.mxu0 0.0
  %9052 = vmatprep.subr.mxu0 0.0
  %9053 = vmatpush1.msra.mxu0 0.0
  %9054 = vmatprep.subr.mxu0 0.0
  %9055 = vmatpush1.msra.mxu0 0.0
  %9056 = vmatprep.subr.mxu0 0.0
  %9057 = vmatpush1.msra.mxu0 0.0
  %9058 = vmatprep.subr.mxu0 0.0
  %9059 = vmatpush1.msra.mxu0 0.0
  %9060 = vmatprep.subr.mxu0 0.0
  %9061 = vmatpush1.msra.mxu0 0.0
  %9062 = vmatprep.subr.mxu0 0.0
  %9063 = vmatpush1.msra.mxu0 0.0
  %9064 = vmatprep.mubr.f32.mxu0 0.0
  %9065 = vmatmul.mubr.f32.gmra.mrb[0].mxu0 %v8998
  %v9066 = vpop.f32.mrb[0].mxu0
  %v9067 = vadd.f32 0.0, %v9066
  %v9068 = vpop.f32.mrb[0].mxu0
  %9069 = vdwg.mxu0
  %v9070 = vadd.f32 %v6425, %v9067
  %9071 = vmatprep.subr.mxu0 0.0
  %9072 = vmatpush1.msra.mxu0 %v715
  %9073 = vmatprep.subr.mxu0 0.0
  %9074 = vmatpush1.msra.mxu0 %v717
  %9075 = vmatprep.subr.mxu0 0.0
  %9076 = vmatpush1.msra.mxu0 %v719
  %9077 = vmatprep.subr.mxu0 0.0
  %9078 = vmatpush1.msra.mxu0 %v721
  %9079 = vmatprep.subr.mxu0 0.0
  %9080 = vmatpush1.msra.mxu0 0.0
  %9081 = vmatprep.subr.mxu0 0.0
  %9082 = vmatpush1.msra.mxu0 0.0
  %9083 = vmatprep.subr.mxu0 0.0
  %9084 = vmatpush1.msra.mxu0 0.0
  %9085 = vmatprep.subr.mxu0 0.0
  %9086 = vmatpush1.msra.mxu0 0.0
  %9087 = vmatprep.subr.mxu0 0.0
  %9088 = vmatpush1.msra.mxu0 0.0
  %9089 = vmatprep.subr.mxu0 0.0
  %9090 = vmatpush1.msra.mxu0 0.0
  %9091 = vmatprep.subr.mxu0 0.0
  %9092 = vmatpush1.msra.mxu0 0.0
  %9093 = vmatprep.subr.mxu0 0.0
  %9094 = vmatpush1.msra.mxu0 0.0
  %9095 = vmatprep.subr.mxu0 0.0
  %9096 = vmatpush1.msra.mxu0 0.0
  %9097 = vmatprep.subr.mxu0 0.0
  %9098 = vmatpush1.msra.mxu0 0.0
  %9099 = vmatprep.subr.mxu0 0.0
  %9100 = vmatpush1.msra.mxu0 0.0
  %9101 = vmatprep.subr.mxu0 0.0
  %9102 = vmatpush1.msra.mxu0 0.0
  %9103 = vmatprep.subr.mxu0 0.0
  %9104 = vmatpush1.msra.mxu0 0.0
  %9105 = vmatprep.subr.mxu0 0.0
  %9106 = vmatpush1.msra.mxu0 0.0
  %9107 = vmatprep.subr.mxu0 0.0
  %9108 = vmatpush1.msra.mxu0 0.0
  %9109 = vmatprep.subr.mxu0 0.0
  %9110 = vmatpush1.msra.mxu0 0.0
  %9111 = vmatprep.subr.mxu0 0.0
  %9112 = vmatpush1.msra.mxu0 0.0
  %9113 = vmatprep.subr.mxu0 0.0
  %9114 = vmatpush1.msra.mxu0 0.0
  %9115 = vmatprep.subr.mxu0 0.0
  %9116 = vmatpush1.msra.mxu0 0.0
  %9117 = vmatprep.subr.mxu0 0.0
  %9118 = vmatpush1.msra.mxu0 0.0
  %9119 = vmatprep.subr.mxu0 0.0
  %9120 = vmatpush1.msra.mxu0 0.0
  %9121 = vmatprep.subr.mxu0 0.0
  %9122 = vmatpush1.msra.mxu0 0.0
  %9123 = vmatprep.subr.mxu0 0.0
  %9124 = vmatpush1.msra.mxu0 0.0
  %9125 = vmatprep.subr.mxu0 0.0
  %9126 = vmatpush1.msra.mxu0 0.0
  %9127 = vmatprep.subr.mxu0 0.0
  %9128 = vmatpush1.msra.mxu0 0.0
  %9129 = vmatprep.subr.mxu0 0.0
  %9130 = vmatpush1.msra.mxu0 0.0
  %9131 = vmatprep.subr.mxu0 0.0
  %9132 = vmatpush1.msra.mxu0 0.0
  %9133 = vmatprep.subr.mxu0 0.0
  %9134 = vmatpush1.msra.mxu0 0.0
  %9135 = vmatprep.mubr.f32.mxu0 0.0
  %9136 = vmatmul.mubr.f32.gmra.mrb[0].mxu0 %v8998
  %v9137 = vpop.f32.mrb[0].mxu0
  %v9138 = vadd.f32 0.0, %v9137
  %v9139 = vpop.f32.mrb[0].mxu0
  %9140 = vdwg.mxu0
  %v9141 = vadd.f32 %v6552, %v9138
  %9142 = vmatprep.subr.mxu0 0.0
  %9143 = vmatpush1.msra.mxu0 %v798
  %9144 = vmatprep.subr.mxu0 0.0
  %9145 = vmatpush1.msra.mxu0 %v800
  %9146 = vmatprep.subr.mxu0 0.0
  %9147 = vmatpush1.msra.mxu0 %v802
  %9148 = vmatprep.subr.mxu0 0.0
  %9149 = vmatpush1.msra.mxu0 %v804
  %9150 = vmatprep.subr.mxu0 0.0
  %9151 = vmatpush1.msra.mxu0 0.0
  %9152 = vmatprep.subr.mxu0 0.0
  %9153 = vmatpush1.msra.mxu0 0.0
  %9154 = vmatprep.subr.mxu0 0.0
  %9155 = vmatpush1.msra.mxu0 0.0
  %9156 = vmatprep.subr.mxu0 0.0
  %9157 = vmatpush1.msra.mxu0 0.0
  %9158 = vmatprep.subr.mxu0 0.0
  %9159 = vmatpush1.msra.mxu0 0.0
  %9160 = vmatprep.subr.mxu0 0.0
  %9161 = vmatpush1.msra.mxu0 0.0
  %9162 = vmatprep.subr.mxu0 0.0
  %9163 = vmatpush1.msra.mxu0 0.0
  %9164 = vmatprep.subr.mxu0 0.0
  %9165 = vmatpush1.msra.mxu0 0.0
  %9166 = vmatprep.subr.mxu0 0.0
  %9167 = vmatpush1.msra.mxu0 0.0
  %9168 = vmatprep.subr.mxu0 0.0
  %9169 = vmatpush1.msra.mxu0 0.0
  %9170 = vmatprep.subr.mxu0 0.0
  %9171 = vmatpush1.msra.mxu0 0.0
  %9172 = vmatprep.subr.mxu0 0.0
  %9173 = vmatpush1.msra.mxu0 0.0
  %9174 = vmatprep.subr.mxu0 0.0
  %9175 = vmatpush1.msra.mxu0 0.0
  %9176 = vmatprep.subr.mxu0 0.0
  %9177 = vmatpush1.msra.mxu0 0.0
  %9178 = vmatprep.subr.mxu0 0.0
  %9179 = vmatpush1.msra.mxu0 0.0
  %9180 = vmatprep.subr.mxu0 0.0
  %9181 = vmatpush1.msra.mxu0 0.0
  %9182 = vmatprep.subr.mxu0 0.0
  %9183 = vmatpush1.msra.mxu0 0.0
  %9184 = vmatprep.subr.mxu0 0.0
  %9185 = vmatpush1.msra.mxu0 0.0
  %9186 = vmatprep.subr.mxu0 0.0
  %9187 = vmatpush1.msra.mxu0 0.0
  %9188 = vmatprep.subr.mxu0 0.0
  %9189 = vmatpush1.msra.mxu0 0.0
  %9190 = vmatprep.subr.mxu0 0.0
  %9191 = vmatpush1.msra.mxu0 0.0
  %9192 = vmatprep.subr.mxu0 0.0
  %9193 = vmatpush1.msra.mxu0 0.0
  %9194 = vmatprep.subr.mxu0 0.0
  %9195 = vmatpush1.msra.mxu0 0.0
  %9196 = vmatprep.subr.mxu0 0.0
  %9197 = vmatpush1.msra.mxu0 0.0
  %9198 = vmatprep.subr.mxu0 0.0
  %9199 = vmatpush1.msra.mxu0 0.0
  %9200 = vmatprep.subr.mxu0 0.0
  %9201 = vmatpush1.msra.mxu0 0.0
  %9202 = vmatprep.subr.mxu0 0.0
  %9203 = vmatpush1.msra.mxu0 0.0
  %9204 = vmatprep.subr.mxu0 0.0
  %9205 = vmatpush1.msra.mxu0 0.0
  %9206 = vmatprep.mubr.f32.mxu0 0.0
  %9207 = vmatmul.mubr.f32.gmra.mrb[0].mxu0 %v8998
  %v9208 = vpop.f32.mrb[0].mxu0
  %v9209 = vadd.f32 0.0, %v9208
  %v9210 = vpop.f32.mrb[0].mxu0
  %9211 = vdwg.mxu0
  %v9212 = vadd.f32 %v6679, %v9209
  %9213 = vmatprep.subr.mxu0 0.0
  %9214 = vmatpush1.msra.mxu0 %v881
  %9215 = vmatprep.subr.mxu0 0.0
  %9216 = vmatpush1.msra.mxu0 %v883
  %9217 = vmatprep.subr.mxu0 0.0
  %9218 = vmatpush1.msra.mxu0 %v885
  %9219 = vmatprep.subr.mxu0 0.0
  %9220 = vmatpush1.msra.mxu0 %v887
  %9221 = vmatprep.subr.mxu0 0.0
  %9222 = vmatpush1.msra.mxu0 0.0
  %9223 = vmatprep.subr.mxu0 0.0
  %9224 = vmatpush1.msra.mxu0 0.0
  %9225 = vmatprep.subr.mxu0 0.0
  %9226 = vmatpush1.msra.mxu0 0.0
  %9227 = vmatprep.subr.mxu0 0.0
  %9228 = vmatpush1.msra.mxu0 0.0
  %9229 = vmatprep.subr.mxu0 0.0
  %9230 = vmatpush1.msra.mxu0 0.0
  %9231 = vmatprep.subr.mxu0 0.0
  %9232 = vmatpush1.msra.mxu0 0.0
  %9233 = vmatprep.subr.mxu0 0.0
  %9234 = vmatpush1.msra.mxu0 0.0
  %9235 = vmatprep.subr.mxu0 0.0
  %9236 = vmatpush1.msra.mxu0 0.0
  %9237 = vmatprep.subr.mxu0 0.0
  %9238 = vmatpush1.msra.mxu0 0.0
  %9239 = vmatprep.subr.mxu0 0.0
  %9240 = vmatpush1.msra.mxu0 0.0
  %9241 = vmatprep.subr.mxu0 0.0
  %9242 = vmatpush1.msra.mxu0 0.0
  %9243 = vmatprep.subr.mxu0 0.0
  %9244 = vmatpush1.msra.mxu0 0.0
  %9245 = vmatprep.subr.mxu0 0.0
  %9246 = vmatpush1.msra.mxu0 0.0
  %9247 = vmatprep.subr.mxu0 0.0
  %9248 = vmatpush1.msra.mxu0 0.0
  %9249 = vmatprep.subr.mxu0 0.0
  %9250 = vmatpush1.msra.mxu0 0.0
  %9251 = vmatprep.subr.mxu0 0.0
  %9252 = vmatpush1.msra.mxu0 0.0
  %9253 = vmatprep.subr.mxu0 0.0
  %9254 = vmatpush1.msra.mxu0 0.0
  %9255 = vmatprep.subr.mxu0 0.0
  %9256 = vmatpush1.msra.mxu0 0.0
  %9257 = vmatprep.subr.mxu0 0.0
  %9258 = vmatpush1.msra.mxu0 0.0
  %9259 = vmatprep.subr.mxu0 0.0
  %9260 = vmatpush1.msra.mxu0 0.0
  %9261 = vmatprep.subr.mxu0 0.0
  %9262 = vmatpush1.msra.mxu0 0.0
  %9263 = vmatprep.subr.mxu0 0.0
  %9264 = vmatpush1.msra.mxu0 0.0
  %9265 = vmatprep.subr.mxu0 0.0
  %9266 = vmatpush1.msra.mxu0 0.0
  %9267 = vmatprep.subr.mxu0 0.0
  %9268 = vmatpush1.msra.mxu0 0.0
  %9269 = vmatprep.subr.mxu0 0.0
  %9270 = vmatpush1.msra.mxu0 0.0
  %9271 = vmatprep.subr.mxu0 0.0
  %9272 = vmatpush1.msra.mxu0 0.0
  %9273 = vmatprep.subr.mxu0 0.0
  %9274 = vmatpush1.msra.mxu0 0.0
  %9275 = vmatprep.subr.mxu0 0.0
  %9276 = vmatpush1.msra.mxu0 0.0
  %9277 = vmatprep.mubr.f32.mxu0 0.0
  %9278 = vmatmul.mubr.f32.gmra.mrb[0].mxu0 %v8998
  %v9279 = vpop.f32.mrb[0].mxu0
  %v9280 = vadd.f32 0.0, %v9279
  %v9281 = vpop.f32.mrb[0].mxu0
  %9282 = vdwg.mxu0
  %v9283 = vadd.f32 %v6806, %v9280
  %v9284 = vxor.u32 %v9070, 2147483648
  %v9285 = vmul.f32 %v9284, 1.442695
  %v9286 = vpow.pop %v9285
  %v9287 = vadd.f32 %v9286, 1.0
  %v9288 = vrcp.pop %v9287
  %v9289 = vmul.f32 1.0, %v9288
  %v9290 = vxor.u32 %v9141, 2147483648
  %v9291 = vmul.f32 %v9290, 1.442695
  %v9292 = vpow.pop %v9291
  %v9293 = vadd.f32 %v9292, 1.0
  %v9294 = vrcp.pop %v9293
  %v9295 = vmul.f32 1.0, %v9294
  %v9296 = vtanh.pop %v9212
  %v9297 = vxor.u32 %v9283, 2147483648
  %v9298 = vmul.f32 %v9297, 1.442695
  %v9299 = vpow.pop %v9298
  %v9300 = vadd.f32 %v9299, 1.0
  %v9301 = vrcp.pop %v9300
  %v9302 = vmul.f32 1.0, %v9301
  %v9303 = vmul.f32 %v9295, %v8992
  %v9304 = vmul.f32 %v9289, %v9296
  %v9305 = vadd.f32 %v9303, %v9304
  %v9306 = vtanh.pop %v9305
  %v9307 = vmul.f32 %v9302, %v9306
  %s9308 = scalar_lea.vmem [#allocation4], 14
  %9309 = vst.msk [vmem:[%s9308] sm:$0x3] %vm987, %v9307
  %v9310 = vld [vmem:[#allocation2] sm:$0x3]
  %v9311 = vld [vmem:[#allocation2 + $0x2] sm:$0x3]
  %v9312 = vld [vmem:[#allocation2 + $0x4] sm:$0x3]
  %v9313 = vld [vmem:[#allocation2 + $0x6] sm:$0x3]
  %v9314 = vld [vmem:[#allocation2 + $0x8] sm:$0x3]
  %v9315 = vld [vmem:[#allocation2 + $0xa] sm:$0x3]
  %v9316 = vld [vmem:[#allocation2 + $0xc] sm:$0x3]
  %v9317 = vld [vmem:[#allocation2 + $0xe] sm:$0x3]
  %v9318 = vld [vmem:[#allocation3] sm:$0x3]
  %v9319 = vld [vmem:[#allocation3 + $0x2] sm:$0x3]
  %v9320 = vld [vmem:[#allocation3 + $0x4] sm:$0x3]
  %v9321 = vld [vmem:[#allocation3 + $0x6] sm:$0x3]
  %v9322 = vld [vmem:[#allocation3 + $0x8] sm:$0x3]
  %v9323 = vld [vmem:[#allocation3 + $0xa] sm:$0x3]
  %v9324 = vld [vmem:[#allocation3 + $0xc] sm:$0x3]
  %v9325 = vld [vmem:[#allocation3 + $0xe] sm:$0x3]
  %v9326 = vld [vmem:[#allocation4] sm:$0x3]
  %v9327 = vld [vmem:[#allocation4 + $0x2] sm:$0x3]
  %v9328 = vld [vmem:[#allocation4 + $0x4] sm:$0x3]
  %v9329 = vld [vmem:[#allocation4 + $0x6] sm:$0x3]
  %v9330 = vld [vmem:[#allocation4 + $0x8] sm:$0x3]
  %v9331 = vld [vmem:[#allocation4 + $0xa] sm:$0x3]
  %v9332 = vld [vmem:[#allocation4 + $0xc] sm:$0x3]
  %v9333 = vld [vmem:[#allocation4 + $0xe] sm:$0x3]
  %9342 = vrot.lane.b32.xlu0 %v9318, 32
  %v9343 = vpop.permute.xlu0 %9342
  %9344 = vrot.lane.b32.xlu0 %v9319, 32
  %v9345 = vpop.permute.xlu0 %9344
  %9346 = vrot.lane.b32.xlu0 %v9320, 32
  %v9347 = vpop.permute.xlu0 %9346
  %9348 = vrot.lane.b32.xlu0 %v9321, 32
  %v9349 = vpop.permute.xlu0 %9348
  %9350 = vrot.lane.b32.xlu0 %v9322, 32
  %v9351 = vpop.permute.xlu0 %9350
  %9352 = vrot.lane.b32.xlu0 %v9323, 32
  %v9353 = vpop.permute.xlu0 %9352
  %9354 = vrot.lane.b32.xlu0 %v9324, 32
  %v9355 = vpop.permute.xlu0 %9354
  %9356 = vrot.lane.b32.xlu0 %v9325, 32
  %v9357 = vpop.permute.xlu0 %9356
  %9374 = vrot.lane.b32.xlu0 %v9326, 64
  %v9375 = vpop.permute.xlu0 %9374
  %9376 = vrot.lane.b32.xlu0 %v9327, 64
  %v9377 = vpop.permute.xlu0 %9376
  %9378 = vrot.lane.b32.xlu0 %v9328, 64
  %v9379 = vpop.permute.xlu0 %9378
  %9380 = vrot.lane.b32.xlu0 %v9329, 64
  %v9381 = vpop.permute.xlu0 %9380
  %9382 = vrot.lane.b32.xlu0 %v9330, 64
  %v9383 = vpop.permute.xlu0 %9382
  %9384 = vrot.lane.b32.xlu0 %v9331, 64
  %v9385 = vpop.permute.xlu0 %9384
  %9386 = vrot.lane.b32.xlu0 %v9332, 64
  %v9387 = vpop.permute.xlu0 %9386
  %9388 = vrot.lane.b32.xlu0 %v9333, 64
  %v9389 = vpop.permute.xlu0 %9388
  %v9398 = vsel %vm90, %v9310, %v9343
  %v9399 = vsel %vm90, %v9311, %v9345
  %v9400 = vsel %vm90, %v9312, %v9347
  %v9401 = vsel %vm90, %v9313, %v9349
  %v9402 = vsel %vm90, %v9314, %v9351
  %v9403 = vsel %vm90, %v9315, %v9353
  %v9404 = vsel %vm90, %v9316, %v9355
  %v9405 = vsel %vm90, %v9317, %v9357
  %vm9406 = vcmask 523264
  %v9407 = vsel %vm9406, %v9398, %v9375
  %v9408 = vsel %vm9406, %v9399, %v9377
  %v9409 = vsel %vm9406, %v9400, %v9379
  %v9410 = vsel %vm9406, %v9401, %v9381
  %v9411 = vsel %vm9406, %v9402, %v9383
  %v9412 = vsel %vm9406, %v9403, %v9385
  %v9413 = vsel %vm9406, %v9404, %v9387
  %v9414 = vsel %vm9406, %v9405, %v9389
  %vm9415 = vcmask 779264
  %9416 = vst.msk [vmem:[%s7] sm:$0x3] %vm9415, %v9407
  %9417 = vst.msk [vmem:[%s7 + $0x2] sm:$0x3] %vm9415, %v9408
  %9418 = vst.msk [vmem:[%s7 + $0x4] sm:$0x3] %vm9415, %v9409
  %9419 = vst.msk [vmem:[%s7 + $0x6] sm:$0x3] %vm9415, %v9410
  %9420 = vst.msk [vmem:[%s7 + $0x8] sm:$0x3] %vm9415, %v9411
  %9421 = vst.msk [vmem:[%s7 + $0xa] sm:$0x3] %vm9415, %v9412
  %9422 = vst.msk [vmem:[%s7 + $0xc] sm:$0x3] %vm9415, %v9413
  %9423 = vst.msk [vmem:[%s7 + $0xe] sm:$0x3] %vm9415, %v9414
  %v9424 = vld [vmem:[%s4] sm:$0xff]
  %v9425 = vld [vmem:[%s4 + $0x8] sm:$0xff]
  %v9426 = vld [vmem:[%s4 + $0x10] sm:$0xff]
  %v9427 = vld [vmem:[%s4 + $0x18] sm:$0xff]
  %v9428 = vld [vmem:[%s4 + $0x20] sm:$0xff]
  %v9429 = vld [vmem:[%s4 + $0x28] sm:$0xff]
  %v9430 = vld [vmem:[%s4 + $0x30] sm:$0xff]
  %v9431 = vld [vmem:[%s4 + $0x38] sm:$0xff]
  %v9432 = vld [vmem:[%s4 + $0x40] sm:$0xff]
  %v9433 = vld [vmem:[%s4 + $0x48] sm:$0xff]
  %v9434 = vld [vmem:[%s4 + $0x50] sm:$0xff]
  %v9435 = vld [vmem:[%s4 + $0x58] sm:$0xff]
  %v9436 = vld [vmem:[%s5] sm:$0x1]
  %v9438 = vlaneseq
  %v9439 = vshrl.u32 %v9438, 7
  %v9440 = vsub.s32 0, %v9439
  %v9441 = vrot.slane %v9436, %v9440
  %v9451 = vcombine.low %v9407, %v9408
  %v9452 = vcombine.low %v9409, %v9410
  %v9454 = vunpack.c.l.s4 1983009808
  %v9455 = vunpack.c.0.s8 %v9454
  %v9456 = vlaneseq
  %v9457 = vshrl.u32 %v9456, 7
  %v9458 = vsub.s32 %v9455, %v9457
  %v9459 = vrot.slane %v9451, %v9458
  %v9461 = vunpack.c.l.s4 1983009808
  %v9462 = vunpack.c.0.s8 %v9461
  %v9463 = vlaneseq
  %v9464 = vshrl.u32 %v9463, 7
  %v9465 = vsub.s32 %v9462, %v9464
  %v9466 = vrot.slane %v9452, %v9465
  %v9467 = vcombine.low %v9459, %v9466
  %v9468 = vcombine.low %v9411, %v9412
  %v9469 = vcombine.low %v9413, %v9414
  %v9471 = vunpack.c.l.s4 1983009808
  %v9472 = vunpack.c.0.s8 %v9471
  %v9473 = vlaneseq
  %v9474 = vshrl.u32 %v9473, 7
  %v9475 = vsub.s32 %v9472, %v9474
  %v9476 = vrot.slane %v9468, %v9475
  %v9478 = vunpack.c.l.s4 1983009808
  %v9479 = vunpack.c.0.s8 %v9478
  %v9480 = vlaneseq
  %v9481 = vshrl.u32 %v9480, 7
  %v9482 = vsub.s32 %v9479, %v9481
  %v9483 = vrot.slane %v9469, %v9482
  %v9484 = vcombine.low %v9476, %v9483
  %vm9485 = vcmask 785408
  %v9486 = vsel %vm9485, %v9467, 0
  %v9488 = vsel %vm9485, %v9484, 0
  %9490 = vmatprep.subr.mxu0 0.0
  %9491 = vmatpush1.msra.mxu0 %v9424
  %9492 = vmatprep.subr.mxu0 0.0
  %9493 = vmatpush1.msra.mxu0 %v9425
  %9494 = vmatprep.subr.mxu0 0.0
  %9495 = vmatpush1.msra.mxu0 %v9426
  %9496 = vmatprep.subr.mxu0 0.0
  %9497 = vmatpush1.msra.mxu0 %v9427
  %9498 = vmatprep.subr.mxu0 0.0
  %9499 = vmatpush1.msra.mxu0 %v9428
  %9500 = vmatprep.subr.mxu0 0.0
  %9501 = vmatpush1.msra.mxu0 %v9429
  %9502 = vmatprep.subr.mxu0 0.0
  %9503 = vmatpush1.msra.mxu0 %v9430
  %9504 = vmatprep.subr.mxu0 0.0
  %9505 = vmatpush1.msra.mxu0 %v9431
  %9506 = vmatprep.subr.mxu0 0.0
  %9507 = vmatpush1.msra.mxu0 %v9432
  %9508 = vmatprep.subr.mxu0 0.0
  %9509 = vmatpush1.msra.mxu0 %v9433
  %9510 = vmatprep.subr.mxu0 0.0
  %9511 = vmatpush1.msra.mxu0 %v9434
  %9512 = vmatprep.subr.mxu0 0.0
  %9513 = vmatpush1.msra.mxu0 %v9435
  %9514 = vmatprep.subr.mxu0 0.0
  %9515 = vmatpush1.msra.mxu0 0.0
  %9516 = vmatprep.subr.mxu0 0.0
  %9517 = vmatpush1.msra.mxu0 0.0
  %9518 = vmatprep.subr.mxu0 0.0
  %9519 = vmatpush1.msra.mxu0 0.0
  %9520 = vmatprep.subr.mxu0 0.0
  %9521 = vmatpush1.msra.mxu0 0.0
  %9522 = vmatprep.subr.mxu0 0.0
  %9523 = vmatpush1.msra.mxu0 0.0
  %9524 = vmatprep.subr.mxu0 0.0
  %9525 = vmatpush1.msra.mxu0 0.0
  %9526 = vmatprep.subr.mxu0 0.0
  %9527 = vmatpush1.msra.mxu0 0.0
  %9528 = vmatprep.subr.mxu0 0.0
  %9529 = vmatpush1.msra.mxu0 0.0
  %9530 = vmatprep.subr.mxu0 0.0
  %9531 = vmatpush1.msra.mxu0 0.0
  %9532 = vmatprep.subr.mxu0 0.0
  %9533 = vmatpush1.msra.mxu0 0.0
  %9534 = vmatprep.subr.mxu0 0.0
  %9535 = vmatpush1.msra.mxu0 0.0
  %9536 = vmatprep.subr.mxu0 0.0
  %9537 = vmatpush1.msra.mxu0 0.0
  %9538 = vmatprep.subr.mxu0 0.0
  %9539 = vmatpush1.msra.mxu0 0.0
  %9540 = vmatprep.subr.mxu0 0.0
  %9541 = vmatpush1.msra.mxu0 0.0
  %9542 = vmatprep.subr.mxu0 0.0
  %9543 = vmatpush1.msra.mxu0 0.0
  %9544 = vmatprep.subr.mxu0 0.0
  %9545 = vmatpush1.msra.mxu0 0.0
  %9546 = vmatprep.subr.mxu0 0.0
  %9547 = vmatpush1.msra.mxu0 0.0
  %9548 = vmatprep.subr.mxu0 0.0
  %9549 = vmatpush1.msra.mxu0 0.0
  %9550 = vmatprep.subr.mxu0 0.0
  %9551 = vmatpush1.msra.mxu0 0.0
  %9552 = vmatprep.subr.mxu0 0.0
  %9553 = vmatpush1.msra.mxu0 0.0
  %9554 = vmatprep.mubr.f32.mxu0 0.0
  %9555 = vmatmul.mubr.f32.gmra.mrb[0].mxu0 %v9486
  %v9556 = vpop.f32.mrb[0].mxu0
  %v9557 = vadd.f32 %v9441, %v9556
  %v9558 = vpop.f32.mrb[0].mxu0
  %9559 = vmatprep.mubr.f32.mxu0 0.0
  %9560 = vmatmul.mubr.f32.gmra.mrb[0].mxu0 %v9488
  %v9561 = vpop.f32.mrb[0].mxu0
  %v9562 = vadd.f32 %v9441, %v9561
  %v9563 = vpop.f32.mrb[0].mxu0
  %9564 = vdwg.mxu0
  %v9567 = vcombine.high %v9557, %v9557
  %v9569 = vunpack.c.l.s4 1983009808
  %v9570 = vunpack.c.0.s8 %v9569
  %v9571 = vlaneseq
  %v9572 = vshrl.u32 %v9571, 7
  %v9573 = vsub.s32 %v9570, %v9572
  %v9574 = vrot.slane %v9557, %v9573
  %v9576 = vunpack.c.l.s4 1983009808
  %v9577 = vunpack.c.0.s8 %v9576
  %v9578 = vlaneseq
  %v9579 = vshrl.u32 %v9578, 7
  %v9580 = vsub.s32 %v9577, %v9579
  %v9581 = vrot.slane %v9567, %v9580
  %v9582 = vcombine.high %v9574, %v9574
  %v9583 = vcombine.high %v9581, %v9581
  %v9584 = vcombine.high %v9562, %v9562
  %v9586 = vunpack.c.l.s4 1983009808
  %v9587 = vunpack.c.0.s8 %v9586
  %v9588 = vlaneseq
  %v9589 = vshrl.u32 %v9588, 7
  %v9590 = vsub.s32 %v9587, %v9589
  %v9591 = vrot.slane %v9562, %v9590
  %v9593 = vunpack.c.l.s4 1983009808
  %v9594 = vunpack.c.0.s8 %v9593
  %v9595 = vlaneseq
  %v9596 = vshrl.u32 %v9595, 7
  %v9597 = vsub.s32 %v9594, %v9596
  %v9598 = vrot.slane %v9584, %v9597
  %v9599 = vcombine.high %v9591, %v9591
  %v9600 = vcombine.high %v9598, %v9598
  %v9609 = vadd.f32 %v9574, %v25
  %v9610 = vadd.f32 %v9582, %v26
  %v9611 = vadd.f32 %v9581, %v27
  %v9612 = vadd.f32 %v9583, %v28
  %v9613 = vadd.f32 %v9591, %v29
  %v9614 = vadd.f32 %v9599, %v30
  %v9615 = vadd.f32 %v9598, %v31
  %v9616 = vadd.f32 %v9600, %v32
  %9617 = vst.msk [vmem:[%s6] sm:$0x3] %vm987, %v9609
  %9618 = vst.msk [vmem:[%s6 + $0x2] sm:$0x3] %vm987, %v9610
  %9619 = vst.msk [vmem:[%s6 + $0x4] sm:$0x3] %vm987, %v9611
  %9620 = vst.msk [vmem:[%s6 + $0x6] sm:$0x3] %vm987, %v9612
  %9621 = vst.msk [vmem:[%s6 + $0x8] sm:$0x3] %vm987, %v9613
  %9622 = vst.msk [vmem:[%s6 + $0xa] sm:$0x3] %vm987, %v9614
  %9623 = vst.msk [vmem:[%s6 + $0xc] sm:$0x3] %vm987, %v9615
  %9624 = vst.msk [vmem:[%s6 + $0xe] sm:$0x3] %vm987, %v9616
  // Predicated region
  $region26: #{lstm_sequence_forward.1} parent=0 // pred_check
    _
  $region27: #{lstm_sequence_forward.1} parent=0 // pred_check_branch
    %9626 = sbr.rel (0) target = $region29
  $region28: #{lstm_sequence_forward.1} parent=0 // pred_region
    _
  $region29: #{lstm_sequence_forward.1} parent=0 // pred_fallthru
    _
  // Predicated region
  $region30: #{lstm_sequence_forward.1} parent=0 // pred_check
    _
  $region31: #{lstm_sequence_forward.1} parent=0 // pred_check_branch
    %9628 = sbr.rel (0) target = $region33
  $region32: #{lstm_sequence_forward.1} parent=0 // pred_region
    _
  $region33: #{lstm_sequence_forward.1} parent=0 // pred_fallthru
    _
  // Predicated region
  $region34: #{lstm_sequence_forward.1} parent=0 // pred_check
    _
  $region35: #{lstm_sequence_forward.1} parent=0 // pred_check_branch
    %9630 = sbr.rel (0) target = $region37
  $region36: #{lstm_sequence_forward.1} parent=0 // pred_region
    _
  $region37: #{lstm_sequence_forward.1} parent=0 // pred_fallthru
    _
  // Predicated region
  $region38: #{lstm_sequence_forward.1} parent=0 // pred_check
    _
  $region39: #{lstm_sequence_forward.1} parent=0 // pred_check_branch
    %9632 = sbr.rel (0) target = $region41
  $region40: #{lstm_sequence_forward.1} parent=0 // pred_region
    _
  $region41: #{lstm_sequence_forward.1} parent=0 // pred_fallthru
    _

</llo_original>
